<compile_context>
chip_gen: v5e
topology: v5e:2x2
jax: 0.10.0
libtpu: 0.0.40
codegen_flags: <defaults>
</compile_context>

<pallas_src>
import functools

import jax
import jax.numpy as jnp
from jax.experimental import pallas as pl
from jax.experimental.pallas import tpu as pltpu


# --------------------------------------------------------------------------
# Fully fused forward kernel
# --------------------------------------------------------------------------

def _generator_kernel(recent_ref, trend_ref, adj_ref, timefeat_ref, wbuf_ref,
                      out_ref, axp_ru_ref, axp_c_ref, *,
                      offs, batch, pad_batch, seq_recent, seq_trend,
                      num_nodes, hidden, units, num_lstm_layers):
    f32 = jnp.float32
    B, PB = batch, pad_batch
    T, Tt, N = seq_recent, seq_trend, num_nodes
    H, U, L = hidden, units, num_lstm_layers
    BN = B * N

    def W(name):
        # Read a weight block from the single packed buffer at its use site.
        r, nr, nc = offs[name]
        return wbuf_ref[r:r + nr, :nc]

    def mm(a, b):
        return jnp.dot(a, b, preferred_element_type=f32)

    # Block-diagonal (over batch) adjacency = top-left block of the
    # time-expanded adjacency.
    a_mat = adj_ref[0:BN, 0:BN]                              # (BN, BN)

    # ---------------- prologue: hoisted input-only projections --------------
    # recent-net cell 0: (A @ x_t) @ W for all t at once; A_time is
    # kron(I_T, blockdiag_b(A_b)), so one graph matmul covers every step.
    ax_all = mm(adj_ref[...], recent_ref[...])               # (T*BN, F)
    axp_ru_ref[...] = mm(ax_all, W('g0_wru_x'))              # (T*BN, 2U)
    axp_c_ref[...] = mm(ax_all, W('g0_wcx'))                 # (T*BN, U)

    # trend LSTM layer 0: x_t @ W_ih for all t in one matmul.
    xpl0 = mm(trend_ref[...], W('l0_wih'))                   # (Tt*PB, 4H)

    # ---------------- recent network: fused 2-cell GCGRU recurrence ---------
    h0 = jnp.zeros((BN, U), f32)
    h1 = jnp.zeros((BN, U), f32)
    ah0 = jnp.zeros((BN, U), f32)        # carries A @ h0 across steps
    for t in range(T):
        lo = t * BN
        # --- cell 0 (x-side graph conv + projections hoisted to prologue) ---
        ru0 = jax.nn.sigmoid(axp_ru_ref[lo:lo + BN, :]
                             + mm(ah0, W('g0_wru_h')) + W('g0_bru'))
        r0, u0 = ru0[:, :U], ru0[:, U:]
        arh0 = mm(a_mat, r0 * h0)
        c0 = jnp.tanh(axp_c_ref[lo:lo + BN, :]
                      + mm(arh0, W('g0_wch')) + W('g0_bc'))
        h0 = u0 * h0 + (1.0 - u0) * c0
        # A @ h0_new: used by cell 1 now AND as cell 0's h-side next step.
        ah0 = mm(a_mat, h0)
        # --- cell 1 (input = new h0) ---
        ah1 = mm(a_mat, h1)
        ru1 = jax.nn.sigmoid(mm(ah0, W('g1_wru_x'))
                             + mm(ah1, W('g1_wru_h')) + W('g1_bru'))
        r1, u1 = ru1[:, :U], ru1[:, U:]
        arh1 = mm(a_mat, r1 * h1)
        c1 = jnp.tanh(mm(ah0, W('g1_wcx'))
                      + mm(arh1, W('g1_wch')) + W('g1_bc'))
        h1 = u1 * h1 + (1.0 - u1) * c1
    # h1: (BN, U) -> top cell at the last step == `recent`

    # ---------------- trend network: stacked LSTM (layer-0 input hoisted) ---
    hs = [jnp.zeros((PB, H), f32) for _ in range(L)]
    cs = [jnp.zeros((PB, H), f32) for _ in range(L)]
    for t in range(Tt):
        x_proj = xpl0[t * PB:(t + 1) * PB, :]                # (PB, 4H)
        for l in range(L):
            if l == 0:
                gates = x_proj + mm(hs[0], W('l0_whh')) + W('l0_b')
            else:
                gates = (mm(hs[l - 1], W(f'l{l}_wih'))
                         + mm(hs[l], W(f'l{l}_whh')) + W(f'l{l}_b'))
            sg = jax.nn.sigmoid(gates)                       # full-width EUP
            tg = jnp.tanh(gates)
            i = sg[:, 0 * H:1 * H]
            f = sg[:, 1 * H:2 * H]
            g = tg[:, 2 * H:3 * H]
            o = sg[:, 3 * H:4 * H]
            cs[l] = f * cs[l] + i * g
            hs[l] = o * jnp.tanh(cs[l])
    trend_vec = hs[-1][:B, :]                                # (B, H)

    # ---------------- feature_fc: Linear + ReLU -----------------------------
    feat = jnp.maximum(mm(timefeat_ref[...], W('fc_w')) + W('fc_b'), 0.0)

    # ---------------- tail: tanh(GCN([recent | trend | feat], A)) -----------
    # trend/feat rows are identical across nodes:
    #   A @ broadcast(v) == rowsum(A)[:, None] * v
    row_vec = mm(trend_vec, W('gcn_trd')) + mm(feat, W('gcn_fea'))   # (B, F)
    graph = mm(mm(a_mat, h1), W('gcn_rec'))                          # (BN, F)
    a_rowsum = jnp.sum(a_mat, axis=-1, keepdims=True)                # (BN, 1)
    Fdim = offs['gcn_b'][2]
    out_ref[...] = jnp.tanh(graph.reshape(B, N, Fdim)
                            + a_rowsum.reshape(B, N, 1) * row_vec[:, None, :]
                            + W('gcn_b'))


# --------------------------------------------------------------------------
# Weight packing: all parameters into ONE (rows, 128) f32 buffer,
# every block starting at an 8-row boundary.
# --------------------------------------------------------------------------

def _pack_params(params, opt):
    F = opt['num_feature']
    U = opt['hidden_dim'] // 2
    blocks = []
    dins = (F, U)
    for i, (w_ru, b_ru, wcx, wch, bc) in enumerate(params['gcgru']):
        din = dins[i]
        blocks += [(f'g{i}_wru_x', w_ru[:din]), (f'g{i}_wru_h', w_ru[din:]),
                   (f'g{i}_wcx', wcx), (f'g{i}_wch', wch),
                   (f'g{i}_bru', b_ru), (f'g{i}_bc', bc)]
    for l, (wih, whh, b) in enumerate(params['lstm']):
        blocks += [(f'l{l}_wih', wih), (f'l{l}_whh', whh), (f'l{l}_b', b)]
    wf, bf = params['feature_fc']
    blocks += [('fc_w', wf), ('fc_b', bf)]
    wg_rec, wg_trend, wg_feat, bg = params['gcn']
    blocks += [('gcn_rec', wg_rec), ('gcn_trd', wg_trend),
               ('gcn_fea', wg_feat), ('gcn_b', bg)]

    offs = {}
    row = 0
    for name, arr in blocks:
        nr, nc = arr.shape
        offs[name] = (row, nr, nc)
        row += ((nr + 7) // 8) * 8
    buf = jnp.zeros((row, 128), jnp.float32)
    for name, arr in blocks:
        r, nr, nc = offs[name]
        buf = buf.at[r:r + nr, :nc].set(arr.astype(jnp.float32))
    return buf, offs


# --------------------------------------------------------------------------
# Wrapper
# --------------------------------------------------------------------------

def generator_forward(recent_data, trend_data, sub_graph, time_feature, params, opt):
    B, T, N, F = recent_data.shape
    Tt = trend_data.shape[1]
    H = opt['hidden_dim']
    U = H // 2
    L = opt['num_layer']
    BN = B * N
    PB = ((B + 7) // 8) * 8          # pad LSTM batch rows to a sublane group

    wbuf, offs = _pack_params(params, opt)

    # recent: (B, T, N, F) -> time-major flat (T*B*N, F)
    recent_flat = jnp.transpose(recent_data, (1, 0, 2, 3)).reshape(T * BN, F)

    # trend: (B, Tt, F) -> time-major, batch padded to PB -> (Tt*PB, F)
    trend_tm = jnp.transpose(trend_data, (1, 0, 2))
    trend_flat = (jnp.zeros((Tt, PB, F), jnp.float32)
                  .at[:, :B, :].set(trend_tm).reshape(Tt * PB, F))

    # adjacency: block-diag over batch, then kron over time (prologue hoist).
    a_blk = (jnp.eye(B, dtype=jnp.float32)[:, None, :, None]
             * sub_graph.astype(jnp.float32)[:, :, None, :]).reshape(BN, BN)
    a_time = jnp.kron(jnp.eye(T, dtype=jnp.float32), a_blk)   # (T*BN, T*BN)

    kernel = functools.partial(
        _generator_kernel, offs=offs, batch=B, pad_batch=PB, seq_recent=T,
        seq_trend=Tt, num_nodes=N, hidden=H, units=U, num_lstm_layers=L)

    return pl.pallas_call(
        kernel,
        out_shape=jax.ShapeDtypeStruct((B, N, F), jnp.float32),
        scratch_shapes=[pltpu.VMEM((T * BN, 2 * U), jnp.float32),   # hoisted ru
                        pltpu.VMEM((T * BN, U), jnp.float32)],      # hoisted c
        # One launch, no grid: total resident footprint (inputs + packed
        # weights + scratch) is well under 1 MiB on any generation.
        compiler_params=pltpu.CompilerParams(vmem_limit_bytes=16 * 1024 * 1024),
    )(recent_flat, trend_flat, a_time, time_feature.astype(jnp.float32), wbuf)


# --------------------------------------------------------------------------
# Parameter construction (deterministic, PyTorch-Linear-style uniform init)
# --------------------------------------------------------------------------

def _uniform(key, shape, bound):
    return jax.random.uniform(key, shape, jnp.float32, -bound, bound)


def make_params(opt, key):
    F = opt['num_feature']
    H = opt['hidden_dim']
    U = H // 2
    Tf = opt['time_feature']
    L = opt['num_layer']
    params = {}

    # GCGRU: 2 cells; each has 3 GCNs (r, u, c) with fc = Linear(din+U -> U).
    # r/u weights fused along the output axis.
    gcgru = []
    for din in (F, U):
        bound = 1.0 / ((din + U) ** 0.5)
        key, kr, ku, kc, kbr, kbu, kbc = jax.random.split(key, 7)
        w_r = _uniform(kr, (din + U, U), bound)
        w_u = _uniform(ku, (din + U, U), bound)
        w_c = _uniform(kc, (din + U, U), bound)
        b_r = _uniform(kbr, (1, U), bound)
        b_u = _uniform(kbu, (1, U), bound)
        b_c = _uniform(kbc, (1, U), bound)
        w_ru = jnp.concatenate([w_r, w_u], axis=1)            # (din+U, 2U)
        b_ru = jnp.concatenate([b_r, b_u], axis=1)            # (1, 2U)
        gcgru.append((w_ru, b_ru, w_c[:din], w_c[din:], b_c))
    params['gcgru'] = gcgru

    # LSTM: L layers, hidden H, PyTorch gate order i,f,g,o; b = b_ih + b_hh.
    lstm = []
    in_dim = F
    bound = 1.0 / (H ** 0.5)
    for _ in range(L):
        key, k1, k2, k3, k4 = jax.random.split(key, 5)
        wih = _uniform(k1, (in_dim, 4 * H), bound)
        whh = _uniform(k2, (H, 4 * H), bound)
        b = _uniform(k3, (1, 4 * H), bound) + _uniform(k4, (1, 4 * H), bound)
        lstm.append((wih, whh, b))
        in_dim = H
    params['lstm'] = lstm

    key, k1, k2 = jax.random.split(key, 3)
    bound = 1.0 / (Tf ** 0.5)
    params['feature_fc'] = (_uniform(k1, (Tf, H), bound), _uniform(k2, (1, H), bound))

    # Final GCN fc: Linear(U + 2H -> F), pre-split row-wise into the
    # recent / trend / time-feature blocks.
    in_gcn = U + 2 * H                                        # == int(2.5 * H)
    bound = 1.0 / (in_gcn ** 0.5)
    key, k1, k2 = jax.random.split(key, 3)
    wg = _uniform(k1, (in_gcn, F), bound)
    bg = _uniform(k2, (1, F), bound)
    params['gcn'] = (wg[:U], wg[U:U + H], wg[U + H:], bg)
    # recent_fc / trend_fc / fc exist in the PyTorch module but are never used
    # in Generator.forward, so they are not materialized here.
    return params


# --------------------------------------------------------------------------

if __name__ == "__main__":
    opt = dict(num_feature=4, hidden_dim=32, num_layer=2, num_adj=8,
               time_feature=6)
    B, T = 2, 8
    N, F, Tf = opt['num_adj'], opt['num_feature'], opt['time_feature']

    key = jax.random.PRNGKey(0)
    kr, kt, kg, kf, kp = jax.random.split(key, 5)

    recent_data = jax.random.normal(kr, (B, T, N, F), jnp.float32)
    trend_data = jax.random.normal(kt, (B, T, F), jnp.float32)
    # row-normalized adjacency (like a norm_adj)
    adj_raw = jax.random.uniform(kg, (B, N, N), jnp.float32)
    sub_graph = adj_raw / jnp.sum(adj_raw, axis=-1, keepdims=True)
    time_feature = jax.random.normal(kf, (B, Tf), jnp.float32)

    params = make_params(opt, kp)

    out = generator_forward(recent_data, trend_data, sub_graph, time_feature,
                            params, opt)
    out = jax.block_until_ready(out)
    assert out.shape == (B, N, F), out.shape
    print("KERNEL_OK")
</pallas_src>

<mosaic_0001>
module attributes {stable_mosaic.version = 11 : i64} {
  func.func @_generator_kernel(%arg0: memref<128x4xf32, #tpu.memory_space<vmem>>, %arg1: memref<64x4xf32, #tpu.memory_space<vmem>>, %arg2: memref<128x128xf32, #tpu.memory_space<vmem>>, %arg3: memref<2x6xf32, #tpu.memory_space<vmem>>, %arg4: memref<368x128xf32, #tpu.memory_space<vmem>>, %arg5: memref<2x8x4xf32, #tpu.memory_space<vmem>>, %arg6: memref<128x32xf32, #tpu.memory_space<vmem>>, %arg7: memref<128x16xf32, #tpu.memory_space<vmem>>) attributes {dimension_semantics = [], scalar_prefetch = 0 : i64, scratch_operands = 2 : i64, tpu.core_type = #tpu.core_type<tc>} {
    %c0 = arith.constant 0 : index
    %c0_0 = arith.constant 0 : index
    %0 = vector.load %arg2[%c0, %c0_0] : memref<128x128xf32, #tpu.memory_space<vmem>>, vector<16x16xf32>
    %c0_1 = arith.constant 0 : index
    %c0_2 = arith.constant 0 : index
    %1 = vector.load %arg2[%c0_1, %c0_2] : memref<128x128xf32, #tpu.memory_space<vmem>>, vector<128x128xf32>
    %c0_3 = arith.constant 0 : index
    %c0_4 = arith.constant 0 : index
    %2 = vector.load %arg0[%c0_3, %c0_4] : memref<128x4xf32, #tpu.memory_space<vmem>>, vector<128x4xf32>
    %cst = arith.constant dense<0.000000e+00> : vector<128x4xf32>
    %3 = tpu.matmul %1, %2, %cst {dimension_numbers = #tpu.dot_dimension_numbers<[1], [0], [0], [1], [0, 0, 1, 1], [], []>} : vector<128x128xf32>, vector<128x4xf32>, vector<128x4xf32> -> vector<128x4xf32>
    %c0_5 = arith.constant 0 : index
    %c0_6 = arith.constant 0 : index
    %4 = vector.load %arg4[%c0_5, %c0_6] : memref<368x128xf32, #tpu.memory_space<vmem>>, vector<4x32xf32>
    %cst_7 = arith.constant dense<0.000000e+00> : vector<128x32xf32>
    %5 = tpu.matmul %3, %4, %cst_7 {dimension_numbers = #tpu.dot_dimension_numbers<[1], [0], [0], [1], [0, 0, 1, 1], [], []>} : vector<128x4xf32>, vector<4x32xf32>, vector<128x32xf32> -> vector<128x32xf32>
    %c0_8 = arith.constant 0 : index
    %c0_9 = arith.constant 0 : index
    %6 = vector.load %arg6[%c0_8, %c0_9] : memref<128x32xf32, #tpu.memory_space<vmem>>, vector<128x32xf32>
    tpu.vector_store %arg6[%c0_8, %c0_9], %5 {strides = array<i32>} : memref<128x32xf32, #tpu.memory_space<vmem>>, vector<128x32xf32>,
    %c24 = arith.constant 24 : index
    %c0_10 = arith.constant 0 : index
    %7 = vector.load %arg4[%c24, %c0_10] : memref<368x128xf32, #tpu.memory_space<vmem>>, vector<4x16xf32>
    %cst_11 = arith.constant dense<0.000000e+00> : vector<128x16xf32>
    %8 = tpu.matmul %3, %7, %cst_11 {dimension_numbers = #tpu.dot_dimension_numbers<[1], [0], [0], [1], [0, 0, 1, 1], [], []>} : vector<128x4xf32>, vector<4x16xf32>, vector<128x16xf32> -> vector<128x16xf32>
    %c0_12 = arith.constant 0 : index
    %c0_13 = arith.constant 0 : index
    %9 = vector.load %arg7[%c0_12, %c0_13] : memref<128x16xf32, #tpu.memory_space<vmem>>, vector<128x16xf32>
    tpu.vector_store %arg7[%c0_12, %c0_13], %8 {strides = array<i32>} : memref<128x16xf32, #tpu.memory_space<vmem>>, vector<128x16xf32>,
    %c0_14 = arith.constant 0 : index
    %c0_15 = arith.constant 0 : index
    %10 = vector.load %arg1[%c0_14, %c0_15] : memref<64x4xf32, #tpu.memory_space<vmem>>, vector<64x4xf32>
    %c144 = arith.constant 144 : index
    %c0_16 = arith.constant 0 : index
    %11 = vector.load %arg4[%c144, %c0_16] : memref<368x128xf32, #tpu.memory_space<vmem>>, vector<4x128xf32>
    %cst_17 = arith.constant dense<0.000000e+00> : vector<64x128xf32>
    %12 = tpu.matmul %10, %11, %cst_17 {dimension_numbers = #tpu.dot_dimension_numbers<[1], [0], [0], [1], [0, 0, 1, 1], [], []>} : vector<64x4xf32>, vector<4x128xf32>, vector<64x128xf32> -> vector<64x128xf32>
    %cst_18 = arith.constant 0.000000e+00 : f32
    %13 = vector.broadcast %cst_18 : f32 to vector<16x16xf32>
    %cst_19 = arith.constant 0.000000e+00 : f32
    %14 = vector.broadcast %cst_19 : f32 to vector<16x16xf32>
    %cst_20 = arith.constant 0.000000e+00 : f32
    %15 = vector.broadcast %cst_20 : f32 to vector<16x16xf32>
    %c0_21 = arith.constant 0 : index
    %c0_22 = arith.constant 0 : index
    %16 = vector.load %arg6[%c0_21, %c0_22] : memref<128x32xf32, #tpu.memory_space<vmem>>, vector<16x32xf32>
    %c8 = arith.constant 8 : index
    %c0_23 = arith.constant 0 : index
    %17 = vector.load %arg4[%c8, %c0_23] : memref<368x128xf32, #tpu.memory_space<vmem>>, vector<16x32xf32>
    %cst_24 = arith.constant dense<0.000000e+00> : vector<16x32xf32>
    %18 = tpu.matmul %15, %17, %cst_24 {dimension_numbers = #tpu.dot_dimension_numbers<[1], [0], [0], [1], [0, 0, 1, 1], [], []>} : vector<16x16xf32>, vector<16x32xf32>, vector<16x32xf32> -> vector<16x32xf32>
    %19 = arith.addf %16, %18 : vector<16x32xf32>
    %c48 = arith.constant 48 : index
    %c0_25 = arith.constant 0 : index
    %20 = vector.load %arg4[%c48, %c0_25] : memref<368x128xf32, #tpu.memory_space<vmem>>, vector<1x32xf32>
    %21 = vector.broadcast %20 : vector<1x32xf32> to vector<16x32xf32>
    %22 = arith.addf %19, %21 : vector<16x32xf32>
    %23 = arith.negf %22 : vector<16x32xf32>
    %24 = math.exp %23 : vector<16x32xf32>
    %cst_26 = arith.constant 1.000000e+00 : f32
    %25 = vector.broadcast %cst_26 : f32 to vector<16x32xf32>
    %26 = arith.addf %25, %24 : vector<16x32xf32>
    %27 = arith.divf %25, %26 : vector<16x32xf32>
    %28 = vector.extract_strided_slice %27 {offsets = [0, 0], sizes = [16, 16], strides = [1, 1]} : vector<16x32xf32> to vector<16x16xf32>
    %29 = vector.extract_strided_slice %27 {offsets = [0, 16], sizes = [16, 16], strides = [1, 1]} : vector<16x32xf32> to vector<16x16xf32>
    %30 = arith.mulf %28, %13 : vector<16x16xf32>
    %cst_27 = arith.constant dense<0.000000e+00> : vector<16x16xf32>
    %31 = tpu.matmul %0, %30, %cst_27 {dimension_numbers = #tpu.dot_dimension_numbers<[1], [0], [0], [1], [0, 0, 1, 1], [], []>} : vector<16x16xf32>, vector<16x16xf32>, vector<16x16xf32> -> vector<16x16xf32>
    %c0_28 = arith.constant 0 : index
    %c0_29 = arith.constant 0 : index
    %32 = vector.load %arg7[%c0_28, %c0_29] : memref<128x16xf32, #tpu.memory_space<vmem>>, vector<16x16xf32>
    %c32 = arith.constant 32 : index
    %c0_30 = arith.constant 0 : index
    %33 = vector.load %arg4[%c32, %c0_30] : memref<368x128xf32, #tpu.memory_space<vmem>>, vector<16x16xf32>
    %cst_31 = arith.constant dense<0.000000e+00> : vector<16x16xf32>
    %34 = tpu.matmul %31, %33, %cst_31 {dimension_numbers = #tpu.dot_dimension_numbers<[1], [0], [0], [1], [0, 0, 1, 1], [], []>} : vector<16x16xf32>, vector<16x16xf32>, vector<16x16xf32> -> vector<16x16xf32>
    %35 = arith.addf %32, %34 : vector<16x16xf32>
    %c56 = arith.constant 56 : index
    %c0_32 = arith.constant 0 : index
    %36 = vector.load %arg4[%c56, %c0_32] : memref<368x128xf32, #tpu.memory_space<vmem>>, vector<1x16xf32>
    %37 = vector.broadcast %36 : vector<1x16xf32> to vector<16x16xf32>
    %38 = arith.addf %35, %37 : vector<16x16xf32>
    %39 = math.tanh %38 : vector<16x16xf32>
    %40 = arith.mulf %29, %13 : vector<16x16xf32>
    %cst_33 = arith.constant 1.000000e+00 : f32
    %41 = vector.broadcast %cst_33 : f32 to vector<16x16xf32>
    %42 = arith.subf %41, %29 : vector<16x16xf32>
    %43 = arith.mulf %42, %39 : vector<16x16xf32>
    %44 = arith.addf %40, %43 : vector<16x16xf32>
    %cst_34 = arith.constant dense<0.000000e+00> : vector<16x16xf32>
    %45 = tpu.matmul %0, %44, %cst_34 {dimension_numbers = #tpu.dot_dimension_numbers<[1], [0], [0], [1], [0, 0, 1, 1], [], []>} : vector<16x16xf32>, vector<16x16xf32>, vector<16x16xf32> -> vector<16x16xf32>
    %cst_35 = arith.constant dense<0.000000e+00> : vector<16x16xf32>
    %46 = tpu.matmul %0, %14, %cst_35 {dimension_numbers = #tpu.dot_dimension_numbers<[1], [0], [0], [1], [0, 0, 1, 1], [], []>} : vector<16x16xf32>, vector<16x16xf32>, vector<16x16xf32> -> vector<16x16xf32>
    %c64 = arith.constant 64 : index
    %c0_36 = arith.constant 0 : index
    %47 = vector.load %arg4[%c64, %c0_36] : memref<368x128xf32, #tpu.memory_space<vmem>>, vector<16x32xf32>
    %cst_37 = arith.constant dense<0.000000e+00> : vector<16x32xf32>
    %48 = tpu.matmul %45, %47, %cst_37 {dimension_numbers = #tpu.dot_dimension_numbers<[1], [0], [0], [1], [0, 0, 1, 1], [], []>} : vector<16x16xf32>, vector<16x32xf32>, vector<16x32xf32> -> vector<16x32xf32>
    %c80 = arith.constant 80 : index
    %c0_38 = arith.constant 0 : index
    %49 = vector.load %arg4[%c80, %c0_38] : memref<368x128xf32, #tpu.memory_space<vmem>>, vector<16x32xf32>
    %cst_39 = arith.constant dense<0.000000e+00> : vector<16x32xf32>
    %50 = tpu.matmul %46, %49, %cst_39 {dimension_numbers = #tpu.dot_dimension_numbers<[1], [0], [0], [1], [0, 0, 1, 1], [], []>} : vector<16x16xf32>, vector<16x32xf32>, vector<16x32xf32> -> vector<16x32xf32>
    %51 = arith.addf %48, %50 : vector<16x32xf32>
    %c128 = arith.constant 128 : index
    %c0_40 = arith.constant 0 : index
    %52 = vector.load %arg4[%c128, %c0_40] : memref<368x128xf32, #tpu.memory_space<vmem>>, vector<1x32xf32>
    %53 = vector.broadcast %52 : vector<1x32xf32> to vector<16x32xf32>
    %54 = arith.addf %51, %53 : vector<16x32xf32>
    %55 = arith.negf %54 : vector<16x32xf32>
    %56 = math.exp %55 : vector<16x32xf32>
    %cst_41 = arith.constant 1.000000e+00 : f32
    %57 = vector.broadcast %cst_41 : f32 to vector<16x32xf32>
    %58 = arith.addf %57, %56 : vector<16x32xf32>
    %59 = arith.divf %57, %58 : vector<16x32xf32>
    %60 = vector.extract_strided_slice %59 {offsets = [0, 0], sizes = [16, 16], strides = [1, 1]} : vector<16x32xf32> to vector<16x16xf32>
    %61 = vector.extract_strided_slice %59 {offsets = [0, 16], sizes = [16, 16], strides = [1, 1]} : vector<16x32xf32> to vector<16x16xf32>
    %62 = arith.mulf %60, %14 : vector<16x16xf32>
    %cst_42 = arith.constant dense<0.000000e+00> : vector<16x16xf32>
    %63 = tpu.matmul %0, %62, %cst_42 {dimension_numbers = #tpu.dot_dimension_numbers<[1], [0], [0], [1], [0, 0, 1, 1], [], []>} : vector<16x16xf32>, vector<16x16xf32>, vector<16x16xf32> -> vector<16x16xf32>
    %c96 = arith.constant 96 : index
    %c0_43 = arith.constant 0 : index
    %64 = vector.load %arg4[%c96, %c0_43] : memref<368x128xf32, #tpu.memory_space<vmem>>, vector<16x16xf32>
    %cst_44 = arith.constant dense<0.000000e+00> : vector<16x16xf32>
    %65 = tpu.matmul %45, %64, %cst_44 {dimension_numbers = #tpu.dot_dimension_numbers<[1], [0], [0], [1], [0, 0, 1, 1], [], []>} : vector<16x16xf32>, vector<16x16xf32>, vector<16x16xf32> -> vector<16x16xf32>
    %c112 = arith.constant 112 : index
    %c0_45 = arith.constant 0 : index
    %66 = vector.load %arg4[%c112, %c0_45] : memref<368x128xf32, #tpu.memory_space<vmem>>, vector<16x16xf32>
    %cst_46 = arith.constant dense<0.000000e+00> : vector<16x16xf32>
    %67 = tpu.matmul %63, %66, %cst_46 {dimension_numbers = #tpu.dot_dimension_numbers<[1], [0], [0], [1], [0, 0, 1, 1], [], []>} : vector<16x16xf32>, vector<16x16xf32>, vector<16x16xf32> -> vector<16x16xf32>
    %68 = arith.addf %65, %67 : vector<16x16xf32>
    %c136 = arith.constant 136 : index
    %c0_47 = arith.constant 0 : index
    %69 = vector.load %arg4[%c136, %c0_47] : memref<368x128xf32, #tpu.memory_space<vmem>>, vector<1x16xf32>
    %70 = vector.broadcast %69 : vector<1x16xf32> to vector<16x16xf32>
    %71 = arith.addf %68, %70 : vector<16x16xf32>
    %72 = math.tanh %71 : vector<16x16xf32>
    %73 = arith.mulf %61, %14 : vector<16x16xf32>
    %cst_48 = arith.constant 1.000000e+00 : f32
    %74 = vector.broadcast %cst_48 : f32 to vector<16x16xf32>
    %75 = arith.subf %74, %61 : vector<16x16xf32>
    %76 = arith.mulf %75, %72 : vector<16x16xf32>
    %77 = arith.addf %73, %76 : vector<16x16xf32>
    %c16 = arith.constant 16 : index
    %c0_49 = arith.constant 0 : index
    %78 = vector.load %arg6[%c16, %c0_49] : memref<128x32xf32, #tpu.memory_space<vmem>>, vector<16x32xf32>
    %c8_50 = arith.constant 8 : index
    %c0_51 = arith.constant 0 : index
    %79 = vector.load %arg4[%c8_50, %c0_51] : memref<368x128xf32, #tpu.memory_space<vmem>>, vector<16x32xf32>
    %cst_52 = arith.constant dense<0.000000e+00> : vector<16x32xf32>
    %80 = tpu.matmul %45, %79, %cst_52 {dimension_numbers = #tpu.dot_dimension_numbers<[1], [0], [0], [1], [0, 0, 1, 1], [], []>} : vector<16x16xf32>, vector<16x32xf32>, vector<16x32xf32> -> vector<16x32xf32>
    %81 = arith.addf %78, %80 : vector<16x32xf32>
    %c48_53 = arith.constant 48 : index
    %c0_54 = arith.constant 0 : index
    %82 = vector.load %arg4[%c48_53, %c0_54] : memref<368x128xf32, #tpu.memory_space<vmem>>, vector<1x32xf32>
    %83 = vector.broadcast %82 : vector<1x32xf32> to vector<16x32xf32>
    %84 = arith.addf %81, %83 : vector<16x32xf32>
    %85 = arith.negf %84 : vector<16x32xf32>
    %86 = math.exp %85 : vector<16x32xf32>
    %cst_55 = arith.constant 1.000000e+00 : f32
    %87 = vector.broadcast %cst_55 : f32 to vector<16x32xf32>
    %88 = arith.addf %87, %86 : vector<16x32xf32>
    %89 = arith.divf %87, %88 : vector<16x32xf32>
    %90 = vector.extract_strided_slice %89 {offsets = [0, 0], sizes = [16, 16], strides = [1, 1]} : vector<16x32xf32> to vector<16x16xf32>
    %91 = vector.extract_strided_slice %89 {offsets = [0, 16], sizes = [16, 16], strides = [1, 1]} : vector<16x32xf32> to vector<16x16xf32>
    %92 = arith.mulf %90, %44 : vector<16x16xf32>
    %cst_56 = arith.constant dense<0.000000e+00> : vector<16x16xf32>
    %93 = tpu.matmul %0, %92, %cst_56 {dimension_numbers = #tpu.dot_dimension_numbers<[1], [0], [0], [1], [0, 0, 1, 1], [], []>} : vector<16x16xf32>, vector<16x16xf32>, vector<16x16xf32> -> vector<16x16xf32>
    %c16_57 = arith.constant 16 : index
    %c0_58 = arith.constant 0 : index
    %94 = vector.load %arg7[%c16_57, %c0_58] : memref<128x16xf32, #tpu.memory_space<vmem>>, vector<16x16xf32>
    %c32_59 = arith.constant 32 : index
    %c0_60 = arith.constant 0 : index
    %95 = vector.load %arg4[%c32_59, %c0_60] : memref<368x128xf32, #tpu.memory_space<vmem>>, vector<16x16xf32>
    %cst_61 = arith.constant dense<0.000000e+00> : vector<16x16xf32>
    %96 = tpu.matmul %93, %95, %cst_61 {dimension_numbers = #tpu.dot_dimension_numbers<[1], [0], [0], [1], [0, 0, 1, 1], [], []>} : vector<16x16xf32>, vector<16x16xf32>, vector<16x16xf32> -> vector<16x16xf32>
    %97 = arith.addf %94, %96 : vector<16x16xf32>
    %c56_62 = arith.constant 56 : index
    %c0_63 = arith.constant 0 : index
    %98 = vector.load %arg4[%c56_62, %c0_63] : memref<368x128xf32, #tpu.memory_space<vmem>>, vector<1x16xf32>
    %99 = vector.broadcast %98 : vector<1x16xf32> to vector<16x16xf32>
    %100 = arith.addf %97, %99 : vector<16x16xf32>
    %101 = math.tanh %100 : vector<16x16xf32>
    %102 = arith.mulf %91, %44 : vector<16x16xf32>
    %cst_64 = arith.constant 1.000000e+00 : f32
    %103 = vector.broadcast %cst_64 : f32 to vector<16x16xf32>
    %104 = arith.subf %103, %91 : vector<16x16xf32>
    %105 = arith.mulf %104, %101 : vector<16x16xf32>
    %106 = arith.addf %102, %105 : vector<16x16xf32>
    %cst_65 = arith.constant dense<0.000000e+00> : vector<16x16xf32>
    %107 = tpu.matmul %0, %106, %cst_65 {dimension_numbers = #tpu.dot_dimension_numbers<[1], [0], [0], [1], [0, 0, 1, 1], [], []>} : vector<16x16xf32>, vector<16x16xf32>, vector<16x16xf32> -> vector<16x16xf32>
    %cst_66 = arith.constant dense<0.000000e+00> : vector<16x16xf32>
    %108 = tpu.matmul %0, %77, %cst_66 {dimension_numbers = #tpu.dot_dimension_numbers<[1], [0], [0], [1], [0, 0, 1, 1], [], []>} : vector<16x16xf32>, vector<16x16xf32>, vector<16x16xf32> -> vector<16x16xf32>
    %c64_67 = arith.constant 64 : index
    %c0_68 = arith.constant 0 : index
    %109 = vector.load %arg4[%c64_67, %c0_68] : memref<368x128xf32, #tpu.memory_space<vmem>>, vector<16x32xf32>
    %cst_69 = arith.constant dense<0.000000e+00> : vector<16x32xf32>
    %110 = tpu.matmul %107, %109, %cst_69 {dimension_numbers = #tpu.dot_dimension_numbers<[1], [0], [0], [1], [0, 0, 1, 1], [], []>} : vector<16x16xf32>, vector<16x32xf32>, vector<16x32xf32> -> vector<16x32xf32>
    %c80_70 = arith.constant 80 : index
    %c0_71 = arith.constant 0 : index
    %111 = vector.load %arg4[%c80_70, %c0_71] : memref<368x128xf32, #tpu.memory_space<vmem>>, vector<16x32xf32>
    %cst_72 = arith.constant dense<0.000000e+00> : vector<16x32xf32>
    %112 = tpu.matmul %108, %111, %cst_72 {dimension_numbers = #tpu.dot_dimension_numbers<[1], [0], [0], [1], [0, 0, 1, 1], [], []>} : vector<16x16xf32>, vector<16x32xf32>, vector<16x32xf32> -> vector<16x32xf32>
    %113 = arith.addf %110, %112 : vector<16x32xf32>
    %c128_73 = arith.constant 128 : index
    %c0_74 = arith.constant 0 : index
    %114 = vector.load %arg4[%c128_73, %c0_74] : memref<368x128xf32, #tpu.memory_space<vmem>>, vector<1x32xf32>
    %115 = vector.broadcast %114 : vector<1x32xf32> to vector<16x32xf32>
    %116 = arith.addf %113, %115 : vector<16x32xf32>
    %117 = arith.negf %116 : vector<16x32xf32>
    %118 = math.exp %117 : vector<16x32xf32>
    %cst_75 = arith.constant 1.000000e+00 : f32
    %119 = vector.broadcast %cst_75 : f32 to vector<16x32xf32>
    %120 = arith.addf %119, %118 : vector<16x32xf32>
    %121 = arith.divf %119, %120 : vector<16x32xf32>
    %122 = vector.extract_strided_slice %121 {offsets = [0, 0], sizes = [16, 16], strides = [1, 1]} : vector<16x32xf32> to vector<16x16xf32>
    %123 = vector.extract_strided_slice %121 {offsets = [0, 16], sizes = [16, 16], strides = [1, 1]} : vector<16x32xf32> to vector<16x16xf32>
    %124 = arith.mulf %122, %77 : vector<16x16xf32>
    %cst_76 = arith.constant dense<0.000000e+00> : vector<16x16xf32>
    %125 = tpu.matmul %0, %124, %cst_76 {dimension_numbers = #tpu.dot_dimension_numbers<[1], [0], [0], [1], [0, 0, 1, 1], [], []>} : vector<16x16xf32>, vector<16x16xf32>, vector<16x16xf32> -> vector<16x16xf32>
    %c96_77 = arith.constant 96 : index
    %c0_78 = arith.constant 0 : index
    %126 = vector.load %arg4[%c96_77, %c0_78] : memref<368x128xf32, #tpu.memory_space<vmem>>, vector<16x16xf32>
    %cst_79 = arith.constant dense<0.000000e+00> : vector<16x16xf32>
    %127 = tpu.matmul %107, %126, %cst_79 {dimension_numbers = #tpu.dot_dimension_numbers<[1], [0], [0], [1], [0, 0, 1, 1], [], []>} : vector<16x16xf32>, vector<16x16xf32>, vector<16x16xf32> -> vector<16x16xf32>
    %c112_80 = arith.constant 112 : index
    %c0_81 = arith.constant 0 : index
    %128 = vector.load %arg4[%c112_80, %c0_81] : memref<368x128xf32, #tpu.memory_space<vmem>>, vector<16x16xf32>
    %cst_82 = arith.constant dense<0.000000e+00> : vector<16x16xf32>
    %129 = tpu.matmul %125, %128, %cst_82 {dimension_numbers = #tpu.dot_dimension_numbers<[1], [0], [0], [1], [0, 0, 1, 1], [], []>} : vector<16x16xf32>, vector<16x16xf32>, vector<16x16xf32> -> vector<16x16xf32>
    %130 = arith.addf %127, %129 : vector<16x16xf32>
    %c136_83 = arith.constant 136 : index
    %c0_84 = arith.constant 0 : index
    %131 = vector.load %arg4[%c136_83, %c0_84] : memref<368x128xf32, #tpu.memory_space<vmem>>, vector<1x16xf32>
    %132 = vector.broadcast %131 : vector<1x16xf32> to vector<16x16xf32>
    %133 = arith.addf %130, %132 : vector<16x16xf32>
    %134 = math.tanh %133 : vector<16x16xf32>
    %135 = arith.mulf %123, %77 : vector<16x16xf32>
    %cst_85 = arith.constant 1.000000e+00 : f32
    %136 = vector.broadcast %cst_85 : f32 to vector<16x16xf32>
    %137 = arith.subf %136, %123 : vector<16x16xf32>
    %138 = arith.mulf %137, %134 : vector<16x16xf32>
    %139 = arith.addf %135, %138 : vector<16x16xf32>
    %c32_86 = arith.constant 32 : index
    %c0_87 = arith.constant 0 : index
    %140 = vector.load %arg6[%c32_86, %c0_87] : memref<128x32xf32, #tpu.memory_space<vmem>>, vector<16x32xf32>
    %c8_88 = arith.constant 8 : index
    %c0_89 = arith.constant 0 : index
    %141 = vector.load %arg4[%c8_88, %c0_89] : memref<368x128xf32, #tpu.memory_space<vmem>>, vector<16x32xf32>
    %cst_90 = arith.constant dense<0.000000e+00> : vector<16x32xf32>
    %142 = tpu.matmul %107, %141, %cst_90 {dimension_numbers = #tpu.dot_dimension_numbers<[1], [0], [0], [1], [0, 0, 1, 1], [], []>} : vector<16x16xf32>, vector<16x32xf32>, vector<16x32xf32> -> vector<16x32xf32>
    %143 = arith.addf %140, %142 : vector<16x32xf32>
    %c48_91 = arith.constant 48 : index
    %c0_92 = arith.constant 0 : index
    %144 = vector.load %arg4[%c48_91, %c0_92] : memref<368x128xf32, #tpu.memory_space<vmem>>, vector<1x32xf32>
    %145 = vector.broadcast %144 : vector<1x32xf32> to vector<16x32xf32>
    %146 = arith.addf %143, %145 : vector<16x32xf32>
    %147 = arith.negf %146 : vector<16x32xf32>
    %148 = math.exp %147 : vector<16x32xf32>
    %cst_93 = arith.constant 1.000000e+00 : f32
    %149 = vector.broadcast %cst_93 : f32 to vector<16x32xf32>
    %150 = arith.addf %149, %148 : vector<16x32xf32>
    %151 = arith.divf %149, %150 : vector<16x32xf32>
    %152 = vector.extract_strided_slice %151 {offsets = [0, 0], sizes = [16, 16], strides = [1, 1]} : vector<16x32xf32> to vector<16x16xf32>
    %153 = vector.extract_strided_slice %151 {offsets = [0, 16], sizes = [16, 16], strides = [1, 1]} : vector<16x32xf32> to vector<16x16xf32>
    %154 = arith.mulf %152, %106 : vector<16x16xf32>
    %cst_94 = arith.constant dense<0.000000e+00> : vector<16x16xf32>
    %155 = tpu.matmul %0, %154, %cst_94 {dimension_numbers = #tpu.dot_dimension_numbers<[1], [0], [0], [1], [0, 0, 1, 1], [], []>} : vector<16x16xf32>, vector<16x16xf32>, vector<16x16xf32> -> vector<16x16xf32>
    %c32_95 = arith.constant 32 : index
    %c0_96 = arith.constant 0 : index
    %156 = vector.load %arg7[%c32_95, %c0_96] : memref<128x16xf32, #tpu.memory_space<vmem>>, vector<16x16xf32>
    %c32_97 = arith.constant 32 : index
    %c0_98 = arith.constant 0 : index
    %157 = vector.load %arg4[%c32_97, %c0_98] : memref<368x128xf32, #tpu.memory_space<vmem>>, vector<16x16xf32>
    %cst_99 = arith.constant dense<0.000000e+00> : vector<16x16xf32>
    %158 = tpu.matmul %155, %157, %cst_99 {dimension_numbers = #tpu.dot_dimension_numbers<[1], [0], [0], [1], [0, 0, 1, 1], [], []>} : vector<16x16xf32>, vector<16x16xf32>, vector<16x16xf32> -> vector<16x16xf32>
    %159 = arith.addf %156, %158 : vector<16x16xf32>
    %c56_100 = arith.constant 56 : index
    %c0_101 = arith.constant 0 : index
    %160 = vector.load %arg4[%c56_100, %c0_101] : memref<368x128xf32, #tpu.memory_space<vmem>>, vector<1x16xf32>
    %161 = vector.broadcast %160 : vector<1x16xf32> to vector<16x16xf32>
    %162 = arith.addf %159, %161 : vector<16x16xf32>
    %163 = math.tanh %162 : vector<16x16xf32>
    %164 = arith.mulf %153, %106 : vector<16x16xf32>
    %cst_102 = arith.constant 1.000000e+00 : f32
    %165 = vector.broadcast %cst_102 : f32 to vector<16x16xf32>
    %166 = arith.subf %165, %153 : vector<16x16xf32>
    %167 = arith.mulf %166, %163 : vector<16x16xf32>
    %168 = arith.addf %164, %167 : vector<16x16xf32>
    %cst_103 = arith.constant dense<0.000000e+00> : vector<16x16xf32>
    %169 = tpu.matmul %0, %168, %cst_103 {dimension_numbers = #tpu.dot_dimension_numbers<[1], [0], [0], [1], [0, 0, 1, 1], [], []>} : vector<16x16xf32>, vector<16x16xf32>, vector<16x16xf32> -> vector<16x16xf32>
    %cst_104 = arith.constant dense<0.000000e+00> : vector<16x16xf32>
    %170 = tpu.matmul %0, %139, %cst_104 {dimension_numbers = #tpu.dot_dimension_numbers<[1], [0], [0], [1], [0, 0, 1, 1], [], []>} : vector<16x16xf32>, vector<16x16xf32>, vector<16x16xf32> -> vector<16x16xf32>
    %c64_105 = arith.constant 64 : index
    %c0_106 = arith.constant 0 : index
    %171 = vector.load %arg4[%c64_105, %c0_106] : memref<368x128xf32, #tpu.memory_space<vmem>>, vector<16x32xf32>
    %cst_107 = arith.constant dense<0.000000e+00> : vector<16x32xf32>
    %172 = tpu.matmul %169, %171, %cst_107 {dimension_numbers = #tpu.dot_dimension_numbers<[1], [0], [0], [1], [0, 0, 1, 1], [], []>} : vector<16x16xf32>, vector<16x32xf32>, vector<16x32xf32> -> vector<16x32xf32>
    %c80_108 = arith.constant 80 : index
    %c0_109 = arith.constant 0 : index
    %173 = vector.load %arg4[%c80_108, %c0_109] : memref<368x128xf32, #tpu.memory_space<vmem>>, vector<16x32xf32>
    %cst_110 = arith.constant dense<0.000000e+00> : vector<16x32xf32>
    %174 = tpu.matmul %170, %173, %cst_110 {dimension_numbers = #tpu.dot_dimension_numbers<[1], [0], [0], [1], [0, 0, 1, 1], [], []>} : vector<16x16xf32>, vector<16x32xf32>, vector<16x32xf32> -> vector<16x32xf32>
    %175 = arith.addf %172, %174 : vector<16x32xf32>
    %c128_111 = arith.constant 128 : index
    %c0_112 = arith.constant 0 : index
    %176 = vector.load %arg4[%c128_111, %c0_112] : memref<368x128xf32, #tpu.memory_space<vmem>>, vector<1x32xf32>
    %177 = vector.broadcast %176 : vector<1x32xf32> to vector<16x32xf32>
    %178 = arith.addf %175, %177 : vector<16x32xf32>
    %179 = arith.negf %178 : vector<16x32xf32>
    %180 = math.exp %179 : vector<16x32xf32>
    %cst_113 = arith.constant 1.000000e+00 : f32
    %181 = vector.broadcast %cst_113 : f32 to vector<16x32xf32>
    %182 = arith.addf %181, %180 : vector<16x32xf32>
    %183 = arith.divf %181, %182 : vector<16x32xf32>
    %184 = vector.extract_strided_slice %183 {offsets = [0, 0], sizes = [16, 16], strides = [1, 1]} : vector<16x32xf32> to vector<16x16xf32>
    %185 = vector.extract_strided_slice %183 {offsets = [0, 16], sizes = [16, 16], strides = [1, 1]} : vector<16x32xf32> to vector<16x16xf32>
    %186 = arith.mulf %184, %139 : vector<16x16xf32>
    %cst_114 = arith.constant dense<0.000000e+00> : vector<16x16xf32>
    %187 = tpu.matmul %0, %186, %cst_114 {dimension_numbers = #tpu.dot_dimension_numbers<[1], [0], [0], [1], [0, 0, 1, 1], [], []>} : vector<16x16xf32>, vector<16x16xf32>, vector<16x16xf32> -> vector<16x16xf32>
    %c96_115 = arith.constant 96 : index
    %c0_116 = arith.constant 0 : index
    %188 = vector.load %arg4[%c96_115, %c0_116] : memref<368x128xf32, #tpu.memory_space<vmem>>, vector<16x16xf32>
    %cst_117 = arith.constant dense<0.000000e+00> : vector<16x16xf32>
    %189 = tpu.matmul %169, %188, %cst_117 {dimension_numbers = #tpu.dot_dimension_numbers<[1], [0], [0], [1], [0, 0, 1, 1], [], []>} : vector<16x16xf32>, vector<16x16xf32>, vector<16x16xf32> -> vector<16x16xf32>
    %c112_118 = arith.constant 112 : index
    %c0_119 = arith.constant 0 : index
    %190 = vector.load %arg4[%c112_118, %c0_119] : memref<368x128xf32, #tpu.memory_space<vmem>>, vector<16x16xf32>
    %cst_120 = arith.constant dense<0.000000e+00> : vector<16x16xf32>
    %191 = tpu.matmul %187, %190, %cst_120 {dimension_numbers = #tpu.dot_dimension_numbers<[1], [0], [0], [1], [0, 0, 1, 1], [], []>} : vector<16x16xf32>, vector<16x16xf32>, vector<16x16xf32> -> vector<16x16xf32>
    %192 = arith.addf %189, %191 : vector<16x16xf32>
    %c136_121 = arith.constant 136 : index
    %c0_122 = arith.constant 0 : index
    %193 = vector.load %arg4[%c136_121, %c0_122] : memref<368x128xf32, #tpu.memory_space<vmem>>, vector<1x16xf32>
    %194 = vector.broadcast %193 : vector<1x16xf32> to vector<16x16xf32>
    %195 = arith.addf %192, %194 : vector<16x16xf32>
    %196 = math.tanh %195 : vector<16x16xf32>
    %197 = arith.mulf %185, %139 : vector<16x16xf32>
    %cst_123 = arith.constant 1.000000e+00 : f32
    %198 = vector.broadcast %cst_123 : f32 to vector<16x16xf32>
    %199 = arith.subf %198, %185 : vector<16x16xf32>
    %200 = arith.mulf %199, %196 : vector<16x16xf32>
    %201 = arith.addf %197, %200 : vector<16x16xf32>
    %c48_124 = arith.constant 48 : index
    %c0_125 = arith.constant 0 : index
    %202 = vector.load %arg6[%c48_124, %c0_125] : memref<128x32xf32, #tpu.memory_space<vmem>>, vector<16x32xf32>
    %c8_126 = arith.constant 8 : index
    %c0_127 = arith.constant 0 : index
    %203 = vector.load %arg4[%c8_126, %c0_127] : memref<368x128xf32, #tpu.memory_space<vmem>>, vector<16x32xf32>
    %cst_128 = arith.constant dense<0.000000e+00> : vector<16x32xf32>
    %204 = tpu.matmul %169, %203, %cst_128 {dimension_numbers = #tpu.dot_dimension_numbers<[1], [0], [0], [1], [0, 0, 1, 1], [], []>} : vector<16x16xf32>, vector<16x32xf32>, vector<16x32xf32> -> vector<16x32xf32>
    %205 = arith.addf %202, %204 : vector<16x32xf32>
    %c48_129 = arith.constant 48 : index
    %c0_130 = arith.constant 0 : index
    %206 = vector.load %arg4[%c48_129, %c0_130] : memref<368x128xf32, #tpu.memory_space<vmem>>, vector<1x32xf32>
    %207 = vector.broadcast %206 : vector<1x32xf32> to vector<16x32xf32>
    %208 = arith.addf %205, %207 : vector<16x32xf32>
    %209 = arith.negf %208 : vector<16x32xf32>
    %210 = math.exp %209 : vector<16x32xf32>
    %cst_131 = arith.constant 1.000000e+00 : f32
    %211 = vector.broadcast %cst_131 : f32 to vector<16x32xf32>
    %212 = arith.addf %211, %210 : vector<16x32xf32>
    %213 = arith.divf %211, %212 : vector<16x32xf32>
    %214 = vector.extract_strided_slice %213 {offsets = [0, 0], sizes = [16, 16], strides = [1, 1]} : vector<16x32xf32> to vector<16x16xf32>
    %215 = vector.extract_strided_slice %213 {offsets = [0, 16], sizes = [16, 16], strides = [1, 1]} : vector<16x32xf32> to vector<16x16xf32>
    %216 = arith.mulf %214, %168 : vector<16x16xf32>
    %cst_132 = arith.constant dense<0.000000e+00> : vector<16x16xf32>
    %217 = tpu.matmul %0, %216, %cst_132 {dimension_numbers = #tpu.dot_dimension_numbers<[1], [0], [0], [1], [0, 0, 1, 1], [], []>} : vector<16x16xf32>, vector<16x16xf32>, vector<16x16xf32> -> vector<16x16xf32>
    %c48_133 = arith.constant 48 : index
    %c0_134 = arith.constant 0 : index
    %218 = vector.load %arg7[%c48_133, %c0_134] : memref<128x16xf32, #tpu.memory_space<vmem>>, vector<16x16xf32>
    %c32_135 = arith.constant 32 : index
    %c0_136 = arith.constant 0 : index
    %219 = vector.load %arg4[%c32_135, %c0_136] : memref<368x128xf32, #tpu.memory_space<vmem>>, vector<16x16xf32>
    %cst_137 = arith.constant dense<0.000000e+00> : vector<16x16xf32>
    %220 = tpu.matmul %217, %219, %cst_137 {dimension_numbers = #tpu.dot_dimension_numbers<[1], [0], [0], [1], [0, 0, 1, 1], [], []>} : vector<16x16xf32>, vector<16x16xf32>, vector<16x16xf32> -> vector<16x16xf32>
    %221 = arith.addf %218, %220 : vector<16x16xf32>
    %c56_138 = arith.constant 56 : index
    %c0_139 = arith.constant 0 : index
    %222 = vector.load %arg4[%c56_138, %c0_139] : memref<368x128xf32, #tpu.memory_space<vmem>>, vector<1x16xf32>
    %223 = vector.broadcast %222 : vector<1x16xf32> to vector<16x16xf32>
    %224 = arith.addf %221, %223 : vector<16x16xf32>
    %225 = math.tanh %224 : vector<16x16xf32>
    %226 = arith.mulf %215, %168 : vector<16x16xf32>
    %cst_140 = arith.constant 1.000000e+00 : f32
    %227 = vector.broadcast %cst_140 : f32 to vector<16x16xf32>
    %228 = arith.subf %227, %215 : vector<16x16xf32>
    %229 = arith.mulf %228, %225 : vector<16x16xf32>
    %230 = arith.addf %226, %229 : vector<16x16xf32>
    %cst_141 = arith.constant dense<0.000000e+00> : vector<16x16xf32>
    %231 = tpu.matmul %0, %230, %cst_141 {dimension_numbers = #tpu.dot_dimension_numbers<[1], [0], [0], [1], [0, 0, 1, 1], [], []>} : vector<16x16xf32>, vector<16x16xf32>, vector<16x16xf32> -> vector<16x16xf32>
    %cst_142 = arith.constant dense<0.000000e+00> : vector<16x16xf32>
    %232 = tpu.matmul %0, %201, %cst_142 {dimension_numbers = #tpu.dot_dimension_numbers<[1], [0], [0], [1], [0, 0, 1, 1], [], []>} : vector<16x16xf32>, vector<16x16xf32>, vector<16x16xf32> -> vector<16x16xf32>
    %c64_143 = arith.constant 64 : index
    %c0_144 = arith.constant 0 : index
    %233 = vector.load %arg4[%c64_143, %c0_144] : memref<368x128xf32, #tpu.memory_space<vmem>>, vector<16x32xf32>
    %cst_145 = arith.constant dense<0.000000e+00> : vector<16x32xf32>
    %234 = tpu.matmul %231, %233, %cst_145 {dimension_numbers = #tpu.dot_dimension_numbers<[1], [0], [0], [1], [0, 0, 1, 1], [], []>} : vector<16x16xf32>, vector<16x32xf32>, vector<16x32xf32> -> vector<16x32xf32>
    %c80_146 = arith.constant 80 : index
    %c0_147 = arith.constant 0 : index
    %235 = vector.load %arg4[%c80_146, %c0_147] : memref<368x128xf32, #tpu.memory_space<vmem>>, vector<16x32xf32>
    %cst_148 = arith.constant dense<0.000000e+00> : vector<16x32xf32>
    %236 = tpu.matmul %232, %235, %cst_148 {dimension_numbers = #tpu.dot_dimension_numbers<[1], [0], [0], [1], [0, 0, 1, 1], [], []>} : vector<16x16xf32>, vector<16x32xf32>, vector<16x32xf32> -> vector<16x32xf32>
    %237 = arith.addf %234, %236 : vector<16x32xf32>
    %c128_149 = arith.constant 128 : index
    %c0_150 = arith.constant 0 : index
    %238 = vector.load %arg4[%c128_149, %c0_150] : memref<368x128xf32, #tpu.memory_space<vmem>>, vector<1x32xf32>
    %239 = vector.broadcast %238 : vector<1x32xf32> to vector<16x32xf32>
    %240 = arith.addf %237, %239 : vector<16x32xf32>
    %241 = arith.negf %240 : vector<16x32xf32>
    %242 = math.exp %241 : vector<16x32xf32>
    %cst_151 = arith.constant 1.000000e+00 : f32
    %243 = vector.broadcast %cst_151 : f32 to vector<16x32xf32>
    %244 = arith.addf %243, %242 : vector<16x32xf32>
    %245 = arith.divf %243, %244 : vector<16x32xf32>
    %246 = vector.extract_strided_slice %245 {offsets = [0, 0], sizes = [16, 16], strides = [1, 1]} : vector<16x32xf32> to vector<16x16xf32>
    %247 = vector.extract_strided_slice %245 {offsets = [0, 16], sizes = [16, 16], strides = [1, 1]} : vector<16x32xf32> to vector<16x16xf32>
    %248 = arith.mulf %246, %201 : vector<16x16xf32>
    %cst_152 = arith.constant dense<0.000000e+00> : vector<16x16xf32>
    %249 = tpu.matmul %0, %248, %cst_152 {dimension_numbers = #tpu.dot_dimension_numbers<[1], [0], [0], [1], [0, 0, 1, 1], [], []>} : vector<16x16xf32>, vector<16x16xf32>, vector<16x16xf32> -> vector<16x16xf32>
    %c96_153 = arith.constant 96 : index
    %c0_154 = arith.constant 0 : index
    %250 = vector.load %arg4[%c96_153, %c0_154] : memref<368x128xf32, #tpu.memory_space<vmem>>, vector<16x16xf32>
    %cst_155 = arith.constant dense<0.000000e+00> : vector<16x16xf32>
    %251 = tpu.matmul %231, %250, %cst_155 {dimension_numbers = #tpu.dot_dimension_numbers<[1], [0], [0], [1], [0, 0, 1, 1], [], []>} : vector<16x16xf32>, vector<16x16xf32>, vector<16x16xf32> -> vector<16x16xf32>
    %c112_156 = arith.constant 112 : index
    %c0_157 = arith.constant 0 : index
    %252 = vector.load %arg4[%c112_156, %c0_157] : memref<368x128xf32, #tpu.memory_space<vmem>>, vector<16x16xf32>
    %cst_158 = arith.constant dense<0.000000e+00> : vector<16x16xf32>
    %253 = tpu.matmul %249, %252, %cst_158 {dimension_numbers = #tpu.dot_dimension_numbers<[1], [0], [0], [1], [0, 0, 1, 1], [], []>} : vector<16x16xf32>, vector<16x16xf32>, vector<16x16xf32> -> vector<16x16xf32>
    %254 = arith.addf %251, %253 : vector<16x16xf32>
    %c136_159 = arith.constant 136 : index
    %c0_160 = arith.constant 0 : index
    %255 = vector.load %arg4[%c136_159, %c0_160] : memref<368x128xf32, #tpu.memory_space<vmem>>, vector<1x16xf32>
    %256 = vector.broadcast %255 : vector<1x16xf32> to vector<16x16xf32>
    %257 = arith.addf %254, %256 : vector<16x16xf32>
    %258 = math.tanh %257 : vector<16x16xf32>
    %259 = arith.mulf %247, %201 : vector<16x16xf32>
    %cst_161 = arith.constant 1.000000e+00 : f32
    %260 = vector.broadcast %cst_161 : f32 to vector<16x16xf32>
    %261 = arith.subf %260, %247 : vector<16x16xf32>
    %262 = arith.mulf %261, %258 : vector<16x16xf32>
    %263 = arith.addf %259, %262 : vector<16x16xf32>
    %c64_162 = arith.constant 64 : index
    %c0_163 = arith.constant 0 : index
    %264 = vector.load %arg6[%c64_162, %c0_163] : memref<128x32xf32, #tpu.memory_space<vmem>>, vector<16x32xf32>
    %c8_164 = arith.constant 8 : index
    %c0_165 = arith.constant 0 : index
    %265 = vector.load %arg4[%c8_164, %c0_165] : memref<368x128xf32, #tpu.memory_space<vmem>>, vector<16x32xf32>
    %cst_166 = arith.constant dense<0.000000e+00> : vector<16x32xf32>
    %266 = tpu.matmul %231, %265, %cst_166 {dimension_numbers = #tpu.dot_dimension_numbers<[1], [0], [0], [1], [0, 0, 1, 1], [], []>} : vector<16x16xf32>, vector<16x32xf32>, vector<16x32xf32> -> vector<16x32xf32>
    %267 = arith.addf %264, %266 : vector<16x32xf32>
    %c48_167 = arith.constant 48 : index
    %c0_168 = arith.constant 0 : index
    %268 = vector.load %arg4[%c48_167, %c0_168] : memref<368x128xf32, #tpu.memory_space<vmem>>, vector<1x32xf32>
    %269 = vector.broadcast %268 : vector<1x32xf32> to vector<16x32xf32>
    %270 = arith.addf %267, %269 : vector<16x32xf32>
    %271 = arith.negf %270 : vector<16x32xf32>
    %272 = math.exp %271 : vector<16x32xf32>
    %cst_169 = arith.constant 1.000000e+00 : f32
    %273 = vector.broadcast %cst_169 : f32 to vector<16x32xf32>
    %274 = arith.addf %273, %272 : vector<16x32xf32>
    %275 = arith.divf %273, %274 : vector<16x32xf32>
    %276 = vector.extract_strided_slice %275 {offsets = [0, 0], sizes = [16, 16], strides = [1, 1]} : vector<16x32xf32> to vector<16x16xf32>
    %277 = vector.extract_strided_slice %275 {offsets = [0, 16], sizes = [16, 16], strides = [1, 1]} : vector<16x32xf32> to vector<16x16xf32>
    %278 = arith.mulf %276, %230 : vector<16x16xf32>
    %cst_170 = arith.constant dense<0.000000e+00> : vector<16x16xf32>
    %279 = tpu.matmul %0, %278, %cst_170 {dimension_numbers = #tpu.dot_dimension_numbers<[1], [0], [0], [1], [0, 0, 1, 1], [], []>} : vector<16x16xf32>, vector<16x16xf32>, vector<16x16xf32> -> vector<16x16xf32>
    %c64_171 = arith.constant 64 : index
    %c0_172 = arith.constant 0 : index
    %280 = vector.load %arg7[%c64_171, %c0_172] : memref<128x16xf32, #tpu.memory_space<vmem>>, vector<16x16xf32>
    %c32_173 = arith.constant 32 : index
    %c0_174 = arith.constant 0 : index
    %281 = vector.load %arg4[%c32_173, %c0_174] : memref<368x128xf32, #tpu.memory_space<vmem>>, vector<16x16xf32>
    %cst_175 = arith.constant dense<0.000000e+00> : vector<16x16xf32>
    %282 = tpu.matmul %279, %281, %cst_175 {dimension_numbers = #tpu.dot_dimension_numbers<[1], [0], [0], [1], [0, 0, 1, 1], [], []>} : vector<16x16xf32>, vector<16x16xf32>, vector<16x16xf32> -> vector<16x16xf32>
    %283 = arith.addf %280, %282 : vector<16x16xf32>
    %c56_176 = arith.constant 56 : index
    %c0_177 = arith.constant 0 : index
    %284 = vector.load %arg4[%c56_176, %c0_177] : memref<368x128xf32, #tpu.memory_space<vmem>>, vector<1x16xf32>
    %285 = vector.broadcast %284 : vector<1x16xf32> to vector<16x16xf32>
    %286 = arith.addf %283, %285 : vector<16x16xf32>
    %287 = math.tanh %286 : vector<16x16xf32>
    %288 = arith.mulf %277, %230 : vector<16x16xf32>
    %cst_178 = arith.constant 1.000000e+00 : f32
    %289 = vector.broadcast %cst_178 : f32 to vector<16x16xf32>
    %290 = arith.subf %289, %277 : vector<16x16xf32>
    %291 = arith.mulf %290, %287 : vector<16x16xf32>
    %292 = arith.addf %288, %291 : vector<16x16xf32>
    %cst_179 = arith.constant dense<0.000000e+00> : vector<16x16xf32>
    %293 = tpu.matmul %0, %292, %cst_179 {dimension_numbers = #tpu.dot_dimension_numbers<[1], [0], [0], [1], [0, 0, 1, 1], [], []>} : vector<16x16xf32>, vector<16x16xf32>, vector<16x16xf32> -> vector<16x16xf32>
    %cst_180 = arith.constant dense<0.000000e+00> : vector<16x16xf32>
    %294 = tpu.matmul %0, %263, %cst_180 {dimension_numbers = #tpu.dot_dimension_numbers<[1], [0], [0], [1], [0, 0, 1, 1], [], []>} : vector<16x16xf32>, vector<16x16xf32>, vector<16x16xf32> -> vector<16x16xf32>
    %c64_181 = arith.constant 64 : index
    %c0_182 = arith.constant 0 : index
    %295 = vector.load %arg4[%c64_181, %c0_182] : memref<368x128xf32, #tpu.memory_space<vmem>>, vector<16x32xf32>
    %cst_183 = arith.constant dense<0.000000e+00> : vector<16x32xf32>
    %296 = tpu.matmul %293, %295, %cst_183 {dimension_numbers = #tpu.dot_dimension_numbers<[1], [0], [0], [1], [0, 0, 1, 1], [], []>} : vector<16x16xf32>, vector<16x32xf32>, vector<16x32xf32> -> vector<16x32xf32>
    %c80_184 = arith.constant 80 : index
    %c0_185 = arith.constant 0 : index
    %297 = vector.load %arg4[%c80_184, %c0_185] : memref<368x128xf32, #tpu.memory_space<vmem>>, vector<16x32xf32>
    %cst_186 = arith.constant dense<0.000000e+00> : vector<16x32xf32>
    %298 = tpu.matmul %294, %297, %cst_186 {dimension_numbers = #tpu.dot_dimension_numbers<[1], [0], [0], [1], [0, 0, 1, 1], [], []>} : vector<16x16xf32>, vector<16x32xf32>, vector<16x32xf32> -> vector<16x32xf32>
    %299 = arith.addf %296, %298 : vector<16x32xf32>
    %c128_187 = arith.constant 128 : index
    %c0_188 = arith.constant 0 : index
    %300 = vector.load %arg4[%c128_187, %c0_188] : memref<368x128xf32, #tpu.memory_space<vmem>>, vector<1x32xf32>
    %301 = vector.broadcast %300 : vector<1x32xf32> to vector<16x32xf32>
    %302 = arith.addf %299, %301 : vector<16x32xf32>
    %303 = arith.negf %302 : vector<16x32xf32>
    %304 = math.exp %303 : vector<16x32xf32>
    %cst_189 = arith.constant 1.000000e+00 : f32
    %305 = vector.broadcast %cst_189 : f32 to vector<16x32xf32>
    %306 = arith.addf %305, %304 : vector<16x32xf32>
    %307 = arith.divf %305, %306 : vector<16x32xf32>
    %308 = vector.extract_strided_slice %307 {offsets = [0, 0], sizes = [16, 16], strides = [1, 1]} : vector<16x32xf32> to vector<16x16xf32>
    %309 = vector.extract_strided_slice %307 {offsets = [0, 16], sizes = [16, 16], strides = [1, 1]} : vector<16x32xf32> to vector<16x16xf32>
    %310 = arith.mulf %308, %263 : vector<16x16xf32>
    %cst_190 = arith.constant dense<0.000000e+00> : vector<16x16xf32>
    %311 = tpu.matmul %0, %310, %cst_190 {dimension_numbers = #tpu.dot_dimension_numbers<[1], [0], [0], [1], [0, 0, 1, 1], [], []>} : vector<16x16xf32>, vector<16x16xf32>, vector<16x16xf32> -> vector<16x16xf32>
    %c96_191 = arith.constant 96 : index
    %c0_192 = arith.constant 0 : index
    %312 = vector.load %arg4[%c96_191, %c0_192] : memref<368x128xf32, #tpu.memory_space<vmem>>, vector<16x16xf32>
    %cst_193 = arith.constant dense<0.000000e+00> : vector<16x16xf32>
    %313 = tpu.matmul %293, %312, %cst_193 {dimension_numbers = #tpu.dot_dimension_numbers<[1], [0], [0], [1], [0, 0, 1, 1], [], []>} : vector<16x16xf32>, vector<16x16xf32>, vector<16x16xf32> -> vector<16x16xf32>
    %c112_194 = arith.constant 112 : index
    %c0_195 = arith.constant 0 : index
    %314 = vector.load %arg4[%c112_194, %c0_195] : memref<368x128xf32, #tpu.memory_space<vmem>>, vector<16x16xf32>
    %cst_196 = arith.constant dense<0.000000e+00> : vector<16x16xf32>
    %315 = tpu.matmul %311, %314, %cst_196 {dimension_numbers = #tpu.dot_dimension_numbers<[1], [0], [0], [1], [0, 0, 1, 1], [], []>} : vector<16x16xf32>, vector<16x16xf32>, vector<16x16xf32> -> vector<16x16xf32>
    %316 = arith.addf %313, %315 : vector<16x16xf32>
    %c136_197 = arith.constant 136 : index
    %c0_198 = arith.constant 0 : index
    %317 = vector.load %arg4[%c136_197, %c0_198] : memref<368x128xf32, #tpu.memory_space<vmem>>, vector<1x16xf32>
    %318 = vector.broadcast %317 : vector<1x16xf32> to vector<16x16xf32>
    %319 = arith.addf %316, %318 : vector<16x16xf32>
    %320 = math.tanh %319 : vector<16x16xf32>
    %321 = arith.mulf %309, %263 : vector<16x16xf32>
    %cst_199 = arith.constant 1.000000e+00 : f32
    %322 = vector.broadcast %cst_199 : f32 to vector<16x16xf32>
    %323 = arith.subf %322, %309 : vector<16x16xf32>
    %324 = arith.mulf %323, %320 : vector<16x16xf32>
    %325 = arith.addf %321, %324 : vector<16x16xf32>
    %c80_200 = arith.constant 80 : index
    %c0_201 = arith.constant 0 : index
    %326 = vector.load %arg6[%c80_200, %c0_201] : memref<128x32xf32, #tpu.memory_space<vmem>>, vector<16x32xf32>
    %c8_202 = arith.constant 8 : index
    %c0_203 = arith.constant 0 : index
    %327 = vector.load %arg4[%c8_202, %c0_203] : memref<368x128xf32, #tpu.memory_space<vmem>>, vector<16x32xf32>
    %cst_204 = arith.constant dense<0.000000e+00> : vector<16x32xf32>
    %328 = tpu.matmul %293, %327, %cst_204 {dimension_numbers = #tpu.dot_dimension_numbers<[1], [0], [0], [1], [0, 0, 1, 1], [], []>} : vector<16x16xf32>, vector<16x32xf32>, vector<16x32xf32> -> vector<16x32xf32>
    %329 = arith.addf %326, %328 : vector<16x32xf32>
    %c48_205 = arith.constant 48 : index
    %c0_206 = arith.constant 0 : index
    %330 = vector.load %arg4[%c48_205, %c0_206] : memref<368x128xf32, #tpu.memory_space<vmem>>, vector<1x32xf32>
    %331 = vector.broadcast %330 : vector<1x32xf32> to vector<16x32xf32>
    %332 = arith.addf %329, %331 : vector<16x32xf32>
    %333 = arith.negf %332 : vector<16x32xf32>
    %334 = math.exp %333 : vector<16x32xf32>
    %cst_207 = arith.constant 1.000000e+00 : f32
    %335 = vector.broadcast %cst_207 : f32 to vector<16x32xf32>
    %336 = arith.addf %335, %334 : vector<16x32xf32>
    %337 = arith.divf %335, %336 : vector<16x32xf32>
    %338 = vector.extract_strided_slice %337 {offsets = [0, 0], sizes = [16, 16], strides = [1, 1]} : vector<16x32xf32> to vector<16x16xf32>
    %339 = vector.extract_strided_slice %337 {offsets = [0, 16], sizes = [16, 16], strides = [1, 1]} : vector<16x32xf32> to vector<16x16xf32>
    %340 = arith.mulf %338, %292 : vector<16x16xf32>
    %cst_208 = arith.constant dense<0.000000e+00> : vector<16x16xf32>
    %341 = tpu.matmul %0, %340, %cst_208 {dimension_numbers = #tpu.dot_dimension_numbers<[1], [0], [0], [1], [0, 0, 1, 1], [], []>} : vector<16x16xf32>, vector<16x16xf32>, vector<16x16xf32> -> vector<16x16xf32>
    %c80_209 = arith.constant 80 : index
    %c0_210 = arith.constant 0 : index
    %342 = vector.load %arg7[%c80_209, %c0_210] : memref<128x16xf32, #tpu.memory_space<vmem>>, vector<16x16xf32>
    %c32_211 = arith.constant 32 : index
    %c0_212 = arith.constant 0 : index
    %343 = vector.load %arg4[%c32_211, %c0_212] : memref<368x128xf32, #tpu.memory_space<vmem>>, vector<16x16xf32>
    %cst_213 = arith.constant dense<0.000000e+00> : vector<16x16xf32>
    %344 = tpu.matmul %341, %343, %cst_213 {dimension_numbers = #tpu.dot_dimension_numbers<[1], [0], [0], [1], [0, 0, 1, 1], [], []>} : vector<16x16xf32>, vector<16x16xf32>, vector<16x16xf32> -> vector<16x16xf32>
    %345 = arith.addf %342, %344 : vector<16x16xf32>
    %c56_214 = arith.constant 56 : index
    %c0_215 = arith.constant 0 : index
    %346 = vector.load %arg4[%c56_214, %c0_215] : memref<368x128xf32, #tpu.memory_space<vmem>>, vector<1x16xf32>
    %347 = vector.broadcast %346 : vector<1x16xf32> to vector<16x16xf32>
    %348 = arith.addf %345, %347 : vector<16x16xf32>
    %349 = math.tanh %348 : vector<16x16xf32>
    %350 = arith.mulf %339, %292 : vector<16x16xf32>
    %cst_216 = arith.constant 1.000000e+00 : f32
    %351 = vector.broadcast %cst_216 : f32 to vector<16x16xf32>
    %352 = arith.subf %351, %339 : vector<16x16xf32>
    %353 = arith.mulf %352, %349 : vector<16x16xf32>
    %354 = arith.addf %350, %353 : vector<16x16xf32>
    %cst_217 = arith.constant dense<0.000000e+00> : vector<16x16xf32>
    %355 = tpu.matmul %0, %354, %cst_217 {dimension_numbers = #tpu.dot_dimension_numbers<[1], [0], [0], [1], [0, 0, 1, 1], [], []>} : vector<16x16xf32>, vector<16x16xf32>, vector<16x16xf32> -> vector<16x16xf32>
    %cst_218 = arith.constant dense<0.000000e+00> : vector<16x16xf32>
    %356 = tpu.matmul %0, %325, %cst_218 {dimension_numbers = #tpu.dot_dimension_numbers<[1], [0], [0], [1], [0, 0, 1, 1], [], []>} : vector<16x16xf32>, vector<16x16xf32>, vector<16x16xf32> -> vector<16x16xf32>
    %c64_219 = arith.constant 64 : index
    %c0_220 = arith.constant 0 : index
    %357 = vector.load %arg4[%c64_219, %c0_220] : memref<368x128xf32, #tpu.memory_space<vmem>>, vector<16x32xf32>
    %cst_221 = arith.constant dense<0.000000e+00> : vector<16x32xf32>
    %358 = tpu.matmul %355, %357, %cst_221 {dimension_numbers = #tpu.dot_dimension_numbers<[1], [0], [0], [1], [0, 0, 1, 1], [], []>} : vector<16x16xf32>, vector<16x32xf32>, vector<16x32xf32> -> vector<16x32xf32>
    %c80_222 = arith.constant 80 : index
    %c0_223 = arith.constant 0 : index
    %359 = vector.load %arg4[%c80_222, %c0_223] : memref<368x128xf32, #tpu.memory_space<vmem>>, vector<16x32xf32>
    %cst_224 = arith.constant dense<0.000000e+00> : vector<16x32xf32>
    %360 = tpu.matmul %356, %359, %cst_224 {dimension_numbers = #tpu.dot_dimension_numbers<[1], [0], [0], [1], [0, 0, 1, 1], [], []>} : vector<16x16xf32>, vector<16x32xf32>, vector<16x32xf32> -> vector<16x32xf32>
    %361 = arith.addf %358, %360 : vector<16x32xf32>
    %c128_225 = arith.constant 128 : index
    %c0_226 = arith.constant 0 : index
    %362 = vector.load %arg4[%c128_225, %c0_226] : memref<368x128xf32, #tpu.memory_space<vmem>>, vector<1x32xf32>
    %363 = vector.broadcast %362 : vector<1x32xf32> to vector<16x32xf32>
    %364 = arith.addf %361, %363 : vector<16x32xf32>
    %365 = arith.negf %364 : vector<16x32xf32>
    %366 = math.exp %365 : vector<16x32xf32>
    %cst_227 = arith.constant 1.000000e+00 : f32
    %367 = vector.broadcast %cst_227 : f32 to vector<16x32xf32>
    %368 = arith.addf %367, %366 : vector<16x32xf32>
    %369 = arith.divf %367, %368 : vector<16x32xf32>
    %370 = vector.extract_strided_slice %369 {offsets = [0, 0], sizes = [16, 16], strides = [1, 1]} : vector<16x32xf32> to vector<16x16xf32>
    %371 = vector.extract_strided_slice %369 {offsets = [0, 16], sizes = [16, 16], strides = [1, 1]} : vector<16x32xf32> to vector<16x16xf32>
    %372 = arith.mulf %370, %325 : vector<16x16xf32>
    %cst_228 = arith.constant dense<0.000000e+00> : vector<16x16xf32>
    %373 = tpu.matmul %0, %372, %cst_228 {dimension_numbers = #tpu.dot_dimension_numbers<[1], [0], [0], [1], [0, 0, 1, 1], [], []>} : vector<16x16xf32>, vector<16x16xf32>, vector<16x16xf32> -> vector<16x16xf32>
    %c96_229 = arith.constant 96 : index
    %c0_230 = arith.constant 0 : index
    %374 = vector.load %arg4[%c96_229, %c0_230] : memref<368x128xf32, #tpu.memory_space<vmem>>, vector<16x16xf32>
    %cst_231 = arith.constant dense<0.000000e+00> : vector<16x16xf32>
    %375 = tpu.matmul %355, %374, %cst_231 {dimension_numbers = #tpu.dot_dimension_numbers<[1], [0], [0], [1], [0, 0, 1, 1], [], []>} : vector<16x16xf32>, vector<16x16xf32>, vector<16x16xf32> -> vector<16x16xf32>
    %c112_232 = arith.constant 112 : index
    %c0_233 = arith.constant 0 : index
    %376 = vector.load %arg4[%c112_232, %c0_233] : memref<368x128xf32, #tpu.memory_space<vmem>>, vector<16x16xf32>
    %cst_234 = arith.constant dense<0.000000e+00> : vector<16x16xf32>
    %377 = tpu.matmul %373, %376, %cst_234 {dimension_numbers = #tpu.dot_dimension_numbers<[1], [0], [0], [1], [0, 0, 1, 1], [], []>} : vector<16x16xf32>, vector<16x16xf32>, vector<16x16xf32> -> vector<16x16xf32>
    %378 = arith.addf %375, %377 : vector<16x16xf32>
    %c136_235 = arith.constant 136 : index
    %c0_236 = arith.constant 0 : index
    %379 = vector.load %arg4[%c136_235, %c0_236] : memref<368x128xf32, #tpu.memory_space<vmem>>, vector<1x16xf32>
    %380 = vector.broadcast %379 : vector<1x16xf32> to vector<16x16xf32>
    %381 = arith.addf %378, %380 : vector<16x16xf32>
    %382 = math.tanh %381 : vector<16x16xf32>
    %383 = arith.mulf %371, %325 : vector<16x16xf32>
    %cst_237 = arith.constant 1.000000e+00 : f32
    %384 = vector.broadcast %cst_237 : f32 to vector<16x16xf32>
    %385 = arith.subf %384, %371 : vector<16x16xf32>
    %386 = arith.mulf %385, %382 : vector<16x16xf32>
    %387 = arith.addf %383, %386 : vector<16x16xf32>
    %c96_238 = arith.constant 96 : index
    %c0_239 = arith.constant 0 : index
    %388 = vector.load %arg6[%c96_238, %c0_239] : memref<128x32xf32, #tpu.memory_space<vmem>>, vector<16x32xf32>
    %c8_240 = arith.constant 8 : index
    %c0_241 = arith.constant 0 : index
    %389 = vector.load %arg4[%c8_240, %c0_241] : memref<368x128xf32, #tpu.memory_space<vmem>>, vector<16x32xf32>
    %cst_242 = arith.constant dense<0.000000e+00> : vector<16x32xf32>
    %390 = tpu.matmul %355, %389, %cst_242 {dimension_numbers = #tpu.dot_dimension_numbers<[1], [0], [0], [1], [0, 0, 1, 1], [], []>} : vector<16x16xf32>, vector<16x32xf32>, vector<16x32xf32> -> vector<16x32xf32>
    %391 = arith.addf %388, %390 : vector<16x32xf32>
    %c48_243 = arith.constant 48 : index
    %c0_244 = arith.constant 0 : index
    %392 = vector.load %arg4[%c48_243, %c0_244] : memref<368x128xf32, #tpu.memory_space<vmem>>, vector<1x32xf32>
    %393 = vector.broadcast %392 : vector<1x32xf32> to vector<16x32xf32>
    %394 = arith.addf %391, %393 : vector<16x32xf32>
    %395 = arith.negf %394 : vector<16x32xf32>
    %396 = math.exp %395 : vector<16x32xf32>
    %cst_245 = arith.constant 1.000000e+00 : f32
    %397 = vector.broadcast %cst_245 : f32 to vector<16x32xf32>
    %398 = arith.addf %397, %396 : vector<16x32xf32>
    %399 = arith.divf %397, %398 : vector<16x32xf32>
    %400 = vector.extract_strided_slice %399 {offsets = [0, 0], sizes = [16, 16], strides = [1, 1]} : vector<16x32xf32> to vector<16x16xf32>
    %401 = vector.extract_strided_slice %399 {offsets = [0, 16], sizes = [16, 16], strides = [1, 1]} : vector<16x32xf32> to vector<16x16xf32>
    %402 = arith.mulf %400, %354 : vector<16x16xf32>
    %cst_246 = arith.constant dense<0.000000e+00> : vector<16x16xf32>
    %403 = tpu.matmul %0, %402, %cst_246 {dimension_numbers = #tpu.dot_dimension_numbers<[1], [0], [0], [1], [0, 0, 1, 1], [], []>} : vector<16x16xf32>, vector<16x16xf32>, vector<16x16xf32> -> vector<16x16xf32>
    %c96_247 = arith.constant 96 : index
    %c0_248 = arith.constant 0 : index
    %404 = vector.load %arg7[%c96_247, %c0_248] : memref<128x16xf32, #tpu.memory_space<vmem>>, vector<16x16xf32>
    %c32_249 = arith.constant 32 : index
    %c0_250 = arith.constant 0 : index
    %405 = vector.load %arg4[%c32_249, %c0_250] : memref<368x128xf32, #tpu.memory_space<vmem>>, vector<16x16xf32>
    %cst_251 = arith.constant dense<0.000000e+00> : vector<16x16xf32>
    %406 = tpu.matmul %403, %405, %cst_251 {dimension_numbers = #tpu.dot_dimension_numbers<[1], [0], [0], [1], [0, 0, 1, 1], [], []>} : vector<16x16xf32>, vector<16x16xf32>, vector<16x16xf32> -> vector<16x16xf32>
    %407 = arith.addf %404, %406 : vector<16x16xf32>
    %c56_252 = arith.constant 56 : index
    %c0_253 = arith.constant 0 : index
    %408 = vector.load %arg4[%c56_252, %c0_253] : memref<368x128xf32, #tpu.memory_space<vmem>>, vector<1x16xf32>
    %409 = vector.broadcast %408 : vector<1x16xf32> to vector<16x16xf32>
    %410 = arith.addf %407, %409 : vector<16x16xf32>
    %411 = math.tanh %410 : vector<16x16xf32>
    %412 = arith.mulf %401, %354 : vector<16x16xf32>
    %cst_254 = arith.constant 1.000000e+00 : f32
    %413 = vector.broadcast %cst_254 : f32 to vector<16x16xf32>
    %414 = arith.subf %413, %401 : vector<16x16xf32>
    %415 = arith.mulf %414, %411 : vector<16x16xf32>
    %416 = arith.addf %412, %415 : vector<16x16xf32>
    %cst_255 = arith.constant dense<0.000000e+00> : vector<16x16xf32>
    %417 = tpu.matmul %0, %416, %cst_255 {dimension_numbers = #tpu.dot_dimension_numbers<[1], [0], [0], [1], [0, 0, 1, 1], [], []>} : vector<16x16xf32>, vector<16x16xf32>, vector<16x16xf32> -> vector<16x16xf32>
    %cst_256 = arith.constant dense<0.000000e+00> : vector<16x16xf32>
    %418 = tpu.matmul %0, %387, %cst_256 {dimension_numbers = #tpu.dot_dimension_numbers<[1], [0], [0], [1], [0, 0, 1, 1], [], []>} : vector<16x16xf32>, vector<16x16xf32>, vector<16x16xf32> -> vector<16x16xf32>
    %c64_257 = arith.constant 64 : index
    %c0_258 = arith.constant 0 : index
    %419 = vector.load %arg4[%c64_257, %c0_258] : memref<368x128xf32, #tpu.memory_space<vmem>>, vector<16x32xf32>
    %cst_259 = arith.constant dense<0.000000e+00> : vector<16x32xf32>
    %420 = tpu.matmul %417, %419, %cst_259 {dimension_numbers = #tpu.dot_dimension_numbers<[1], [0], [0], [1], [0, 0, 1, 1], [], []>} : vector<16x16xf32>, vector<16x32xf32>, vector<16x32xf32> -> vector<16x32xf32>
    %c80_260 = arith.constant 80 : index
    %c0_261 = arith.constant 0 : index
    %421 = vector.load %arg4[%c80_260, %c0_261] : memref<368x128xf32, #tpu.memory_space<vmem>>, vector<16x32xf32>
    %cst_262 = arith.constant dense<0.000000e+00> : vector<16x32xf32>
    %422 = tpu.matmul %418, %421, %cst_262 {dimension_numbers = #tpu.dot_dimension_numbers<[1], [0], [0], [1], [0, 0, 1, 1], [], []>} : vector<16x16xf32>, vector<16x32xf32>, vector<16x32xf32> -> vector<16x32xf32>
    %423 = arith.addf %420, %422 : vector<16x32xf32>
    %c128_263 = arith.constant 128 : index
    %c0_264 = arith.constant 0 : index
    %424 = vector.load %arg4[%c128_263, %c0_264] : memref<368x128xf32, #tpu.memory_space<vmem>>, vector<1x32xf32>
    %425 = vector.broadcast %424 : vector<1x32xf32> to vector<16x32xf32>
    %426 = arith.addf %423, %425 : vector<16x32xf32>
    %427 = arith.negf %426 : vector<16x32xf32>
    %428 = math.exp %427 : vector<16x32xf32>
    %cst_265 = arith.constant 1.000000e+00 : f32
    %429 = vector.broadcast %cst_265 : f32 to vector<16x32xf32>
    %430 = arith.addf %429, %428 : vector<16x32xf32>
    %431 = arith.divf %429, %430 : vector<16x32xf32>
    %432 = vector.extract_strided_slice %431 {offsets = [0, 0], sizes = [16, 16], strides = [1, 1]} : vector<16x32xf32> to vector<16x16xf32>
    %433 = vector.extract_strided_slice %431 {offsets = [0, 16], sizes = [16, 16], strides = [1, 1]} : vector<16x32xf32> to vector<16x16xf32>
    %434 = arith.mulf %432, %387 : vector<16x16xf32>
    %cst_266 = arith.constant dense<0.000000e+00> : vector<16x16xf32>
    %435 = tpu.matmul %0, %434, %cst_266 {dimension_numbers = #tpu.dot_dimension_numbers<[1], [0], [0], [1], [0, 0, 1, 1], [], []>} : vector<16x16xf32>, vector<16x16xf32>, vector<16x16xf32> -> vector<16x16xf32>
    %c96_267 = arith.constant 96 : index
    %c0_268 = arith.constant 0 : index
    %436 = vector.load %arg4[%c96_267, %c0_268] : memref<368x128xf32, #tpu.memory_space<vmem>>, vector<16x16xf32>
    %cst_269 = arith.constant dense<0.000000e+00> : vector<16x16xf32>
    %437 = tpu.matmul %417, %436, %cst_269 {dimension_numbers = #tpu.dot_dimension_numbers<[1], [0], [0], [1], [0, 0, 1, 1], [], []>} : vector<16x16xf32>, vector<16x16xf32>, vector<16x16xf32> -> vector<16x16xf32>
    %c112_270 = arith.constant 112 : index
    %c0_271 = arith.constant 0 : index
    %438 = vector.load %arg4[%c112_270, %c0_271] : memref<368x128xf32, #tpu.memory_space<vmem>>, vector<16x16xf32>
    %cst_272 = arith.constant dense<0.000000e+00> : vector<16x16xf32>
    %439 = tpu.matmul %435, %438, %cst_272 {dimension_numbers = #tpu.dot_dimension_numbers<[1], [0], [0], [1], [0, 0, 1, 1], [], []>} : vector<16x16xf32>, vector<16x16xf32>, vector<16x16xf32> -> vector<16x16xf32>
    %440 = arith.addf %437, %439 : vector<16x16xf32>
    %c136_273 = arith.constant 136 : index
    %c0_274 = arith.constant 0 : index
    %441 = vector.load %arg4[%c136_273, %c0_274] : memref<368x128xf32, #tpu.memory_space<vmem>>, vector<1x16xf32>
    %442 = vector.broadcast %441 : vector<1x16xf32> to vector<16x16xf32>
    %443 = arith.addf %440, %442 : vector<16x16xf32>
    %444 = math.tanh %443 : vector<16x16xf32>
    %445 = arith.mulf %433, %387 : vector<16x16xf32>
    %cst_275 = arith.constant 1.000000e+00 : f32
    %446 = vector.broadcast %cst_275 : f32 to vector<16x16xf32>
    %447 = arith.subf %446, %433 : vector<16x16xf32>
    %448 = arith.mulf %447, %444 : vector<16x16xf32>
    %449 = arith.addf %445, %448 : vector<16x16xf32>
    %c112_276 = arith.constant 112 : index
    %c0_277 = arith.constant 0 : index
    %450 = vector.load %arg6[%c112_276, %c0_277] : memref<128x32xf32, #tpu.memory_space<vmem>>, vector<16x32xf32>
    %c8_278 = arith.constant 8 : index
    %c0_279 = arith.constant 0 : index
    %451 = vector.load %arg4[%c8_278, %c0_279] : memref<368x128xf32, #tpu.memory_space<vmem>>, vector<16x32xf32>
    %cst_280 = arith.constant dense<0.000000e+00> : vector<16x32xf32>
    %452 = tpu.matmul %417, %451, %cst_280 {dimension_numbers = #tpu.dot_dimension_numbers<[1], [0], [0], [1], [0, 0, 1, 1], [], []>} : vector<16x16xf32>, vector<16x32xf32>, vector<16x32xf32> -> vector<16x32xf32>
    %453 = arith.addf %450, %452 : vector<16x32xf32>
    %c48_281 = arith.constant 48 : index
    %c0_282 = arith.constant 0 : index
    %454 = vector.load %arg4[%c48_281, %c0_282] : memref<368x128xf32, #tpu.memory_space<vmem>>, vector<1x32xf32>
    %455 = vector.broadcast %454 : vector<1x32xf32> to vector<16x32xf32>
    %456 = arith.addf %453, %455 : vector<16x32xf32>
    %457 = arith.negf %456 : vector<16x32xf32>
    %458 = math.exp %457 : vector<16x32xf32>
    %cst_283 = arith.constant 1.000000e+00 : f32
    %459 = vector.broadcast %cst_283 : f32 to vector<16x32xf32>
    %460 = arith.addf %459, %458 : vector<16x32xf32>
    %461 = arith.divf %459, %460 : vector<16x32xf32>
    %462 = vector.extract_strided_slice %461 {offsets = [0, 0], sizes = [16, 16], strides = [1, 1]} : vector<16x32xf32> to vector<16x16xf32>
    %463 = vector.extract_strided_slice %461 {offsets = [0, 16], sizes = [16, 16], strides = [1, 1]} : vector<16x32xf32> to vector<16x16xf32>
    %464 = arith.mulf %462, %416 : vector<16x16xf32>
    %cst_284 = arith.constant dense<0.000000e+00> : vector<16x16xf32>
    %465 = tpu.matmul %0, %464, %cst_284 {dimension_numbers = #tpu.dot_dimension_numbers<[1], [0], [0], [1], [0, 0, 1, 1], [], []>} : vector<16x16xf32>, vector<16x16xf32>, vector<16x16xf32> -> vector<16x16xf32>
    %c112_285 = arith.constant 112 : index
    %c0_286 = arith.constant 0 : index
    %466 = vector.load %arg7[%c112_285, %c0_286] : memref<128x16xf32, #tpu.memory_space<vmem>>, vector<16x16xf32>
    %c32_287 = arith.constant 32 : index
    %c0_288 = arith.constant 0 : index
    %467 = vector.load %arg4[%c32_287, %c0_288] : memref<368x128xf32, #tpu.memory_space<vmem>>, vector<16x16xf32>
    %cst_289 = arith.constant dense<0.000000e+00> : vector<16x16xf32>
    %468 = tpu.matmul %465, %467, %cst_289 {dimension_numbers = #tpu.dot_dimension_numbers<[1], [0], [0], [1], [0, 0, 1, 1], [], []>} : vector<16x16xf32>, vector<16x16xf32>, vector<16x16xf32> -> vector<16x16xf32>
    %469 = arith.addf %466, %468 : vector<16x16xf32>
    %c56_290 = arith.constant 56 : index
    %c0_291 = arith.constant 0 : index
    %470 = vector.load %arg4[%c56_290, %c0_291] : memref<368x128xf32, #tpu.memory_space<vmem>>, vector<1x16xf32>
    %471 = vector.broadcast %470 : vector<1x16xf32> to vector<16x16xf32>
    %472 = arith.addf %469, %471 : vector<16x16xf32>
    %473 = math.tanh %472 : vector<16x16xf32>
    %474 = arith.mulf %463, %416 : vector<16x16xf32>
    %cst_292 = arith.constant 1.000000e+00 : f32
    %475 = vector.broadcast %cst_292 : f32 to vector<16x16xf32>
    %476 = arith.subf %475, %463 : vector<16x16xf32>
    %477 = arith.mulf %476, %473 : vector<16x16xf32>
    %478 = arith.addf %474, %477 : vector<16x16xf32>
    %cst_293 = arith.constant dense<0.000000e+00> : vector<16x16xf32>
    %479 = tpu.matmul %0, %478, %cst_293 {dimension_numbers = #tpu.dot_dimension_numbers<[1], [0], [0], [1], [0, 0, 1, 1], [], []>} : vector<16x16xf32>, vector<16x16xf32>, vector<16x16xf32> -> vector<16x16xf32>
    %cst_294 = arith.constant dense<0.000000e+00> : vector<16x16xf32>
    %480 = tpu.matmul %0, %449, %cst_294 {dimension_numbers = #tpu.dot_dimension_numbers<[1], [0], [0], [1], [0, 0, 1, 1], [], []>} : vector<16x16xf32>, vector<16x16xf32>, vector<16x16xf32> -> vector<16x16xf32>
    %c64_295 = arith.constant 64 : index
    %c0_296 = arith.constant 0 : index
    %481 = vector.load %arg4[%c64_295, %c0_296] : memref<368x128xf32, #tpu.memory_space<vmem>>, vector<16x32xf32>
    %cst_297 = arith.constant dense<0.000000e+00> : vector<16x32xf32>
    %482 = tpu.matmul %479, %481, %cst_297 {dimension_numbers = #tpu.dot_dimension_numbers<[1], [0], [0], [1], [0, 0, 1, 1], [], []>} : vector<16x16xf32>, vector<16x32xf32>, vector<16x32xf32> -> vector<16x32xf32>
    %c80_298 = arith.constant 80 : index
    %c0_299 = arith.constant 0 : index
    %483 = vector.load %arg4[%c80_298, %c0_299] : memref<368x128xf32, #tpu.memory_space<vmem>>, vector<16x32xf32>
    %cst_300 = arith.constant dense<0.000000e+00> : vector<16x32xf32>
    %484 = tpu.matmul %480, %483, %cst_300 {dimension_numbers = #tpu.dot_dimension_numbers<[1], [0], [0], [1], [0, 0, 1, 1], [], []>} : vector<16x16xf32>, vector<16x32xf32>, vector<16x32xf32> -> vector<16x32xf32>
    %485 = arith.addf %482, %484 : vector<16x32xf32>
    %c128_301 = arith.constant 128 : index
    %c0_302 = arith.constant 0 : index
    %486 = vector.load %arg4[%c128_301, %c0_302] : memref<368x128xf32, #tpu.memory_space<vmem>>, vector<1x32xf32>
    %487 = vector.broadcast %486 : vector<1x32xf32> to vector<16x32xf32>
    %488 = arith.addf %485, %487 : vector<16x32xf32>
    %489 = arith.negf %488 : vector<16x32xf32>
    %490 = math.exp %489 : vector<16x32xf32>
    %cst_303 = arith.constant 1.000000e+00 : f32
    %491 = vector.broadcast %cst_303 : f32 to vector<16x32xf32>
    %492 = arith.addf %491, %490 : vector<16x32xf32>
    %493 = arith.divf %491, %492 : vector<16x32xf32>
    %494 = vector.extract_strided_slice %493 {offsets = [0, 0], sizes = [16, 16], strides = [1, 1]} : vector<16x32xf32> to vector<16x16xf32>
    %495 = vector.extract_strided_slice %493 {offsets = [0, 16], sizes = [16, 16], strides = [1, 1]} : vector<16x32xf32> to vector<16x16xf32>
    %496 = arith.mulf %494, %449 : vector<16x16xf32>
    %cst_304 = arith.constant dense<0.000000e+00> : vector<16x16xf32>
    %497 = tpu.matmul %0, %496, %cst_304 {dimension_numbers = #tpu.dot_dimension_numbers<[1], [0], [0], [1], [0, 0, 1, 1], [], []>} : vector<16x16xf32>, vector<16x16xf32>, vector<16x16xf32> -> vector<16x16xf32>
    %c96_305 = arith.constant 96 : index
    %c0_306 = arith.constant 0 : index
    %498 = vector.load %arg4[%c96_305, %c0_306] : memref<368x128xf32, #tpu.memory_space<vmem>>, vector<16x16xf32>
    %cst_307 = arith.constant dense<0.000000e+00> : vector<16x16xf32>
    %499 = tpu.matmul %479, %498, %cst_307 {dimension_numbers = #tpu.dot_dimension_numbers<[1], [0], [0], [1], [0, 0, 1, 1], [], []>} : vector<16x16xf32>, vector<16x16xf32>, vector<16x16xf32> -> vector<16x16xf32>
    %c112_308 = arith.constant 112 : index
    %c0_309 = arith.constant 0 : index
    %500 = vector.load %arg4[%c112_308, %c0_309] : memref<368x128xf32, #tpu.memory_space<vmem>>, vector<16x16xf32>
    %cst_310 = arith.constant dense<0.000000e+00> : vector<16x16xf32>
    %501 = tpu.matmul %497, %500, %cst_310 {dimension_numbers = #tpu.dot_dimension_numbers<[1], [0], [0], [1], [0, 0, 1, 1], [], []>} : vector<16x16xf32>, vector<16x16xf32>, vector<16x16xf32> -> vector<16x16xf32>
    %502 = arith.addf %499, %501 : vector<16x16xf32>
    %c136_311 = arith.constant 136 : index
    %c0_312 = arith.constant 0 : index
    %503 = vector.load %arg4[%c136_311, %c0_312] : memref<368x128xf32, #tpu.memory_space<vmem>>, vector<1x16xf32>
    %504 = vector.broadcast %503 : vector<1x16xf32> to vector<16x16xf32>
    %505 = arith.addf %502, %504 : vector<16x16xf32>
    %506 = math.tanh %505 : vector<16x16xf32>
    %507 = arith.mulf %495, %449 : vector<16x16xf32>
    %cst_313 = arith.constant 1.000000e+00 : f32
    %508 = vector.broadcast %cst_313 : f32 to vector<16x16xf32>
    %509 = arith.subf %508, %495 : vector<16x16xf32>
    %510 = arith.mulf %509, %506 : vector<16x16xf32>
    %511 = arith.addf %507, %510 : vector<16x16xf32>
    %cst_314 = arith.constant 0.000000e+00 : f32
    %512 = vector.broadcast %cst_314 : f32 to vector<8x32xf32>
    %cst_315 = arith.constant 0.000000e+00 : f32
    %513 = vector.broadcast %cst_315 : f32 to vector<8x32xf32>
    %cst_316 = arith.constant 0.000000e+00 : f32
    %514 = vector.broadcast %cst_316 : f32 to vector<8x32xf32>
    %cst_317 = arith.constant 0.000000e+00 : f32
    %515 = vector.broadcast %cst_317 : f32 to vector<8x32xf32>
    %516 = vector.extract_strided_slice %12 {offsets = [0, 0], sizes = [8, 128], strides = [1, 1]} : vector<64x128xf32> to vector<8x128xf32>
    %c152 = arith.constant 152 : index
    %c0_318 = arith.constant 0 : index
    %517 = vector.load %arg4[%c152, %c0_318] : memref<368x128xf32, #tpu.memory_space<vmem>>, vector<32x128xf32>
    %cst_319 = arith.constant dense<0.000000e+00> : vector<8x128xf32>
    %518 = tpu.matmul %512, %517, %cst_319 {dimension_numbers = #tpu.dot_dimension_numbers<[1], [0], [0], [1], [0, 0, 1, 1], [], []>} : vector<8x32xf32>, vector<32x128xf32>, vector<8x128xf32> -> vector<8x128xf32>
    %519 = arith.addf %516, %518 : vector<8x128xf32>
    %c184 = arith.constant 184 : index
    %c0_320 = arith.constant 0 : index
    %520 = vector.load %arg4[%c184, %c0_320] : memref<368x128xf32, #tpu.memory_space<vmem>>, vector<1x128xf32>
    %521 = vector.broadcast %520 : vector<1x128xf32> to vector<8x128xf32>
    %522 = arith.addf %519, %521 : vector<8x128xf32>
    %523 = arith.negf %522 : vector<8x128xf32>
    %524 = math.exp %523 : vector<8x128xf32>
    %cst_321 = arith.constant 1.000000e+00 : f32
    %525 = vector.broadcast %cst_321 : f32 to vector<8x128xf32>
    %526 = arith.addf %525, %524 : vector<8x128xf32>
    %527 = arith.divf %525, %526 : vector<8x128xf32>
    %528 = math.tanh %522 : vector<8x128xf32>
    %529 = vector.extract_strided_slice %527 {offsets = [0, 0], sizes = [8, 32], strides = [1, 1]} : vector<8x128xf32> to vector<8x32xf32>
    %530 = vector.extract_strided_slice %527 {offsets = [0, 32], sizes = [8, 32], strides = [1, 1]} : vector<8x128xf32> to vector<8x32xf32>
    %531 = vector.extract_strided_slice %528 {offsets = [0, 64], sizes = [8, 32], strides = [1, 1]} : vector<8x128xf32> to vector<8x32xf32>
    %532 = vector.extract_strided_slice %527 {offsets = [0, 96], sizes = [8, 32], strides = [1, 1]} : vector<8x128xf32> to vector<8x32xf32>
    %533 = arith.mulf %530, %514 : vector<8x32xf32>
    %534 = arith.mulf %529, %531 : vector<8x32xf32>
    %535 = arith.addf %533, %534 : vector<8x32xf32>
    %536 = math.tanh %535 : vector<8x32xf32>
    %537 = arith.mulf %532, %536 : vector<8x32xf32>
    %c192 = arith.constant 192 : index
    %c0_322 = arith.constant 0 : index
    %538 = vector.load %arg4[%c192, %c0_322] : memref<368x128xf32, #tpu.memory_space<vmem>>, vector<32x128xf32>
    %cst_323 = arith.constant dense<0.000000e+00> : vector<8x128xf32>
    %539 = tpu.matmul %537, %538, %cst_323 {dimension_numbers = #tpu.dot_dimension_numbers<[1], [0], [0], [1], [0, 0, 1, 1], [], []>} : vector<8x32xf32>, vector<32x128xf32>, vector<8x128xf32> -> vector<8x128xf32>
    %c224 = arith.constant 224 : index
    %c0_324 = arith.constant 0 : index
    %540 = vector.load %arg4[%c224, %c0_324] : memref<368x128xf32, #tpu.memory_space<vmem>>, vector<32x128xf32>
    %cst_325 = arith.constant dense<0.000000e+00> : vector<8x128xf32>
    %541 = tpu.matmul %513, %540, %cst_325 {dimension_numbers = #tpu.dot_dimension_numbers<[1], [0], [0], [1], [0, 0, 1, 1], [], []>} : vector<8x32xf32>, vector<32x128xf32>, vector<8x128xf32> -> vector<8x128xf32>
    %542 = arith.addf %539, %541 : vector<8x128xf32>
    %c256 = arith.constant 256 : index
    %c0_326 = arith.constant 0 : index
    %543 = vector.load %arg4[%c256, %c0_326] : memref<368x128xf32, #tpu.memory_space<vmem>>, vector<1x128xf32>
    %544 = vector.broadcast %543 : vector<1x128xf32> to vector<8x128xf32>
    %545 = arith.addf %542, %544 : vector<8x128xf32>
    %546 = arith.negf %545 : vector<8x128xf32>
    %547 = math.exp %546 : vector<8x128xf32>
    %cst_327 = arith.constant 1.000000e+00 : f32
    %548 = vector.broadcast %cst_327 : f32 to vector<8x128xf32>
    %549 = arith.addf %548, %547 : vector<8x128xf32>
    %550 = arith.divf %548, %549 : vector<8x128xf32>
    %551 = math.tanh %545 : vector<8x128xf32>
    %552 = vector.extract_strided_slice %550 {offsets = [0, 0], sizes = [8, 32], strides = [1, 1]} : vector<8x128xf32> to vector<8x32xf32>
    %553 = vector.extract_strided_slice %550 {offsets = [0, 32], sizes = [8, 32], strides = [1, 1]} : vector<8x128xf32> to vector<8x32xf32>
    %554 = vector.extract_strided_slice %551 {offsets = [0, 64], sizes = [8, 32], strides = [1, 1]} : vector<8x128xf32> to vector<8x32xf32>
    %555 = vector.extract_strided_slice %550 {offsets = [0, 96], sizes = [8, 32], strides = [1, 1]} : vector<8x128xf32> to vector<8x32xf32>
    %556 = arith.mulf %553, %515 : vector<8x32xf32>
    %557 = arith.mulf %552, %554 : vector<8x32xf32>
    %558 = arith.addf %556, %557 : vector<8x32xf32>
    %559 = math.tanh %558 : vector<8x32xf32>
    %560 = arith.mulf %555, %559 : vector<8x32xf32>
    %561 = vector.extract_strided_slice %12 {offsets = [8, 0], sizes = [8, 128], strides = [1, 1]} : vector<64x128xf32> to vector<8x128xf32>
    %c152_328 = arith.constant 152 : index
    %c0_329 = arith.constant 0 : index
    %562 = vector.load %arg4[%c152_328, %c0_329] : memref<368x128xf32, #tpu.memory_space<vmem>>, vector<32x128xf32>
    %cst_330 = arith.constant dense<0.000000e+00> : vector<8x128xf32>
    %563 = tpu.matmul %537, %562, %cst_330 {dimension_numbers = #tpu.dot_dimension_numbers<[1], [0], [0], [1], [0, 0, 1, 1], [], []>} : vector<8x32xf32>, vector<32x128xf32>, vector<8x128xf32> -> vector<8x128xf32>
    %564 = arith.addf %561, %563 : vector<8x128xf32>
    %c184_331 = arith.constant 184 : index
    %c0_332 = arith.constant 0 : index
    %565 = vector.load %arg4[%c184_331, %c0_332] : memref<368x128xf32, #tpu.memory_space<vmem>>, vector<1x128xf32>
    %566 = vector.broadcast %565 : vector<1x128xf32> to vector<8x128xf32>
    %567 = arith.addf %564, %566 : vector<8x128xf32>
    %568 = arith.negf %567 : vector<8x128xf32>
    %569 = math.exp %568 : vector<8x128xf32>
    %cst_333 = arith.constant 1.000000e+00 : f32
    %570 = vector.broadcast %cst_333 : f32 to vector<8x128xf32>
    %571 = arith.addf %570, %569 : vector<8x128xf32>
    %572 = arith.divf %570, %571 : vector<8x128xf32>
    %573 = math.tanh %567 : vector<8x128xf32>
    %574 = vector.extract_strided_slice %572 {offsets = [0, 0], sizes = [8, 32], strides = [1, 1]} : vector<8x128xf32> to vector<8x32xf32>
    %575 = vector.extract_strided_slice %572 {offsets = [0, 32], sizes = [8, 32], strides = [1, 1]} : vector<8x128xf32> to vector<8x32xf32>
    %576 = vector.extract_strided_slice %573 {offsets = [0, 64], sizes = [8, 32], strides = [1, 1]} : vector<8x128xf32> to vector<8x32xf32>
    %577 = vector.extract_strided_slice %572 {offsets = [0, 96], sizes = [8, 32], strides = [1, 1]} : vector<8x128xf32> to vector<8x32xf32>
    %578 = arith.mulf %575, %535 : vector<8x32xf32>
    %579 = arith.mulf %574, %576 : vector<8x32xf32>
    %580 = arith.addf %578, %579 : vector<8x32xf32>
    %581 = math.tanh %580 : vector<8x32xf32>
    %582 = arith.mulf %577, %581 : vector<8x32xf32>
    %c192_334 = arith.constant 192 : index
    %c0_335 = arith.constant 0 : index
    %583 = vector.load %arg4[%c192_334, %c0_335] : memref<368x128xf32, #tpu.memory_space<vmem>>, vector<32x128xf32>
    %cst_336 = arith.constant dense<0.000000e+00> : vector<8x128xf32>
    %584 = tpu.matmul %582, %583, %cst_336 {dimension_numbers = #tpu.dot_dimension_numbers<[1], [0], [0], [1], [0, 0, 1, 1], [], []>} : vector<8x32xf32>, vector<32x128xf32>, vector<8x128xf32> -> vector<8x128xf32>
    %c224_337 = arith.constant 224 : index
    %c0_338 = arith.constant 0 : index
    %585 = vector.load %arg4[%c224_337, %c0_338] : memref<368x128xf32, #tpu.memory_space<vmem>>, vector<32x128xf32>
    %cst_339 = arith.constant dense<0.000000e+00> : vector<8x128xf32>
    %586 = tpu.matmul %560, %585, %cst_339 {dimension_numbers = #tpu.dot_dimension_numbers<[1], [0], [0], [1], [0, 0, 1, 1], [], []>} : vector<8x32xf32>, vector<32x128xf32>, vector<8x128xf32> -> vector<8x128xf32>
    %587 = arith.addf %584, %586 : vector<8x128xf32>
    %c256_340 = arith.constant 256 : index
    %c0_341 = arith.constant 0 : index
    %588 = vector.load %arg4[%c256_340, %c0_341] : memref<368x128xf32, #tpu.memory_space<vmem>>, vector<1x128xf32>
    %589 = vector.broadcast %588 : vector<1x128xf32> to vector<8x128xf32>
    %590 = arith.addf %587, %589 : vector<8x128xf32>
    %591 = arith.negf %590 : vector<8x128xf32>
    %592 = math.exp %591 : vector<8x128xf32>
    %cst_342 = arith.constant 1.000000e+00 : f32
    %593 = vector.broadcast %cst_342 : f32 to vector<8x128xf32>
    %594 = arith.addf %593, %592 : vector<8x128xf32>
    %595 = arith.divf %593, %594 : vector<8x128xf32>
    %596 = math.tanh %590 : vector<8x128xf32>
    %597 = vector.extract_strided_slice %595 {offsets = [0, 0], sizes = [8, 32], strides = [1, 1]} : vector<8x128xf32> to vector<8x32xf32>
    %598 = vector.extract_strided_slice %595 {offsets = [0, 32], sizes = [8, 32], strides = [1, 1]} : vector<8x128xf32> to vector<8x32xf32>
    %599 = vector.extract_strided_slice %596 {offsets = [0, 64], sizes = [8, 32], strides = [1, 1]} : vector<8x128xf32> to vector<8x32xf32>
    %600 = vector.extract_strided_slice %595 {offsets = [0, 96], sizes = [8, 32], strides = [1, 1]} : vector<8x128xf32> to vector<8x32xf32>
    %601 = arith.mulf %598, %558 : vector<8x32xf32>
    %602 = arith.mulf %597, %599 : vector<8x32xf32>
    %603 = arith.addf %601, %602 : vector<8x32xf32>
    %604 = math.tanh %603 : vector<8x32xf32>
    %605 = arith.mulf %600, %604 : vector<8x32xf32>
    %606 = vector.extract_strided_slice %12 {offsets = [16, 0], sizes = [8, 128], strides = [1, 1]} : vector<64x128xf32> to vector<8x128xf32>
    %c152_343 = arith.constant 152 : index
    %c0_344 = arith.constant 0 : index
    %607 = vector.load %arg4[%c152_343, %c0_344] : memref<368x128xf32, #tpu.memory_space<vmem>>, vector<32x128xf32>
    %cst_345 = arith.constant dense<0.000000e+00> : vector<8x128xf32>
    %608 = tpu.matmul %582, %607, %cst_345 {dimension_numbers = #tpu.dot_dimension_numbers<[1], [0], [0], [1], [0, 0, 1, 1], [], []>} : vector<8x32xf32>, vector<32x128xf32>, vector<8x128xf32> -> vector<8x128xf32>
    %609 = arith.addf %606, %608 : vector<8x128xf32>
    %c184_346 = arith.constant 184 : index
    %c0_347 = arith.constant 0 : index
    %610 = vector.load %arg4[%c184_346, %c0_347] : memref<368x128xf32, #tpu.memory_space<vmem>>, vector<1x128xf32>
    %611 = vector.broadcast %610 : vector<1x128xf32> to vector<8x128xf32>
    %612 = arith.addf %609, %611 : vector<8x128xf32>
    %613 = arith.negf %612 : vector<8x128xf32>
    %614 = math.exp %613 : vector<8x128xf32>
    %cst_348 = arith.constant 1.000000e+00 : f32
    %615 = vector.broadcast %cst_348 : f32 to vector<8x128xf32>
    %616 = arith.addf %615, %614 : vector<8x128xf32>
    %617 = arith.divf %615, %616 : vector<8x128xf32>
    %618 = math.tanh %612 : vector<8x128xf32>
    %619 = vector.extract_strided_slice %617 {offsets = [0, 0], sizes = [8, 32], strides = [1, 1]} : vector<8x128xf32> to vector<8x32xf32>
    %620 = vector.extract_strided_slice %617 {offsets = [0, 32], sizes = [8, 32], strides = [1, 1]} : vector<8x128xf32> to vector<8x32xf32>
    %621 = vector.extract_strided_slice %618 {offsets = [0, 64], sizes = [8, 32], strides = [1, 1]} : vector<8x128xf32> to vector<8x32xf32>
    %622 = vector.extract_strided_slice %617 {offsets = [0, 96], sizes = [8, 32], strides = [1, 1]} : vector<8x128xf32> to vector<8x32xf32>
    %623 = arith.mulf %620, %580 : vector<8x32xf32>
    %624 = arith.mulf %619, %621 : vector<8x32xf32>
    %625 = arith.addf %623, %624 : vector<8x32xf32>
    %626 = math.tanh %625 : vector<8x32xf32>
    %627 = arith.mulf %622, %626 : vector<8x32xf32>
    %c192_349 = arith.constant 192 : index
    %c0_350 = arith.constant 0 : index
    %628 = vector.load %arg4[%c192_349, %c0_350] : memref<368x128xf32, #tpu.memory_space<vmem>>, vector<32x128xf32>
    %cst_351 = arith.constant dense<0.000000e+00> : vector<8x128xf32>
    %629 = tpu.matmul %627, %628, %cst_351 {dimension_numbers = #tpu.dot_dimension_numbers<[1], [0], [0], [1], [0, 0, 1, 1], [], []>} : vector<8x32xf32>, vector<32x128xf32>, vector<8x128xf32> -> vector<8x128xf32>
    %c224_352 = arith.constant 224 : index
    %c0_353 = arith.constant 0 : index
    %630 = vector.load %arg4[%c224_352, %c0_353] : memref<368x128xf32, #tpu.memory_space<vmem>>, vector<32x128xf32>
    %cst_354 = arith.constant dense<0.000000e+00> : vector<8x128xf32>
    %631 = tpu.matmul %605, %630, %cst_354 {dimension_numbers = #tpu.dot_dimension_numbers<[1], [0], [0], [1], [0, 0, 1, 1], [], []>} : vector<8x32xf32>, vector<32x128xf32>, vector<8x128xf32> -> vector<8x128xf32>
    %632 = arith.addf %629, %631 : vector<8x128xf32>
    %c256_355 = arith.constant 256 : index
    %c0_356 = arith.constant 0 : index
    %633 = vector.load %arg4[%c256_355, %c0_356] : memref<368x128xf32, #tpu.memory_space<vmem>>, vector<1x128xf32>
    %634 = vector.broadcast %633 : vector<1x128xf32> to vector<8x128xf32>
    %635 = arith.addf %632, %634 : vector<8x128xf32>
    %636 = arith.negf %635 : vector<8x128xf32>
    %637 = math.exp %636 : vector<8x128xf32>
    %cst_357 = arith.constant 1.000000e+00 : f32
    %638 = vector.broadcast %cst_357 : f32 to vector<8x128xf32>
    %639 = arith.addf %638, %637 : vector<8x128xf32>
    %640 = arith.divf %638, %639 : vector<8x128xf32>
    %641 = math.tanh %635 : vector<8x128xf32>
    %642 = vector.extract_strided_slice %640 {offsets = [0, 0], sizes = [8, 32], strides = [1, 1]} : vector<8x128xf32> to vector<8x32xf32>
    %643 = vector.extract_strided_slice %640 {offsets = [0, 32], sizes = [8, 32], strides = [1, 1]} : vector<8x128xf32> to vector<8x32xf32>
    %644 = vector.extract_strided_slice %641 {offsets = [0, 64], sizes = [8, 32], strides = [1, 1]} : vector<8x128xf32> to vector<8x32xf32>
    %645 = vector.extract_strided_slice %640 {offsets = [0, 96], sizes = [8, 32], strides = [1, 1]} : vector<8x128xf32> to vector<8x32xf32>
    %646 = arith.mulf %643, %603 : vector<8x32xf32>
    %647 = arith.mulf %642, %644 : vector<8x32xf32>
    %648 = arith.addf %646, %647 : vector<8x32xf32>
    %649 = math.tanh %648 : vector<8x32xf32>
    %650 = arith.mulf %645, %649 : vector<8x32xf32>
    %651 = vector.extract_strided_slice %12 {offsets = [24, 0], sizes = [8, 128], strides = [1, 1]} : vector<64x128xf32> to vector<8x128xf32>
    %c152_358 = arith.constant 152 : index
    %c0_359 = arith.constant 0 : index
    %652 = vector.load %arg4[%c152_358, %c0_359] : memref<368x128xf32, #tpu.memory_space<vmem>>, vector<32x128xf32>
    %cst_360 = arith.constant dense<0.000000e+00> : vector<8x128xf32>
    %653 = tpu.matmul %627, %652, %cst_360 {dimension_numbers = #tpu.dot_dimension_numbers<[1], [0], [0], [1], [0, 0, 1, 1], [], []>} : vector<8x32xf32>, vector<32x128xf32>, vector<8x128xf32> -> vector<8x128xf32>
    %654 = arith.addf %651, %653 : vector<8x128xf32>
    %c184_361 = arith.constant 184 : index
    %c0_362 = arith.constant 0 : index
    %655 = vector.load %arg4[%c184_361, %c0_362] : memref<368x128xf32, #tpu.memory_space<vmem>>, vector<1x128xf32>
    %656 = vector.broadcast %655 : vector<1x128xf32> to vector<8x128xf32>
    %657 = arith.addf %654, %656 : vector<8x128xf32>
    %658 = arith.negf %657 : vector<8x128xf32>
    %659 = math.exp %658 : vector<8x128xf32>
    %cst_363 = arith.constant 1.000000e+00 : f32
    %660 = vector.broadcast %cst_363 : f32 to vector<8x128xf32>
    %661 = arith.addf %660, %659 : vector<8x128xf32>
    %662 = arith.divf %660, %661 : vector<8x128xf32>
    %663 = math.tanh %657 : vector<8x128xf32>
    %664 = vector.extract_strided_slice %662 {offsets = [0, 0], sizes = [8, 32], strides = [1, 1]} : vector<8x128xf32> to vector<8x32xf32>
    %665 = vector.extract_strided_slice %662 {offsets = [0, 32], sizes = [8, 32], strides = [1, 1]} : vector<8x128xf32> to vector<8x32xf32>
    %666 = vector.extract_strided_slice %663 {offsets = [0, 64], sizes = [8, 32], strides = [1, 1]} : vector<8x128xf32> to vector<8x32xf32>
    %667 = vector.extract_strided_slice %662 {offsets = [0, 96], sizes = [8, 32], strides = [1, 1]} : vector<8x128xf32> to vector<8x32xf32>
    %668 = arith.mulf %665, %625 : vector<8x32xf32>
    %669 = arith.mulf %664, %666 : vector<8x32xf32>
    %670 = arith.addf %668, %669 : vector<8x32xf32>
    %671 = math.tanh %670 : vector<8x32xf32>
    %672 = arith.mulf %667, %671 : vector<8x32xf32>
    %c192_364 = arith.constant 192 : index
    %c0_365 = arith.constant 0 : index
    %673 = vector.load %arg4[%c192_364, %c0_365] : memref<368x128xf32, #tpu.memory_space<vmem>>, vector<32x128xf32>
    %cst_366 = arith.constant dense<0.000000e+00> : vector<8x128xf32>
    %674 = tpu.matmul %672, %673, %cst_366 {dimension_numbers = #tpu.dot_dimension_numbers<[1], [0], [0], [1], [0, 0, 1, 1], [], []>} : vector<8x32xf32>, vector<32x128xf32>, vector<8x128xf32> -> vector<8x128xf32>
    %c224_367 = arith.constant 224 : index
    %c0_368 = arith.constant 0 : index
    %675 = vector.load %arg4[%c224_367, %c0_368] : memref<368x128xf32, #tpu.memory_space<vmem>>, vector<32x128xf32>
    %cst_369 = arith.constant dense<0.000000e+00> : vector<8x128xf32>
    %676 = tpu.matmul %650, %675, %cst_369 {dimension_numbers = #tpu.dot_dimension_numbers<[1], [0], [0], [1], [0, 0, 1, 1], [], []>} : vector<8x32xf32>, vector<32x128xf32>, vector<8x128xf32> -> vector<8x128xf32>
    %677 = arith.addf %674, %676 : vector<8x128xf32>
    %c256_370 = arith.constant 256 : index
    %c0_371 = arith.constant 0 : index
    %678 = vector.load %arg4[%c256_370, %c0_371] : memref<368x128xf32, #tpu.memory_space<vmem>>, vector<1x128xf32>
    %679 = vector.broadcast %678 : vector<1x128xf32> to vector<8x128xf32>
    %680 = arith.addf %677, %679 : vector<8x128xf32>
    %681 = arith.negf %680 : vector<8x128xf32>
    %682 = math.exp %681 : vector<8x128xf32>
    %cst_372 = arith.constant 1.000000e+00 : f32
    %683 = vector.broadcast %cst_372 : f32 to vector<8x128xf32>
    %684 = arith.addf %683, %682 : vector<8x128xf32>
    %685 = arith.divf %683, %684 : vector<8x128xf32>
    %686 = math.tanh %680 : vector<8x128xf32>
    %687 = vector.extract_strided_slice %685 {offsets = [0, 0], sizes = [8, 32], strides = [1, 1]} : vector<8x128xf32> to vector<8x32xf32>
    %688 = vector.extract_strided_slice %685 {offsets = [0, 32], sizes = [8, 32], strides = [1, 1]} : vector<8x128xf32> to vector<8x32xf32>
    %689 = vector.extract_strided_slice %686 {offsets = [0, 64], sizes = [8, 32], strides = [1, 1]} : vector<8x128xf32> to vector<8x32xf32>
    %690 = vector.extract_strided_slice %685 {offsets = [0, 96], sizes = [8, 32], strides = [1, 1]} : vector<8x128xf32> to vector<8x32xf32>
    %691 = arith.mulf %688, %648 : vector<8x32xf32>
    %692 = arith.mulf %687, %689 : vector<8x32xf32>
    %693 = arith.addf %691, %692 : vector<8x32xf32>
    %694 = math.tanh %693 : vector<8x32xf32>
    %695 = arith.mulf %690, %694 : vector<8x32xf32>
    %696 = vector.extract_strided_slice %12 {offsets = [32, 0], sizes = [8, 128], strides = [1, 1]} : vector<64x128xf32> to vector<8x128xf32>
    %c152_373 = arith.constant 152 : index
    %c0_374 = arith.constant 0 : index
    %697 = vector.load %arg4[%c152_373, %c0_374] : memref<368x128xf32, #tpu.memory_space<vmem>>, vector<32x128xf32>
    %cst_375 = arith.constant dense<0.000000e+00> : vector<8x128xf32>
    %698 = tpu.matmul %672, %697, %cst_375 {dimension_numbers = #tpu.dot_dimension_numbers<[1], [0], [0], [1], [0, 0, 1, 1], [], []>} : vector<8x32xf32>, vector<32x128xf32>, vector<8x128xf32> -> vector<8x128xf32>
    %699 = arith.addf %696, %698 : vector<8x128xf32>
    %c184_376 = arith.constant 184 : index
    %c0_377 = arith.constant 0 : index
    %700 = vector.load %arg4[%c184_376, %c0_377] : memref<368x128xf32, #tpu.memory_space<vmem>>, vector<1x128xf32>
    %701 = vector.broadcast %700 : vector<1x128xf32> to vector<8x128xf32>
    %702 = arith.addf %699, %701 : vector<8x128xf32>
    %703 = arith.negf %702 : vector<8x128xf32>
    %704 = math.exp %703 : vector<8x128xf32>
    %cst_378 = arith.constant 1.000000e+00 : f32
    %705 = vector.broadcast %cst_378 : f32 to vector<8x128xf32>
    %706 = arith.addf %705, %704 : vector<8x128xf32>
    %707 = arith.divf %705, %706 : vector<8x128xf32>
    %708 = math.tanh %702 : vector<8x128xf32>
    %709 = vector.extract_strided_slice %707 {offsets = [0, 0], sizes = [8, 32], strides = [1, 1]} : vector<8x128xf32> to vector<8x32xf32>
    %710 = vector.extract_strided_slice %707 {offsets = [0, 32], sizes = [8, 32], strides = [1, 1]} : vector<8x128xf32> to vector<8x32xf32>
    %711 = vector.extract_strided_slice %708 {offsets = [0, 64], sizes = [8, 32], strides = [1, 1]} : vector<8x128xf32> to vector<8x32xf32>
    %712 = vector.extract_strided_slice %707 {offsets = [0, 96], sizes = [8, 32], strides = [1, 1]} : vector<8x128xf32> to vector<8x32xf32>
    %713 = arith.mulf %710, %670 : vector<8x32xf32>
    %714 = arith.mulf %709, %711 : vector<8x32xf32>
    %715 = arith.addf %713, %714 : vector<8x32xf32>
    %716 = math.tanh %715 : vector<8x32xf32>
    %717 = arith.mulf %712, %716 : vector<8x32xf32>
    %c192_379 = arith.constant 192 : index
    %c0_380 = arith.constant 0 : index
    %718 = vector.load %arg4[%c192_379, %c0_380] : memref<368x128xf32, #tpu.memory_space<vmem>>, vector<32x128xf32>
    %cst_381 = arith.constant dense<0.000000e+00> : vector<8x128xf32>
    %719 = tpu.matmul %717, %718, %cst_381 {dimension_numbers = #tpu.dot_dimension_numbers<[1], [0], [0], [1], [0, 0, 1, 1], [], []>} : vector<8x32xf32>, vector<32x128xf32>, vector<8x128xf32> -> vector<8x128xf32>
    %c224_382 = arith.constant 224 : index
    %c0_383 = arith.constant 0 : index
    %720 = vector.load %arg4[%c224_382, %c0_383] : memref<368x128xf32, #tpu.memory_space<vmem>>, vector<32x128xf32>
    %cst_384 = arith.constant dense<0.000000e+00> : vector<8x128xf32>
    %721 = tpu.matmul %695, %720, %cst_384 {dimension_numbers = #tpu.dot_dimension_numbers<[1], [0], [0], [1], [0, 0, 1, 1], [], []>} : vector<8x32xf32>, vector<32x128xf32>, vector<8x128xf32> -> vector<8x128xf32>
    %722 = arith.addf %719, %721 : vector<8x128xf32>
    %c256_385 = arith.constant 256 : index
    %c0_386 = arith.constant 0 : index
    %723 = vector.load %arg4[%c256_385, %c0_386] : memref<368x128xf32, #tpu.memory_space<vmem>>, vector<1x128xf32>
    %724 = vector.broadcast %723 : vector<1x128xf32> to vector<8x128xf32>
    %725 = arith.addf %722, %724 : vector<8x128xf32>
    %726 = arith.negf %725 : vector<8x128xf32>
    %727 = math.exp %726 : vector<8x128xf32>
    %cst_387 = arith.constant 1.000000e+00 : f32
    %728 = vector.broadcast %cst_387 : f32 to vector<8x128xf32>
    %729 = arith.addf %728, %727 : vector<8x128xf32>
    %730 = arith.divf %728, %729 : vector<8x128xf32>
    %731 = math.tanh %725 : vector<8x128xf32>
    %732 = vector.extract_strided_slice %730 {offsets = [0, 0], sizes = [8, 32], strides = [1, 1]} : vector<8x128xf32> to vector<8x32xf32>
    %733 = vector.extract_strided_slice %730 {offsets = [0, 32], sizes = [8, 32], strides = [1, 1]} : vector<8x128xf32> to vector<8x32xf32>
    %734 = vector.extract_strided_slice %731 {offsets = [0, 64], sizes = [8, 32], strides = [1, 1]} : vector<8x128xf32> to vector<8x32xf32>
    %735 = vector.extract_strided_slice %730 {offsets = [0, 96], sizes = [8, 32], strides = [1, 1]} : vector<8x128xf32> to vector<8x32xf32>
    %736 = arith.mulf %733, %693 : vector<8x32xf32>
    %737 = arith.mulf %732, %734 : vector<8x32xf32>
    %738 = arith.addf %736, %737 : vector<8x32xf32>
    %739 = math.tanh %738 : vector<8x32xf32>
    %740 = arith.mulf %735, %739 : vector<8x32xf32>
    %741 = vector.extract_strided_slice %12 {offsets = [40, 0], sizes = [8, 128], strides = [1, 1]} : vector<64x128xf32> to vector<8x128xf32>
    %c152_388 = arith.constant 152 : index
    %c0_389 = arith.constant 0 : index
    %742 = vector.load %arg4[%c152_388, %c0_389] : memref<368x128xf32, #tpu.memory_space<vmem>>, vector<32x128xf32>
    %cst_390 = arith.constant dense<0.000000e+00> : vector<8x128xf32>
    %743 = tpu.matmul %717, %742, %cst_390 {dimension_numbers = #tpu.dot_dimension_numbers<[1], [0], [0], [1], [0, 0, 1, 1], [], []>} : vector<8x32xf32>, vector<32x128xf32>, vector<8x128xf32> -> vector<8x128xf32>
    %744 = arith.addf %741, %743 : vector<8x128xf32>
    %c184_391 = arith.constant 184 : index
    %c0_392 = arith.constant 0 : index
    %745 = vector.load %arg4[%c184_391, %c0_392] : memref<368x128xf32, #tpu.memory_space<vmem>>, vector<1x128xf32>
    %746 = vector.broadcast %745 : vector<1x128xf32> to vector<8x128xf32>
    %747 = arith.addf %744, %746 : vector<8x128xf32>
    %748 = arith.negf %747 : vector<8x128xf32>
    %749 = math.exp %748 : vector<8x128xf32>
    %cst_393 = arith.constant 1.000000e+00 : f32
    %750 = vector.broadcast %cst_393 : f32 to vector<8x128xf32>
    %751 = arith.addf %750, %749 : vector<8x128xf32>
    %752 = arith.divf %750, %751 : vector<8x128xf32>
    %753 = math.tanh %747 : vector<8x128xf32>
    %754 = vector.extract_strided_slice %752 {offsets = [0, 0], sizes = [8, 32], strides = [1, 1]} : vector<8x128xf32> to vector<8x32xf32>
    %755 = vector.extract_strided_slice %752 {offsets = [0, 32], sizes = [8, 32], strides = [1, 1]} : vector<8x128xf32> to vector<8x32xf32>
    %756 = vector.extract_strided_slice %753 {offsets = [0, 64], sizes = [8, 32], strides = [1, 1]} : vector<8x128xf32> to vector<8x32xf32>
    %757 = vector.extract_strided_slice %752 {offsets = [0, 96], sizes = [8, 32], strides = [1, 1]} : vector<8x128xf32> to vector<8x32xf32>
    %758 = arith.mulf %755, %715 : vector<8x32xf32>
    %759 = arith.mulf %754, %756 : vector<8x32xf32>
    %760 = arith.addf %758, %759 : vector<8x32xf32>
    %761 = math.tanh %760 : vector<8x32xf32>
    %762 = arith.mulf %757, %761 : vector<8x32xf32>
    %c192_394 = arith.constant 192 : index
    %c0_395 = arith.constant 0 : index
    %763 = vector.load %arg4[%c192_394, %c0_395] : memref<368x128xf32, #tpu.memory_space<vmem>>, vector<32x128xf32>
    %cst_396 = arith.constant dense<0.000000e+00> : vector<8x128xf32>
    %764 = tpu.matmul %762, %763, %cst_396 {dimension_numbers = #tpu.dot_dimension_numbers<[1], [0], [0], [1], [0, 0, 1, 1], [], []>} : vector<8x32xf32>, vector<32x128xf32>, vector<8x128xf32> -> vector<8x128xf32>
    %c224_397 = arith.constant 224 : index
    %c0_398 = arith.constant 0 : index
    %765 = vector.load %arg4[%c224_397, %c0_398] : memref<368x128xf32, #tpu.memory_space<vmem>>, vector<32x128xf32>
    %cst_399 = arith.constant dense<0.000000e+00> : vector<8x128xf32>
    %766 = tpu.matmul %740, %765, %cst_399 {dimension_numbers = #tpu.dot_dimension_numbers<[1], [0], [0], [1], [0, 0, 1, 1], [], []>} : vector<8x32xf32>, vector<32x128xf32>, vector<8x128xf32> -> vector<8x128xf32>
    %767 = arith.addf %764, %766 : vector<8x128xf32>
    %c256_400 = arith.constant 256 : index
    %c0_401 = arith.constant 0 : index
    %768 = vector.load %arg4[%c256_400, %c0_401] : memref<368x128xf32, #tpu.memory_space<vmem>>, vector<1x128xf32>
    %769 = vector.broadcast %768 : vector<1x128xf32> to vector<8x128xf32>
    %770 = arith.addf %767, %769 : vector<8x128xf32>
    %771 = arith.negf %770 : vector<8x128xf32>
    %772 = math.exp %771 : vector<8x128xf32>
    %cst_402 = arith.constant 1.000000e+00 : f32
    %773 = vector.broadcast %cst_402 : f32 to vector<8x128xf32>
    %774 = arith.addf %773, %772 : vector<8x128xf32>
    %775 = arith.divf %773, %774 : vector<8x128xf32>
    %776 = math.tanh %770 : vector<8x128xf32>
    %777 = vector.extract_strided_slice %775 {offsets = [0, 0], sizes = [8, 32], strides = [1, 1]} : vector<8x128xf32> to vector<8x32xf32>
    %778 = vector.extract_strided_slice %775 {offsets = [0, 32], sizes = [8, 32], strides = [1, 1]} : vector<8x128xf32> to vector<8x32xf32>
    %779 = vector.extract_strided_slice %776 {offsets = [0, 64], sizes = [8, 32], strides = [1, 1]} : vector<8x128xf32> to vector<8x32xf32>
    %780 = vector.extract_strided_slice %775 {offsets = [0, 96], sizes = [8, 32], strides = [1, 1]} : vector<8x128xf32> to vector<8x32xf32>
    %781 = arith.mulf %778, %738 : vector<8x32xf32>
    %782 = arith.mulf %777, %779 : vector<8x32xf32>
    %783 = arith.addf %781, %782 : vector<8x32xf32>
    %784 = math.tanh %783 : vector<8x32xf32>
    %785 = arith.mulf %780, %784 : vector<8x32xf32>
    %786 = vector.extract_strided_slice %12 {offsets = [48, 0], sizes = [8, 128], strides = [1, 1]} : vector<64x128xf32> to vector<8x128xf32>
    %c152_403 = arith.constant 152 : index
    %c0_404 = arith.constant 0 : index
    %787 = vector.load %arg4[%c152_403, %c0_404] : memref<368x128xf32, #tpu.memory_space<vmem>>, vector<32x128xf32>
    %cst_405 = arith.constant dense<0.000000e+00> : vector<8x128xf32>
    %788 = tpu.matmul %762, %787, %cst_405 {dimension_numbers = #tpu.dot_dimension_numbers<[1], [0], [0], [1], [0, 0, 1, 1], [], []>} : vector<8x32xf32>, vector<32x128xf32>, vector<8x128xf32> -> vector<8x128xf32>
    %789 = arith.addf %786, %788 : vector<8x128xf32>
    %c184_406 = arith.constant 184 : index
    %c0_407 = arith.constant 0 : index
    %790 = vector.load %arg4[%c184_406, %c0_407] : memref<368x128xf32, #tpu.memory_space<vmem>>, vector<1x128xf32>
    %791 = vector.broadcast %790 : vector<1x128xf32> to vector<8x128xf32>
    %792 = arith.addf %789, %791 : vector<8x128xf32>
    %793 = arith.negf %792 : vector<8x128xf32>
    %794 = math.exp %793 : vector<8x128xf32>
    %cst_408 = arith.constant 1.000000e+00 : f32
    %795 = vector.broadcast %cst_408 : f32 to vector<8x128xf32>
    %796 = arith.addf %795, %794 : vector<8x128xf32>
    %797 = arith.divf %795, %796 : vector<8x128xf32>
    %798 = math.tanh %792 : vector<8x128xf32>
    %799 = vector.extract_strided_slice %797 {offsets = [0, 0], sizes = [8, 32], strides = [1, 1]} : vector<8x128xf32> to vector<8x32xf32>
    %800 = vector.extract_strided_slice %797 {offsets = [0, 32], sizes = [8, 32], strides = [1, 1]} : vector<8x128xf32> to vector<8x32xf32>
    %801 = vector.extract_strided_slice %798 {offsets = [0, 64], sizes = [8, 32], strides = [1, 1]} : vector<8x128xf32> to vector<8x32xf32>
    %802 = vector.extract_strided_slice %797 {offsets = [0, 96], sizes = [8, 32], strides = [1, 1]} : vector<8x128xf32> to vector<8x32xf32>
    %803 = arith.mulf %800, %760 : vector<8x32xf32>
    %804 = arith.mulf %799, %801 : vector<8x32xf32>
    %805 = arith.addf %803, %804 : vector<8x32xf32>
    %806 = math.tanh %805 : vector<8x32xf32>
    %807 = arith.mulf %802, %806 : vector<8x32xf32>
    %c192_409 = arith.constant 192 : index
    %c0_410 = arith.constant 0 : index
    %808 = vector.load %arg4[%c192_409, %c0_410] : memref<368x128xf32, #tpu.memory_space<vmem>>, vector<32x128xf32>
    %cst_411 = arith.constant dense<0.000000e+00> : vector<8x128xf32>
    %809 = tpu.matmul %807, %808, %cst_411 {dimension_numbers = #tpu.dot_dimension_numbers<[1], [0], [0], [1], [0, 0, 1, 1], [], []>} : vector<8x32xf32>, vector<32x128xf32>, vector<8x128xf32> -> vector<8x128xf32>
    %c224_412 = arith.constant 224 : index
    %c0_413 = arith.constant 0 : index
    %810 = vector.load %arg4[%c224_412, %c0_413] : memref<368x128xf32, #tpu.memory_space<vmem>>, vector<32x128xf32>
    %cst_414 = arith.constant dense<0.000000e+00> : vector<8x128xf32>
    %811 = tpu.matmul %785, %810, %cst_414 {dimension_numbers = #tpu.dot_dimension_numbers<[1], [0], [0], [1], [0, 0, 1, 1], [], []>} : vector<8x32xf32>, vector<32x128xf32>, vector<8x128xf32> -> vector<8x128xf32>
    %812 = arith.addf %809, %811 : vector<8x128xf32>
    %c256_415 = arith.constant 256 : index
    %c0_416 = arith.constant 0 : index
    %813 = vector.load %arg4[%c256_415, %c0_416] : memref<368x128xf32, #tpu.memory_space<vmem>>, vector<1x128xf32>
    %814 = vector.broadcast %813 : vector<1x128xf32> to vector<8x128xf32>
    %815 = arith.addf %812, %814 : vector<8x128xf32>
    %816 = arith.negf %815 : vector<8x128xf32>
    %817 = math.exp %816 : vector<8x128xf32>
    %cst_417 = arith.constant 1.000000e+00 : f32
    %818 = vector.broadcast %cst_417 : f32 to vector<8x128xf32>
    %819 = arith.addf %818, %817 : vector<8x128xf32>
    %820 = arith.divf %818, %819 : vector<8x128xf32>
    %821 = math.tanh %815 : vector<8x128xf32>
    %822 = vector.extract_strided_slice %820 {offsets = [0, 0], sizes = [8, 32], strides = [1, 1]} : vector<8x128xf32> to vector<8x32xf32>
    %823 = vector.extract_strided_slice %820 {offsets = [0, 32], sizes = [8, 32], strides = [1, 1]} : vector<8x128xf32> to vector<8x32xf32>
    %824 = vector.extract_strided_slice %821 {offsets = [0, 64], sizes = [8, 32], strides = [1, 1]} : vector<8x128xf32> to vector<8x32xf32>
    %825 = vector.extract_strided_slice %820 {offsets = [0, 96], sizes = [8, 32], strides = [1, 1]} : vector<8x128xf32> to vector<8x32xf32>
    %826 = arith.mulf %823, %783 : vector<8x32xf32>
    %827 = arith.mulf %822, %824 : vector<8x32xf32>
    %828 = arith.addf %826, %827 : vector<8x32xf32>
    %829 = math.tanh %828 : vector<8x32xf32>
    %830 = arith.mulf %825, %829 : vector<8x32xf32>
    %831 = vector.extract_strided_slice %12 {offsets = [56, 0], sizes = [8, 128], strides = [1, 1]} : vector<64x128xf32> to vector<8x128xf32>
    %c152_418 = arith.constant 152 : index
    %c0_419 = arith.constant 0 : index
    %832 = vector.load %arg4[%c152_418, %c0_419] : memref<368x128xf32, #tpu.memory_space<vmem>>, vector<32x128xf32>
    %cst_420 = arith.constant dense<0.000000e+00> : vector<8x128xf32>
    %833 = tpu.matmul %807, %832, %cst_420 {dimension_numbers = #tpu.dot_dimension_numbers<[1], [0], [0], [1], [0, 0, 1, 1], [], []>} : vector<8x32xf32>, vector<32x128xf32>, vector<8x128xf32> -> vector<8x128xf32>
    %834 = arith.addf %831, %833 : vector<8x128xf32>
    %c184_421 = arith.constant 184 : index
    %c0_422 = arith.constant 0 : index
    %835 = vector.load %arg4[%c184_421, %c0_422] : memref<368x128xf32, #tpu.memory_space<vmem>>, vector<1x128xf32>
    %836 = vector.broadcast %835 : vector<1x128xf32> to vector<8x128xf32>
    %837 = arith.addf %834, %836 : vector<8x128xf32>
    %838 = arith.negf %837 : vector<8x128xf32>
    %839 = math.exp %838 : vector<8x128xf32>
    %cst_423 = arith.constant 1.000000e+00 : f32
    %840 = vector.broadcast %cst_423 : f32 to vector<8x128xf32>
    %841 = arith.addf %840, %839 : vector<8x128xf32>
    %842 = arith.divf %840, %841 : vector<8x128xf32>
    %843 = math.tanh %837 : vector<8x128xf32>
    %844 = vector.extract_strided_slice %842 {offsets = [0, 0], sizes = [8, 32], strides = [1, 1]} : vector<8x128xf32> to vector<8x32xf32>
    %845 = vector.extract_strided_slice %842 {offsets = [0, 32], sizes = [8, 32], strides = [1, 1]} : vector<8x128xf32> to vector<8x32xf32>
    %846 = vector.extract_strided_slice %843 {offsets = [0, 64], sizes = [8, 32], strides = [1, 1]} : vector<8x128xf32> to vector<8x32xf32>
    %847 = vector.extract_strided_slice %842 {offsets = [0, 96], sizes = [8, 32], strides = [1, 1]} : vector<8x128xf32> to vector<8x32xf32>
    %848 = arith.mulf %845, %805 : vector<8x32xf32>
    %849 = arith.mulf %844, %846 : vector<8x32xf32>
    %850 = arith.addf %848, %849 : vector<8x32xf32>
    %851 = math.tanh %850 : vector<8x32xf32>
    %852 = arith.mulf %847, %851 : vector<8x32xf32>
    %c192_424 = arith.constant 192 : index
    %c0_425 = arith.constant 0 : index
    %853 = vector.load %arg4[%c192_424, %c0_425] : memref<368x128xf32, #tpu.memory_space<vmem>>, vector<32x128xf32>
    %cst_426 = arith.constant dense<0.000000e+00> : vector<8x128xf32>
    %854 = tpu.matmul %852, %853, %cst_426 {dimension_numbers = #tpu.dot_dimension_numbers<[1], [0], [0], [1], [0, 0, 1, 1], [], []>} : vector<8x32xf32>, vector<32x128xf32>, vector<8x128xf32> -> vector<8x128xf32>
    %c224_427 = arith.constant 224 : index
    %c0_428 = arith.constant 0 : index
    %855 = vector.load %arg4[%c224_427, %c0_428] : memref<368x128xf32, #tpu.memory_space<vmem>>, vector<32x128xf32>
    %cst_429 = arith.constant dense<0.000000e+00> : vector<8x128xf32>
    %856 = tpu.matmul %830, %855, %cst_429 {dimension_numbers = #tpu.dot_dimension_numbers<[1], [0], [0], [1], [0, 0, 1, 1], [], []>} : vector<8x32xf32>, vector<32x128xf32>, vector<8x128xf32> -> vector<8x128xf32>
    %857 = arith.addf %854, %856 : vector<8x128xf32>
    %c256_430 = arith.constant 256 : index
    %c0_431 = arith.constant 0 : index
    %858 = vector.load %arg4[%c256_430, %c0_431] : memref<368x128xf32, #tpu.memory_space<vmem>>, vector<1x128xf32>
    %859 = vector.broadcast %858 : vector<1x128xf32> to vector<8x128xf32>
    %860 = arith.addf %857, %859 : vector<8x128xf32>
    %861 = arith.negf %860 : vector<8x128xf32>
    %862 = math.exp %861 : vector<8x128xf32>
    %cst_432 = arith.constant 1.000000e+00 : f32
    %863 = vector.broadcast %cst_432 : f32 to vector<8x128xf32>
    %864 = arith.addf %863, %862 : vector<8x128xf32>
    %865 = arith.divf %863, %864 : vector<8x128xf32>
    %866 = math.tanh %860 : vector<8x128xf32>
    %867 = vector.extract_strided_slice %865 {offsets = [0, 0], sizes = [8, 32], strides = [1, 1]} : vector<8x128xf32> to vector<8x32xf32>
    %868 = vector.extract_strided_slice %865 {offsets = [0, 32], sizes = [8, 32], strides = [1, 1]} : vector<8x128xf32> to vector<8x32xf32>
    %869 = vector.extract_strided_slice %866 {offsets = [0, 64], sizes = [8, 32], strides = [1, 1]} : vector<8x128xf32> to vector<8x32xf32>
    %870 = vector.extract_strided_slice %865 {offsets = [0, 96], sizes = [8, 32], strides = [1, 1]} : vector<8x128xf32> to vector<8x32xf32>
    %871 = arith.mulf %868, %828 : vector<8x32xf32>
    %872 = arith.mulf %867, %869 : vector<8x32xf32>
    %873 = arith.addf %871, %872 : vector<8x32xf32>
    %874 = math.tanh %873 : vector<8x32xf32>
    %875 = arith.mulf %870, %874 : vector<8x32xf32>
    %876 = vector.extract_strided_slice %875 {offsets = [0, 0], sizes = [2, 32], strides = [1, 1]} : vector<8x32xf32> to vector<2x32xf32>
    %c0_433 = arith.constant 0 : index
    %c0_434 = arith.constant 0 : index
    %877 = vector.load %arg3[%c0_433, %c0_434] : memref<2x6xf32, #tpu.memory_space<vmem>>, vector<2x6xf32>
    %c264 = arith.constant 264 : index
    %c0_435 = arith.constant 0 : index
    %878 = vector.load %arg4[%c264, %c0_435] : memref<368x128xf32, #tpu.memory_space<vmem>>, vector<6x32xf32>
    %cst_436 = arith.constant dense<0.000000e+00> : vector<2x32xf32>
    %879 = tpu.matmul %877, %878, %cst_436 {dimension_numbers = #tpu.dot_dimension_numbers<[1], [0], [0], [1], [0, 0, 1, 1], [], []>} : vector<2x6xf32>, vector<6x32xf32>, vector<2x32xf32> -> vector<2x32xf32>
    %c272 = arith.constant 272 : index
    %c0_437 = arith.constant 0 : index
    %880 = vector.load %arg4[%c272, %c0_437] : memref<368x128xf32, #tpu.memory_space<vmem>>, vector<1x32xf32>
    %881 = vector.broadcast %880 : vector<1x32xf32> to vector<2x32xf32>
    %882 = arith.addf %879, %881 : vector<2x32xf32>
    %cst_438 = arith.constant 0.000000e+00 : f32
    %883 = vector.broadcast %cst_438 : f32 to vector<2x32xf32>
    %884 = arith.maximumf %882, %883 : vector<2x32xf32>
    %c296 = arith.constant 296 : index
    %c0_439 = arith.constant 0 : index
    %885 = vector.load %arg4[%c296, %c0_439] : memref<368x128xf32, #tpu.memory_space<vmem>>, vector<32x4xf32>
    %cst_440 = arith.constant dense<0.000000e+00> : vector<2x4xf32>
    %886 = tpu.matmul %876, %885, %cst_440 {dimension_numbers = #tpu.dot_dimension_numbers<[1], [0], [0], [1], [0, 0, 1, 1], [], []>} : vector<2x32xf32>, vector<32x4xf32>, vector<2x4xf32> -> vector<2x4xf32>
    %c328 = arith.constant 328 : index
    %c0_441 = arith.constant 0 : index
    %887 = vector.load %arg4[%c328, %c0_441] : memref<368x128xf32, #tpu.memory_space<vmem>>, vector<32x4xf32>
    %cst_442 = arith.constant dense<0.000000e+00> : vector<2x4xf32>
    %888 = tpu.matmul %884, %887, %cst_442 {dimension_numbers = #tpu.dot_dimension_numbers<[1], [0], [0], [1], [0, 0, 1, 1], [], []>} : vector<2x32xf32>, vector<32x4xf32>, vector<2x4xf32> -> vector<2x4xf32>
    %889 = arith.addf %886, %888 : vector<2x4xf32>
    %cst_443 = arith.constant dense<0.000000e+00> : vector<16x16xf32>
    %890 = tpu.matmul %0, %511, %cst_443 {dimension_numbers = #tpu.dot_dimension_numbers<[1], [0], [0], [1], [0, 0, 1, 1], [], []>} : vector<16x16xf32>, vector<16x16xf32>, vector<16x16xf32> -> vector<16x16xf32>
    %c280 = arith.constant 280 : index
    %c0_444 = arith.constant 0 : index
    %891 = vector.load %arg4[%c280, %c0_444] : memref<368x128xf32, #tpu.memory_space<vmem>>, vector<16x4xf32>
    %cst_445 = arith.constant dense<0.000000e+00> : vector<16x4xf32>
    %892 = tpu.matmul %890, %891, %cst_445 {dimension_numbers = #tpu.dot_dimension_numbers<[1], [0], [0], [1], [0, 0, 1, 1], [], []>} : vector<16x16xf32>, vector<16x4xf32>, vector<16x4xf32> -> vector<16x4xf32>
    %cst_446 = arith.constant dense<0.000000e+00> : vector<16xf32>
    %893 = vector.multi_reduction <add>, %0, %cst_446 [1] : vector<16x16xf32> to vector<16xf32>
    %894 = vector.shape_cast %893 : vector<16xf32> to vector<16x1xf32>
    %895 = vector.shape_cast %892 : vector<16x4xf32> to vector<2x8x4xf32>
    %896 = vector.shape_cast %894 : vector<16x1xf32> to vector<2x8x1xf32>
    %897 = vector.shape_cast %889 : vector<2x4xf32> to vector<2x1x4xf32>
    %898 = vector.broadcast %896 : vector<2x8x1xf32> to vector<2x8x4xf32>
    %899 = vector.broadcast %897 : vector<2x1x4xf32> to vector<2x8x4xf32>
    %900 = arith.mulf %898, %899 : vector<2x8x4xf32>
    %901 = arith.addf %895, %900 : vector<2x8x4xf32>
    %c360 = arith.constant 360 : index
    %c0_447 = arith.constant 0 : index
    %902 = vector.load %arg4[%c360, %c0_447] : memref<368x128xf32, #tpu.memory_space<vmem>>, vector<1x4xf32>
    %903 = vector.shape_cast %902 : vector<1x4xf32> to vector<1x1x4xf32>
    %904 = vector.broadcast %903 : vector<1x1x4xf32> to vector<2x8x4xf32>
    %905 = arith.addf %901, %904 : vector<2x8x4xf32>
    %906 = math.tanh %905 : vector<2x8x4xf32>
    %c0_448 = arith.constant 0 : index
    %c0_449 = arith.constant 0 : index
    %c0_450 = arith.constant 0 : index
    %907 = vector.load %arg5[%c0_448, %c0_449, %c0_450] : memref<2x8x4xf32, #tpu.memory_space<vmem>>, vector<2x8x4xf32>
    tpu.vector_store %arg5[%c0_448, %c0_449, %c0_450], %906 {strides = array<i32>} : memref<2x8x4xf32, #tpu.memory_space<vmem>>, vector<2x8x4xf32>,
    return
  }
}

</mosaic_0001>

<llo_original>
// kernel: tpu_custom_call.1
$region0: #{tpu_custom_call.1}
  #allocation0 [shape = 'u32[]', space=smem, size = 0x4, offset = 0x4, fixed_abs, tag = 'smem constant byte address 0x4 - core index']
  #allocation1 [shape = 'u32[72,128]{1,0:T(1,128)}', space=vmem, size = 0x9000, scoped, tag = 'internal scratch']
  #allocation2 [shape = 'f32[128,32]{1,0:T(8,128)}', space=vmem, size = 0x10000, scoped, tag = 'scratch operand']
  #allocation3 [shape = 'f32[128,16]{1,0:T(8,128)}', space=vmem, size = 0x10000, scoped, tag = 'scratch operand']
  %s0 = inlined_call_operand.vmem [shape: f32[128,4], index: 0, kind: input, shape index: {}]
  %s1 = inlined_call_operand.vmem [shape: f32[64,4], index: 1, kind: input, shape index: {}]
  %s2 = inlined_call_operand.vmem [shape: f32[128,128], index: 2, kind: input, shape index: {}]
  %s3 = inlined_call_operand.vmem [shape: f32[2,6], index: 3, kind: input, shape index: {}]
  %s4 = inlined_call_operand.hbm [shape: f32[368,128], index: 4, kind: input, shape index: {}]
  %s5 = inlined_call_operand.vmem [shape: f32[2,8,4], index: 5, kind: output, shape index: {}]
  %s6 = sld [smem:[#allocation0]]
  $region34: #{tpu_custom_call.1} parent=0
    _
  %s8 = ssub.s32 1, %s6
  %s9 = scalar_select 0, %s8, %s6
  $region1: #{tpu_custom_call.1} parent=0
    #allocation4 [shape = 'u8[188416]{0}', space=vmem, size = 0x2e000, scoped, tag = 'input window, operand 4, single buffered']
    #allocation5 [shape = 's32[1]{0}', space=sflag, size = 0x4, scoped, tag = 'scoped memory for tpu_custom_call.1']
    %10 = vsyncpa [#allocation5], 0
    // Predicated region
    $region2: #{tpu_custom_call.1} parent=1 // pred_check
      _
    $region3: #{tpu_custom_call.1} parent=1 // pred_check_branch
      %12 = sbr.rel (0) target = $region5
    $region4: #{tpu_custom_call.1} parent=1 // pred_region
      _
    $region5: #{tpu_custom_call.1} parent=1 // pred_fallthru
      _
    // Predicated region
    $region6: #{tpu_custom_call.1} parent=1 // pred_check
      _
    $region7: #{tpu_custom_call.1} parent=1 // pred_check_branch
      %14 = sbr.rel (0) target = $region9
    $region8: #{tpu_custom_call.1} parent=1 // pred_region
      _
    $region9: #{tpu_custom_call.1} parent=1 // pred_fallthru
      _
    // Predicated region
    $region10: #{tpu_custom_call.1} parent=1 // pred_check
      _
    $region11: #{tpu_custom_call.1} parent=1 // pred_check_branch
      %16 = sbr.rel (0) target = $region13
    $region12: #{tpu_custom_call.1} parent=1 // pred_region
      _
    $region13: #{tpu_custom_call.1} parent=1 // pred_fallthru
      _
    // Predicated region
    $region14: #{tpu_custom_call.1} parent=1 // pred_check
      _
    $region15: #{tpu_custom_call.1} parent=1 // pred_check_branch
      %18 = sbr.rel (0) target = $region17
    $region16: #{tpu_custom_call.1} parent=1 // pred_region
      _
    $region17: #{tpu_custom_call.1} parent=1 // pred_fallthru
      _
    // Predicated region
    $region18: #{tpu_custom_call.1} parent=1 // pred_check
      _
    $region19: #{tpu_custom_call.1} parent=1 // pred_check_branch
      %20 = sbr.rel (0) target = $region21
    $region20: #{tpu_custom_call.1} parent=1 // pred_region
      %22 = vsyncadd [#allocation5], 0
      %s23 = sshll.u32 %s4, 4
      %s24 = int_to_ptr.hbm [resolvable:$true] %s23
      %s25 = sshll.u32 [#allocation4], 4
      %s26 = int_to_ptr.vmem [resolvable:$true] %s25
      %31 = dma.hbm_to_vmem [thread:$0]  %s24, 5888, %s26, [#allocation5], 128, 128, 8
    $region21: #{tpu_custom_call.1} parent=1 // pred_fallthru
      _
    // Predicated region
    $region22: #{tpu_custom_call.1} parent=1 // pred_check
      _
    $region23: #{tpu_custom_call.1} parent=1 // pred_check_branch
      %33 = sbr.rel (0) target = $region25
    $region24: #{tpu_custom_call.1} parent=1 // pred_region
      %35 = dma.done [#allocation5], 5888
    $region25: #{tpu_custom_call.1} parent=1 // pred_fallthru
      _
    %v36 = vld [vmem:[%s2] sm:$0xff]
    %v37 = vld [vmem:[%s2 + $0x8] sm:$0xff]
    %v38 = vld [vmem:[%s2] sm:$0xff]
    %v39 = vld [vmem:[%s2 + $0x8] sm:$0xff]
    %v40 = vld [vmem:[%s2 + $0x10] sm:$0xff]
    %v41 = vld [vmem:[%s2 + $0x18] sm:$0xff]
    %v42 = vld [vmem:[%s2 + $0x20] sm:$0xff]
    %v43 = vld [vmem:[%s2 + $0x28] sm:$0xff]
    %v44 = vld [vmem:[%s2 + $0x30] sm:$0xff]
    %v45 = vld [vmem:[%s2 + $0x38] sm:$0xff]
    %v46 = vld [vmem:[%s2 + $0x40] sm:$0xff]
    %v47 = vld [vmem:[%s2 + $0x48] sm:$0xff]
    %v48 = vld [vmem:[%s2 + $0x50] sm:$0xff]
    %v49 = vld [vmem:[%s2 + $0x58] sm:$0xff]
    %v50 = vld [vmem:[%s2 + $0x60] sm:$0xff]
    %v51 = vld [vmem:[%s2 + $0x68] sm:$0xff]
    %v52 = vld [vmem:[%s2 + $0x70] sm:$0xff]
    %v53 = vld [vmem:[%s2 + $0x78] sm:$0xff]
    %v54 = vld [vmem:[%s0] sm:$0xff]
    %v55 = vld [vmem:[%s0 + $0x8] sm:$0xff]
    %v56 = vld [vmem:[%s0 + $0x10] sm:$0xff]
    %v57 = vld [vmem:[%s0 + $0x18] sm:$0xff]
    %v58 = vld [vmem:[%s0 + $0x20] sm:$0xff]
    %v59 = vld [vmem:[%s0 + $0x28] sm:$0xff]
    %v60 = vld [vmem:[%s0 + $0x30] sm:$0xff]
    %v61 = vld [vmem:[%s0 + $0x38] sm:$0xff]
    %v62 = vld [vmem:[%s0 + $0x40] sm:$0xff]
    %v63 = vld [vmem:[%s0 + $0x48] sm:$0xff]
    %v64 = vld [vmem:[%s0 + $0x50] sm:$0xff]
    %v65 = vld [vmem:[%s0 + $0x58] sm:$0xff]
    %v66 = vld [vmem:[%s0 + $0x60] sm:$0xff]
    %v67 = vld [vmem:[%s0 + $0x68] sm:$0xff]
    %v68 = vld [vmem:[%s0 + $0x70] sm:$0xff]
    %v69 = vld [vmem:[%s0 + $0x78] sm:$0xff]
    %70 = vmatpush.msra.mxu0 %v69
    %71 = vmatpush.msra.mxu0 %v68
    %72 = vmatpush.msra.mxu0 %v67
    %73 = vmatpush.msra.mxu0 %v66
    %74 = vmatpush.msra.mxu0 %v65
    %75 = vmatpush.msra.mxu0 %v64
    %76 = vmatpush.msra.mxu0 %v63
    %77 = vmatpush.msra.mxu0 %v62
    %78 = vmatpush.msra.mxu0 %v61
    %79 = vmatpush.msra.mxu0 %v60
    %80 = vmatpush.msra.mxu0 %v59
    %81 = vmatpush.msra.mxu0 %v58
    %82 = vmatpush.msra.mxu0 %v57
    %83 = vmatpush.msra.mxu0 %v56
    %84 = vmatpush.msra.mxu0 %v55
    %85 = vmatpush.msra.mxu0 %v54
    %86 = vmatmul.f32.gmra.mxu0 %v38
    %v87 = vpop.f32.mrf.mxu0
    %v88 = vadd.f32 0.0, %v87
    %89 = vmatmul.f32.gmra.mxu0 %v39
    %v90 = vpop.f32.mrf.mxu0
    %v91 = vadd.f32 0.0, %v90
    %92 = vmatmul.f32.gmra.mxu0 %v40
    %v93 = vpop.f32.mrf.mxu0
    %v94 = vadd.f32 0.0, %v93
    %95 = vmatmul.f32.gmra.mxu0 %v41
    %v96 = vpop.f32.mrf.mxu0
    %v97 = vadd.f32 0.0, %v96
    %98 = vmatmul.f32.gmra.mxu0 %v42
    %v99 = vpop.f32.mrf.mxu0
    %v100 = vadd.f32 0.0, %v99
    %101 = vmatmul.f32.gmra.mxu0 %v43
    %v102 = vpop.f32.mrf.mxu0
    %v103 = vadd.f32 0.0, %v102
    %104 = vmatmul.f32.gmra.mxu0 %v44
    %v105 = vpop.f32.mrf.mxu0
    %v106 = vadd.f32 0.0, %v105
    %107 = vmatmul.f32.gmra.mxu0 %v45
    %v108 = vpop.f32.mrf.mxu0
    %v109 = vadd.f32 0.0, %v108
    %110 = vmatmul.f32.gmra.mxu0 %v46
    %v111 = vpop.f32.mrf.mxu0
    %v112 = vadd.f32 0.0, %v111
    %113 = vmatmul.f32.gmra.mxu0 %v47
    %v114 = vpop.f32.mrf.mxu0
    %v115 = vadd.f32 0.0, %v114
    %116 = vmatmul.f32.gmra.mxu0 %v48
    %v117 = vpop.f32.mrf.mxu0
    %v118 = vadd.f32 0.0, %v117
    %119 = vmatmul.f32.gmra.mxu0 %v49
    %v120 = vpop.f32.mrf.mxu0
    %v121 = vadd.f32 0.0, %v120
    %122 = vmatmul.f32.gmra.mxu0 %v50
    %v123 = vpop.f32.mrf.mxu0
    %v124 = vadd.f32 0.0, %v123
    %125 = vmatmul.f32.gmra.mxu0 %v51
    %v126 = vpop.f32.mrf.mxu0
    %v127 = vadd.f32 0.0, %v126
    %128 = vmatmul.f32.gmra.mxu0 %v52
    %v129 = vpop.f32.mrf.mxu0
    %v130 = vadd.f32 0.0, %v129
    %131 = vmatmul.f32.gmra.mxu0 %v53
    %v132 = vpop.f32.mrf.mxu0
    %v133 = vadd.f32 0.0, %v132
    %134 = vdwg.mxu0
    %v135 = vld [vmem:[#allocation4] sm:$0xf]
    %vm136 = vcmask 31744
    %v138 = vsel %vm136, %v88, 0
    %v141 = vsel %vm136, %v91, 0
    %v144 = vsel %vm136, %v94, 0
    %v147 = vsel %vm136, %v97, 0
    %v150 = vsel %vm136, %v100, 0
    %v153 = vsel %vm136, %v103, 0
    %v156 = vsel %vm136, %v106, 0
    %v159 = vsel %vm136, %v109, 0
    %v162 = vsel %vm136, %v112, 0
    %v165 = vsel %vm136, %v115, 0
    %v168 = vsel %vm136, %v118, 0
    %v171 = vsel %vm136, %v121, 0
    %v174 = vsel %vm136, %v124, 0
    %v177 = vsel %vm136, %v127, 0
    %v180 = vsel %vm136, %v130, 0
    %v183 = vsel %vm136, %v133, 0
    %vm185 = vcmask 1043456
    %v187 = vsel %vm185, %v135, 0
    %189 = vmatpush.msra.mxu0 0.0
    %190 = vmatpush.msra.mxu0 0.0
    %191 = vmatpush.msra.mxu0 0.0
    %192 = vmatpush.msra.mxu0 0.0
    %193 = vmatpush.msra.mxu0 0.0
    %194 = vmatpush.msra.mxu0 0.0
    %195 = vmatpush.msra.mxu0 0.0
    %196 = vmatpush.msra.mxu0 0.0
    %197 = vmatpush.msra.mxu0 0.0
    %198 = vmatpush.msra.mxu0 0.0
    %199 = vmatpush.msra.mxu0 0.0
    %200 = vmatpush.msra.mxu0 0.0
    %201 = vmatpush.msra.mxu0 0.0
    %202 = vmatpush.msra.mxu0 0.0
    %203 = vmatpush.msra.mxu0 0.0
    %204 = vmatpush.msra.mxu0 %v187
    %205 = vmatmul.f32.gmra.mxu0 %v138
    %v206 = vpop.f32.mrf.mxu0
    %v207 = vadd.f32 0.0, %v206
    %208 = vmatmul.f32.gmra.mxu0 %v141
    %v209 = vpop.f32.mrf.mxu0
    %v210 = vadd.f32 0.0, %v209
    %211 = vmatmul.f32.gmra.mxu0 %v144
    %v212 = vpop.f32.mrf.mxu0
    %v213 = vadd.f32 0.0, %v212
    %214 = vmatmul.f32.gmra.mxu0 %v147
    %v215 = vpop.f32.mrf.mxu0
    %v216 = vadd.f32 0.0, %v215
    %217 = vmatmul.f32.gmra.mxu0 %v150
    %v218 = vpop.f32.mrf.mxu0
    %v219 = vadd.f32 0.0, %v218
    %220 = vmatmul.f32.gmra.mxu0 %v153
    %v221 = vpop.f32.mrf.mxu0
    %v222 = vadd.f32 0.0, %v221
    %223 = vmatmul.f32.gmra.mxu0 %v156
    %v224 = vpop.f32.mrf.mxu0
    %v225 = vadd.f32 0.0, %v224
    %226 = vmatmul.f32.gmra.mxu0 %v159
    %v227 = vpop.f32.mrf.mxu0
    %v228 = vadd.f32 0.0, %v227
    %229 = vmatmul.f32.gmra.mxu0 %v162
    %v230 = vpop.f32.mrf.mxu0
    %v231 = vadd.f32 0.0, %v230
    %232 = vmatmul.f32.gmra.mxu0 %v165
    %v233 = vpop.f32.mrf.mxu0
    %v234 = vadd.f32 0.0, %v233
    %235 = vmatmul.f32.gmra.mxu0 %v168
    %v236 = vpop.f32.mrf.mxu0
    %v237 = vadd.f32 0.0, %v236
    %238 = vmatmul.f32.gmra.mxu0 %v171
    %v239 = vpop.f32.mrf.mxu0
    %v240 = vadd.f32 0.0, %v239
    %241 = vmatmul.f32.gmra.mxu0 %v174
    %v242 = vpop.f32.mrf.mxu0
    %v243 = vadd.f32 0.0, %v242
    %244 = vmatmul.f32.gmra.mxu0 %v177
    %v245 = vpop.f32.mrf.mxu0
    %v246 = vadd.f32 0.0, %v245
    %247 = vmatmul.f32.gmra.mxu0 %v180
    %v248 = vpop.f32.mrf.mxu0
    %v249 = vadd.f32 0.0, %v248
    %250 = vmatmul.f32.gmra.mxu0 %v183
    %v251 = vpop.f32.mrf.mxu0
    %v252 = vadd.f32 0.0, %v251
    %253 = vdwg.mxu0
    %vm254 = vcmask 261120
    %255 = vst.msk [vmem:[#allocation2] sm:$0xff] %vm254, %v207
    %256 = vst.msk [vmem:[#allocation2 + $0x8] sm:$0xff] %vm254, %v210
    %257 = vst.msk [vmem:[#allocation2 + $0x10] sm:$0xff] %vm254, %v213
    %258 = vst.msk [vmem:[#allocation2 + $0x18] sm:$0xff] %vm254, %v216
    %259 = vst.msk [vmem:[#allocation2 + $0x20] sm:$0xff] %vm254, %v219
    %260 = vst.msk [vmem:[#allocation2 + $0x28] sm:$0xff] %vm254, %v222
    %261 = vst.msk [vmem:[#allocation2 + $0x30] sm:$0xff] %vm254, %v225
    %262 = vst.msk [vmem:[#allocation2 + $0x38] sm:$0xff] %vm254, %v228
    %263 = vst.msk [vmem:[#allocation2 + $0x40] sm:$0xff] %vm254, %v231
    %264 = vst.msk [vmem:[#allocation2 + $0x48] sm:$0xff] %vm254, %v234
    %265 = vst.msk [vmem:[#allocation2 + $0x50] sm:$0xff] %vm254, %v237
    %266 = vst.msk [vmem:[#allocation2 + $0x58] sm:$0xff] %vm254, %v240
    %267 = vst.msk [vmem:[#allocation2 + $0x60] sm:$0xff] %vm254, %v243
    %268 = vst.msk [vmem:[#allocation2 + $0x68] sm:$0xff] %vm254, %v246
    %269 = vst.msk [vmem:[#allocation2 + $0x70] sm:$0xff] %vm254, %v249
    %270 = vst.msk [vmem:[#allocation2 + $0x78] sm:$0xff] %vm254, %v252
    %v271 = vld [vmem:[#allocation4 + $0x18] sm:$0xf]
    %v273 = vsel %vm185, %v271, 0
    %275 = vmatpush.msra.mxu0 0.0
    %276 = vmatpush.msra.mxu0 0.0
    %277 = vmatpush.msra.mxu0 0.0
    %278 = vmatpush.msra.mxu0 0.0
    %279 = vmatpush.msra.mxu0 0.0
    %280 = vmatpush.msra.mxu0 0.0
    %281 = vmatpush.msra.mxu0 0.0
    %282 = vmatpush.msra.mxu0 0.0
    %283 = vmatpush.msra.mxu0 0.0
    %284 = vmatpush.msra.mxu0 0.0
    %285 = vmatpush.msra.mxu0 0.0
    %286 = vmatpush.msra.mxu0 0.0
    %287 = vmatpush.msra.mxu0 0.0
    %288 = vmatpush.msra.mxu0 0.0
    %289 = vmatpush.msra.mxu0 0.0
    %290 = vmatpush.msra.mxu0 %v273
    %291 = vmatmul.f32.gmra.mxu0 %v138
    %v292 = vpop.f32.mrf.mxu0
    %v293 = vadd.f32 0.0, %v292
    %294 = vmatmul.f32.gmra.mxu0 %v141
    %v295 = vpop.f32.mrf.mxu0
    %v296 = vadd.f32 0.0, %v295
    %297 = vmatmul.f32.gmra.mxu0 %v144
    %v298 = vpop.f32.mrf.mxu0
    %v299 = vadd.f32 0.0, %v298
    %300 = vmatmul.f32.gmra.mxu0 %v147
    %v301 = vpop.f32.mrf.mxu0
    %v302 = vadd.f32 0.0, %v301
    %303 = vmatmul.f32.gmra.mxu0 %v150
    %v304 = vpop.f32.mrf.mxu0
    %v305 = vadd.f32 0.0, %v304
    %306 = vmatmul.f32.gmra.mxu0 %v153
    %v307 = vpop.f32.mrf.mxu0
    %v308 = vadd.f32 0.0, %v307
    %309 = vmatmul.f32.gmra.mxu0 %v156
    %v310 = vpop.f32.mrf.mxu0
    %v311 = vadd.f32 0.0, %v310
    %312 = vmatmul.f32.gmra.mxu0 %v159
    %v313 = vpop.f32.mrf.mxu0
    %v314 = vadd.f32 0.0, %v313
    %315 = vmatmul.f32.gmra.mxu0 %v162
    %v316 = vpop.f32.mrf.mxu0
    %v317 = vadd.f32 0.0, %v316
    %318 = vmatmul.f32.gmra.mxu0 %v165
    %v319 = vpop.f32.mrf.mxu0
    %v320 = vadd.f32 0.0, %v319
    %321 = vmatmul.f32.gmra.mxu0 %v168
    %v322 = vpop.f32.mrf.mxu0
    %v323 = vadd.f32 0.0, %v322
    %324 = vmatmul.f32.gmra.mxu0 %v171
    %v325 = vpop.f32.mrf.mxu0
    %v326 = vadd.f32 0.0, %v325
    %327 = vmatmul.f32.gmra.mxu0 %v174
    %v328 = vpop.f32.mrf.mxu0
    %v329 = vadd.f32 0.0, %v328
    %330 = vmatmul.f32.gmra.mxu0 %v177
    %v331 = vpop.f32.mrf.mxu0
    %v332 = vadd.f32 0.0, %v331
    %333 = vmatmul.f32.gmra.mxu0 %v180
    %v334 = vpop.f32.mrf.mxu0
    %v335 = vadd.f32 0.0, %v334
    %336 = vmatmul.f32.gmra.mxu0 %v183
    %v337 = vpop.f32.mrf.mxu0
    %v338 = vadd.f32 0.0, %v337
    %339 = vdwg.mxu0
    %vm340 = vcmask 130048
    %341 = vst.msk [vmem:[#allocation3] sm:$0xff] %vm340, %v293
    %342 = vst.msk [vmem:[#allocation3 + $0x8] sm:$0xff] %vm340, %v296
    %343 = vst.msk [vmem:[#allocation3 + $0x10] sm:$0xff] %vm340, %v299
    %344 = vst.msk [vmem:[#allocation3 + $0x18] sm:$0xff] %vm340, %v302
    %345 = vst.msk [vmem:[#allocation3 + $0x20] sm:$0xff] %vm340, %v305
    %346 = vst.msk [vmem:[#allocation3 + $0x28] sm:$0xff] %vm340, %v308
    %347 = vst.msk [vmem:[#allocation3 + $0x30] sm:$0xff] %vm340, %v311
    %348 = vst.msk [vmem:[#allocation3 + $0x38] sm:$0xff] %vm340, %v314
    %349 = vst.msk [vmem:[#allocation3 + $0x40] sm:$0xff] %vm340, %v317
    %350 = vst.msk [vmem:[#allocation3 + $0x48] sm:$0xff] %vm340, %v320
    %351 = vst.msk [vmem:[#allocation3 + $0x50] sm:$0xff] %vm340, %v323
    %352 = vst.msk [vmem:[#allocation3 + $0x58] sm:$0xff] %vm340, %v326
    %353 = vst.msk [vmem:[#allocation3 + $0x60] sm:$0xff] %vm340, %v329
    %354 = vst.msk [vmem:[#allocation3 + $0x68] sm:$0xff] %vm340, %v332
    %355 = vst.msk [vmem:[#allocation3 + $0x70] sm:$0xff] %vm340, %v335
    %356 = vst.msk [vmem:[#allocation3 + $0x78] sm:$0xff] %vm340, %v338
    %v357 = vld [vmem:[%s1] sm:$0xff]
    %v358 = vld [vmem:[%s1 + $0x8] sm:$0xff]
    %v359 = vld [vmem:[%s1 + $0x10] sm:$0xff]
    %v360 = vld [vmem:[%s1 + $0x18] sm:$0xff]
    %v361 = vld [vmem:[%s1 + $0x20] sm:$0xff]
    %v362 = vld [vmem:[%s1 + $0x28] sm:$0xff]
    %v363 = vld [vmem:[%s1 + $0x30] sm:$0xff]
    %v364 = vld [vmem:[%s1 + $0x38] sm:$0xff]
    %v365 = vld [vmem:[#allocation4 + $0x90] sm:$0xf]
    %v367 = vsel %vm136, %v357, 0
    %v370 = vsel %vm136, %v358, 0
    %v373 = vsel %vm136, %v359, 0
    %v376 = vsel %vm136, %v360, 0
    %v379 = vsel %vm136, %v361, 0
    %v382 = vsel %vm136, %v362, 0
    %v385 = vsel %vm136, %v363, 0
    %v388 = vsel %vm136, %v364, 0
    %v391 = vsel %vm185, %v365, 0
    %393 = vmatpush.msra.mxu0 0.0
    %394 = vmatpush.msra.mxu0 0.0
    %395 = vmatpush.msra.mxu0 0.0
    %396 = vmatpush.msra.mxu0 0.0
    %397 = vmatpush.msra.mxu0 0.0
    %398 = vmatpush.msra.mxu0 0.0
    %399 = vmatpush.msra.mxu0 0.0
    %400 = vmatpush.msra.mxu0 0.0
    %401 = vmatpush.msra.mxu0 0.0
    %402 = vmatpush.msra.mxu0 0.0
    %403 = vmatpush.msra.mxu0 0.0
    %404 = vmatpush.msra.mxu0 0.0
    %405 = vmatpush.msra.mxu0 0.0
    %406 = vmatpush.msra.mxu0 0.0
    %407 = vmatpush.msra.mxu0 0.0
    %408 = vmatpush.msra.mxu0 %v391
    %409 = vmatmul.f32.gmra.mxu0 %v367
    %v410 = vpop.f32.mrf.mxu0
    %v411 = vadd.f32 0.0, %v410
    %412 = vmatmul.f32.gmra.mxu0 %v370
    %v413 = vpop.f32.mrf.mxu0
    %v414 = vadd.f32 0.0, %v413
    %415 = vmatmul.f32.gmra.mxu0 %v373
    %v416 = vpop.f32.mrf.mxu0
    %v417 = vadd.f32 0.0, %v416
    %418 = vmatmul.f32.gmra.mxu0 %v376
    %v419 = vpop.f32.mrf.mxu0
    %v420 = vadd.f32 0.0, %v419
    %421 = vmatmul.f32.gmra.mxu0 %v379
    %v422 = vpop.f32.mrf.mxu0
    %v423 = vadd.f32 0.0, %v422
    %424 = vmatmul.f32.gmra.mxu0 %v382
    %v425 = vpop.f32.mrf.mxu0
    %v426 = vadd.f32 0.0, %v425
    %427 = vmatmul.f32.gmra.mxu0 %v385
    %v428 = vpop.f32.mrf.mxu0
    %v429 = vadd.f32 0.0, %v428
    %430 = vmatmul.f32.gmra.mxu0 %v388
    %v431 = vpop.f32.mrf.mxu0
    %v432 = vadd.f32 0.0, %v431
    %433 = vdwg.mxu0
    %v434 = vld [vmem:[#allocation2] sm:$0xff]
    %v435 = vld [vmem:[#allocation2 + $0x8] sm:$0xff]
    %v436 = vld [vmem:[#allocation4 + $0x8] sm:$0xff]
    %v437 = vld [vmem:[#allocation4 + $0x10] sm:$0xff]
    %v439 = vsel %vm340, 0.0, 0
    %441 = vmatpush.msra.mxu0 0.0
    %442 = vmatpush.msra.mxu0 0.0
    %443 = vmatpush.msra.mxu0 0.0
    %444 = vmatpush.msra.mxu0 0.0
    %445 = vmatpush.msra.mxu0 0.0
    %446 = vmatpush.msra.mxu0 0.0
    %447 = vmatpush.msra.mxu0 0.0
    %448 = vmatpush.msra.mxu0 0.0
    %449 = vmatpush.msra.mxu0 0.0
    %450 = vmatpush.msra.mxu0 0.0
    %451 = vmatpush.msra.mxu0 0.0
    %452 = vmatpush.msra.mxu0 0.0
    %453 = vmatpush.msra.mxu0 0.0
    %454 = vmatpush.msra.mxu0 0.0
    %455 = vmatpush.msra.mxu0 %v437
    %456 = vmatpush.msra.mxu0 %v436
    %457 = vmatmul.f32.gmra.mxu0 %v439
    %v458 = vpop.f32.mrf.mxu0
    %v459 = vadd.f32 0.0, %v458
    %460 = vmatmul.f32.gmra.mxu0 %v439
    %v461 = vpop.f32.mrf.mxu0
    %v462 = vadd.f32 0.0, %v461
    %463 = vdwg.mxu0
    %v464 = vadd.f32 %v434, %v459
    %v465 = vadd.f32 %v435, %v462
    %v466 = vld [vmem:[#allocation4 + $0x30] sm:$0x1]
    %v467 = vperm.slane %v466, 0
    %v468 = vadd.f32 %v464, %v467
    %v469 = vadd.f32 %v465, %v467
    %v470 = vxor.u32 %v468, 2147483648
    %v471 = vxor.u32 %v469, 2147483648
    %v472 = vmul.f32 %v470, 1.442695
    %v473 = vpow.pop %v472
    %v474 = vmul.f32 %v471, 1.442695
    %v475 = vpow.pop %v474
    %v476 = vadd.f32 %v473, 1.0
    %v477 = vadd.f32 %v475, 1.0
    %v478 = vrcp.pop %v476
    %v479 = vmul.f32 %v476, %v478
    %v480 = vsub.f32 1.0, %v479
    %v481 = vmul.f32 %v478, %v480
    %v482 = vadd.f32 %v478, %v481
    %vm483 = vweird.f32 %v476
    %vm484 = vweird.f32 %v478
    %vm485 = vmor %vm483, %vm484
    %v486 = vsel %vm485, %v478, %v482
    %v487 = vand.u32 2147483647, %v476
    %vm488 = vcmp.eq.f32.partialorder %v487, 8.507059e+37
    %v489 = vand.u32 %v476, 2147483648
    %v490 = vor.u32 1.1754944e-38, %v489
    %v491 = vsel %vm488, %v490, %v486
    %v492 = vmul.f32 1.0, %v491
    %v493 = vrcp.pop %v477
    %v494 = vmul.f32 %v477, %v493
    %v495 = vsub.f32 1.0, %v494
    %v496 = vmul.f32 %v493, %v495
    %v497 = vadd.f32 %v493, %v496
    %vm498 = vweird.f32 %v477
    %vm499 = vweird.f32 %v493
    %vm500 = vmor %vm498, %vm499
    %v501 = vsel %vm500, %v493, %v497
    %v502 = vand.u32 2147483647, %v477
    %vm503 = vcmp.eq.f32.partialorder %v502, 8.507059e+37
    %v504 = vand.u32 %v477, 2147483648
    %v505 = vor.u32 1.1754944e-38, %v504
    %v506 = vsel %vm503, %v505, %v501
    %v507 = vmul.f32 1.0, %v506
    %v508 = vmul.f32 %v492, 0.0
    %v509 = vmul.f32 %v507, 0.0
    %v511 = vsel %vm340, %v36, 0
    %v514 = vsel %vm340, %v37, 0
    %516 = vmatpush.msra.mxu0 0.0
    %517 = vmatpush.msra.mxu0 0.0
    %518 = vmatpush.msra.mxu0 0.0
    %519 = vmatpush.msra.mxu0 0.0
    %520 = vmatpush.msra.mxu0 0.0
    %521 = vmatpush.msra.mxu0 0.0
    %522 = vmatpush.msra.mxu0 0.0
    %523 = vmatpush.msra.mxu0 0.0
    %524 = vmatpush.msra.mxu0 0.0
    %525 = vmatpush.msra.mxu0 0.0
    %526 = vmatpush.msra.mxu0 0.0
    %527 = vmatpush.msra.mxu0 0.0
    %528 = vmatpush.msra.mxu0 0.0
    %529 = vmatpush.msra.mxu0 0.0
    %530 = vmatpush.msra.mxu0 %v509
    %531 = vmatpush.msra.mxu0 %v508
    %532 = vmatmul.f32.gmra.mxu0 %v511
    %v533 = vpop.f32.mrf.mxu0
    %v534 = vadd.f32 0.0, %v533
    %535 = vmatmul.f32.gmra.mxu0 %v514
    %v536 = vpop.f32.mrf.mxu0
    %v537 = vadd.f32 0.0, %v536
    %538 = vdwg.mxu0
    %v539 = vld [vmem:[#allocation3] sm:$0xff]
    %v540 = vld [vmem:[#allocation3 + $0x8] sm:$0xff]
    %v541 = vld [vmem:[#allocation4 + $0x20] sm:$0xff]
    %v542 = vld [vmem:[#allocation4 + $0x28] sm:$0xff]
    %v544 = vsel %vm340, %v534, 0
    %v547 = vsel %vm340, %v537, 0
    %549 = vmatpush.msra.mxu0 0.0
    %550 = vmatpush.msra.mxu0 0.0
    %551 = vmatpush.msra.mxu0 0.0
    %552 = vmatpush.msra.mxu0 0.0
    %553 = vmatpush.msra.mxu0 0.0
    %554 = vmatpush.msra.mxu0 0.0
    %555 = vmatpush.msra.mxu0 0.0
    %556 = vmatpush.msra.mxu0 0.0
    %557 = vmatpush.msra.mxu0 0.0
    %558 = vmatpush.msra.mxu0 0.0
    %559 = vmatpush.msra.mxu0 0.0
    %560 = vmatpush.msra.mxu0 0.0
    %561 = vmatpush.msra.mxu0 0.0
    %562 = vmatpush.msra.mxu0 0.0
    %563 = vmatpush.msra.mxu0 %v542
    %564 = vmatpush.msra.mxu0 %v541
    %565 = vmatmul.f32.gmra.mxu0 %v544
    %v566 = vpop.f32.mrf.mxu0
    %v567 = vadd.f32 0.0, %v566
    %568 = vmatmul.f32.gmra.mxu0 %v547
    %v569 = vpop.f32.mrf.mxu0
    %v570 = vadd.f32 0.0, %v569
    %571 = vdwg.mxu0
    %v572 = vadd.f32 %v539, %v567
    %v573 = vadd.f32 %v540, %v570
    %v574 = vld [vmem:[#allocation4 + $0x38] sm:$0x1]
    %v575 = vperm.slane %v574, 0
    %v576 = vadd.f32 %v572, %v575
    %v577 = vadd.f32 %v573, %v575
    %v578 = vtanh.pop %v576
    %v579 = vtanh.pop %v577
    %v580 = vsub.f32 1.0, %v492
    %v581 = vsub.f32 1.0, %v507
    %584 = vrot.lane.b32.xlu0 %v578, 16
    %v585 = vpop.permute.xlu0 %584
    %586 = vrot.lane.b32.xlu0 %v579, 16
    %v587 = vpop.permute.xlu0 %586
    %v590 = vmul.f32 %v580, %v585
    %v591 = vmul.f32 %v581, %v587
    %v592 = vadd.f32 %v508, %v590
    %v593 = vadd.f32 %v509, %v591
    %596 = vrot.lane.b32.xlu0 %v592, 112
    %v597 = vpop.permute.xlu0 %596
    %598 = vrot.lane.b32.xlu0 %v593, 112
    %v599 = vpop.permute.xlu0 %598
    %602 = vmatpush.msra.mxu0 0.0
    %603 = vmatpush.msra.mxu0 0.0
    %604 = vmatpush.msra.mxu0 0.0
    %605 = vmatpush.msra.mxu0 0.0
    %606 = vmatpush.msra.mxu0 0.0
    %607 = vmatpush.msra.mxu0 0.0
    %608 = vmatpush.msra.mxu0 0.0
    %609 = vmatpush.msra.mxu0 0.0
    %610 = vmatpush.msra.mxu0 0.0
    %611 = vmatpush.msra.mxu0 0.0
    %612 = vmatpush.msra.mxu0 0.0
    %613 = vmatpush.msra.mxu0 0.0
    %614 = vmatpush.msra.mxu0 0.0
    %615 = vmatpush.msra.mxu0 0.0
    %616 = vmatpush.msra.mxu0 %v599
    %617 = vmatpush.msra.mxu0 %v597
    %618 = vmatmul.f32.gmra.mxu0 %v511
    %v619 = vpop.f32.mrf.mxu0
    %v620 = vadd.f32 0.0, %v619
    %621 = vmatmul.f32.gmra.mxu0 %v514
    %v622 = vpop.f32.mrf.mxu0
    %v623 = vadd.f32 0.0, %v622
    %624 = vdwg.mxu0
    %625 = vmatpush.msra.mxu0 0.0
    %626 = vmatpush.msra.mxu0 0.0
    %627 = vmatpush.msra.mxu0 0.0
    %628 = vmatpush.msra.mxu0 0.0
    %629 = vmatpush.msra.mxu0 0.0
    %630 = vmatpush.msra.mxu0 0.0
    %631 = vmatpush.msra.mxu0 0.0
    %632 = vmatpush.msra.mxu0 0.0
    %633 = vmatpush.msra.mxu0 0.0
    %634 = vmatpush.msra.mxu0 0.0
    %635 = vmatpush.msra.mxu0 0.0
    %636 = vmatpush.msra.mxu0 0.0
    %637 = vmatpush.msra.mxu0 0.0
    %638 = vmatpush.msra.mxu0 0.0
    %639 = vmatpush.msra.mxu0 0.0
    %640 = vmatpush.msra.mxu0 0.0
    %641 = vmatmul.f32.gmra.mxu0 %v511
    %v642 = vpop.f32.mrf.mxu0
    %v643 = vadd.f32 0.0, %v642
    %644 = vmatmul.f32.gmra.mxu0 %v514
    %v645 = vpop.f32.mrf.mxu0
    %v646 = vadd.f32 0.0, %v645
    %647 = vdwg.mxu0
    %v648 = vld [vmem:[#allocation4 + $0x40] sm:$0xff]
    %v649 = vld [vmem:[#allocation4 + $0x48] sm:$0xff]
    %v650 = vld [vmem:[#allocation4 + $0x50] sm:$0xff]
    %v651 = vld [vmem:[#allocation4 + $0x58] sm:$0xff]
    %v653 = vsel %vm340, %v643, 0
    %v656 = vsel %vm340, %v646, 0
    %658 = vmatpush.msra.mxu0 0.0
    %659 = vmatpush.msra.mxu0 0.0
    %660 = vmatpush.msra.mxu0 0.0
    %661 = vmatpush.msra.mxu0 0.0
    %662 = vmatpush.msra.mxu0 0.0
    %663 = vmatpush.msra.mxu0 0.0
    %664 = vmatpush.msra.mxu0 0.0
    %665 = vmatpush.msra.mxu0 0.0
    %666 = vmatpush.msra.mxu0 0.0
    %667 = vmatpush.msra.mxu0 0.0
    %668 = vmatpush.msra.mxu0 0.0
    %669 = vmatpush.msra.mxu0 0.0
    %670 = vmatpush.msra.mxu0 0.0
    %671 = vmatpush.msra.mxu0 0.0
    %672 = vmatpush.msra.mxu0 %v651
    %673 = vmatpush.msra.mxu0 %v650
    %674 = vmatmul.f32.gmra.mxu0 %v653
    %v675 = vpop.f32.mrf.mxu0
    %v676 = vadd.f32 0.0, %v675
    %677 = vmatmul.f32.gmra.mxu0 %v656
    %v678 = vpop.f32.mrf.mxu0
    %v679 = vadd.f32 0.0, %v678
    %680 = vdwg.mxu0
    %v682 = vsel %vm340, %v620, 0
    %v685 = vsel %vm340, %v623, 0
    %687 = vmatpush.msra.mxu0 0.0
    %688 = vmatpush.msra.mxu0 0.0
    %689 = vmatpush.msra.mxu0 0.0
    %690 = vmatpush.msra.mxu0 0.0
    %691 = vmatpush.msra.mxu0 0.0
    %692 = vmatpush.msra.mxu0 0.0
    %693 = vmatpush.msra.mxu0 0.0
    %694 = vmatpush.msra.mxu0 0.0
    %695 = vmatpush.msra.mxu0 0.0
    %696 = vmatpush.msra.mxu0 0.0
    %697 = vmatpush.msra.mxu0 0.0
    %698 = vmatpush.msra.mxu0 0.0
    %699 = vmatpush.msra.mxu0 0.0
    %700 = vmatpush.msra.mxu0 0.0
    %701 = vmatpush.msra.mxu0 %v649
    %702 = vmatpush.msra.mxu0 %v648
    %703 = vmatmul.f32.gmra.mxu0 %v682
    %v704 = vpop.f32.mrf.mxu0
    %v705 = vadd.f32 %v676, %v704
    %706 = vmatmul.f32.gmra.mxu0 %v685
    %v707 = vpop.f32.mrf.mxu0
    %v708 = vadd.f32 %v679, %v707
    %709 = vdwg.mxu0
    %v710 = vld [vmem:[#allocation4 + $0x80] sm:$0x1]
    %v711 = vperm.slane %v710, 0
    %v712 = vadd.f32 %v705, %v711
    %v713 = vadd.f32 %v708, %v711
    %v714 = vxor.u32 %v712, 2147483648
    %v715 = vxor.u32 %v713, 2147483648
    %v716 = vmul.f32 %v714, 1.442695
    %v717 = vpow.pop %v716
    %v718 = vmul.f32 %v715, 1.442695
    %v719 = vpow.pop %v718
    %v720 = vadd.f32 %v717, 1.0
    %v721 = vadd.f32 %v719, 1.0
    %v722 = vrcp.pop %v720
    %v723 = vmul.f32 %v720, %v722
    %v724 = vsub.f32 1.0, %v723
    %v725 = vmul.f32 %v722, %v724
    %v726 = vadd.f32 %v722, %v725
    %vm727 = vweird.f32 %v720
    %vm728 = vweird.f32 %v722
    %vm729 = vmor %vm727, %vm728
    %v730 = vsel %vm729, %v722, %v726
    %v731 = vand.u32 2147483647, %v720
    %vm732 = vcmp.eq.f32.partialorder %v731, 8.507059e+37
    %v733 = vand.u32 %v720, 2147483648
    %v734 = vor.u32 1.1754944e-38, %v733
    %v735 = vsel %vm732, %v734, %v730
    %v736 = vmul.f32 1.0, %v735
    %v737 = vrcp.pop %v721
    %v738 = vmul.f32 %v721, %v737
    %v739 = vsub.f32 1.0, %v738
    %v740 = vmul.f32 %v737, %v739
    %v741 = vadd.f32 %v737, %v740
    %vm742 = vweird.f32 %v721
    %vm743 = vweird.f32 %v737
    %vm744 = vmor %vm742, %vm743
    %v745 = vsel %vm744, %v737, %v741
    %v746 = vand.u32 2147483647, %v721
    %vm747 = vcmp.eq.f32.partialorder %v746, 8.507059e+37
    %v748 = vand.u32 %v721, 2147483648
    %v749 = vor.u32 1.1754944e-38, %v748
    %v750 = vsel %vm747, %v749, %v745
    %v751 = vmul.f32 1.0, %v750
    %v752 = vmul.f32 %v736, 0.0
    %v753 = vmul.f32 %v751, 0.0
    %754 = vmatpush.msra.mxu0 0.0
    %755 = vmatpush.msra.mxu0 0.0
    %756 = vmatpush.msra.mxu0 0.0
    %757 = vmatpush.msra.mxu0 0.0
    %758 = vmatpush.msra.mxu0 0.0
    %759 = vmatpush.msra.mxu0 0.0
    %760 = vmatpush.msra.mxu0 0.0
    %761 = vmatpush.msra.mxu0 0.0
    %762 = vmatpush.msra.mxu0 0.0
    %763 = vmatpush.msra.mxu0 0.0
    %764 = vmatpush.msra.mxu0 0.0
    %765 = vmatpush.msra.mxu0 0.0
    %766 = vmatpush.msra.mxu0 0.0
    %767 = vmatpush.msra.mxu0 0.0
    %768 = vmatpush.msra.mxu0 %v753
    %769 = vmatpush.msra.mxu0 %v752
    %770 = vmatmul.f32.gmra.mxu0 %v511
    %v771 = vpop.f32.mrf.mxu0
    %v772 = vadd.f32 0.0, %v771
    %773 = vmatmul.f32.gmra.mxu0 %v514
    %v774 = vpop.f32.mrf.mxu0
    %v775 = vadd.f32 0.0, %v774
    %776 = vdwg.mxu0
    %v777 = vld [vmem:[#allocation4 + $0x60] sm:$0xff]
    %v778 = vld [vmem:[#allocation4 + $0x68] sm:$0xff]
    %v779 = vld [vmem:[#allocation4 + $0x70] sm:$0xff]
    %v780 = vld [vmem:[#allocation4 + $0x78] sm:$0xff]
    %v782 = vsel %vm340, %v772, 0
    %v785 = vsel %vm340, %v775, 0
    %787 = vmatpush.msra.mxu0 0.0
    %788 = vmatpush.msra.mxu0 0.0
    %789 = vmatpush.msra.mxu0 0.0
    %790 = vmatpush.msra.mxu0 0.0
    %791 = vmatpush.msra.mxu0 0.0
    %792 = vmatpush.msra.mxu0 0.0
    %793 = vmatpush.msra.mxu0 0.0
    %794 = vmatpush.msra.mxu0 0.0
    %795 = vmatpush.msra.mxu0 0.0
    %796 = vmatpush.msra.mxu0 0.0
    %797 = vmatpush.msra.mxu0 0.0
    %798 = vmatpush.msra.mxu0 0.0
    %799 = vmatpush.msra.mxu0 0.0
    %800 = vmatpush.msra.mxu0 0.0
    %801 = vmatpush.msra.mxu0 %v780
    %802 = vmatpush.msra.mxu0 %v779
    %803 = vmatmul.f32.gmra.mxu0 %v782
    %v804 = vpop.f32.mrf.mxu0
    %v805 = vadd.f32 0.0, %v804
    %806 = vmatmul.f32.gmra.mxu0 %v785
    %v807 = vpop.f32.mrf.mxu0
    %v808 = vadd.f32 0.0, %v807
    %809 = vdwg.mxu0
    %810 = vmatpush.msra.mxu0 0.0
    %811 = vmatpush.msra.mxu0 0.0
    %812 = vmatpush.msra.mxu0 0.0
    %813 = vmatpush.msra.mxu0 0.0
    %814 = vmatpush.msra.mxu0 0.0
    %815 = vmatpush.msra.mxu0 0.0
    %816 = vmatpush.msra.mxu0 0.0
    %817 = vmatpush.msra.mxu0 0.0
    %818 = vmatpush.msra.mxu0 0.0
    %819 = vmatpush.msra.mxu0 0.0
    %820 = vmatpush.msra.mxu0 0.0
    %821 = vmatpush.msra.mxu0 0.0
    %822 = vmatpush.msra.mxu0 0.0
    %823 = vmatpush.msra.mxu0 0.0
    %824 = vmatpush.msra.mxu0 %v778
    %825 = vmatpush.msra.mxu0 %v777
    %826 = vmatmul.f32.gmra.mxu0 %v682
    %v827 = vpop.f32.mrf.mxu0
    %v828 = vadd.f32 %v805, %v827
    %829 = vmatmul.f32.gmra.mxu0 %v685
    %v830 = vpop.f32.mrf.mxu0
    %v831 = vadd.f32 %v808, %v830
    %832 = vdwg.mxu0
    %v833 = vld [vmem:[#allocation4 + $0x88] sm:$0x1]
    %v834 = vperm.slane %v833, 0
    %v835 = vadd.f32 %v828, %v834
    %v836 = vadd.f32 %v831, %v834
    %v837 = vtanh.pop %v835
    %v838 = vtanh.pop %v836
    %v839 = vsub.f32 1.0, %v736
    %v840 = vsub.f32 1.0, %v751
    %843 = vrot.lane.b32.xlu0 %v837, 16
    %v844 = vpop.permute.xlu0 %843
    %845 = vrot.lane.b32.xlu0 %v838, 16
    %v846 = vpop.permute.xlu0 %845
    %v849 = vmul.f32 %v839, %v844
    %v850 = vmul.f32 %v840, %v846
    %v851 = vadd.f32 %v752, %v849
    %v852 = vadd.f32 %v753, %v850
    %v853 = vld [vmem:[#allocation2 + $0x10] sm:$0xff]
    %v854 = vld [vmem:[#allocation2 + $0x18] sm:$0xff]
    %855 = vmatpush.msra.mxu0 0.0
    %856 = vmatpush.msra.mxu0 0.0
    %857 = vmatpush.msra.mxu0 0.0
    %858 = vmatpush.msra.mxu0 0.0
    %859 = vmatpush.msra.mxu0 0.0
    %860 = vmatpush.msra.mxu0 0.0
    %861 = vmatpush.msra.mxu0 0.0
    %862 = vmatpush.msra.mxu0 0.0
    %863 = vmatpush.msra.mxu0 0.0
    %864 = vmatpush.msra.mxu0 0.0
    %865 = vmatpush.msra.mxu0 0.0
    %866 = vmatpush.msra.mxu0 0.0
    %867 = vmatpush.msra.mxu0 0.0
    %868 = vmatpush.msra.mxu0 0.0
    %869 = vmatpush.msra.mxu0 %v437
    %870 = vmatpush.msra.mxu0 %v436
    %871 = vmatmul.f32.gmra.mxu0 %v682
    %v872 = vpop.f32.mrf.mxu0
    %v873 = vadd.f32 0.0, %v872
    %874 = vmatmul.f32.gmra.mxu0 %v685
    %v875 = vpop.f32.mrf.mxu0
    %v876 = vadd.f32 0.0, %v875
    %877 = vdwg.mxu0
    %v878 = vadd.f32 %v853, %v873
    %v879 = vadd.f32 %v854, %v876
    %v880 = vadd.f32 %v878, %v467
    %v881 = vadd.f32 %v879, %v467
    %v882 = vxor.u32 %v880, 2147483648
    %v883 = vxor.u32 %v881, 2147483648
    %v884 = vmul.f32 %v882, 1.442695
    %v885 = vpow.pop %v884
    %v886 = vmul.f32 %v883, 1.442695
    %v887 = vpow.pop %v886
    %v888 = vadd.f32 %v885, 1.0
    %v889 = vadd.f32 %v887, 1.0
    %v890 = vrcp.pop %v888
    %v891 = vmul.f32 %v888, %v890
    %v892 = vsub.f32 1.0, %v891
    %v893 = vmul.f32 %v890, %v892
    %v894 = vadd.f32 %v890, %v893
    %vm895 = vweird.f32 %v888
    %vm896 = vweird.f32 %v890
    %vm897 = vmor %vm895, %vm896
    %v898 = vsel %vm897, %v890, %v894
    %v899 = vand.u32 2147483647, %v888
    %vm900 = vcmp.eq.f32.partialorder %v899, 8.507059e+37
    %v901 = vand.u32 %v888, 2147483648
    %v902 = vor.u32 1.1754944e-38, %v901
    %v903 = vsel %vm900, %v902, %v898
    %v904 = vmul.f32 1.0, %v903
    %v905 = vrcp.pop %v889
    %v906 = vmul.f32 %v889, %v905
    %v907 = vsub.f32 1.0, %v906
    %v908 = vmul.f32 %v905, %v907
    %v909 = vadd.f32 %v905, %v908
    %vm910 = vweird.f32 %v889
    %vm911 = vweird.f32 %v905
    %vm912 = vmor %vm910, %vm911
    %v913 = vsel %vm912, %v905, %v909
    %v914 = vand.u32 2147483647, %v889
    %vm915 = vcmp.eq.f32.partialorder %v914, 8.507059e+37
    %v916 = vand.u32 %v889, 2147483648
    %v917 = vor.u32 1.1754944e-38, %v916
    %v918 = vsel %vm915, %v917, %v913
    %v919 = vmul.f32 1.0, %v918
    %v920 = vmul.f32 %v904, %v597
    %v921 = vmul.f32 %v919, %v599
    %922 = vmatpush.msra.mxu0 0.0
    %923 = vmatpush.msra.mxu0 0.0
    %924 = vmatpush.msra.mxu0 0.0
    %925 = vmatpush.msra.mxu0 0.0
    %926 = vmatpush.msra.mxu0 0.0
    %927 = vmatpush.msra.mxu0 0.0
    %928 = vmatpush.msra.mxu0 0.0
    %929 = vmatpush.msra.mxu0 0.0
    %930 = vmatpush.msra.mxu0 0.0
    %931 = vmatpush.msra.mxu0 0.0
    %932 = vmatpush.msra.mxu0 0.0
    %933 = vmatpush.msra.mxu0 0.0
    %934 = vmatpush.msra.mxu0 0.0
    %935 = vmatpush.msra.mxu0 0.0
    %936 = vmatpush.msra.mxu0 %v921
    %937 = vmatpush.msra.mxu0 %v920
    %938 = vmatmul.f32.gmra.mxu0 %v511
    %v939 = vpop.f32.mrf.mxu0
    %v940 = vadd.f32 0.0, %v939
    %941 = vmatmul.f32.gmra.mxu0 %v514
    %v942 = vpop.f32.mrf.mxu0
    %v943 = vadd.f32 0.0, %v942
    %944 = vdwg.mxu0
    %v945 = vld [vmem:[#allocation3 + $0x10] sm:$0xff]
    %v946 = vld [vmem:[#allocation3 + $0x18] sm:$0xff]
    %v948 = vsel %vm340, %v940, 0
    %v951 = vsel %vm340, %v943, 0
    %953 = vmatpush.msra.mxu0 0.0
    %954 = vmatpush.msra.mxu0 0.0
    %955 = vmatpush.msra.mxu0 0.0
    %956 = vmatpush.msra.mxu0 0.0
    %957 = vmatpush.msra.mxu0 0.0
    %958 = vmatpush.msra.mxu0 0.0
    %959 = vmatpush.msra.mxu0 0.0
    %960 = vmatpush.msra.mxu0 0.0
    %961 = vmatpush.msra.mxu0 0.0
    %962 = vmatpush.msra.mxu0 0.0
    %963 = vmatpush.msra.mxu0 0.0
    %964 = vmatpush.msra.mxu0 0.0
    %965 = vmatpush.msra.mxu0 0.0
    %966 = vmatpush.msra.mxu0 0.0
    %967 = vmatpush.msra.mxu0 %v542
    %968 = vmatpush.msra.mxu0 %v541
    %969 = vmatmul.f32.gmra.mxu0 %v948
    %v970 = vpop.f32.mrf.mxu0
    %v971 = vadd.f32 0.0, %v970
    %972 = vmatmul.f32.gmra.mxu0 %v951
    %v973 = vpop.f32.mrf.mxu0
    %v974 = vadd.f32 0.0, %v973
    %975 = vdwg.mxu0
    %v976 = vadd.f32 %v945, %v971
    %v977 = vadd.f32 %v946, %v974
    %v978 = vadd.f32 %v976, %v575
    %v979 = vadd.f32 %v977, %v575
    %v980 = vtanh.pop %v978
    %v981 = vtanh.pop %v979
    %v982 = vmul.f32 %v904, %v592
    %v983 = vmul.f32 %v919, %v593
    %v984 = vsub.f32 1.0, %v904
    %v985 = vsub.f32 1.0, %v919
    %988 = vrot.lane.b32.xlu0 %v980, 16
    %v989 = vpop.permute.xlu0 %988
    %990 = vrot.lane.b32.xlu0 %v981, 16
    %v991 = vpop.permute.xlu0 %990
    %v994 = vmul.f32 %v984, %v989
    %v995 = vmul.f32 %v985, %v991
    %v996 = vadd.f32 %v982, %v994
    %v997 = vadd.f32 %v983, %v995
    %1000 = vrot.lane.b32.xlu0 %v996, 112
    %v1001 = vpop.permute.xlu0 %1000
    %1002 = vrot.lane.b32.xlu0 %v997, 112
    %v1003 = vpop.permute.xlu0 %1002
    %1006 = vmatpush.msra.mxu0 0.0
    %1007 = vmatpush.msra.mxu0 0.0
    %1008 = vmatpush.msra.mxu0 0.0
    %1009 = vmatpush.msra.mxu0 0.0
    %1010 = vmatpush.msra.mxu0 0.0
    %1011 = vmatpush.msra.mxu0 0.0
    %1012 = vmatpush.msra.mxu0 0.0
    %1013 = vmatpush.msra.mxu0 0.0
    %1014 = vmatpush.msra.mxu0 0.0
    %1015 = vmatpush.msra.mxu0 0.0
    %1016 = vmatpush.msra.mxu0 0.0
    %1017 = vmatpush.msra.mxu0 0.0
    %1018 = vmatpush.msra.mxu0 0.0
    %1019 = vmatpush.msra.mxu0 0.0
    %1020 = vmatpush.msra.mxu0 %v1003
    %1021 = vmatpush.msra.mxu0 %v1001
    %1022 = vmatmul.f32.gmra.mxu0 %v511
    %v1023 = vpop.f32.mrf.mxu0
    %v1024 = vadd.f32 0.0, %v1023
    %1025 = vmatmul.f32.gmra.mxu0 %v514
    %v1026 = vpop.f32.mrf.mxu0
    %v1027 = vadd.f32 0.0, %v1026
    %1028 = vdwg.mxu0
    %1031 = vrot.lane.b32.xlu0 %v851, 112
    %v1032 = vpop.permute.xlu0 %1031
    %1033 = vrot.lane.b32.xlu0 %v852, 112
    %v1034 = vpop.permute.xlu0 %1033
    %1037 = vmatpush.msra.mxu0 0.0
    %1038 = vmatpush.msra.mxu0 0.0
    %1039 = vmatpush.msra.mxu0 0.0
    %1040 = vmatpush.msra.mxu0 0.0
    %1041 = vmatpush.msra.mxu0 0.0
    %1042 = vmatpush.msra.mxu0 0.0
    %1043 = vmatpush.msra.mxu0 0.0
    %1044 = vmatpush.msra.mxu0 0.0
    %1045 = vmatpush.msra.mxu0 0.0
    %1046 = vmatpush.msra.mxu0 0.0
    %1047 = vmatpush.msra.mxu0 0.0
    %1048 = vmatpush.msra.mxu0 0.0
    %1049 = vmatpush.msra.mxu0 0.0
    %1050 = vmatpush.msra.mxu0 0.0
    %1051 = vmatpush.msra.mxu0 %v1034
    %1052 = vmatpush.msra.mxu0 %v1032
    %1053 = vmatmul.f32.gmra.mxu0 %v511
    %v1054 = vpop.f32.mrf.mxu0
    %v1055 = vadd.f32 0.0, %v1054
    %1056 = vmatmul.f32.gmra.mxu0 %v514
    %v1057 = vpop.f32.mrf.mxu0
    %v1058 = vadd.f32 0.0, %v1057
    %1059 = vdwg.mxu0
    %v1061 = vsel %vm340, %v1055, 0
    %v1064 = vsel %vm340, %v1058, 0
    %1066 = vmatpush.msra.mxu0 0.0
    %1067 = vmatpush.msra.mxu0 0.0
    %1068 = vmatpush.msra.mxu0 0.0
    %1069 = vmatpush.msra.mxu0 0.0
    %1070 = vmatpush.msra.mxu0 0.0
    %1071 = vmatpush.msra.mxu0 0.0
    %1072 = vmatpush.msra.mxu0 0.0
    %1073 = vmatpush.msra.mxu0 0.0
    %1074 = vmatpush.msra.mxu0 0.0
    %1075 = vmatpush.msra.mxu0 0.0
    %1076 = vmatpush.msra.mxu0 0.0
    %1077 = vmatpush.msra.mxu0 0.0
    %1078 = vmatpush.msra.mxu0 0.0
    %1079 = vmatpush.msra.mxu0 0.0
    %1080 = vmatpush.msra.mxu0 %v651
    %1081 = vmatpush.msra.mxu0 %v650
    %1082 = vmatmul.f32.gmra.mxu0 %v1061
    %v1083 = vpop.f32.mrf.mxu0
    %v1084 = vadd.f32 0.0, %v1083
    %1085 = vmatmul.f32.gmra.mxu0 %v1064
    %v1086 = vpop.f32.mrf.mxu0
    %v1087 = vadd.f32 0.0, %v1086
    %1088 = vdwg.mxu0
    %v1090 = vsel %vm340, %v1024, 0
    %v1093 = vsel %vm340, %v1027, 0
    %1095 = vmatpush.msra.mxu0 0.0
    %1096 = vmatpush.msra.mxu0 0.0
    %1097 = vmatpush.msra.mxu0 0.0
    %1098 = vmatpush.msra.mxu0 0.0
    %1099 = vmatpush.msra.mxu0 0.0
    %1100 = vmatpush.msra.mxu0 0.0
    %1101 = vmatpush.msra.mxu0 0.0
    %1102 = vmatpush.msra.mxu0 0.0
    %1103 = vmatpush.msra.mxu0 0.0
    %1104 = vmatpush.msra.mxu0 0.0
    %1105 = vmatpush.msra.mxu0 0.0
    %1106 = vmatpush.msra.mxu0 0.0
    %1107 = vmatpush.msra.mxu0 0.0
    %1108 = vmatpush.msra.mxu0 0.0
    %1109 = vmatpush.msra.mxu0 %v649
    %1110 = vmatpush.msra.mxu0 %v648
    %1111 = vmatmul.f32.gmra.mxu0 %v1090
    %v1112 = vpop.f32.mrf.mxu0
    %v1113 = vadd.f32 %v1084, %v1112
    %1114 = vmatmul.f32.gmra.mxu0 %v1093
    %v1115 = vpop.f32.mrf.mxu0
    %v1116 = vadd.f32 %v1087, %v1115
    %1117 = vdwg.mxu0
    %v1118 = vadd.f32 %v1113, %v711
    %v1119 = vadd.f32 %v1116, %v711
    %v1120 = vxor.u32 %v1118, 2147483648
    %v1121 = vxor.u32 %v1119, 2147483648
    %v1122 = vmul.f32 %v1120, 1.442695
    %v1123 = vpow.pop %v1122
    %v1124 = vmul.f32 %v1121, 1.442695
    %v1125 = vpow.pop %v1124
    %v1126 = vadd.f32 %v1123, 1.0
    %v1127 = vadd.f32 %v1125, 1.0
    %v1128 = vrcp.pop %v1126
    %v1129 = vmul.f32 %v1126, %v1128
    %v1130 = vsub.f32 1.0, %v1129
    %v1131 = vmul.f32 %v1128, %v1130
    %v1132 = vadd.f32 %v1128, %v1131
    %vm1133 = vweird.f32 %v1126
    %vm1134 = vweird.f32 %v1128
    %vm1135 = vmor %vm1133, %vm1134
    %v1136 = vsel %vm1135, %v1128, %v1132
    %v1137 = vand.u32 2147483647, %v1126
    %vm1138 = vcmp.eq.f32.partialorder %v1137, 8.507059e+37
    %v1139 = vand.u32 %v1126, 2147483648
    %v1140 = vor.u32 1.1754944e-38, %v1139
    %v1141 = vsel %vm1138, %v1140, %v1136
    %v1142 = vmul.f32 1.0, %v1141
    %v1143 = vrcp.pop %v1127
    %v1144 = vmul.f32 %v1127, %v1143
    %v1145 = vsub.f32 1.0, %v1144
    %v1146 = vmul.f32 %v1143, %v1145
    %v1147 = vadd.f32 %v1143, %v1146
    %vm1148 = vweird.f32 %v1127
    %vm1149 = vweird.f32 %v1143
    %vm1150 = vmor %vm1148, %vm1149
    %v1151 = vsel %vm1150, %v1143, %v1147
    %v1152 = vand.u32 2147483647, %v1127
    %vm1153 = vcmp.eq.f32.partialorder %v1152, 8.507059e+37
    %v1154 = vand.u32 %v1127, 2147483648
    %v1155 = vor.u32 1.1754944e-38, %v1154
    %v1156 = vsel %vm1153, %v1155, %v1151
    %v1157 = vmul.f32 1.0, %v1156
    %v1158 = vmul.f32 %v1142, %v1032
    %v1159 = vmul.f32 %v1157, %v1034
    %1160 = vmatpush.msra.mxu0 0.0
    %1161 = vmatpush.msra.mxu0 0.0
    %1162 = vmatpush.msra.mxu0 0.0
    %1163 = vmatpush.msra.mxu0 0.0
    %1164 = vmatpush.msra.mxu0 0.0
    %1165 = vmatpush.msra.mxu0 0.0
    %1166 = vmatpush.msra.mxu0 0.0
    %1167 = vmatpush.msra.mxu0 0.0
    %1168 = vmatpush.msra.mxu0 0.0
    %1169 = vmatpush.msra.mxu0 0.0
    %1170 = vmatpush.msra.mxu0 0.0
    %1171 = vmatpush.msra.mxu0 0.0
    %1172 = vmatpush.msra.mxu0 0.0
    %1173 = vmatpush.msra.mxu0 0.0
    %1174 = vmatpush.msra.mxu0 %v1159
    %1175 = vmatpush.msra.mxu0 %v1158
    %1176 = vmatmul.f32.gmra.mxu0 %v511
    %v1177 = vpop.f32.mrf.mxu0
    %v1178 = vadd.f32 0.0, %v1177
    %1179 = vmatmul.f32.gmra.mxu0 %v514
    %v1180 = vpop.f32.mrf.mxu0
    %v1181 = vadd.f32 0.0, %v1180
    %1182 = vdwg.mxu0
    %v1184 = vsel %vm340, %v1178, 0
    %v1187 = vsel %vm340, %v1181, 0
    %1189 = vmatpush.msra.mxu0 0.0
    %1190 = vmatpush.msra.mxu0 0.0
    %1191 = vmatpush.msra.mxu0 0.0
    %1192 = vmatpush.msra.mxu0 0.0
    %1193 = vmatpush.msra.mxu0 0.0
    %1194 = vmatpush.msra.mxu0 0.0
    %1195 = vmatpush.msra.mxu0 0.0
    %1196 = vmatpush.msra.mxu0 0.0
    %1197 = vmatpush.msra.mxu0 0.0
    %1198 = vmatpush.msra.mxu0 0.0
    %1199 = vmatpush.msra.mxu0 0.0
    %1200 = vmatpush.msra.mxu0 0.0
    %1201 = vmatpush.msra.mxu0 0.0
    %1202 = vmatpush.msra.mxu0 0.0
    %1203 = vmatpush.msra.mxu0 %v780
    %1204 = vmatpush.msra.mxu0 %v779
    %1205 = vmatmul.f32.gmra.mxu0 %v1184
    %v1206 = vpop.f32.mrf.mxu0
    %v1207 = vadd.f32 0.0, %v1206
    %1208 = vmatmul.f32.gmra.mxu0 %v1187
    %v1209 = vpop.f32.mrf.mxu0
    %v1210 = vadd.f32 0.0, %v1209
    %1211 = vdwg.mxu0
    %1212 = vmatpush.msra.mxu0 0.0
    %1213 = vmatpush.msra.mxu0 0.0
    %1214 = vmatpush.msra.mxu0 0.0
    %1215 = vmatpush.msra.mxu0 0.0
    %1216 = vmatpush.msra.mxu0 0.0
    %1217 = vmatpush.msra.mxu0 0.0
    %1218 = vmatpush.msra.mxu0 0.0
    %1219 = vmatpush.msra.mxu0 0.0
    %1220 = vmatpush.msra.mxu0 0.0
    %1221 = vmatpush.msra.mxu0 0.0
    %1222 = vmatpush.msra.mxu0 0.0
    %1223 = vmatpush.msra.mxu0 0.0
    %1224 = vmatpush.msra.mxu0 0.0
    %1225 = vmatpush.msra.mxu0 0.0
    %1226 = vmatpush.msra.mxu0 %v778
    %1227 = vmatpush.msra.mxu0 %v777
    %1228 = vmatmul.f32.gmra.mxu0 %v1090
    %v1229 = vpop.f32.mrf.mxu0
    %v1230 = vadd.f32 %v1207, %v1229
    %1231 = vmatmul.f32.gmra.mxu0 %v1093
    %v1232 = vpop.f32.mrf.mxu0
    %v1233 = vadd.f32 %v1210, %v1232
    %1234 = vdwg.mxu0
    %v1235 = vadd.f32 %v1230, %v834
    %v1236 = vadd.f32 %v1233, %v834
    %v1237 = vtanh.pop %v1235
    %v1238 = vtanh.pop %v1236
    %v1239 = vmul.f32 %v1142, %v851
    %v1240 = vmul.f32 %v1157, %v852
    %v1241 = vsub.f32 1.0, %v1142
    %v1242 = vsub.f32 1.0, %v1157
    %1245 = vrot.lane.b32.xlu0 %v1237, 16
    %v1246 = vpop.permute.xlu0 %1245
    %1247 = vrot.lane.b32.xlu0 %v1238, 16
    %v1248 = vpop.permute.xlu0 %1247
    %v1251 = vmul.f32 %v1241, %v1246
    %v1252 = vmul.f32 %v1242, %v1248
    %v1253 = vadd.f32 %v1239, %v1251
    %v1254 = vadd.f32 %v1240, %v1252
    %v1255 = vld [vmem:[#allocation2 + $0x20] sm:$0xff]
    %v1256 = vld [vmem:[#allocation2 + $0x28] sm:$0xff]
    %1257 = vmatpush.msra.mxu0 0.0
    %1258 = vmatpush.msra.mxu0 0.0
    %1259 = vmatpush.msra.mxu0 0.0
    %1260 = vmatpush.msra.mxu0 0.0
    %1261 = vmatpush.msra.mxu0 0.0
    %1262 = vmatpush.msra.mxu0 0.0
    %1263 = vmatpush.msra.mxu0 0.0
    %1264 = vmatpush.msra.mxu0 0.0
    %1265 = vmatpush.msra.mxu0 0.0
    %1266 = vmatpush.msra.mxu0 0.0
    %1267 = vmatpush.msra.mxu0 0.0
    %1268 = vmatpush.msra.mxu0 0.0
    %1269 = vmatpush.msra.mxu0 0.0
    %1270 = vmatpush.msra.mxu0 0.0
    %1271 = vmatpush.msra.mxu0 %v437
    %1272 = vmatpush.msra.mxu0 %v436
    %1273 = vmatmul.f32.gmra.mxu0 %v1090
    %v1274 = vpop.f32.mrf.mxu0
    %v1275 = vadd.f32 0.0, %v1274
    %1276 = vmatmul.f32.gmra.mxu0 %v1093
    %v1277 = vpop.f32.mrf.mxu0
    %v1278 = vadd.f32 0.0, %v1277
    %1279 = vdwg.mxu0
    %v1280 = vadd.f32 %v1255, %v1275
    %v1281 = vadd.f32 %v1256, %v1278
    %v1282 = vadd.f32 %v1280, %v467
    %v1283 = vadd.f32 %v1281, %v467
    %v1284 = vxor.u32 %v1282, 2147483648
    %v1285 = vxor.u32 %v1283, 2147483648
    %v1286 = vmul.f32 %v1284, 1.442695
    %v1287 = vpow.pop %v1286
    %v1288 = vmul.f32 %v1285, 1.442695
    %v1289 = vpow.pop %v1288
    %v1290 = vadd.f32 %v1287, 1.0
    %v1291 = vadd.f32 %v1289, 1.0
    %v1292 = vrcp.pop %v1290
    %v1293 = vmul.f32 %v1290, %v1292
    %v1294 = vsub.f32 1.0, %v1293
    %v1295 = vmul.f32 %v1292, %v1294
    %v1296 = vadd.f32 %v1292, %v1295
    %vm1297 = vweird.f32 %v1290
    %vm1298 = vweird.f32 %v1292
    %vm1299 = vmor %vm1297, %vm1298
    %v1300 = vsel %vm1299, %v1292, %v1296
    %v1301 = vand.u32 2147483647, %v1290
    %vm1302 = vcmp.eq.f32.partialorder %v1301, 8.507059e+37
    %v1303 = vand.u32 %v1290, 2147483648
    %v1304 = vor.u32 1.1754944e-38, %v1303
    %v1305 = vsel %vm1302, %v1304, %v1300
    %v1306 = vmul.f32 1.0, %v1305
    %v1307 = vrcp.pop %v1291
    %v1308 = vmul.f32 %v1291, %v1307
    %v1309 = vsub.f32 1.0, %v1308
    %v1310 = vmul.f32 %v1307, %v1309
    %v1311 = vadd.f32 %v1307, %v1310
    %vm1312 = vweird.f32 %v1291
    %vm1313 = vweird.f32 %v1307
    %vm1314 = vmor %vm1312, %vm1313
    %v1315 = vsel %vm1314, %v1307, %v1311
    %v1316 = vand.u32 2147483647, %v1291
    %vm1317 = vcmp.eq.f32.partialorder %v1316, 8.507059e+37
    %v1318 = vand.u32 %v1291, 2147483648
    %v1319 = vor.u32 1.1754944e-38, %v1318
    %v1320 = vsel %vm1317, %v1319, %v1315
    %v1321 = vmul.f32 1.0, %v1320
    %v1322 = vmul.f32 %v1306, %v1001
    %v1323 = vmul.f32 %v1321, %v1003
    %1324 = vmatpush.msra.mxu0 0.0
    %1325 = vmatpush.msra.mxu0 0.0
    %1326 = vmatpush.msra.mxu0 0.0
    %1327 = vmatpush.msra.mxu0 0.0
    %1328 = vmatpush.msra.mxu0 0.0
    %1329 = vmatpush.msra.mxu0 0.0
    %1330 = vmatpush.msra.mxu0 0.0
    %1331 = vmatpush.msra.mxu0 0.0
    %1332 = vmatpush.msra.mxu0 0.0
    %1333 = vmatpush.msra.mxu0 0.0
    %1334 = vmatpush.msra.mxu0 0.0
    %1335 = vmatpush.msra.mxu0 0.0
    %1336 = vmatpush.msra.mxu0 0.0
    %1337 = vmatpush.msra.mxu0 0.0
    %1338 = vmatpush.msra.mxu0 %v1323
    %1339 = vmatpush.msra.mxu0 %v1322
    %1340 = vmatmul.f32.gmra.mxu0 %v511
    %v1341 = vpop.f32.mrf.mxu0
    %v1342 = vadd.f32 0.0, %v1341
    %1343 = vmatmul.f32.gmra.mxu0 %v514
    %v1344 = vpop.f32.mrf.mxu0
    %v1345 = vadd.f32 0.0, %v1344
    %1346 = vdwg.mxu0
    %v1347 = vld [vmem:[#allocation3 + $0x20] sm:$0xff]
    %v1348 = vld [vmem:[#allocation3 + $0x28] sm:$0xff]
    %v1350 = vsel %vm340, %v1342, 0
    %v1353 = vsel %vm340, %v1345, 0
    %1355 = vmatpush.msra.mxu0 0.0
    %1356 = vmatpush.msra.mxu0 0.0
    %1357 = vmatpush.msra.mxu0 0.0
    %1358 = vmatpush.msra.mxu0 0.0
    %1359 = vmatpush.msra.mxu0 0.0
    %1360 = vmatpush.msra.mxu0 0.0
    %1361 = vmatpush.msra.mxu0 0.0
    %1362 = vmatpush.msra.mxu0 0.0
    %1363 = vmatpush.msra.mxu0 0.0
    %1364 = vmatpush.msra.mxu0 0.0
    %1365 = vmatpush.msra.mxu0 0.0
    %1366 = vmatpush.msra.mxu0 0.0
    %1367 = vmatpush.msra.mxu0 0.0
    %1368 = vmatpush.msra.mxu0 0.0
    %1369 = vmatpush.msra.mxu0 %v542
    %1370 = vmatpush.msra.mxu0 %v541
    %1371 = vmatmul.f32.gmra.mxu0 %v1350
    %v1372 = vpop.f32.mrf.mxu0
    %v1373 = vadd.f32 0.0, %v1372
    %1374 = vmatmul.f32.gmra.mxu0 %v1353
    %v1375 = vpop.f32.mrf.mxu0
    %v1376 = vadd.f32 0.0, %v1375
    %1377 = vdwg.mxu0
    %v1378 = vadd.f32 %v1347, %v1373
    %v1379 = vadd.f32 %v1348, %v1376
    %v1380 = vadd.f32 %v1378, %v575
    %v1381 = vadd.f32 %v1379, %v575
    %v1382 = vtanh.pop %v1380
    %v1383 = vtanh.pop %v1381
    %v1384 = vmul.f32 %v1306, %v996
    %v1385 = vmul.f32 %v1321, %v997
    %v1386 = vsub.f32 1.0, %v1306
    %v1387 = vsub.f32 1.0, %v1321
    %1390 = vrot.lane.b32.xlu0 %v1382, 16
    %v1391 = vpop.permute.xlu0 %1390
    %1392 = vrot.lane.b32.xlu0 %v1383, 16
    %v1393 = vpop.permute.xlu0 %1392
    %v1396 = vmul.f32 %v1386, %v1391
    %v1397 = vmul.f32 %v1387, %v1393
    %v1398 = vadd.f32 %v1384, %v1396
    %v1399 = vadd.f32 %v1385, %v1397
    %1402 = vrot.lane.b32.xlu0 %v1398, 112
    %v1403 = vpop.permute.xlu0 %1402
    %1404 = vrot.lane.b32.xlu0 %v1399, 112
    %v1405 = vpop.permute.xlu0 %1404
    %1408 = vmatpush.msra.mxu0 0.0
    %1409 = vmatpush.msra.mxu0 0.0
    %1410 = vmatpush.msra.mxu0 0.0
    %1411 = vmatpush.msra.mxu0 0.0
    %1412 = vmatpush.msra.mxu0 0.0
    %1413 = vmatpush.msra.mxu0 0.0
    %1414 = vmatpush.msra.mxu0 0.0
    %1415 = vmatpush.msra.mxu0 0.0
    %1416 = vmatpush.msra.mxu0 0.0
    %1417 = vmatpush.msra.mxu0 0.0
    %1418 = vmatpush.msra.mxu0 0.0
    %1419 = vmatpush.msra.mxu0 0.0
    %1420 = vmatpush.msra.mxu0 0.0
    %1421 = vmatpush.msra.mxu0 0.0
    %1422 = vmatpush.msra.mxu0 %v1405
    %1423 = vmatpush.msra.mxu0 %v1403
    %1424 = vmatmul.f32.gmra.mxu0 %v511
    %v1425 = vpop.f32.mrf.mxu0
    %v1426 = vadd.f32 0.0, %v1425
    %1427 = vmatmul.f32.gmra.mxu0 %v514
    %v1428 = vpop.f32.mrf.mxu0
    %v1429 = vadd.f32 0.0, %v1428
    %1430 = vdwg.mxu0
    %1433 = vrot.lane.b32.xlu0 %v1253, 112
    %v1434 = vpop.permute.xlu0 %1433
    %1435 = vrot.lane.b32.xlu0 %v1254, 112
    %v1436 = vpop.permute.xlu0 %1435
    %1439 = vmatpush.msra.mxu0 0.0
    %1440 = vmatpush.msra.mxu0 0.0
    %1441 = vmatpush.msra.mxu0 0.0
    %1442 = vmatpush.msra.mxu0 0.0
    %1443 = vmatpush.msra.mxu0 0.0
    %1444 = vmatpush.msra.mxu0 0.0
    %1445 = vmatpush.msra.mxu0 0.0
    %1446 = vmatpush.msra.mxu0 0.0
    %1447 = vmatpush.msra.mxu0 0.0
    %1448 = vmatpush.msra.mxu0 0.0
    %1449 = vmatpush.msra.mxu0 0.0
    %1450 = vmatpush.msra.mxu0 0.0
    %1451 = vmatpush.msra.mxu0 0.0
    %1452 = vmatpush.msra.mxu0 0.0
    %1453 = vmatpush.msra.mxu0 %v1436
    %1454 = vmatpush.msra.mxu0 %v1434
    %1455 = vmatmul.f32.gmra.mxu0 %v511
    %v1456 = vpop.f32.mrf.mxu0
    %v1457 = vadd.f32 0.0, %v1456
    %1458 = vmatmul.f32.gmra.mxu0 %v514
    %v1459 = vpop.f32.mrf.mxu0
    %v1460 = vadd.f32 0.0, %v1459
    %1461 = vdwg.mxu0
    %v1463 = vsel %vm340, %v1457, 0
    %v1466 = vsel %vm340, %v1460, 0
    %1468 = vmatpush.msra.mxu0 0.0
    %1469 = vmatpush.msra.mxu0 0.0
    %1470 = vmatpush.msra.mxu0 0.0
    %1471 = vmatpush.msra.mxu0 0.0
    %1472 = vmatpush.msra.mxu0 0.0
    %1473 = vmatpush.msra.mxu0 0.0
    %1474 = vmatpush.msra.mxu0 0.0
    %1475 = vmatpush.msra.mxu0 0.0
    %1476 = vmatpush.msra.mxu0 0.0
    %1477 = vmatpush.msra.mxu0 0.0
    %1478 = vmatpush.msra.mxu0 0.0
    %1479 = vmatpush.msra.mxu0 0.0
    %1480 = vmatpush.msra.mxu0 0.0
    %1481 = vmatpush.msra.mxu0 0.0
    %1482 = vmatpush.msra.mxu0 %v651
    %1483 = vmatpush.msra.mxu0 %v650
    %1484 = vmatmul.f32.gmra.mxu0 %v1463
    %v1485 = vpop.f32.mrf.mxu0
    %v1486 = vadd.f32 0.0, %v1485
    %1487 = vmatmul.f32.gmra.mxu0 %v1466
    %v1488 = vpop.f32.mrf.mxu0
    %v1489 = vadd.f32 0.0, %v1488
    %1490 = vdwg.mxu0
    %v1492 = vsel %vm340, %v1426, 0
    %v1495 = vsel %vm340, %v1429, 0
    %1497 = vmatpush.msra.mxu0 0.0
    %1498 = vmatpush.msra.mxu0 0.0
    %1499 = vmatpush.msra.mxu0 0.0
    %1500 = vmatpush.msra.mxu0 0.0
    %1501 = vmatpush.msra.mxu0 0.0
    %1502 = vmatpush.msra.mxu0 0.0
    %1503 = vmatpush.msra.mxu0 0.0
    %1504 = vmatpush.msra.mxu0 0.0
    %1505 = vmatpush.msra.mxu0 0.0
    %1506 = vmatpush.msra.mxu0 0.0
    %1507 = vmatpush.msra.mxu0 0.0
    %1508 = vmatpush.msra.mxu0 0.0
    %1509 = vmatpush.msra.mxu0 0.0
    %1510 = vmatpush.msra.mxu0 0.0
    %1511 = vmatpush.msra.mxu0 %v649
    %1512 = vmatpush.msra.mxu0 %v648
    %1513 = vmatmul.f32.gmra.mxu0 %v1492
    %v1514 = vpop.f32.mrf.mxu0
    %v1515 = vadd.f32 %v1486, %v1514
    %1516 = vmatmul.f32.gmra.mxu0 %v1495
    %v1517 = vpop.f32.mrf.mxu0
    %v1518 = vadd.f32 %v1489, %v1517
    %1519 = vdwg.mxu0
    %v1520 = vadd.f32 %v1515, %v711
    %v1521 = vadd.f32 %v1518, %v711
    %v1522 = vxor.u32 %v1520, 2147483648
    %v1523 = vxor.u32 %v1521, 2147483648
    %v1524 = vmul.f32 %v1522, 1.442695
    %v1525 = vpow.pop %v1524
    %v1526 = vmul.f32 %v1523, 1.442695
    %v1527 = vpow.pop %v1526
    %v1528 = vadd.f32 %v1525, 1.0
    %v1529 = vadd.f32 %v1527, 1.0
    %v1530 = vrcp.pop %v1528
    %v1531 = vmul.f32 %v1528, %v1530
    %v1532 = vsub.f32 1.0, %v1531
    %v1533 = vmul.f32 %v1530, %v1532
    %v1534 = vadd.f32 %v1530, %v1533
    %vm1535 = vweird.f32 %v1528
    %vm1536 = vweird.f32 %v1530
    %vm1537 = vmor %vm1535, %vm1536
    %v1538 = vsel %vm1537, %v1530, %v1534
    %v1539 = vand.u32 2147483647, %v1528
    %vm1540 = vcmp.eq.f32.partialorder %v1539, 8.507059e+37
    %v1541 = vand.u32 %v1528, 2147483648
    %v1542 = vor.u32 1.1754944e-38, %v1541
    %v1543 = vsel %vm1540, %v1542, %v1538
    %v1544 = vmul.f32 1.0, %v1543
    %v1545 = vrcp.pop %v1529
    %v1546 = vmul.f32 %v1529, %v1545
    %v1547 = vsub.f32 1.0, %v1546
    %v1548 = vmul.f32 %v1545, %v1547
    %v1549 = vadd.f32 %v1545, %v1548
    %vm1550 = vweird.f32 %v1529
    %vm1551 = vweird.f32 %v1545
    %vm1552 = vmor %vm1550, %vm1551
    %v1553 = vsel %vm1552, %v1545, %v1549
    %v1554 = vand.u32 2147483647, %v1529
    %vm1555 = vcmp.eq.f32.partialorder %v1554, 8.507059e+37
    %v1556 = vand.u32 %v1529, 2147483648
    %v1557 = vor.u32 1.1754944e-38, %v1556
    %v1558 = vsel %vm1555, %v1557, %v1553
    %v1559 = vmul.f32 1.0, %v1558
    %v1560 = vmul.f32 %v1544, %v1434
    %v1561 = vmul.f32 %v1559, %v1436
    %1562 = vmatpush.msra.mxu0 0.0
    %1563 = vmatpush.msra.mxu0 0.0
    %1564 = vmatpush.msra.mxu0 0.0
    %1565 = vmatpush.msra.mxu0 0.0
    %1566 = vmatpush.msra.mxu0 0.0
    %1567 = vmatpush.msra.mxu0 0.0
    %1568 = vmatpush.msra.mxu0 0.0
    %1569 = vmatpush.msra.mxu0 0.0
    %1570 = vmatpush.msra.mxu0 0.0
    %1571 = vmatpush.msra.mxu0 0.0
    %1572 = vmatpush.msra.mxu0 0.0
    %1573 = vmatpush.msra.mxu0 0.0
    %1574 = vmatpush.msra.mxu0 0.0
    %1575 = vmatpush.msra.mxu0 0.0
    %1576 = vmatpush.msra.mxu0 %v1561
    %1577 = vmatpush.msra.mxu0 %v1560
    %1578 = vmatmul.f32.gmra.mxu0 %v511
    %v1579 = vpop.f32.mrf.mxu0
    %v1580 = vadd.f32 0.0, %v1579
    %1581 = vmatmul.f32.gmra.mxu0 %v514
    %v1582 = vpop.f32.mrf.mxu0
    %v1583 = vadd.f32 0.0, %v1582
    %1584 = vdwg.mxu0
    %v1586 = vsel %vm340, %v1580, 0
    %v1589 = vsel %vm340, %v1583, 0
    %1591 = vmatpush.msra.mxu0 0.0
    %1592 = vmatpush.msra.mxu0 0.0
    %1593 = vmatpush.msra.mxu0 0.0
    %1594 = vmatpush.msra.mxu0 0.0
    %1595 = vmatpush.msra.mxu0 0.0
    %1596 = vmatpush.msra.mxu0 0.0
    %1597 = vmatpush.msra.mxu0 0.0
    %1598 = vmatpush.msra.mxu0 0.0
    %1599 = vmatpush.msra.mxu0 0.0
    %1600 = vmatpush.msra.mxu0 0.0
    %1601 = vmatpush.msra.mxu0 0.0
    %1602 = vmatpush.msra.mxu0 0.0
    %1603 = vmatpush.msra.mxu0 0.0
    %1604 = vmatpush.msra.mxu0 0.0
    %1605 = vmatpush.msra.mxu0 %v780
    %1606 = vmatpush.msra.mxu0 %v779
    %1607 = vmatmul.f32.gmra.mxu0 %v1586
    %v1608 = vpop.f32.mrf.mxu0
    %v1609 = vadd.f32 0.0, %v1608
    %1610 = vmatmul.f32.gmra.mxu0 %v1589
    %v1611 = vpop.f32.mrf.mxu0
    %v1612 = vadd.f32 0.0, %v1611
    %1613 = vdwg.mxu0
    %1614 = vmatpush.msra.mxu0 0.0
    %1615 = vmatpush.msra.mxu0 0.0
    %1616 = vmatpush.msra.mxu0 0.0
    %1617 = vmatpush.msra.mxu0 0.0
    %1618 = vmatpush.msra.mxu0 0.0
    %1619 = vmatpush.msra.mxu0 0.0
    %1620 = vmatpush.msra.mxu0 0.0
    %1621 = vmatpush.msra.mxu0 0.0
    %1622 = vmatpush.msra.mxu0 0.0
    %1623 = vmatpush.msra.mxu0 0.0
    %1624 = vmatpush.msra.mxu0 0.0
    %1625 = vmatpush.msra.mxu0 0.0
    %1626 = vmatpush.msra.mxu0 0.0
    %1627 = vmatpush.msra.mxu0 0.0
    %1628 = vmatpush.msra.mxu0 %v778
    %1629 = vmatpush.msra.mxu0 %v777
    %1630 = vmatmul.f32.gmra.mxu0 %v1492
    %v1631 = vpop.f32.mrf.mxu0
    %v1632 = vadd.f32 %v1609, %v1631
    %1633 = vmatmul.f32.gmra.mxu0 %v1495
    %v1634 = vpop.f32.mrf.mxu0
    %v1635 = vadd.f32 %v1612, %v1634
    %1636 = vdwg.mxu0
    %v1637 = vadd.f32 %v1632, %v834
    %v1638 = vadd.f32 %v1635, %v834
    %v1639 = vtanh.pop %v1637
    %v1640 = vtanh.pop %v1638
    %v1641 = vmul.f32 %v1544, %v1253
    %v1642 = vmul.f32 %v1559, %v1254
    %v1643 = vsub.f32 1.0, %v1544
    %v1644 = vsub.f32 1.0, %v1559
    %1647 = vrot.lane.b32.xlu0 %v1639, 16
    %v1648 = vpop.permute.xlu0 %1647
    %1649 = vrot.lane.b32.xlu0 %v1640, 16
    %v1650 = vpop.permute.xlu0 %1649
    %v1653 = vmul.f32 %v1643, %v1648
    %v1654 = vmul.f32 %v1644, %v1650
    %v1655 = vadd.f32 %v1641, %v1653
    %v1656 = vadd.f32 %v1642, %v1654
    %v1657 = vld [vmem:[#allocation2 + $0x30] sm:$0xff]
    %v1658 = vld [vmem:[#allocation2 + $0x38] sm:$0xff]
    %1659 = vmatpush.msra.mxu0 0.0
    %1660 = vmatpush.msra.mxu0 0.0
    %1661 = vmatpush.msra.mxu0 0.0
    %1662 = vmatpush.msra.mxu0 0.0
    %1663 = vmatpush.msra.mxu0 0.0
    %1664 = vmatpush.msra.mxu0 0.0
    %1665 = vmatpush.msra.mxu0 0.0
    %1666 = vmatpush.msra.mxu0 0.0
    %1667 = vmatpush.msra.mxu0 0.0
    %1668 = vmatpush.msra.mxu0 0.0
    %1669 = vmatpush.msra.mxu0 0.0
    %1670 = vmatpush.msra.mxu0 0.0
    %1671 = vmatpush.msra.mxu0 0.0
    %1672 = vmatpush.msra.mxu0 0.0
    %1673 = vmatpush.msra.mxu0 %v437
    %1674 = vmatpush.msra.mxu0 %v436
    %1675 = vmatmul.f32.gmra.mxu0 %v1492
    %v1676 = vpop.f32.mrf.mxu0
    %v1677 = vadd.f32 0.0, %v1676
    %1678 = vmatmul.f32.gmra.mxu0 %v1495
    %v1679 = vpop.f32.mrf.mxu0
    %v1680 = vadd.f32 0.0, %v1679
    %1681 = vdwg.mxu0
    %v1682 = vadd.f32 %v1657, %v1677
    %v1683 = vadd.f32 %v1658, %v1680
    %v1684 = vadd.f32 %v1682, %v467
    %v1685 = vadd.f32 %v1683, %v467
    %v1686 = vxor.u32 %v1684, 2147483648
    %v1687 = vxor.u32 %v1685, 2147483648
    %v1688 = vmul.f32 %v1686, 1.442695
    %v1689 = vpow.pop %v1688
    %v1690 = vmul.f32 %v1687, 1.442695
    %v1691 = vpow.pop %v1690
    %v1692 = vadd.f32 %v1689, 1.0
    %v1693 = vadd.f32 %v1691, 1.0
    %v1694 = vrcp.pop %v1692
    %v1695 = vmul.f32 %v1692, %v1694
    %v1696 = vsub.f32 1.0, %v1695
    %v1697 = vmul.f32 %v1694, %v1696
    %v1698 = vadd.f32 %v1694, %v1697
    %vm1699 = vweird.f32 %v1692
    %vm1700 = vweird.f32 %v1694
    %vm1701 = vmor %vm1699, %vm1700
    %v1702 = vsel %vm1701, %v1694, %v1698
    %v1703 = vand.u32 2147483647, %v1692
    %vm1704 = vcmp.eq.f32.partialorder %v1703, 8.507059e+37
    %v1705 = vand.u32 %v1692, 2147483648
    %v1706 = vor.u32 1.1754944e-38, %v1705
    %v1707 = vsel %vm1704, %v1706, %v1702
    %v1708 = vmul.f32 1.0, %v1707
    %v1709 = vrcp.pop %v1693
    %v1710 = vmul.f32 %v1693, %v1709
    %v1711 = vsub.f32 1.0, %v1710
    %v1712 = vmul.f32 %v1709, %v1711
    %v1713 = vadd.f32 %v1709, %v1712
    %vm1714 = vweird.f32 %v1693
    %vm1715 = vweird.f32 %v1709
    %vm1716 = vmor %vm1714, %vm1715
    %v1717 = vsel %vm1716, %v1709, %v1713
    %v1718 = vand.u32 2147483647, %v1693
    %vm1719 = vcmp.eq.f32.partialorder %v1718, 8.507059e+37
    %v1720 = vand.u32 %v1693, 2147483648
    %v1721 = vor.u32 1.1754944e-38, %v1720
    %v1722 = vsel %vm1719, %v1721, %v1717
    %v1723 = vmul.f32 1.0, %v1722
    %v1724 = vmul.f32 %v1708, %v1403
    %v1725 = vmul.f32 %v1723, %v1405
    %1726 = vmatpush.msra.mxu0 0.0
    %1727 = vmatpush.msra.mxu0 0.0
    %1728 = vmatpush.msra.mxu0 0.0
    %1729 = vmatpush.msra.mxu0 0.0
    %1730 = vmatpush.msra.mxu0 0.0
    %1731 = vmatpush.msra.mxu0 0.0
    %1732 = vmatpush.msra.mxu0 0.0
    %1733 = vmatpush.msra.mxu0 0.0
    %1734 = vmatpush.msra.mxu0 0.0
    %1735 = vmatpush.msra.mxu0 0.0
    %1736 = vmatpush.msra.mxu0 0.0
    %1737 = vmatpush.msra.mxu0 0.0
    %1738 = vmatpush.msra.mxu0 0.0
    %1739 = vmatpush.msra.mxu0 0.0
    %1740 = vmatpush.msra.mxu0 %v1725
    %1741 = vmatpush.msra.mxu0 %v1724
    %1742 = vmatmul.f32.gmra.mxu0 %v511
    %v1743 = vpop.f32.mrf.mxu0
    %v1744 = vadd.f32 0.0, %v1743
    %1745 = vmatmul.f32.gmra.mxu0 %v514
    %v1746 = vpop.f32.mrf.mxu0
    %v1747 = vadd.f32 0.0, %v1746
    %1748 = vdwg.mxu0
    %v1749 = vld [vmem:[#allocation3 + $0x30] sm:$0xff]
    %v1750 = vld [vmem:[#allocation3 + $0x38] sm:$0xff]
    %v1752 = vsel %vm340, %v1744, 0
    %v1755 = vsel %vm340, %v1747, 0
    %1757 = vmatpush.msra.mxu0 0.0
    %1758 = vmatpush.msra.mxu0 0.0
    %1759 = vmatpush.msra.mxu0 0.0
    %1760 = vmatpush.msra.mxu0 0.0
    %1761 = vmatpush.msra.mxu0 0.0
    %1762 = vmatpush.msra.mxu0 0.0
    %1763 = vmatpush.msra.mxu0 0.0
    %1764 = vmatpush.msra.mxu0 0.0
    %1765 = vmatpush.msra.mxu0 0.0
    %1766 = vmatpush.msra.mxu0 0.0
    %1767 = vmatpush.msra.mxu0 0.0
    %1768 = vmatpush.msra.mxu0 0.0
    %1769 = vmatpush.msra.mxu0 0.0
    %1770 = vmatpush.msra.mxu0 0.0
    %1771 = vmatpush.msra.mxu0 %v542
    %1772 = vmatpush.msra.mxu0 %v541
    %1773 = vmatmul.f32.gmra.mxu0 %v1752
    %v1774 = vpop.f32.mrf.mxu0
    %v1775 = vadd.f32 0.0, %v1774
    %1776 = vmatmul.f32.gmra.mxu0 %v1755
    %v1777 = vpop.f32.mrf.mxu0
    %v1778 = vadd.f32 0.0, %v1777
    %1779 = vdwg.mxu0
    %v1780 = vadd.f32 %v1749, %v1775
    %v1781 = vadd.f32 %v1750, %v1778
    %v1782 = vadd.f32 %v1780, %v575
    %v1783 = vadd.f32 %v1781, %v575
    %v1784 = vtanh.pop %v1782
    %v1785 = vtanh.pop %v1783
    %v1786 = vmul.f32 %v1708, %v1398
    %v1787 = vmul.f32 %v1723, %v1399
    %v1788 = vsub.f32 1.0, %v1708
    %v1789 = vsub.f32 1.0, %v1723
    %1792 = vrot.lane.b32.xlu0 %v1784, 16
    %v1793 = vpop.permute.xlu0 %1792
    %1794 = vrot.lane.b32.xlu0 %v1785, 16
    %v1795 = vpop.permute.xlu0 %1794
    %v1798 = vmul.f32 %v1788, %v1793
    %v1799 = vmul.f32 %v1789, %v1795
    %v1800 = vadd.f32 %v1786, %v1798
    %v1801 = vadd.f32 %v1787, %v1799
    %1804 = vrot.lane.b32.xlu0 %v1800, 112
    %v1805 = vpop.permute.xlu0 %1804
    %1806 = vrot.lane.b32.xlu0 %v1801, 112
    %v1807 = vpop.permute.xlu0 %1806
    %1810 = vmatpush.msra.mxu0 0.0
    %1811 = vmatpush.msra.mxu0 0.0
    %1812 = vmatpush.msra.mxu0 0.0
    %1813 = vmatpush.msra.mxu0 0.0
    %1814 = vmatpush.msra.mxu0 0.0
    %1815 = vmatpush.msra.mxu0 0.0
    %1816 = vmatpush.msra.mxu0 0.0
    %1817 = vmatpush.msra.mxu0 0.0
    %1818 = vmatpush.msra.mxu0 0.0
    %1819 = vmatpush.msra.mxu0 0.0
    %1820 = vmatpush.msra.mxu0 0.0
    %1821 = vmatpush.msra.mxu0 0.0
    %1822 = vmatpush.msra.mxu0 0.0
    %1823 = vmatpush.msra.mxu0 0.0
    %1824 = vmatpush.msra.mxu0 %v1807
    %1825 = vmatpush.msra.mxu0 %v1805
    %1826 = vmatmul.f32.gmra.mxu0 %v511
    %v1827 = vpop.f32.mrf.mxu0
    %v1828 = vadd.f32 0.0, %v1827
    %1829 = vmatmul.f32.gmra.mxu0 %v514
    %v1830 = vpop.f32.mrf.mxu0
    %v1831 = vadd.f32 0.0, %v1830
    %1832 = vdwg.mxu0
    %1835 = vrot.lane.b32.xlu0 %v1655, 112
    %v1836 = vpop.permute.xlu0 %1835
    %1837 = vrot.lane.b32.xlu0 %v1656, 112
    %v1838 = vpop.permute.xlu0 %1837
    %1841 = vmatpush.msra.mxu0 0.0
    %1842 = vmatpush.msra.mxu0 0.0
    %1843 = vmatpush.msra.mxu0 0.0
    %1844 = vmatpush.msra.mxu0 0.0
    %1845 = vmatpush.msra.mxu0 0.0
    %1846 = vmatpush.msra.mxu0 0.0
    %1847 = vmatpush.msra.mxu0 0.0
    %1848 = vmatpush.msra.mxu0 0.0
    %1849 = vmatpush.msra.mxu0 0.0
    %1850 = vmatpush.msra.mxu0 0.0
    %1851 = vmatpush.msra.mxu0 0.0
    %1852 = vmatpush.msra.mxu0 0.0
    %1853 = vmatpush.msra.mxu0 0.0
    %1854 = vmatpush.msra.mxu0 0.0
    %1855 = vmatpush.msra.mxu0 %v1838
    %1856 = vmatpush.msra.mxu0 %v1836
    %1857 = vmatmul.f32.gmra.mxu0 %v511
    %v1858 = vpop.f32.mrf.mxu0
    %v1859 = vadd.f32 0.0, %v1858
    %1860 = vmatmul.f32.gmra.mxu0 %v514
    %v1861 = vpop.f32.mrf.mxu0
    %v1862 = vadd.f32 0.0, %v1861
    %1863 = vdwg.mxu0
    %v1865 = vsel %vm340, %v1859, 0
    %v1868 = vsel %vm340, %v1862, 0
    %1870 = vmatpush.msra.mxu0 0.0
    %1871 = vmatpush.msra.mxu0 0.0
    %1872 = vmatpush.msra.mxu0 0.0
    %1873 = vmatpush.msra.mxu0 0.0
    %1874 = vmatpush.msra.mxu0 0.0
    %1875 = vmatpush.msra.mxu0 0.0
    %1876 = vmatpush.msra.mxu0 0.0
    %1877 = vmatpush.msra.mxu0 0.0
    %1878 = vmatpush.msra.mxu0 0.0
    %1879 = vmatpush.msra.mxu0 0.0
    %1880 = vmatpush.msra.mxu0 0.0
    %1881 = vmatpush.msra.mxu0 0.0
    %1882 = vmatpush.msra.mxu0 0.0
    %1883 = vmatpush.msra.mxu0 0.0
    %1884 = vmatpush.msra.mxu0 %v651
    %1885 = vmatpush.msra.mxu0 %v650
    %1886 = vmatmul.f32.gmra.mxu0 %v1865
    %v1887 = vpop.f32.mrf.mxu0
    %v1888 = vadd.f32 0.0, %v1887
    %1889 = vmatmul.f32.gmra.mxu0 %v1868
    %v1890 = vpop.f32.mrf.mxu0
    %v1891 = vadd.f32 0.0, %v1890
    %1892 = vdwg.mxu0
    %v1894 = vsel %vm340, %v1828, 0
    %v1897 = vsel %vm340, %v1831, 0
    %1899 = vmatpush.msra.mxu0 0.0
    %1900 = vmatpush.msra.mxu0 0.0
    %1901 = vmatpush.msra.mxu0 0.0
    %1902 = vmatpush.msra.mxu0 0.0
    %1903 = vmatpush.msra.mxu0 0.0
    %1904 = vmatpush.msra.mxu0 0.0
    %1905 = vmatpush.msra.mxu0 0.0
    %1906 = vmatpush.msra.mxu0 0.0
    %1907 = vmatpush.msra.mxu0 0.0
    %1908 = vmatpush.msra.mxu0 0.0
    %1909 = vmatpush.msra.mxu0 0.0
    %1910 = vmatpush.msra.mxu0 0.0
    %1911 = vmatpush.msra.mxu0 0.0
    %1912 = vmatpush.msra.mxu0 0.0
    %1913 = vmatpush.msra.mxu0 %v649
    %1914 = vmatpush.msra.mxu0 %v648
    %1915 = vmatmul.f32.gmra.mxu0 %v1894
    %v1916 = vpop.f32.mrf.mxu0
    %v1917 = vadd.f32 %v1888, %v1916
    %1918 = vmatmul.f32.gmra.mxu0 %v1897
    %v1919 = vpop.f32.mrf.mxu0
    %v1920 = vadd.f32 %v1891, %v1919
    %1921 = vdwg.mxu0
    %v1922 = vadd.f32 %v1917, %v711
    %v1923 = vadd.f32 %v1920, %v711
    %v1924 = vxor.u32 %v1922, 2147483648
    %v1925 = vxor.u32 %v1923, 2147483648
    %v1926 = vmul.f32 %v1924, 1.442695
    %v1927 = vpow.pop %v1926
    %v1928 = vmul.f32 %v1925, 1.442695
    %v1929 = vpow.pop %v1928
    %v1930 = vadd.f32 %v1927, 1.0
    %v1931 = vadd.f32 %v1929, 1.0
    %v1932 = vrcp.pop %v1930
    %v1933 = vmul.f32 %v1930, %v1932
    %v1934 = vsub.f32 1.0, %v1933
    %v1935 = vmul.f32 %v1932, %v1934
    %v1936 = vadd.f32 %v1932, %v1935
    %vm1937 = vweird.f32 %v1930
    %vm1938 = vweird.f32 %v1932
    %vm1939 = vmor %vm1937, %vm1938
    %v1940 = vsel %vm1939, %v1932, %v1936
    %v1941 = vand.u32 2147483647, %v1930
    %vm1942 = vcmp.eq.f32.partialorder %v1941, 8.507059e+37
    %v1943 = vand.u32 %v1930, 2147483648
    %v1944 = vor.u32 1.1754944e-38, %v1943
    %v1945 = vsel %vm1942, %v1944, %v1940
    %v1946 = vmul.f32 1.0, %v1945
    %v1947 = vrcp.pop %v1931
    %v1948 = vmul.f32 %v1931, %v1947
    %v1949 = vsub.f32 1.0, %v1948
    %v1950 = vmul.f32 %v1947, %v1949
    %v1951 = vadd.f32 %v1947, %v1950
    %vm1952 = vweird.f32 %v1931
    %vm1953 = vweird.f32 %v1947
    %vm1954 = vmor %vm1952, %vm1953
    %v1955 = vsel %vm1954, %v1947, %v1951
    %v1956 = vand.u32 2147483647, %v1931
    %vm1957 = vcmp.eq.f32.partialorder %v1956, 8.507059e+37
    %v1958 = vand.u32 %v1931, 2147483648
    %v1959 = vor.u32 1.1754944e-38, %v1958
    %v1960 = vsel %vm1957, %v1959, %v1955
    %v1961 = vmul.f32 1.0, %v1960
    %v1962 = vmul.f32 %v1946, %v1836
    %v1963 = vmul.f32 %v1961, %v1838
    %1964 = vmatpush.msra.mxu0 0.0
    %1965 = vmatpush.msra.mxu0 0.0
    %1966 = vmatpush.msra.mxu0 0.0
    %1967 = vmatpush.msra.mxu0 0.0
    %1968 = vmatpush.msra.mxu0 0.0
    %1969 = vmatpush.msra.mxu0 0.0
    %1970 = vmatpush.msra.mxu0 0.0
    %1971 = vmatpush.msra.mxu0 0.0
    %1972 = vmatpush.msra.mxu0 0.0
    %1973 = vmatpush.msra.mxu0 0.0
    %1974 = vmatpush.msra.mxu0 0.0
    %1975 = vmatpush.msra.mxu0 0.0
    %1976 = vmatpush.msra.mxu0 0.0
    %1977 = vmatpush.msra.mxu0 0.0
    %1978 = vmatpush.msra.mxu0 %v1963
    %1979 = vmatpush.msra.mxu0 %v1962
    %1980 = vmatmul.f32.gmra.mxu0 %v511
    %v1981 = vpop.f32.mrf.mxu0
    %v1982 = vadd.f32 0.0, %v1981
    %1983 = vmatmul.f32.gmra.mxu0 %v514
    %v1984 = vpop.f32.mrf.mxu0
    %v1985 = vadd.f32 0.0, %v1984
    %1986 = vdwg.mxu0
    %v1988 = vsel %vm340, %v1982, 0
    %v1991 = vsel %vm340, %v1985, 0
    %1993 = vmatpush.msra.mxu0 0.0
    %1994 = vmatpush.msra.mxu0 0.0
    %1995 = vmatpush.msra.mxu0 0.0
    %1996 = vmatpush.msra.mxu0 0.0
    %1997 = vmatpush.msra.mxu0 0.0
    %1998 = vmatpush.msra.mxu0 0.0
    %1999 = vmatpush.msra.mxu0 0.0
    %2000 = vmatpush.msra.mxu0 0.0
    %2001 = vmatpush.msra.mxu0 0.0
    %2002 = vmatpush.msra.mxu0 0.0
    %2003 = vmatpush.msra.mxu0 0.0
    %2004 = vmatpush.msra.mxu0 0.0
    %2005 = vmatpush.msra.mxu0 0.0
    %2006 = vmatpush.msra.mxu0 0.0
    %2007 = vmatpush.msra.mxu0 %v780
    %2008 = vmatpush.msra.mxu0 %v779
    %2009 = vmatmul.f32.gmra.mxu0 %v1988
    %v2010 = vpop.f32.mrf.mxu0
    %v2011 = vadd.f32 0.0, %v2010
    %2012 = vmatmul.f32.gmra.mxu0 %v1991
    %v2013 = vpop.f32.mrf.mxu0
    %v2014 = vadd.f32 0.0, %v2013
    %2015 = vdwg.mxu0
    %2016 = vmatpush.msra.mxu0 0.0
    %2017 = vmatpush.msra.mxu0 0.0
    %2018 = vmatpush.msra.mxu0 0.0
    %2019 = vmatpush.msra.mxu0 0.0
    %2020 = vmatpush.msra.mxu0 0.0
    %2021 = vmatpush.msra.mxu0 0.0
    %2022 = vmatpush.msra.mxu0 0.0
    %2023 = vmatpush.msra.mxu0 0.0
    %2024 = vmatpush.msra.mxu0 0.0
    %2025 = vmatpush.msra.mxu0 0.0
    %2026 = vmatpush.msra.mxu0 0.0
    %2027 = vmatpush.msra.mxu0 0.0
    %2028 = vmatpush.msra.mxu0 0.0
    %2029 = vmatpush.msra.mxu0 0.0
    %2030 = vmatpush.msra.mxu0 %v778
    %2031 = vmatpush.msra.mxu0 %v777
    %2032 = vmatmul.f32.gmra.mxu0 %v1894
    %v2033 = vpop.f32.mrf.mxu0
    %v2034 = vadd.f32 %v2011, %v2033
    %2035 = vmatmul.f32.gmra.mxu0 %v1897
    %v2036 = vpop.f32.mrf.mxu0
    %v2037 = vadd.f32 %v2014, %v2036
    %2038 = vdwg.mxu0
    %v2039 = vadd.f32 %v2034, %v834
    %v2040 = vadd.f32 %v2037, %v834
    %v2041 = vtanh.pop %v2039
    %v2042 = vtanh.pop %v2040
    %v2043 = vmul.f32 %v1946, %v1655
    %v2044 = vmul.f32 %v1961, %v1656
    %v2045 = vsub.f32 1.0, %v1946
    %v2046 = vsub.f32 1.0, %v1961
    %2049 = vrot.lane.b32.xlu0 %v2041, 16
    %v2050 = vpop.permute.xlu0 %2049
    %2051 = vrot.lane.b32.xlu0 %v2042, 16
    %v2052 = vpop.permute.xlu0 %2051
    %v2055 = vmul.f32 %v2045, %v2050
    %v2056 = vmul.f32 %v2046, %v2052
    %v2057 = vadd.f32 %v2043, %v2055
    %v2058 = vadd.f32 %v2044, %v2056
    %v2059 = vld [vmem:[#allocation2 + $0x40] sm:$0xff]
    %v2060 = vld [vmem:[#allocation2 + $0x48] sm:$0xff]
    %2061 = vmatpush.msra.mxu0 0.0
    %2062 = vmatpush.msra.mxu0 0.0
    %2063 = vmatpush.msra.mxu0 0.0
    %2064 = vmatpush.msra.mxu0 0.0
    %2065 = vmatpush.msra.mxu0 0.0
    %2066 = vmatpush.msra.mxu0 0.0
    %2067 = vmatpush.msra.mxu0 0.0
    %2068 = vmatpush.msra.mxu0 0.0
    %2069 = vmatpush.msra.mxu0 0.0
    %2070 = vmatpush.msra.mxu0 0.0
    %2071 = vmatpush.msra.mxu0 0.0
    %2072 = vmatpush.msra.mxu0 0.0
    %2073 = vmatpush.msra.mxu0 0.0
    %2074 = vmatpush.msra.mxu0 0.0
    %2075 = vmatpush.msra.mxu0 %v437
    %2076 = vmatpush.msra.mxu0 %v436
    %2077 = vmatmul.f32.gmra.mxu0 %v1894
    %v2078 = vpop.f32.mrf.mxu0
    %v2079 = vadd.f32 0.0, %v2078
    %2080 = vmatmul.f32.gmra.mxu0 %v1897
    %v2081 = vpop.f32.mrf.mxu0
    %v2082 = vadd.f32 0.0, %v2081
    %2083 = vdwg.mxu0
    %v2084 = vadd.f32 %v2059, %v2079
    %v2085 = vadd.f32 %v2060, %v2082
    %v2086 = vadd.f32 %v2084, %v467
    %v2087 = vadd.f32 %v2085, %v467
    %v2088 = vxor.u32 %v2086, 2147483648
    %v2089 = vxor.u32 %v2087, 2147483648
    %v2090 = vmul.f32 %v2088, 1.442695
    %v2091 = vpow.pop %v2090
    %v2092 = vmul.f32 %v2089, 1.442695
    %v2093 = vpow.pop %v2092
    %v2094 = vadd.f32 %v2091, 1.0
    %v2095 = vadd.f32 %v2093, 1.0
    %v2096 = vrcp.pop %v2094
    %v2097 = vmul.f32 %v2094, %v2096
    %v2098 = vsub.f32 1.0, %v2097
    %v2099 = vmul.f32 %v2096, %v2098
    %v2100 = vadd.f32 %v2096, %v2099
    %vm2101 = vweird.f32 %v2094
    %vm2102 = vweird.f32 %v2096
    %vm2103 = vmor %vm2101, %vm2102
    %v2104 = vsel %vm2103, %v2096, %v2100
    %v2105 = vand.u32 2147483647, %v2094
    %vm2106 = vcmp.eq.f32.partialorder %v2105, 8.507059e+37
    %v2107 = vand.u32 %v2094, 2147483648
    %v2108 = vor.u32 1.1754944e-38, %v2107
    %v2109 = vsel %vm2106, %v2108, %v2104
    %v2110 = vmul.f32 1.0, %v2109
    %v2111 = vrcp.pop %v2095
    %v2112 = vmul.f32 %v2095, %v2111
    %v2113 = vsub.f32 1.0, %v2112
    %v2114 = vmul.f32 %v2111, %v2113
    %v2115 = vadd.f32 %v2111, %v2114
    %vm2116 = vweird.f32 %v2095
    %vm2117 = vweird.f32 %v2111
    %vm2118 = vmor %vm2116, %vm2117
    %v2119 = vsel %vm2118, %v2111, %v2115
    %v2120 = vand.u32 2147483647, %v2095
    %vm2121 = vcmp.eq.f32.partialorder %v2120, 8.507059e+37
    %v2122 = vand.u32 %v2095, 2147483648
    %v2123 = vor.u32 1.1754944e-38, %v2122
    %v2124 = vsel %vm2121, %v2123, %v2119
    %v2125 = vmul.f32 1.0, %v2124
    %v2126 = vmul.f32 %v2110, %v1805
    %v2127 = vmul.f32 %v2125, %v1807
    %2128 = vmatpush.msra.mxu0 0.0
    %2129 = vmatpush.msra.mxu0 0.0
    %2130 = vmatpush.msra.mxu0 0.0
    %2131 = vmatpush.msra.mxu0 0.0
    %2132 = vmatpush.msra.mxu0 0.0
    %2133 = vmatpush.msra.mxu0 0.0
    %2134 = vmatpush.msra.mxu0 0.0
    %2135 = vmatpush.msra.mxu0 0.0
    %2136 = vmatpush.msra.mxu0 0.0
    %2137 = vmatpush.msra.mxu0 0.0
    %2138 = vmatpush.msra.mxu0 0.0
    %2139 = vmatpush.msra.mxu0 0.0
    %2140 = vmatpush.msra.mxu0 0.0
    %2141 = vmatpush.msra.mxu0 0.0
    %2142 = vmatpush.msra.mxu0 %v2127
    %2143 = vmatpush.msra.mxu0 %v2126
    %2144 = vmatmul.f32.gmra.mxu0 %v511
    %v2145 = vpop.f32.mrf.mxu0
    %v2146 = vadd.f32 0.0, %v2145
    %2147 = vmatmul.f32.gmra.mxu0 %v514
    %v2148 = vpop.f32.mrf.mxu0
    %v2149 = vadd.f32 0.0, %v2148
    %2150 = vdwg.mxu0
    %v2151 = vld [vmem:[#allocation3 + $0x40] sm:$0xff]
    %v2152 = vld [vmem:[#allocation3 + $0x48] sm:$0xff]
    %v2154 = vsel %vm340, %v2146, 0
    %v2157 = vsel %vm340, %v2149, 0
    %2159 = vmatpush.msra.mxu0 0.0
    %2160 = vmatpush.msra.mxu0 0.0
    %2161 = vmatpush.msra.mxu0 0.0
    %2162 = vmatpush.msra.mxu0 0.0
    %2163 = vmatpush.msra.mxu0 0.0
    %2164 = vmatpush.msra.mxu0 0.0
    %2165 = vmatpush.msra.mxu0 0.0
    %2166 = vmatpush.msra.mxu0 0.0
    %2167 = vmatpush.msra.mxu0 0.0
    %2168 = vmatpush.msra.mxu0 0.0
    %2169 = vmatpush.msra.mxu0 0.0
    %2170 = vmatpush.msra.mxu0 0.0
    %2171 = vmatpush.msra.mxu0 0.0
    %2172 = vmatpush.msra.mxu0 0.0
    %2173 = vmatpush.msra.mxu0 %v542
    %2174 = vmatpush.msra.mxu0 %v541
    %2175 = vmatmul.f32.gmra.mxu0 %v2154
    %v2176 = vpop.f32.mrf.mxu0
    %v2177 = vadd.f32 0.0, %v2176
    %2178 = vmatmul.f32.gmra.mxu0 %v2157
    %v2179 = vpop.f32.mrf.mxu0
    %v2180 = vadd.f32 0.0, %v2179
    %2181 = vdwg.mxu0
    %v2182 = vadd.f32 %v2151, %v2177
    %v2183 = vadd.f32 %v2152, %v2180
    %v2184 = vadd.f32 %v2182, %v575
    %v2185 = vadd.f32 %v2183, %v575
    %v2186 = vtanh.pop %v2184
    %v2187 = vtanh.pop %v2185
    %v2188 = vmul.f32 %v2110, %v1800
    %v2189 = vmul.f32 %v2125, %v1801
    %v2190 = vsub.f32 1.0, %v2110
    %v2191 = vsub.f32 1.0, %v2125
    %2194 = vrot.lane.b32.xlu0 %v2186, 16
    %v2195 = vpop.permute.xlu0 %2194
    %2196 = vrot.lane.b32.xlu0 %v2187, 16
    %v2197 = vpop.permute.xlu0 %2196
    %v2200 = vmul.f32 %v2190, %v2195
    %v2201 = vmul.f32 %v2191, %v2197
    %v2202 = vadd.f32 %v2188, %v2200
    %v2203 = vadd.f32 %v2189, %v2201
    %2206 = vrot.lane.b32.xlu0 %v2202, 112
    %v2207 = vpop.permute.xlu0 %2206
    %2208 = vrot.lane.b32.xlu0 %v2203, 112
    %v2209 = vpop.permute.xlu0 %2208
    %2212 = vmatpush.msra.mxu0 0.0
    %2213 = vmatpush.msra.mxu0 0.0
    %2214 = vmatpush.msra.mxu0 0.0
    %2215 = vmatpush.msra.mxu0 0.0
    %2216 = vmatpush.msra.mxu0 0.0
    %2217 = vmatpush.msra.mxu0 0.0
    %2218 = vmatpush.msra.mxu0 0.0
    %2219 = vmatpush.msra.mxu0 0.0
    %2220 = vmatpush.msra.mxu0 0.0
    %2221 = vmatpush.msra.mxu0 0.0
    %2222 = vmatpush.msra.mxu0 0.0
    %2223 = vmatpush.msra.mxu0 0.0
    %2224 = vmatpush.msra.mxu0 0.0
    %2225 = vmatpush.msra.mxu0 0.0
    %2226 = vmatpush.msra.mxu0 %v2209
    %2227 = vmatpush.msra.mxu0 %v2207
    %2228 = vmatmul.f32.gmra.mxu0 %v511
    %v2229 = vpop.f32.mrf.mxu0
    %v2230 = vadd.f32 0.0, %v2229
    %2231 = vmatmul.f32.gmra.mxu0 %v514
    %v2232 = vpop.f32.mrf.mxu0
    %v2233 = vadd.f32 0.0, %v2232
    %2234 = vdwg.mxu0
    %2237 = vrot.lane.b32.xlu0 %v2057, 112
    %v2238 = vpop.permute.xlu0 %2237
    %2239 = vrot.lane.b32.xlu0 %v2058, 112
    %v2240 = vpop.permute.xlu0 %2239
    %2243 = vmatpush.msra.mxu0 0.0
    %2244 = vmatpush.msra.mxu0 0.0
    %2245 = vmatpush.msra.mxu0 0.0
    %2246 = vmatpush.msra.mxu0 0.0
    %2247 = vmatpush.msra.mxu0 0.0
    %2248 = vmatpush.msra.mxu0 0.0
    %2249 = vmatpush.msra.mxu0 0.0
    %2250 = vmatpush.msra.mxu0 0.0
    %2251 = vmatpush.msra.mxu0 0.0
    %2252 = vmatpush.msra.mxu0 0.0
    %2253 = vmatpush.msra.mxu0 0.0
    %2254 = vmatpush.msra.mxu0 0.0
    %2255 = vmatpush.msra.mxu0 0.0
    %2256 = vmatpush.msra.mxu0 0.0
    %2257 = vmatpush.msra.mxu0 %v2240
    %2258 = vmatpush.msra.mxu0 %v2238
    %2259 = vmatmul.f32.gmra.mxu0 %v511
    %v2260 = vpop.f32.mrf.mxu0
    %v2261 = vadd.f32 0.0, %v2260
    %2262 = vmatmul.f32.gmra.mxu0 %v514
    %v2263 = vpop.f32.mrf.mxu0
    %v2264 = vadd.f32 0.0, %v2263
    %2265 = vdwg.mxu0
    %v2267 = vsel %vm340, %v2261, 0
    %v2270 = vsel %vm340, %v2264, 0
    %2272 = vmatpush.msra.mxu0 0.0
    %2273 = vmatpush.msra.mxu0 0.0
    %2274 = vmatpush.msra.mxu0 0.0
    %2275 = vmatpush.msra.mxu0 0.0
    %2276 = vmatpush.msra.mxu0 0.0
    %2277 = vmatpush.msra.mxu0 0.0
    %2278 = vmatpush.msra.mxu0 0.0
    %2279 = vmatpush.msra.mxu0 0.0
    %2280 = vmatpush.msra.mxu0 0.0
    %2281 = vmatpush.msra.mxu0 0.0
    %2282 = vmatpush.msra.mxu0 0.0
    %2283 = vmatpush.msra.mxu0 0.0
    %2284 = vmatpush.msra.mxu0 0.0
    %2285 = vmatpush.msra.mxu0 0.0
    %2286 = vmatpush.msra.mxu0 %v651
    %2287 = vmatpush.msra.mxu0 %v650
    %2288 = vmatmul.f32.gmra.mxu0 %v2267
    %v2289 = vpop.f32.mrf.mxu0
    %v2290 = vadd.f32 0.0, %v2289
    %2291 = vmatmul.f32.gmra.mxu0 %v2270
    %v2292 = vpop.f32.mrf.mxu0
    %v2293 = vadd.f32 0.0, %v2292
    %2294 = vdwg.mxu0
    %v2296 = vsel %vm340, %v2230, 0
    %v2299 = vsel %vm340, %v2233, 0
    %2301 = vmatpush.msra.mxu0 0.0
    %2302 = vmatpush.msra.mxu0 0.0
    %2303 = vmatpush.msra.mxu0 0.0
    %2304 = vmatpush.msra.mxu0 0.0
    %2305 = vmatpush.msra.mxu0 0.0
    %2306 = vmatpush.msra.mxu0 0.0
    %2307 = vmatpush.msra.mxu0 0.0
    %2308 = vmatpush.msra.mxu0 0.0
    %2309 = vmatpush.msra.mxu0 0.0
    %2310 = vmatpush.msra.mxu0 0.0
    %2311 = vmatpush.msra.mxu0 0.0
    %2312 = vmatpush.msra.mxu0 0.0
    %2313 = vmatpush.msra.mxu0 0.0
    %2314 = vmatpush.msra.mxu0 0.0
    %2315 = vmatpush.msra.mxu0 %v649
    %2316 = vmatpush.msra.mxu0 %v648
    %2317 = vmatmul.f32.gmra.mxu0 %v2296
    %v2318 = vpop.f32.mrf.mxu0
    %v2319 = vadd.f32 %v2290, %v2318
    %2320 = vmatmul.f32.gmra.mxu0 %v2299
    %v2321 = vpop.f32.mrf.mxu0
    %v2322 = vadd.f32 %v2293, %v2321
    %2323 = vdwg.mxu0
    %v2324 = vadd.f32 %v2319, %v711
    %v2325 = vadd.f32 %v2322, %v711
    %v2326 = vxor.u32 %v2324, 2147483648
    %v2327 = vxor.u32 %v2325, 2147483648
    %v2328 = vmul.f32 %v2326, 1.442695
    %v2329 = vpow.pop %v2328
    %v2330 = vmul.f32 %v2327, 1.442695
    %v2331 = vpow.pop %v2330
    %v2332 = vadd.f32 %v2329, 1.0
    %v2333 = vadd.f32 %v2331, 1.0
    %v2334 = vrcp.pop %v2332
    %v2335 = vmul.f32 %v2332, %v2334
    %v2336 = vsub.f32 1.0, %v2335
    %v2337 = vmul.f32 %v2334, %v2336
    %v2338 = vadd.f32 %v2334, %v2337
    %vm2339 = vweird.f32 %v2332
    %vm2340 = vweird.f32 %v2334
    %vm2341 = vmor %vm2339, %vm2340
    %v2342 = vsel %vm2341, %v2334, %v2338
    %v2343 = vand.u32 2147483647, %v2332
    %vm2344 = vcmp.eq.f32.partialorder %v2343, 8.507059e+37
    %v2345 = vand.u32 %v2332, 2147483648
    %v2346 = vor.u32 1.1754944e-38, %v2345
    %v2347 = vsel %vm2344, %v2346, %v2342
    %v2348 = vmul.f32 1.0, %v2347
    %v2349 = vrcp.pop %v2333
    %v2350 = vmul.f32 %v2333, %v2349
    %v2351 = vsub.f32 1.0, %v2350
    %v2352 = vmul.f32 %v2349, %v2351
    %v2353 = vadd.f32 %v2349, %v2352
    %vm2354 = vweird.f32 %v2333
    %vm2355 = vweird.f32 %v2349
    %vm2356 = vmor %vm2354, %vm2355
    %v2357 = vsel %vm2356, %v2349, %v2353
    %v2358 = vand.u32 2147483647, %v2333
    %vm2359 = vcmp.eq.f32.partialorder %v2358, 8.507059e+37
    %v2360 = vand.u32 %v2333, 2147483648
    %v2361 = vor.u32 1.1754944e-38, %v2360
    %v2362 = vsel %vm2359, %v2361, %v2357
    %v2363 = vmul.f32 1.0, %v2362
    %v2364 = vmul.f32 %v2348, %v2238
    %v2365 = vmul.f32 %v2363, %v2240
    %2366 = vmatpush.msra.mxu0 0.0
    %2367 = vmatpush.msra.mxu0 0.0
    %2368 = vmatpush.msra.mxu0 0.0
    %2369 = vmatpush.msra.mxu0 0.0
    %2370 = vmatpush.msra.mxu0 0.0
    %2371 = vmatpush.msra.mxu0 0.0
    %2372 = vmatpush.msra.mxu0 0.0
    %2373 = vmatpush.msra.mxu0 0.0
    %2374 = vmatpush.msra.mxu0 0.0
    %2375 = vmatpush.msra.mxu0 0.0
    %2376 = vmatpush.msra.mxu0 0.0
    %2377 = vmatpush.msra.mxu0 0.0
    %2378 = vmatpush.msra.mxu0 0.0
    %2379 = vmatpush.msra.mxu0 0.0
    %2380 = vmatpush.msra.mxu0 %v2365
    %2381 = vmatpush.msra.mxu0 %v2364
    %2382 = vmatmul.f32.gmra.mxu0 %v511
    %v2383 = vpop.f32.mrf.mxu0
    %v2384 = vadd.f32 0.0, %v2383
    %2385 = vmatmul.f32.gmra.mxu0 %v514
    %v2386 = vpop.f32.mrf.mxu0
    %v2387 = vadd.f32 0.0, %v2386
    %2388 = vdwg.mxu0
    %v2390 = vsel %vm340, %v2384, 0
    %v2393 = vsel %vm340, %v2387, 0
    %2395 = vmatpush.msra.mxu0 0.0
    %2396 = vmatpush.msra.mxu0 0.0
    %2397 = vmatpush.msra.mxu0 0.0
    %2398 = vmatpush.msra.mxu0 0.0
    %2399 = vmatpush.msra.mxu0 0.0
    %2400 = vmatpush.msra.mxu0 0.0
    %2401 = vmatpush.msra.mxu0 0.0
    %2402 = vmatpush.msra.mxu0 0.0
    %2403 = vmatpush.msra.mxu0 0.0
    %2404 = vmatpush.msra.mxu0 0.0
    %2405 = vmatpush.msra.mxu0 0.0
    %2406 = vmatpush.msra.mxu0 0.0
    %2407 = vmatpush.msra.mxu0 0.0
    %2408 = vmatpush.msra.mxu0 0.0
    %2409 = vmatpush.msra.mxu0 %v780
    %2410 = vmatpush.msra.mxu0 %v779
    %2411 = vmatmul.f32.gmra.mxu0 %v2390
    %v2412 = vpop.f32.mrf.mxu0
    %v2413 = vadd.f32 0.0, %v2412
    %2414 = vmatmul.f32.gmra.mxu0 %v2393
    %v2415 = vpop.f32.mrf.mxu0
    %v2416 = vadd.f32 0.0, %v2415
    %2417 = vdwg.mxu0
    %2418 = vmatpush.msra.mxu0 0.0
    %2419 = vmatpush.msra.mxu0 0.0
    %2420 = vmatpush.msra.mxu0 0.0
    %2421 = vmatpush.msra.mxu0 0.0
    %2422 = vmatpush.msra.mxu0 0.0
    %2423 = vmatpush.msra.mxu0 0.0
    %2424 = vmatpush.msra.mxu0 0.0
    %2425 = vmatpush.msra.mxu0 0.0
    %2426 = vmatpush.msra.mxu0 0.0
    %2427 = vmatpush.msra.mxu0 0.0
    %2428 = vmatpush.msra.mxu0 0.0
    %2429 = vmatpush.msra.mxu0 0.0
    %2430 = vmatpush.msra.mxu0 0.0
    %2431 = vmatpush.msra.mxu0 0.0
    %2432 = vmatpush.msra.mxu0 %v778
    %2433 = vmatpush.msra.mxu0 %v777
    %2434 = vmatmul.f32.gmra.mxu0 %v2296
    %v2435 = vpop.f32.mrf.mxu0
    %v2436 = vadd.f32 %v2413, %v2435
    %2437 = vmatmul.f32.gmra.mxu0 %v2299
    %v2438 = vpop.f32.mrf.mxu0
    %v2439 = vadd.f32 %v2416, %v2438
    %2440 = vdwg.mxu0
    %v2441 = vadd.f32 %v2436, %v834
    %v2442 = vadd.f32 %v2439, %v834
    %v2443 = vtanh.pop %v2441
    %v2444 = vtanh.pop %v2442
    %v2445 = vmul.f32 %v2348, %v2057
    %v2446 = vmul.f32 %v2363, %v2058
    %v2447 = vsub.f32 1.0, %v2348
    %v2448 = vsub.f32 1.0, %v2363
    %2451 = vrot.lane.b32.xlu0 %v2443, 16
    %v2452 = vpop.permute.xlu0 %2451
    %2453 = vrot.lane.b32.xlu0 %v2444, 16
    %v2454 = vpop.permute.xlu0 %2453
    %v2457 = vmul.f32 %v2447, %v2452
    %v2458 = vmul.f32 %v2448, %v2454
    %v2459 = vadd.f32 %v2445, %v2457
    %v2460 = vadd.f32 %v2446, %v2458
    %v2461 = vld [vmem:[#allocation2 + $0x50] sm:$0xff]
    %v2462 = vld [vmem:[#allocation2 + $0x58] sm:$0xff]
    %2463 = vmatpush.msra.mxu0 0.0
    %2464 = vmatpush.msra.mxu0 0.0
    %2465 = vmatpush.msra.mxu0 0.0
    %2466 = vmatpush.msra.mxu0 0.0
    %2467 = vmatpush.msra.mxu0 0.0
    %2468 = vmatpush.msra.mxu0 0.0
    %2469 = vmatpush.msra.mxu0 0.0
    %2470 = vmatpush.msra.mxu0 0.0
    %2471 = vmatpush.msra.mxu0 0.0
    %2472 = vmatpush.msra.mxu0 0.0
    %2473 = vmatpush.msra.mxu0 0.0
    %2474 = vmatpush.msra.mxu0 0.0
    %2475 = vmatpush.msra.mxu0 0.0
    %2476 = vmatpush.msra.mxu0 0.0
    %2477 = vmatpush.msra.mxu0 %v437
    %2478 = vmatpush.msra.mxu0 %v436
    %2479 = vmatmul.f32.gmra.mxu0 %v2296
    %v2480 = vpop.f32.mrf.mxu0
    %v2481 = vadd.f32 0.0, %v2480
    %2482 = vmatmul.f32.gmra.mxu0 %v2299
    %v2483 = vpop.f32.mrf.mxu0
    %v2484 = vadd.f32 0.0, %v2483
    %2485 = vdwg.mxu0
    %v2486 = vadd.f32 %v2461, %v2481
    %v2487 = vadd.f32 %v2462, %v2484
    %v2488 = vadd.f32 %v2486, %v467
    %v2489 = vadd.f32 %v2487, %v467
    %v2490 = vxor.u32 %v2488, 2147483648
    %v2491 = vxor.u32 %v2489, 2147483648
    %v2492 = vmul.f32 %v2490, 1.442695
    %v2493 = vpow.pop %v2492
    %v2494 = vmul.f32 %v2491, 1.442695
    %v2495 = vpow.pop %v2494
    %v2496 = vadd.f32 %v2493, 1.0
    %v2497 = vadd.f32 %v2495, 1.0
    %v2498 = vrcp.pop %v2496
    %v2499 = vmul.f32 %v2496, %v2498
    %v2500 = vsub.f32 1.0, %v2499
    %v2501 = vmul.f32 %v2498, %v2500
    %v2502 = vadd.f32 %v2498, %v2501
    %vm2503 = vweird.f32 %v2496
    %vm2504 = vweird.f32 %v2498
    %vm2505 = vmor %vm2503, %vm2504
    %v2506 = vsel %vm2505, %v2498, %v2502
    %v2507 = vand.u32 2147483647, %v2496
    %vm2508 = vcmp.eq.f32.partialorder %v2507, 8.507059e+37
    %v2509 = vand.u32 %v2496, 2147483648
    %v2510 = vor.u32 1.1754944e-38, %v2509
    %v2511 = vsel %vm2508, %v2510, %v2506
    %v2512 = vmul.f32 1.0, %v2511
    %v2513 = vrcp.pop %v2497
    %v2514 = vmul.f32 %v2497, %v2513
    %v2515 = vsub.f32 1.0, %v2514
    %v2516 = vmul.f32 %v2513, %v2515
    %v2517 = vadd.f32 %v2513, %v2516
    %vm2518 = vweird.f32 %v2497
    %vm2519 = vweird.f32 %v2513
    %vm2520 = vmor %vm2518, %vm2519
    %v2521 = vsel %vm2520, %v2513, %v2517
    %v2522 = vand.u32 2147483647, %v2497
    %vm2523 = vcmp.eq.f32.partialorder %v2522, 8.507059e+37
    %v2524 = vand.u32 %v2497, 2147483648
    %v2525 = vor.u32 1.1754944e-38, %v2524
    %v2526 = vsel %vm2523, %v2525, %v2521
    %v2527 = vmul.f32 1.0, %v2526
    %v2528 = vmul.f32 %v2512, %v2207
    %v2529 = vmul.f32 %v2527, %v2209
    %2530 = vmatpush.msra.mxu0 0.0
    %2531 = vmatpush.msra.mxu0 0.0
    %2532 = vmatpush.msra.mxu0 0.0
    %2533 = vmatpush.msra.mxu0 0.0
    %2534 = vmatpush.msra.mxu0 0.0
    %2535 = vmatpush.msra.mxu0 0.0
    %2536 = vmatpush.msra.mxu0 0.0
    %2537 = vmatpush.msra.mxu0 0.0
    %2538 = vmatpush.msra.mxu0 0.0
    %2539 = vmatpush.msra.mxu0 0.0
    %2540 = vmatpush.msra.mxu0 0.0
    %2541 = vmatpush.msra.mxu0 0.0
    %2542 = vmatpush.msra.mxu0 0.0
    %2543 = vmatpush.msra.mxu0 0.0
    %2544 = vmatpush.msra.mxu0 %v2529
    %2545 = vmatpush.msra.mxu0 %v2528
    %2546 = vmatmul.f32.gmra.mxu0 %v511
    %v2547 = vpop.f32.mrf.mxu0
    %v2548 = vadd.f32 0.0, %v2547
    %2549 = vmatmul.f32.gmra.mxu0 %v514
    %v2550 = vpop.f32.mrf.mxu0
    %v2551 = vadd.f32 0.0, %v2550
    %2552 = vdwg.mxu0
    %v2553 = vld [vmem:[#allocation3 + $0x50] sm:$0xff]
    %v2554 = vld [vmem:[#allocation3 + $0x58] sm:$0xff]
    %v2556 = vsel %vm340, %v2548, 0
    %v2559 = vsel %vm340, %v2551, 0
    %2561 = vmatpush.msra.mxu0 0.0
    %2562 = vmatpush.msra.mxu0 0.0
    %2563 = vmatpush.msra.mxu0 0.0
    %2564 = vmatpush.msra.mxu0 0.0
    %2565 = vmatpush.msra.mxu0 0.0
    %2566 = vmatpush.msra.mxu0 0.0
    %2567 = vmatpush.msra.mxu0 0.0
    %2568 = vmatpush.msra.mxu0 0.0
    %2569 = vmatpush.msra.mxu0 0.0
    %2570 = vmatpush.msra.mxu0 0.0
    %2571 = vmatpush.msra.mxu0 0.0
    %2572 = vmatpush.msra.mxu0 0.0
    %2573 = vmatpush.msra.mxu0 0.0
    %2574 = vmatpush.msra.mxu0 0.0
    %2575 = vmatpush.msra.mxu0 %v542
    %2576 = vmatpush.msra.mxu0 %v541
    %2577 = vmatmul.f32.gmra.mxu0 %v2556
    %v2578 = vpop.f32.mrf.mxu0
    %v2579 = vadd.f32 0.0, %v2578
    %2580 = vmatmul.f32.gmra.mxu0 %v2559
    %v2581 = vpop.f32.mrf.mxu0
    %v2582 = vadd.f32 0.0, %v2581
    %2583 = vdwg.mxu0
    %v2584 = vadd.f32 %v2553, %v2579
    %v2585 = vadd.f32 %v2554, %v2582
    %v2586 = vadd.f32 %v2584, %v575
    %v2587 = vadd.f32 %v2585, %v575
    %v2588 = vtanh.pop %v2586
    %v2589 = vtanh.pop %v2587
    %v2590 = vmul.f32 %v2512, %v2202
    %v2591 = vmul.f32 %v2527, %v2203
    %v2592 = vsub.f32 1.0, %v2512
    %v2593 = vsub.f32 1.0, %v2527
    %2596 = vrot.lane.b32.xlu0 %v2588, 16
    %v2597 = vpop.permute.xlu0 %2596
    %2598 = vrot.lane.b32.xlu0 %v2589, 16
    %v2599 = vpop.permute.xlu0 %2598
    %v2602 = vmul.f32 %v2592, %v2597
    %v2603 = vmul.f32 %v2593, %v2599
    %v2604 = vadd.f32 %v2590, %v2602
    %v2605 = vadd.f32 %v2591, %v2603
    %2608 = vrot.lane.b32.xlu0 %v2604, 112
    %v2609 = vpop.permute.xlu0 %2608
    %2610 = vrot.lane.b32.xlu0 %v2605, 112
    %v2611 = vpop.permute.xlu0 %2610
    %2614 = vmatpush.msra.mxu0 0.0
    %2615 = vmatpush.msra.mxu0 0.0
    %2616 = vmatpush.msra.mxu0 0.0
    %2617 = vmatpush.msra.mxu0 0.0
    %2618 = vmatpush.msra.mxu0 0.0
    %2619 = vmatpush.msra.mxu0 0.0
    %2620 = vmatpush.msra.mxu0 0.0
    %2621 = vmatpush.msra.mxu0 0.0
    %2622 = vmatpush.msra.mxu0 0.0
    %2623 = vmatpush.msra.mxu0 0.0
    %2624 = vmatpush.msra.mxu0 0.0
    %2625 = vmatpush.msra.mxu0 0.0
    %2626 = vmatpush.msra.mxu0 0.0
    %2627 = vmatpush.msra.mxu0 0.0
    %2628 = vmatpush.msra.mxu0 %v2611
    %2629 = vmatpush.msra.mxu0 %v2609
    %2630 = vmatmul.f32.gmra.mxu0 %v511
    %v2631 = vpop.f32.mrf.mxu0
    %v2632 = vadd.f32 0.0, %v2631
    %2633 = vmatmul.f32.gmra.mxu0 %v514
    %v2634 = vpop.f32.mrf.mxu0
    %v2635 = vadd.f32 0.0, %v2634
    %2636 = vdwg.mxu0
    %2639 = vrot.lane.b32.xlu0 %v2459, 112
    %v2640 = vpop.permute.xlu0 %2639
    %2641 = vrot.lane.b32.xlu0 %v2460, 112
    %v2642 = vpop.permute.xlu0 %2641
    %2645 = vmatpush.msra.mxu0 0.0
    %2646 = vmatpush.msra.mxu0 0.0
    %2647 = vmatpush.msra.mxu0 0.0
    %2648 = vmatpush.msra.mxu0 0.0
    %2649 = vmatpush.msra.mxu0 0.0
    %2650 = vmatpush.msra.mxu0 0.0
    %2651 = vmatpush.msra.mxu0 0.0
    %2652 = vmatpush.msra.mxu0 0.0
    %2653 = vmatpush.msra.mxu0 0.0
    %2654 = vmatpush.msra.mxu0 0.0
    %2655 = vmatpush.msra.mxu0 0.0
    %2656 = vmatpush.msra.mxu0 0.0
    %2657 = vmatpush.msra.mxu0 0.0
    %2658 = vmatpush.msra.mxu0 0.0
    %2659 = vmatpush.msra.mxu0 %v2642
    %2660 = vmatpush.msra.mxu0 %v2640
    %2661 = vmatmul.f32.gmra.mxu0 %v511
    %v2662 = vpop.f32.mrf.mxu0
    %v2663 = vadd.f32 0.0, %v2662
    %2664 = vmatmul.f32.gmra.mxu0 %v514
    %v2665 = vpop.f32.mrf.mxu0
    %v2666 = vadd.f32 0.0, %v2665
    %2667 = vdwg.mxu0
    %v2669 = vsel %vm340, %v2663, 0
    %v2672 = vsel %vm340, %v2666, 0
    %2674 = vmatpush.msra.mxu0 0.0
    %2675 = vmatpush.msra.mxu0 0.0
    %2676 = vmatpush.msra.mxu0 0.0
    %2677 = vmatpush.msra.mxu0 0.0
    %2678 = vmatpush.msra.mxu0 0.0
    %2679 = vmatpush.msra.mxu0 0.0
    %2680 = vmatpush.msra.mxu0 0.0
    %2681 = vmatpush.msra.mxu0 0.0
    %2682 = vmatpush.msra.mxu0 0.0
    %2683 = vmatpush.msra.mxu0 0.0
    %2684 = vmatpush.msra.mxu0 0.0
    %2685 = vmatpush.msra.mxu0 0.0
    %2686 = vmatpush.msra.mxu0 0.0
    %2687 = vmatpush.msra.mxu0 0.0
    %2688 = vmatpush.msra.mxu0 %v651
    %2689 = vmatpush.msra.mxu0 %v650
    %2690 = vmatmul.f32.gmra.mxu0 %v2669
    %v2691 = vpop.f32.mrf.mxu0
    %v2692 = vadd.f32 0.0, %v2691
    %2693 = vmatmul.f32.gmra.mxu0 %v2672
    %v2694 = vpop.f32.mrf.mxu0
    %v2695 = vadd.f32 0.0, %v2694
    %2696 = vdwg.mxu0
    %v2698 = vsel %vm340, %v2632, 0
    %v2701 = vsel %vm340, %v2635, 0
    %2703 = vmatpush.msra.mxu0 0.0
    %2704 = vmatpush.msra.mxu0 0.0
    %2705 = vmatpush.msra.mxu0 0.0
    %2706 = vmatpush.msra.mxu0 0.0
    %2707 = vmatpush.msra.mxu0 0.0
    %2708 = vmatpush.msra.mxu0 0.0
    %2709 = vmatpush.msra.mxu0 0.0
    %2710 = vmatpush.msra.mxu0 0.0
    %2711 = vmatpush.msra.mxu0 0.0
    %2712 = vmatpush.msra.mxu0 0.0
    %2713 = vmatpush.msra.mxu0 0.0
    %2714 = vmatpush.msra.mxu0 0.0
    %2715 = vmatpush.msra.mxu0 0.0
    %2716 = vmatpush.msra.mxu0 0.0
    %2717 = vmatpush.msra.mxu0 %v649
    %2718 = vmatpush.msra.mxu0 %v648
    %2719 = vmatmul.f32.gmra.mxu0 %v2698
    %v2720 = vpop.f32.mrf.mxu0
    %v2721 = vadd.f32 %v2692, %v2720
    %2722 = vmatmul.f32.gmra.mxu0 %v2701
    %v2723 = vpop.f32.mrf.mxu0
    %v2724 = vadd.f32 %v2695, %v2723
    %2725 = vdwg.mxu0
    %v2726 = vadd.f32 %v2721, %v711
    %v2727 = vadd.f32 %v2724, %v711
    %v2728 = vxor.u32 %v2726, 2147483648
    %v2729 = vxor.u32 %v2727, 2147483648
    %v2730 = vmul.f32 %v2728, 1.442695
    %v2731 = vpow.pop %v2730
    %v2732 = vmul.f32 %v2729, 1.442695
    %v2733 = vpow.pop %v2732
    %v2734 = vadd.f32 %v2731, 1.0
    %v2735 = vadd.f32 %v2733, 1.0
    %v2736 = vrcp.pop %v2734
    %v2737 = vmul.f32 %v2734, %v2736
    %v2738 = vsub.f32 1.0, %v2737
    %v2739 = vmul.f32 %v2736, %v2738
    %v2740 = vadd.f32 %v2736, %v2739
    %vm2741 = vweird.f32 %v2734
    %vm2742 = vweird.f32 %v2736
    %vm2743 = vmor %vm2741, %vm2742
    %v2744 = vsel %vm2743, %v2736, %v2740
    %v2745 = vand.u32 2147483647, %v2734
    %vm2746 = vcmp.eq.f32.partialorder %v2745, 8.507059e+37
    %v2747 = vand.u32 %v2734, 2147483648
    %v2748 = vor.u32 1.1754944e-38, %v2747
    %v2749 = vsel %vm2746, %v2748, %v2744
    %v2750 = vmul.f32 1.0, %v2749
    %v2751 = vrcp.pop %v2735
    %v2752 = vmul.f32 %v2735, %v2751
    %v2753 = vsub.f32 1.0, %v2752
    %v2754 = vmul.f32 %v2751, %v2753
    %v2755 = vadd.f32 %v2751, %v2754
    %vm2756 = vweird.f32 %v2735
    %vm2757 = vweird.f32 %v2751
    %vm2758 = vmor %vm2756, %vm2757
    %v2759 = vsel %vm2758, %v2751, %v2755
    %v2760 = vand.u32 2147483647, %v2735
    %vm2761 = vcmp.eq.f32.partialorder %v2760, 8.507059e+37
    %v2762 = vand.u32 %v2735, 2147483648
    %v2763 = vor.u32 1.1754944e-38, %v2762
    %v2764 = vsel %vm2761, %v2763, %v2759
    %v2765 = vmul.f32 1.0, %v2764
    %v2766 = vmul.f32 %v2750, %v2640
    %v2767 = vmul.f32 %v2765, %v2642
    %2768 = vmatpush.msra.mxu0 0.0
    %2769 = vmatpush.msra.mxu0 0.0
    %2770 = vmatpush.msra.mxu0 0.0
    %2771 = vmatpush.msra.mxu0 0.0
    %2772 = vmatpush.msra.mxu0 0.0
    %2773 = vmatpush.msra.mxu0 0.0
    %2774 = vmatpush.msra.mxu0 0.0
    %2775 = vmatpush.msra.mxu0 0.0
    %2776 = vmatpush.msra.mxu0 0.0
    %2777 = vmatpush.msra.mxu0 0.0
    %2778 = vmatpush.msra.mxu0 0.0
    %2779 = vmatpush.msra.mxu0 0.0
    %2780 = vmatpush.msra.mxu0 0.0
    %2781 = vmatpush.msra.mxu0 0.0
    %2782 = vmatpush.msra.mxu0 %v2767
    %2783 = vmatpush.msra.mxu0 %v2766
    %2784 = vmatmul.f32.gmra.mxu0 %v511
    %v2785 = vpop.f32.mrf.mxu0
    %v2786 = vadd.f32 0.0, %v2785
    %2787 = vmatmul.f32.gmra.mxu0 %v514
    %v2788 = vpop.f32.mrf.mxu0
    %v2789 = vadd.f32 0.0, %v2788
    %2790 = vdwg.mxu0
    %v2792 = vsel %vm340, %v2786, 0
    %v2795 = vsel %vm340, %v2789, 0
    %2797 = vmatpush.msra.mxu0 0.0
    %2798 = vmatpush.msra.mxu0 0.0
    %2799 = vmatpush.msra.mxu0 0.0
    %2800 = vmatpush.msra.mxu0 0.0
    %2801 = vmatpush.msra.mxu0 0.0
    %2802 = vmatpush.msra.mxu0 0.0
    %2803 = vmatpush.msra.mxu0 0.0
    %2804 = vmatpush.msra.mxu0 0.0
    %2805 = vmatpush.msra.mxu0 0.0
    %2806 = vmatpush.msra.mxu0 0.0
    %2807 = vmatpush.msra.mxu0 0.0
    %2808 = vmatpush.msra.mxu0 0.0
    %2809 = vmatpush.msra.mxu0 0.0
    %2810 = vmatpush.msra.mxu0 0.0
    %2811 = vmatpush.msra.mxu0 %v780
    %2812 = vmatpush.msra.mxu0 %v779
    %2813 = vmatmul.f32.gmra.mxu0 %v2792
    %v2814 = vpop.f32.mrf.mxu0
    %v2815 = vadd.f32 0.0, %v2814
    %2816 = vmatmul.f32.gmra.mxu0 %v2795
    %v2817 = vpop.f32.mrf.mxu0
    %v2818 = vadd.f32 0.0, %v2817
    %2819 = vdwg.mxu0
    %2820 = vmatpush.msra.mxu0 0.0
    %2821 = vmatpush.msra.mxu0 0.0
    %2822 = vmatpush.msra.mxu0 0.0
    %2823 = vmatpush.msra.mxu0 0.0
    %2824 = vmatpush.msra.mxu0 0.0
    %2825 = vmatpush.msra.mxu0 0.0
    %2826 = vmatpush.msra.mxu0 0.0
    %2827 = vmatpush.msra.mxu0 0.0
    %2828 = vmatpush.msra.mxu0 0.0
    %2829 = vmatpush.msra.mxu0 0.0
    %2830 = vmatpush.msra.mxu0 0.0
    %2831 = vmatpush.msra.mxu0 0.0
    %2832 = vmatpush.msra.mxu0 0.0
    %2833 = vmatpush.msra.mxu0 0.0
    %2834 = vmatpush.msra.mxu0 %v778
    %2835 = vmatpush.msra.mxu0 %v777
    %2836 = vmatmul.f32.gmra.mxu0 %v2698
    %v2837 = vpop.f32.mrf.mxu0
    %v2838 = vadd.f32 %v2815, %v2837
    %2839 = vmatmul.f32.gmra.mxu0 %v2701
    %v2840 = vpop.f32.mrf.mxu0
    %v2841 = vadd.f32 %v2818, %v2840
    %2842 = vdwg.mxu0
    %v2843 = vadd.f32 %v2838, %v834
    %v2844 = vadd.f32 %v2841, %v834
    %v2845 = vtanh.pop %v2843
    %v2846 = vtanh.pop %v2844
    %v2847 = vmul.f32 %v2750, %v2459
    %v2848 = vmul.f32 %v2765, %v2460
    %v2849 = vsub.f32 1.0, %v2750
    %v2850 = vsub.f32 1.0, %v2765
    %2853 = vrot.lane.b32.xlu0 %v2845, 16
    %v2854 = vpop.permute.xlu0 %2853
    %2855 = vrot.lane.b32.xlu0 %v2846, 16
    %v2856 = vpop.permute.xlu0 %2855
    %v2859 = vmul.f32 %v2849, %v2854
    %v2860 = vmul.f32 %v2850, %v2856
    %v2861 = vadd.f32 %v2847, %v2859
    %v2862 = vadd.f32 %v2848, %v2860
    %v2863 = vld [vmem:[#allocation2 + $0x60] sm:$0xff]
    %v2864 = vld [vmem:[#allocation2 + $0x68] sm:$0xff]
    %2865 = vmatpush.msra.mxu0 0.0
    %2866 = vmatpush.msra.mxu0 0.0
    %2867 = vmatpush.msra.mxu0 0.0
    %2868 = vmatpush.msra.mxu0 0.0
    %2869 = vmatpush.msra.mxu0 0.0
    %2870 = vmatpush.msra.mxu0 0.0
    %2871 = vmatpush.msra.mxu0 0.0
    %2872 = vmatpush.msra.mxu0 0.0
    %2873 = vmatpush.msra.mxu0 0.0
    %2874 = vmatpush.msra.mxu0 0.0
    %2875 = vmatpush.msra.mxu0 0.0
    %2876 = vmatpush.msra.mxu0 0.0
    %2877 = vmatpush.msra.mxu0 0.0
    %2878 = vmatpush.msra.mxu0 0.0
    %2879 = vmatpush.msra.mxu0 %v437
    %2880 = vmatpush.msra.mxu0 %v436
    %2881 = vmatmul.f32.gmra.mxu0 %v2698
    %v2882 = vpop.f32.mrf.mxu0
    %v2883 = vadd.f32 0.0, %v2882
    %2884 = vmatmul.f32.gmra.mxu0 %v2701
    %v2885 = vpop.f32.mrf.mxu0
    %v2886 = vadd.f32 0.0, %v2885
    %2887 = vdwg.mxu0
    %v2888 = vadd.f32 %v2863, %v2883
    %v2889 = vadd.f32 %v2864, %v2886
    %v2890 = vadd.f32 %v2888, %v467
    %v2891 = vadd.f32 %v2889, %v467
    %v2892 = vxor.u32 %v2890, 2147483648
    %v2893 = vxor.u32 %v2891, 2147483648
    %v2894 = vmul.f32 %v2892, 1.442695
    %v2895 = vpow.pop %v2894
    %v2896 = vmul.f32 %v2893, 1.442695
    %v2897 = vpow.pop %v2896
    %v2898 = vadd.f32 %v2895, 1.0
    %v2899 = vadd.f32 %v2897, 1.0
    %v2900 = vrcp.pop %v2898
    %v2901 = vmul.f32 %v2898, %v2900
    %v2902 = vsub.f32 1.0, %v2901
    %v2903 = vmul.f32 %v2900, %v2902
    %v2904 = vadd.f32 %v2900, %v2903
    %vm2905 = vweird.f32 %v2898
    %vm2906 = vweird.f32 %v2900
    %vm2907 = vmor %vm2905, %vm2906
    %v2908 = vsel %vm2907, %v2900, %v2904
    %v2909 = vand.u32 2147483647, %v2898
    %vm2910 = vcmp.eq.f32.partialorder %v2909, 8.507059e+37
    %v2911 = vand.u32 %v2898, 2147483648
    %v2912 = vor.u32 1.1754944e-38, %v2911
    %v2913 = vsel %vm2910, %v2912, %v2908
    %v2914 = vmul.f32 1.0, %v2913
    %v2915 = vrcp.pop %v2899
    %v2916 = vmul.f32 %v2899, %v2915
    %v2917 = vsub.f32 1.0, %v2916
    %v2918 = vmul.f32 %v2915, %v2917
    %v2919 = vadd.f32 %v2915, %v2918
    %vm2920 = vweird.f32 %v2899
    %vm2921 = vweird.f32 %v2915
    %vm2922 = vmor %vm2920, %vm2921
    %v2923 = vsel %vm2922, %v2915, %v2919
    %v2924 = vand.u32 2147483647, %v2899
    %vm2925 = vcmp.eq.f32.partialorder %v2924, 8.507059e+37
    %v2926 = vand.u32 %v2899, 2147483648
    %v2927 = vor.u32 1.1754944e-38, %v2926
    %v2928 = vsel %vm2925, %v2927, %v2923
    %v2929 = vmul.f32 1.0, %v2928
    %v2930 = vmul.f32 %v2914, %v2609
    %v2931 = vmul.f32 %v2929, %v2611
    %2932 = vmatpush.msra.mxu0 0.0
    %2933 = vmatpush.msra.mxu0 0.0
    %2934 = vmatpush.msra.mxu0 0.0
    %2935 = vmatpush.msra.mxu0 0.0
    %2936 = vmatpush.msra.mxu0 0.0
    %2937 = vmatpush.msra.mxu0 0.0
    %2938 = vmatpush.msra.mxu0 0.0
    %2939 = vmatpush.msra.mxu0 0.0
    %2940 = vmatpush.msra.mxu0 0.0
    %2941 = vmatpush.msra.mxu0 0.0
    %2942 = vmatpush.msra.mxu0 0.0
    %2943 = vmatpush.msra.mxu0 0.0
    %2944 = vmatpush.msra.mxu0 0.0
    %2945 = vmatpush.msra.mxu0 0.0
    %2946 = vmatpush.msra.mxu0 %v2931
    %2947 = vmatpush.msra.mxu0 %v2930
    %2948 = vmatmul.f32.gmra.mxu0 %v511
    %v2949 = vpop.f32.mrf.mxu0
    %v2950 = vadd.f32 0.0, %v2949
    %2951 = vmatmul.f32.gmra.mxu0 %v514
    %v2952 = vpop.f32.mrf.mxu0
    %v2953 = vadd.f32 0.0, %v2952
    %2954 = vdwg.mxu0
    %v2955 = vld [vmem:[#allocation3 + $0x60] sm:$0xff]
    %v2956 = vld [vmem:[#allocation3 + $0x68] sm:$0xff]
    %v2958 = vsel %vm340, %v2950, 0
    %v2961 = vsel %vm340, %v2953, 0
    %2963 = vmatpush.msra.mxu0 0.0
    %2964 = vmatpush.msra.mxu0 0.0
    %2965 = vmatpush.msra.mxu0 0.0
    %2966 = vmatpush.msra.mxu0 0.0
    %2967 = vmatpush.msra.mxu0 0.0
    %2968 = vmatpush.msra.mxu0 0.0
    %2969 = vmatpush.msra.mxu0 0.0
    %2970 = vmatpush.msra.mxu0 0.0
    %2971 = vmatpush.msra.mxu0 0.0
    %2972 = vmatpush.msra.mxu0 0.0
    %2973 = vmatpush.msra.mxu0 0.0
    %2974 = vmatpush.msra.mxu0 0.0
    %2975 = vmatpush.msra.mxu0 0.0
    %2976 = vmatpush.msra.mxu0 0.0
    %2977 = vmatpush.msra.mxu0 %v542
    %2978 = vmatpush.msra.mxu0 %v541
    %2979 = vmatmul.f32.gmra.mxu0 %v2958
    %v2980 = vpop.f32.mrf.mxu0
    %v2981 = vadd.f32 0.0, %v2980
    %2982 = vmatmul.f32.gmra.mxu0 %v2961
    %v2983 = vpop.f32.mrf.mxu0
    %v2984 = vadd.f32 0.0, %v2983
    %2985 = vdwg.mxu0
    %v2986 = vadd.f32 %v2955, %v2981
    %v2987 = vadd.f32 %v2956, %v2984
    %v2988 = vadd.f32 %v2986, %v575
    %v2989 = vadd.f32 %v2987, %v575
    %v2990 = vtanh.pop %v2988
    %v2991 = vtanh.pop %v2989
    %v2992 = vmul.f32 %v2914, %v2604
    %v2993 = vmul.f32 %v2929, %v2605
    %v2994 = vsub.f32 1.0, %v2914
    %v2995 = vsub.f32 1.0, %v2929
    %2998 = vrot.lane.b32.xlu0 %v2990, 16
    %v2999 = vpop.permute.xlu0 %2998
    %3000 = vrot.lane.b32.xlu0 %v2991, 16
    %v3001 = vpop.permute.xlu0 %3000
    %v3004 = vmul.f32 %v2994, %v2999
    %v3005 = vmul.f32 %v2995, %v3001
    %v3006 = vadd.f32 %v2992, %v3004
    %v3007 = vadd.f32 %v2993, %v3005
    %3010 = vrot.lane.b32.xlu0 %v3006, 112
    %v3011 = vpop.permute.xlu0 %3010
    %3012 = vrot.lane.b32.xlu0 %v3007, 112
    %v3013 = vpop.permute.xlu0 %3012
    %3016 = vmatpush.msra.mxu0 0.0
    %3017 = vmatpush.msra.mxu0 0.0
    %3018 = vmatpush.msra.mxu0 0.0
    %3019 = vmatpush.msra.mxu0 0.0
    %3020 = vmatpush.msra.mxu0 0.0
    %3021 = vmatpush.msra.mxu0 0.0
    %3022 = vmatpush.msra.mxu0 0.0
    %3023 = vmatpush.msra.mxu0 0.0
    %3024 = vmatpush.msra.mxu0 0.0
    %3025 = vmatpush.msra.mxu0 0.0
    %3026 = vmatpush.msra.mxu0 0.0
    %3027 = vmatpush.msra.mxu0 0.0
    %3028 = vmatpush.msra.mxu0 0.0
    %3029 = vmatpush.msra.mxu0 0.0
    %3030 = vmatpush.msra.mxu0 %v3013
    %3031 = vmatpush.msra.mxu0 %v3011
    %3032 = vmatmul.f32.gmra.mxu0 %v511
    %v3033 = vpop.f32.mrf.mxu0
    %v3034 = vadd.f32 0.0, %v3033
    %3035 = vmatmul.f32.gmra.mxu0 %v514
    %v3036 = vpop.f32.mrf.mxu0
    %v3037 = vadd.f32 0.0, %v3036
    %3038 = vdwg.mxu0
    %3041 = vrot.lane.b32.xlu0 %v2861, 112
    %v3042 = vpop.permute.xlu0 %3041
    %3043 = vrot.lane.b32.xlu0 %v2862, 112
    %v3044 = vpop.permute.xlu0 %3043
    %3047 = vmatpush.msra.mxu0 0.0
    %3048 = vmatpush.msra.mxu0 0.0
    %3049 = vmatpush.msra.mxu0 0.0
    %3050 = vmatpush.msra.mxu0 0.0
    %3051 = vmatpush.msra.mxu0 0.0
    %3052 = vmatpush.msra.mxu0 0.0
    %3053 = vmatpush.msra.mxu0 0.0
    %3054 = vmatpush.msra.mxu0 0.0
    %3055 = vmatpush.msra.mxu0 0.0
    %3056 = vmatpush.msra.mxu0 0.0
    %3057 = vmatpush.msra.mxu0 0.0
    %3058 = vmatpush.msra.mxu0 0.0
    %3059 = vmatpush.msra.mxu0 0.0
    %3060 = vmatpush.msra.mxu0 0.0
    %3061 = vmatpush.msra.mxu0 %v3044
    %3062 = vmatpush.msra.mxu0 %v3042
    %3063 = vmatmul.f32.gmra.mxu0 %v511
    %v3064 = vpop.f32.mrf.mxu0
    %v3065 = vadd.f32 0.0, %v3064
    %3066 = vmatmul.f32.gmra.mxu0 %v514
    %v3067 = vpop.f32.mrf.mxu0
    %v3068 = vadd.f32 0.0, %v3067
    %3069 = vdwg.mxu0
    %v3071 = vsel %vm340, %v3065, 0
    %v3074 = vsel %vm340, %v3068, 0
    %3076 = vmatpush.msra.mxu0 0.0
    %3077 = vmatpush.msra.mxu0 0.0
    %3078 = vmatpush.msra.mxu0 0.0
    %3079 = vmatpush.msra.mxu0 0.0
    %3080 = vmatpush.msra.mxu0 0.0
    %3081 = vmatpush.msra.mxu0 0.0
    %3082 = vmatpush.msra.mxu0 0.0
    %3083 = vmatpush.msra.mxu0 0.0
    %3084 = vmatpush.msra.mxu0 0.0
    %3085 = vmatpush.msra.mxu0 0.0
    %3086 = vmatpush.msra.mxu0 0.0
    %3087 = vmatpush.msra.mxu0 0.0
    %3088 = vmatpush.msra.mxu0 0.0
    %3089 = vmatpush.msra.mxu0 0.0
    %3090 = vmatpush.msra.mxu0 %v651
    %3091 = vmatpush.msra.mxu0 %v650
    %3092 = vmatmul.f32.gmra.mxu0 %v3071
    %v3093 = vpop.f32.mrf.mxu0
    %v3094 = vadd.f32 0.0, %v3093
    %3095 = vmatmul.f32.gmra.mxu0 %v3074
    %v3096 = vpop.f32.mrf.mxu0
    %v3097 = vadd.f32 0.0, %v3096
    %3098 = vdwg.mxu0
    %v3100 = vsel %vm340, %v3034, 0
    %v3103 = vsel %vm340, %v3037, 0
    %3105 = vmatpush.msra.mxu0 0.0
    %3106 = vmatpush.msra.mxu0 0.0
    %3107 = vmatpush.msra.mxu0 0.0
    %3108 = vmatpush.msra.mxu0 0.0
    %3109 = vmatpush.msra.mxu0 0.0
    %3110 = vmatpush.msra.mxu0 0.0
    %3111 = vmatpush.msra.mxu0 0.0
    %3112 = vmatpush.msra.mxu0 0.0
    %3113 = vmatpush.msra.mxu0 0.0
    %3114 = vmatpush.msra.mxu0 0.0
    %3115 = vmatpush.msra.mxu0 0.0
    %3116 = vmatpush.msra.mxu0 0.0
    %3117 = vmatpush.msra.mxu0 0.0
    %3118 = vmatpush.msra.mxu0 0.0
    %3119 = vmatpush.msra.mxu0 %v649
    %3120 = vmatpush.msra.mxu0 %v648
    %3121 = vmatmul.f32.gmra.mxu0 %v3100
    %v3122 = vpop.f32.mrf.mxu0
    %v3123 = vadd.f32 %v3094, %v3122
    %3124 = vmatmul.f32.gmra.mxu0 %v3103
    %v3125 = vpop.f32.mrf.mxu0
    %v3126 = vadd.f32 %v3097, %v3125
    %3127 = vdwg.mxu0
    %v3128 = vadd.f32 %v3123, %v711
    %v3129 = vadd.f32 %v3126, %v711
    %v3130 = vxor.u32 %v3128, 2147483648
    %v3131 = vxor.u32 %v3129, 2147483648
    %v3132 = vmul.f32 %v3130, 1.442695
    %v3133 = vpow.pop %v3132
    %v3134 = vmul.f32 %v3131, 1.442695
    %v3135 = vpow.pop %v3134
    %v3136 = vadd.f32 %v3133, 1.0
    %v3137 = vadd.f32 %v3135, 1.0
    %v3138 = vrcp.pop %v3136
    %v3139 = vmul.f32 %v3136, %v3138
    %v3140 = vsub.f32 1.0, %v3139
    %v3141 = vmul.f32 %v3138, %v3140
    %v3142 = vadd.f32 %v3138, %v3141
    %vm3143 = vweird.f32 %v3136
    %vm3144 = vweird.f32 %v3138
    %vm3145 = vmor %vm3143, %vm3144
    %v3146 = vsel %vm3145, %v3138, %v3142
    %v3147 = vand.u32 2147483647, %v3136
    %vm3148 = vcmp.eq.f32.partialorder %v3147, 8.507059e+37
    %v3149 = vand.u32 %v3136, 2147483648
    %v3150 = vor.u32 1.1754944e-38, %v3149
    %v3151 = vsel %vm3148, %v3150, %v3146
    %v3152 = vmul.f32 1.0, %v3151
    %v3153 = vrcp.pop %v3137
    %v3154 = vmul.f32 %v3137, %v3153
    %v3155 = vsub.f32 1.0, %v3154
    %v3156 = vmul.f32 %v3153, %v3155
    %v3157 = vadd.f32 %v3153, %v3156
    %vm3158 = vweird.f32 %v3137
    %vm3159 = vweird.f32 %v3153
    %vm3160 = vmor %vm3158, %vm3159
    %v3161 = vsel %vm3160, %v3153, %v3157
    %v3162 = vand.u32 2147483647, %v3137
    %vm3163 = vcmp.eq.f32.partialorder %v3162, 8.507059e+37
    %v3164 = vand.u32 %v3137, 2147483648
    %v3165 = vor.u32 1.1754944e-38, %v3164
    %v3166 = vsel %vm3163, %v3165, %v3161
    %v3167 = vmul.f32 1.0, %v3166
    %v3168 = vmul.f32 %v3152, %v3042
    %v3169 = vmul.f32 %v3167, %v3044
    %3170 = vmatpush.msra.mxu0 0.0
    %3171 = vmatpush.msra.mxu0 0.0
    %3172 = vmatpush.msra.mxu0 0.0
    %3173 = vmatpush.msra.mxu0 0.0
    %3174 = vmatpush.msra.mxu0 0.0
    %3175 = vmatpush.msra.mxu0 0.0
    %3176 = vmatpush.msra.mxu0 0.0
    %3177 = vmatpush.msra.mxu0 0.0
    %3178 = vmatpush.msra.mxu0 0.0
    %3179 = vmatpush.msra.mxu0 0.0
    %3180 = vmatpush.msra.mxu0 0.0
    %3181 = vmatpush.msra.mxu0 0.0
    %3182 = vmatpush.msra.mxu0 0.0
    %3183 = vmatpush.msra.mxu0 0.0
    %3184 = vmatpush.msra.mxu0 %v3169
    %3185 = vmatpush.msra.mxu0 %v3168
    %3186 = vmatmul.f32.gmra.mxu0 %v511
    %v3187 = vpop.f32.mrf.mxu0
    %v3188 = vadd.f32 0.0, %v3187
    %3189 = vmatmul.f32.gmra.mxu0 %v514
    %v3190 = vpop.f32.mrf.mxu0
    %v3191 = vadd.f32 0.0, %v3190
    %3192 = vdwg.mxu0
    %v3194 = vsel %vm340, %v3188, 0
    %v3197 = vsel %vm340, %v3191, 0
    %3199 = vmatpush.msra.mxu0 0.0
    %3200 = vmatpush.msra.mxu0 0.0
    %3201 = vmatpush.msra.mxu0 0.0
    %3202 = vmatpush.msra.mxu0 0.0
    %3203 = vmatpush.msra.mxu0 0.0
    %3204 = vmatpush.msra.mxu0 0.0
    %3205 = vmatpush.msra.mxu0 0.0
    %3206 = vmatpush.msra.mxu0 0.0
    %3207 = vmatpush.msra.mxu0 0.0
    %3208 = vmatpush.msra.mxu0 0.0
    %3209 = vmatpush.msra.mxu0 0.0
    %3210 = vmatpush.msra.mxu0 0.0
    %3211 = vmatpush.msra.mxu0 0.0
    %3212 = vmatpush.msra.mxu0 0.0
    %3213 = vmatpush.msra.mxu0 %v780
    %3214 = vmatpush.msra.mxu0 %v779
    %3215 = vmatmul.f32.gmra.mxu0 %v3194
    %v3216 = vpop.f32.mrf.mxu0
    %v3217 = vadd.f32 0.0, %v3216
    %3218 = vmatmul.f32.gmra.mxu0 %v3197
    %v3219 = vpop.f32.mrf.mxu0
    %v3220 = vadd.f32 0.0, %v3219
    %3221 = vdwg.mxu0
    %3222 = vmatpush.msra.mxu0 0.0
    %3223 = vmatpush.msra.mxu0 0.0
    %3224 = vmatpush.msra.mxu0 0.0
    %3225 = vmatpush.msra.mxu0 0.0
    %3226 = vmatpush.msra.mxu0 0.0
    %3227 = vmatpush.msra.mxu0 0.0
    %3228 = vmatpush.msra.mxu0 0.0
    %3229 = vmatpush.msra.mxu0 0.0
    %3230 = vmatpush.msra.mxu0 0.0
    %3231 = vmatpush.msra.mxu0 0.0
    %3232 = vmatpush.msra.mxu0 0.0
    %3233 = vmatpush.msra.mxu0 0.0
    %3234 = vmatpush.msra.mxu0 0.0
    %3235 = vmatpush.msra.mxu0 0.0
    %3236 = vmatpush.msra.mxu0 %v778
    %3237 = vmatpush.msra.mxu0 %v777
    %3238 = vmatmul.f32.gmra.mxu0 %v3100
    %v3239 = vpop.f32.mrf.mxu0
    %v3240 = vadd.f32 %v3217, %v3239
    %3241 = vmatmul.f32.gmra.mxu0 %v3103
    %v3242 = vpop.f32.mrf.mxu0
    %v3243 = vadd.f32 %v3220, %v3242
    %3244 = vdwg.mxu0
    %v3245 = vadd.f32 %v3240, %v834
    %v3246 = vadd.f32 %v3243, %v834
    %v3247 = vtanh.pop %v3245
    %v3248 = vtanh.pop %v3246
    %v3249 = vmul.f32 %v3152, %v2861
    %v3250 = vmul.f32 %v3167, %v2862
    %v3251 = vsub.f32 1.0, %v3152
    %v3252 = vsub.f32 1.0, %v3167
    %3255 = vrot.lane.b32.xlu0 %v3247, 16
    %v3256 = vpop.permute.xlu0 %3255
    %3257 = vrot.lane.b32.xlu0 %v3248, 16
    %v3258 = vpop.permute.xlu0 %3257
    %v3261 = vmul.f32 %v3251, %v3256
    %v3262 = vmul.f32 %v3252, %v3258
    %v3263 = vadd.f32 %v3249, %v3261
    %v3264 = vadd.f32 %v3250, %v3262
    %v3265 = vld [vmem:[#allocation2 + $0x70] sm:$0xff]
    %v3266 = vld [vmem:[#allocation2 + $0x78] sm:$0xff]
    %3267 = vmatpush.msra.mxu0 0.0
    %3268 = vmatpush.msra.mxu0 0.0
    %3269 = vmatpush.msra.mxu0 0.0
    %3270 = vmatpush.msra.mxu0 0.0
    %3271 = vmatpush.msra.mxu0 0.0
    %3272 = vmatpush.msra.mxu0 0.0
    %3273 = vmatpush.msra.mxu0 0.0
    %3274 = vmatpush.msra.mxu0 0.0
    %3275 = vmatpush.msra.mxu0 0.0
    %3276 = vmatpush.msra.mxu0 0.0
    %3277 = vmatpush.msra.mxu0 0.0
    %3278 = vmatpush.msra.mxu0 0.0
    %3279 = vmatpush.msra.mxu0 0.0
    %3280 = vmatpush.msra.mxu0 0.0
    %3281 = vmatpush.msra.mxu0 %v437
    %3282 = vmatpush.msra.mxu0 %v436
    %3283 = vmatmul.f32.gmra.mxu0 %v3100
    %v3284 = vpop.f32.mrf.mxu0
    %v3285 = vadd.f32 0.0, %v3284
    %3286 = vmatmul.f32.gmra.mxu0 %v3103
    %v3287 = vpop.f32.mrf.mxu0
    %v3288 = vadd.f32 0.0, %v3287
    %3289 = vdwg.mxu0
    %v3290 = vadd.f32 %v3265, %v3285
    %v3291 = vadd.f32 %v3266, %v3288
    %v3292 = vadd.f32 %v3290, %v467
    %v3293 = vadd.f32 %v3291, %v467
    %v3294 = vxor.u32 %v3292, 2147483648
    %v3295 = vxor.u32 %v3293, 2147483648
    %v3296 = vmul.f32 %v3294, 1.442695
    %v3297 = vpow.pop %v3296
    %v3298 = vmul.f32 %v3295, 1.442695
    %v3299 = vpow.pop %v3298
    %v3300 = vadd.f32 %v3297, 1.0
    %v3301 = vadd.f32 %v3299, 1.0
    %v3302 = vrcp.pop %v3300
    %v3303 = vmul.f32 %v3300, %v3302
    %v3304 = vsub.f32 1.0, %v3303
    %v3305 = vmul.f32 %v3302, %v3304
    %v3306 = vadd.f32 %v3302, %v3305
    %vm3307 = vweird.f32 %v3300
    %vm3308 = vweird.f32 %v3302
    %vm3309 = vmor %vm3307, %vm3308
    %v3310 = vsel %vm3309, %v3302, %v3306
    %v3311 = vand.u32 2147483647, %v3300
    %vm3312 = vcmp.eq.f32.partialorder %v3311, 8.507059e+37
    %v3313 = vand.u32 %v3300, 2147483648
    %v3314 = vor.u32 1.1754944e-38, %v3313
    %v3315 = vsel %vm3312, %v3314, %v3310
    %v3316 = vmul.f32 1.0, %v3315
    %v3317 = vrcp.pop %v3301
    %v3318 = vmul.f32 %v3301, %v3317
    %v3319 = vsub.f32 1.0, %v3318
    %v3320 = vmul.f32 %v3317, %v3319
    %v3321 = vadd.f32 %v3317, %v3320
    %vm3322 = vweird.f32 %v3301
    %vm3323 = vweird.f32 %v3317
    %vm3324 = vmor %vm3322, %vm3323
    %v3325 = vsel %vm3324, %v3317, %v3321
    %v3326 = vand.u32 2147483647, %v3301
    %vm3327 = vcmp.eq.f32.partialorder %v3326, 8.507059e+37
    %v3328 = vand.u32 %v3301, 2147483648
    %v3329 = vor.u32 1.1754944e-38, %v3328
    %v3330 = vsel %vm3327, %v3329, %v3325
    %v3331 = vmul.f32 1.0, %v3330
    %v3332 = vmul.f32 %v3316, %v3011
    %v3333 = vmul.f32 %v3331, %v3013
    %3334 = vmatpush.msra.mxu0 0.0
    %3335 = vmatpush.msra.mxu0 0.0
    %3336 = vmatpush.msra.mxu0 0.0
    %3337 = vmatpush.msra.mxu0 0.0
    %3338 = vmatpush.msra.mxu0 0.0
    %3339 = vmatpush.msra.mxu0 0.0
    %3340 = vmatpush.msra.mxu0 0.0
    %3341 = vmatpush.msra.mxu0 0.0
    %3342 = vmatpush.msra.mxu0 0.0
    %3343 = vmatpush.msra.mxu0 0.0
    %3344 = vmatpush.msra.mxu0 0.0
    %3345 = vmatpush.msra.mxu0 0.0
    %3346 = vmatpush.msra.mxu0 0.0
    %3347 = vmatpush.msra.mxu0 0.0
    %3348 = vmatpush.msra.mxu0 %v3333
    %3349 = vmatpush.msra.mxu0 %v3332
    %3350 = vmatmul.f32.gmra.mxu0 %v511
    %v3351 = vpop.f32.mrf.mxu0
    %v3352 = vadd.f32 0.0, %v3351
    %3353 = vmatmul.f32.gmra.mxu0 %v514
    %v3354 = vpop.f32.mrf.mxu0
    %v3355 = vadd.f32 0.0, %v3354
    %3356 = vdwg.mxu0
    %v3357 = vld [vmem:[#allocation3 + $0x70] sm:$0xff]
    %v3358 = vld [vmem:[#allocation3 + $0x78] sm:$0xff]
    %v3360 = vsel %vm340, %v3352, 0
    %v3363 = vsel %vm340, %v3355, 0
    %3365 = vmatpush.msra.mxu0 0.0
    %3366 = vmatpush.msra.mxu0 0.0
    %3367 = vmatpush.msra.mxu0 0.0
    %3368 = vmatpush.msra.mxu0 0.0
    %3369 = vmatpush.msra.mxu0 0.0
    %3370 = vmatpush.msra.mxu0 0.0
    %3371 = vmatpush.msra.mxu0 0.0
    %3372 = vmatpush.msra.mxu0 0.0
    %3373 = vmatpush.msra.mxu0 0.0
    %3374 = vmatpush.msra.mxu0 0.0
    %3375 = vmatpush.msra.mxu0 0.0
    %3376 = vmatpush.msra.mxu0 0.0
    %3377 = vmatpush.msra.mxu0 0.0
    %3378 = vmatpush.msra.mxu0 0.0
    %3379 = vmatpush.msra.mxu0 %v542
    %3380 = vmatpush.msra.mxu0 %v541
    %3381 = vmatmul.f32.gmra.mxu0 %v3360
    %v3382 = vpop.f32.mrf.mxu0
    %v3383 = vadd.f32 0.0, %v3382
    %3384 = vmatmul.f32.gmra.mxu0 %v3363
    %v3385 = vpop.f32.mrf.mxu0
    %v3386 = vadd.f32 0.0, %v3385
    %3387 = vdwg.mxu0
    %v3388 = vadd.f32 %v3357, %v3383
    %v3389 = vadd.f32 %v3358, %v3386
    %v3390 = vadd.f32 %v3388, %v575
    %v3391 = vadd.f32 %v3389, %v575
    %v3392 = vtanh.pop %v3390
    %v3393 = vtanh.pop %v3391
    %v3394 = vmul.f32 %v3316, %v3006
    %v3395 = vmul.f32 %v3331, %v3007
    %v3396 = vsub.f32 1.0, %v3316
    %v3397 = vsub.f32 1.0, %v3331
    %3400 = vrot.lane.b32.xlu0 %v3392, 16
    %v3401 = vpop.permute.xlu0 %3400
    %3402 = vrot.lane.b32.xlu0 %v3393, 16
    %v3403 = vpop.permute.xlu0 %3402
    %v3406 = vmul.f32 %v3396, %v3401
    %v3407 = vmul.f32 %v3397, %v3403
    %v3408 = vadd.f32 %v3394, %v3406
    %v3409 = vadd.f32 %v3395, %v3407
    %3412 = vrot.lane.b32.xlu0 %v3408, 112
    %v3413 = vpop.permute.xlu0 %3412
    %3414 = vrot.lane.b32.xlu0 %v3409, 112
    %v3415 = vpop.permute.xlu0 %3414
    %3418 = vmatpush.msra.mxu0 0.0
    %3419 = vmatpush.msra.mxu0 0.0
    %3420 = vmatpush.msra.mxu0 0.0
    %3421 = vmatpush.msra.mxu0 0.0
    %3422 = vmatpush.msra.mxu0 0.0
    %3423 = vmatpush.msra.mxu0 0.0
    %3424 = vmatpush.msra.mxu0 0.0
    %3425 = vmatpush.msra.mxu0 0.0
    %3426 = vmatpush.msra.mxu0 0.0
    %3427 = vmatpush.msra.mxu0 0.0
    %3428 = vmatpush.msra.mxu0 0.0
    %3429 = vmatpush.msra.mxu0 0.0
    %3430 = vmatpush.msra.mxu0 0.0
    %3431 = vmatpush.msra.mxu0 0.0
    %3432 = vmatpush.msra.mxu0 %v3415
    %3433 = vmatpush.msra.mxu0 %v3413
    %3434 = vmatmul.f32.gmra.mxu0 %v511
    %v3435 = vpop.f32.mrf.mxu0
    %v3436 = vadd.f32 0.0, %v3435
    %3437 = vmatmul.f32.gmra.mxu0 %v514
    %v3438 = vpop.f32.mrf.mxu0
    %v3439 = vadd.f32 0.0, %v3438
    %3440 = vdwg.mxu0
    %3443 = vrot.lane.b32.xlu0 %v3263, 112
    %v3444 = vpop.permute.xlu0 %3443
    %3445 = vrot.lane.b32.xlu0 %v3264, 112
    %v3446 = vpop.permute.xlu0 %3445
    %3449 = vmatpush.msra.mxu0 0.0
    %3450 = vmatpush.msra.mxu0 0.0
    %3451 = vmatpush.msra.mxu0 0.0
    %3452 = vmatpush.msra.mxu0 0.0
    %3453 = vmatpush.msra.mxu0 0.0
    %3454 = vmatpush.msra.mxu0 0.0
    %3455 = vmatpush.msra.mxu0 0.0
    %3456 = vmatpush.msra.mxu0 0.0
    %3457 = vmatpush.msra.mxu0 0.0
    %3458 = vmatpush.msra.mxu0 0.0
    %3459 = vmatpush.msra.mxu0 0.0
    %3460 = vmatpush.msra.mxu0 0.0
    %3461 = vmatpush.msra.mxu0 0.0
    %3462 = vmatpush.msra.mxu0 0.0
    %3463 = vmatpush.msra.mxu0 %v3446
    %3464 = vmatpush.msra.mxu0 %v3444
    %3465 = vmatmul.f32.gmra.mxu0 %v511
    %v3466 = vpop.f32.mrf.mxu0
    %v3467 = vadd.f32 0.0, %v3466
    %3468 = vmatmul.f32.gmra.mxu0 %v514
    %v3469 = vpop.f32.mrf.mxu0
    %v3470 = vadd.f32 0.0, %v3469
    %3471 = vdwg.mxu0
    %v3473 = vsel %vm340, %v3467, 0
    %v3476 = vsel %vm340, %v3470, 0
    %3478 = vmatpush.msra.mxu0 0.0
    %3479 = vmatpush.msra.mxu0 0.0
    %3480 = vmatpush.msra.mxu0 0.0
    %3481 = vmatpush.msra.mxu0 0.0
    %3482 = vmatpush.msra.mxu0 0.0
    %3483 = vmatpush.msra.mxu0 0.0
    %3484 = vmatpush.msra.mxu0 0.0
    %3485 = vmatpush.msra.mxu0 0.0
    %3486 = vmatpush.msra.mxu0 0.0
    %3487 = vmatpush.msra.mxu0 0.0
    %3488 = vmatpush.msra.mxu0 0.0
    %3489 = vmatpush.msra.mxu0 0.0
    %3490 = vmatpush.msra.mxu0 0.0
    %3491 = vmatpush.msra.mxu0 0.0
    %3492 = vmatpush.msra.mxu0 %v651
    %3493 = vmatpush.msra.mxu0 %v650
    %3494 = vmatmul.f32.gmra.mxu0 %v3473
    %v3495 = vpop.f32.mrf.mxu0
    %v3496 = vadd.f32 0.0, %v3495
    %3497 = vmatmul.f32.gmra.mxu0 %v3476
    %v3498 = vpop.f32.mrf.mxu0
    %v3499 = vadd.f32 0.0, %v3498
    %3500 = vdwg.mxu0
    %v3502 = vsel %vm340, %v3436, 0
    %v3505 = vsel %vm340, %v3439, 0
    %3507 = vmatpush.msra.mxu0 0.0
    %3508 = vmatpush.msra.mxu0 0.0
    %3509 = vmatpush.msra.mxu0 0.0
    %3510 = vmatpush.msra.mxu0 0.0
    %3511 = vmatpush.msra.mxu0 0.0
    %3512 = vmatpush.msra.mxu0 0.0
    %3513 = vmatpush.msra.mxu0 0.0
    %3514 = vmatpush.msra.mxu0 0.0
    %3515 = vmatpush.msra.mxu0 0.0
    %3516 = vmatpush.msra.mxu0 0.0
    %3517 = vmatpush.msra.mxu0 0.0
    %3518 = vmatpush.msra.mxu0 0.0
    %3519 = vmatpush.msra.mxu0 0.0
    %3520 = vmatpush.msra.mxu0 0.0
    %3521 = vmatpush.msra.mxu0 %v649
    %3522 = vmatpush.msra.mxu0 %v648
    %3523 = vmatmul.f32.gmra.mxu0 %v3502
    %v3524 = vpop.f32.mrf.mxu0
    %v3525 = vadd.f32 %v3496, %v3524
    %3526 = vmatmul.f32.gmra.mxu0 %v3505
    %v3527 = vpop.f32.mrf.mxu0
    %v3528 = vadd.f32 %v3499, %v3527
    %3529 = vdwg.mxu0
    %v3530 = vadd.f32 %v3525, %v711
    %v3531 = vadd.f32 %v3528, %v711
    %v3532 = vxor.u32 %v3530, 2147483648
    %v3533 = vxor.u32 %v3531, 2147483648
    %v3534 = vmul.f32 %v3532, 1.442695
    %v3535 = vpow.pop %v3534
    %v3536 = vmul.f32 %v3533, 1.442695
    %v3537 = vpow.pop %v3536
    %v3538 = vadd.f32 %v3535, 1.0
    %v3539 = vadd.f32 %v3537, 1.0
    %v3540 = vrcp.pop %v3538
    %v3541 = vmul.f32 %v3538, %v3540
    %v3542 = vsub.f32 1.0, %v3541
    %v3543 = vmul.f32 %v3540, %v3542
    %v3544 = vadd.f32 %v3540, %v3543
    %vm3545 = vweird.f32 %v3538
    %vm3546 = vweird.f32 %v3540
    %vm3547 = vmor %vm3545, %vm3546
    %v3548 = vsel %vm3547, %v3540, %v3544
    %v3549 = vand.u32 2147483647, %v3538
    %vm3550 = vcmp.eq.f32.partialorder %v3549, 8.507059e+37
    %v3551 = vand.u32 %v3538, 2147483648
    %v3552 = vor.u32 1.1754944e-38, %v3551
    %v3553 = vsel %vm3550, %v3552, %v3548
    %v3554 = vmul.f32 1.0, %v3553
    %v3555 = vrcp.pop %v3539
    %v3556 = vmul.f32 %v3539, %v3555
    %v3557 = vsub.f32 1.0, %v3556
    %v3558 = vmul.f32 %v3555, %v3557
    %v3559 = vadd.f32 %v3555, %v3558
    %vm3560 = vweird.f32 %v3539
    %vm3561 = vweird.f32 %v3555
    %vm3562 = vmor %vm3560, %vm3561
    %v3563 = vsel %vm3562, %v3555, %v3559
    %v3564 = vand.u32 2147483647, %v3539
    %vm3565 = vcmp.eq.f32.partialorder %v3564, 8.507059e+37
    %v3566 = vand.u32 %v3539, 2147483648
    %v3567 = vor.u32 1.1754944e-38, %v3566
    %v3568 = vsel %vm3565, %v3567, %v3563
    %v3569 = vmul.f32 1.0, %v3568
    %v3570 = vmul.f32 %v3554, %v3444
    %v3571 = vmul.f32 %v3569, %v3446
    %3572 = vmatpush.msra.mxu0 0.0
    %3573 = vmatpush.msra.mxu0 0.0
    %3574 = vmatpush.msra.mxu0 0.0
    %3575 = vmatpush.msra.mxu0 0.0
    %3576 = vmatpush.msra.mxu0 0.0
    %3577 = vmatpush.msra.mxu0 0.0
    %3578 = vmatpush.msra.mxu0 0.0
    %3579 = vmatpush.msra.mxu0 0.0
    %3580 = vmatpush.msra.mxu0 0.0
    %3581 = vmatpush.msra.mxu0 0.0
    %3582 = vmatpush.msra.mxu0 0.0
    %3583 = vmatpush.msra.mxu0 0.0
    %3584 = vmatpush.msra.mxu0 0.0
    %3585 = vmatpush.msra.mxu0 0.0
    %3586 = vmatpush.msra.mxu0 %v3571
    %3587 = vmatpush.msra.mxu0 %v3570
    %3588 = vmatmul.f32.gmra.mxu0 %v511
    %v3589 = vpop.f32.mrf.mxu0
    %v3590 = vadd.f32 0.0, %v3589
    %3591 = vmatmul.f32.gmra.mxu0 %v514
    %v3592 = vpop.f32.mrf.mxu0
    %v3593 = vadd.f32 0.0, %v3592
    %3594 = vdwg.mxu0
    %v3596 = vsel %vm340, %v3590, 0
    %v3599 = vsel %vm340, %v3593, 0
    %3601 = vmatpush.msra.mxu0 0.0
    %3602 = vmatpush.msra.mxu0 0.0
    %3603 = vmatpush.msra.mxu0 0.0
    %3604 = vmatpush.msra.mxu0 0.0
    %3605 = vmatpush.msra.mxu0 0.0
    %3606 = vmatpush.msra.mxu0 0.0
    %3607 = vmatpush.msra.mxu0 0.0
    %3608 = vmatpush.msra.mxu0 0.0
    %3609 = vmatpush.msra.mxu0 0.0
    %3610 = vmatpush.msra.mxu0 0.0
    %3611 = vmatpush.msra.mxu0 0.0
    %3612 = vmatpush.msra.mxu0 0.0
    %3613 = vmatpush.msra.mxu0 0.0
    %3614 = vmatpush.msra.mxu0 0.0
    %3615 = vmatpush.msra.mxu0 %v780
    %3616 = vmatpush.msra.mxu0 %v779
    %3617 = vmatmul.f32.gmra.mxu0 %v3596
    %v3618 = vpop.f32.mrf.mxu0
    %v3619 = vadd.f32 0.0, %v3618
    %3620 = vmatmul.f32.gmra.mxu0 %v3599
    %v3621 = vpop.f32.mrf.mxu0
    %v3622 = vadd.f32 0.0, %v3621
    %3623 = vdwg.mxu0
    %3624 = vmatpush.msra.mxu0 0.0
    %3625 = vmatpush.msra.mxu0 0.0
    %3626 = vmatpush.msra.mxu0 0.0
    %3627 = vmatpush.msra.mxu0 0.0
    %3628 = vmatpush.msra.mxu0 0.0
    %3629 = vmatpush.msra.mxu0 0.0
    %3630 = vmatpush.msra.mxu0 0.0
    %3631 = vmatpush.msra.mxu0 0.0
    %3632 = vmatpush.msra.mxu0 0.0
    %3633 = vmatpush.msra.mxu0 0.0
    %3634 = vmatpush.msra.mxu0 0.0
    %3635 = vmatpush.msra.mxu0 0.0
    %3636 = vmatpush.msra.mxu0 0.0
    %3637 = vmatpush.msra.mxu0 0.0
    %3638 = vmatpush.msra.mxu0 %v778
    %3639 = vmatpush.msra.mxu0 %v777
    %3640 = vmatmul.f32.gmra.mxu0 %v3502
    %v3641 = vpop.f32.mrf.mxu0
    %v3642 = vadd.f32 %v3619, %v3641
    %3643 = vmatmul.f32.gmra.mxu0 %v3505
    %v3644 = vpop.f32.mrf.mxu0
    %v3645 = vadd.f32 %v3622, %v3644
    %3646 = vdwg.mxu0
    %v3647 = vadd.f32 %v3642, %v834
    %v3648 = vadd.f32 %v3645, %v834
    %v3649 = vtanh.pop %v3647
    %v3650 = vtanh.pop %v3648
    %v3651 = vmul.f32 %v3554, %v3263
    %v3652 = vmul.f32 %v3569, %v3264
    %v3653 = vsub.f32 1.0, %v3554
    %v3654 = vsub.f32 1.0, %v3569
    %3657 = vrot.lane.b32.xlu0 %v3649, 16
    %v3658 = vpop.permute.xlu0 %3657
    %3659 = vrot.lane.b32.xlu0 %v3650, 16
    %v3660 = vpop.permute.xlu0 %3659
    %v3663 = vmul.f32 %v3653, %v3658
    %v3664 = vmul.f32 %v3654, %v3660
    %v3665 = vadd.f32 %v3651, %v3663
    %v3666 = vadd.f32 %v3652, %v3664
    %v3667 = vld [vmem:[#allocation4 + $0x98] sm:$0xff]
    %v3668 = vld [vmem:[#allocation4 + $0xa0] sm:$0xff]
    %v3669 = vld [vmem:[#allocation4 + $0xa8] sm:$0xff]
    %v3670 = vld [vmem:[#allocation4 + $0xb0] sm:$0xff]
    %v3671 = vsel %vm254, 0.0, 0
    %3673 = vmatpush.msra.mxu0 0.0
    %3674 = vmatpush.msra.mxu0 0.0
    %3675 = vmatpush.msra.mxu0 0.0
    %3676 = vmatpush.msra.mxu0 0.0
    %3677 = vmatpush.msra.mxu0 0.0
    %3678 = vmatpush.msra.mxu0 0.0
    %3679 = vmatpush.msra.mxu0 0.0
    %3680 = vmatpush.msra.mxu0 0.0
    %3681 = vmatpush.msra.mxu0 0.0
    %3682 = vmatpush.msra.mxu0 0.0
    %3683 = vmatpush.msra.mxu0 0.0
    %3684 = vmatpush.msra.mxu0 0.0
    %3685 = vmatpush.msra.mxu0 %v3670
    %3686 = vmatpush.msra.mxu0 %v3669
    %3687 = vmatpush.msra.mxu0 %v3668
    %3688 = vmatpush.msra.mxu0 %v3667
    %3689 = vmatmul.f32.gmra.mxu0 %v3671
    %v3690 = vpop.f32.mrf.mxu0
    %v3691 = vadd.f32 0.0, %v3690
    %3692 = vdwg.mxu0
    %v3693 = vadd.f32 %v411, %v3691
    %v3694 = vld [vmem:[#allocation4 + $0xb8] sm:$0x1]
    %v3695 = vperm.slane %v3694, 0
    %v3696 = vadd.f32 %v3693, %v3695
    %v3697 = vxor.u32 %v3696, 2147483648
    %v3698 = vmul.f32 %v3697, 1.442695
    %v3699 = vpow.pop %v3698
    %v3700 = vadd.f32 %v3699, 1.0
    %v3701 = vrcp.pop %v3700
    %v3702 = vmul.f32 %v3700, %v3701
    %v3703 = vsub.f32 1.0, %v3702
    %v3704 = vmul.f32 %v3701, %v3703
    %v3705 = vadd.f32 %v3701, %v3704
    %vm3706 = vweird.f32 %v3700
    %vm3707 = vweird.f32 %v3701
    %vm3708 = vmor %vm3706, %vm3707
    %v3709 = vsel %vm3708, %v3701, %v3705
    %v3710 = vand.u32 2147483647, %v3700
    %vm3711 = vcmp.eq.f32.partialorder %v3710, 8.507059e+37
    %v3712 = vand.u32 %v3700, 2147483648
    %v3713 = vor.u32 1.1754944e-38, %v3712
    %v3714 = vsel %vm3711, %v3713, %v3709
    %v3715 = vmul.f32 1.0, %v3714
    %v3716 = vtanh.pop %v3696
    %v3717 = vmul.f32 %v3715, 0.0
    %3719 = vrot.lane.b32.xlu0 %v3716, 64
    %v3720 = vpop.permute.xlu0 %3719
    %v3722 = vmul.f32 %v3715, %v3720
    %3724 = vrot.lane.b32.xlu0 %v3722, 32
    %v3725 = vpop.permute.xlu0 %3724
    %v3727 = vadd.f32 %v3717, %v3725
    %v3728 = vtanh.pop %v3727
    %3730 = vrot.lane.b32.xlu0 %v3728, 64
    %v3731 = vpop.permute.xlu0 %3730
    %v3733 = vmul.f32 %v3715, %v3731
    %v3734 = vld [vmem:[#allocation4 + $0xc0] sm:$0xff]
    %v3735 = vld [vmem:[#allocation4 + $0xc8] sm:$0xff]
    %v3736 = vld [vmem:[#allocation4 + $0xd0] sm:$0xff]
    %v3737 = vld [vmem:[#allocation4 + $0xd8] sm:$0xff]
    %v3738 = vld [vmem:[#allocation4 + $0xe0] sm:$0xff]
    %v3739 = vld [vmem:[#allocation4 + $0xe8] sm:$0xff]
    %v3740 = vld [vmem:[#allocation4 + $0xf0] sm:$0xff]
    %v3741 = vld [vmem:[#allocation4 + $0xf8] sm:$0xff]
    %3742 = vmatpush.msra.mxu0 0.0
    %3743 = vmatpush.msra.mxu0 0.0
    %3744 = vmatpush.msra.mxu0 0.0
    %3745 = vmatpush.msra.mxu0 0.0
    %3746 = vmatpush.msra.mxu0 0.0
    %3747 = vmatpush.msra.mxu0 0.0
    %3748 = vmatpush.msra.mxu0 0.0
    %3749 = vmatpush.msra.mxu0 0.0
    %3750 = vmatpush.msra.mxu0 0.0
    %3751 = vmatpush.msra.mxu0 0.0
    %3752 = vmatpush.msra.mxu0 0.0
    %3753 = vmatpush.msra.mxu0 0.0
    %3754 = vmatpush.msra.mxu0 %v3741
    %3755 = vmatpush.msra.mxu0 %v3740
    %3756 = vmatpush.msra.mxu0 %v3739
    %3757 = vmatpush.msra.mxu0 %v3738
    %3758 = vmatmul.f32.gmra.mxu0 %v3671
    %v3759 = vpop.f32.mrf.mxu0
    %v3760 = vadd.f32 0.0, %v3759
    %3761 = vdwg.mxu0
    %3763 = vrot.lane.b32.xlu0 %v3733, 32
    %v3764 = vpop.permute.xlu0 %3763
    %v3765 = vsel %vm254, %v3764, 0
    %3767 = vmatpush.msra.mxu0 0.0
    %3768 = vmatpush.msra.mxu0 0.0
    %3769 = vmatpush.msra.mxu0 0.0
    %3770 = vmatpush.msra.mxu0 0.0
    %3771 = vmatpush.msra.mxu0 0.0
    %3772 = vmatpush.msra.mxu0 0.0
    %3773 = vmatpush.msra.mxu0 0.0
    %3774 = vmatpush.msra.mxu0 0.0
    %3775 = vmatpush.msra.mxu0 0.0
    %3776 = vmatpush.msra.mxu0 0.0
    %3777 = vmatpush.msra.mxu0 0.0
    %3778 = vmatpush.msra.mxu0 0.0
    %3779 = vmatpush.msra.mxu0 %v3737
    %3780 = vmatpush.msra.mxu0 %v3736
    %3781 = vmatpush.msra.mxu0 %v3735
    %3782 = vmatpush.msra.mxu0 %v3734
    %3783 = vmatmul.f32.gmra.mxu0 %v3765
    %v3784 = vpop.f32.mrf.mxu0
    %v3785 = vadd.f32 %v3760, %v3784
    %3786 = vdwg.mxu0
    %v3787 = vld [vmem:[#allocation4 + $0x100] sm:$0x1]
    %v3788 = vperm.slane %v3787, 0
    %v3789 = vadd.f32 %v3785, %v3788
    %v3790 = vxor.u32 %v3789, 2147483648
    %v3791 = vmul.f32 %v3790, 1.442695
    %v3792 = vpow.pop %v3791
    %v3793 = vadd.f32 %v3792, 1.0
    %v3794 = vrcp.pop %v3793
    %v3795 = vmul.f32 %v3793, %v3794
    %v3796 = vsub.f32 1.0, %v3795
    %v3797 = vmul.f32 %v3794, %v3796
    %v3798 = vadd.f32 %v3794, %v3797
    %vm3799 = vweird.f32 %v3793
    %vm3800 = vweird.f32 %v3794
    %vm3801 = vmor %vm3799, %vm3800
    %v3802 = vsel %vm3801, %v3794, %v3798
    %v3803 = vand.u32 2147483647, %v3793
    %vm3804 = vcmp.eq.f32.partialorder %v3803, 8.507059e+37
    %v3805 = vand.u32 %v3793, 2147483648
    %v3806 = vor.u32 1.1754944e-38, %v3805
    %v3807 = vsel %vm3804, %v3806, %v3802
    %v3808 = vmul.f32 1.0, %v3807
    %v3809 = vtanh.pop %v3789
    %v3810 = vmul.f32 %v3808, 0.0
    %3812 = vrot.lane.b32.xlu0 %v3809, 64
    %v3813 = vpop.permute.xlu0 %3812
    %v3815 = vmul.f32 %v3808, %v3813
    %3817 = vrot.lane.b32.xlu0 %v3815, 32
    %v3818 = vpop.permute.xlu0 %3817
    %v3820 = vadd.f32 %v3810, %v3818
    %v3821 = vtanh.pop %v3820
    %3823 = vrot.lane.b32.xlu0 %v3821, 64
    %v3824 = vpop.permute.xlu0 %3823
    %v3826 = vmul.f32 %v3808, %v3824
    %3827 = vmatpush.msra.mxu0 0.0
    %3828 = vmatpush.msra.mxu0 0.0
    %3829 = vmatpush.msra.mxu0 0.0
    %3830 = vmatpush.msra.mxu0 0.0
    %3831 = vmatpush.msra.mxu0 0.0
    %3832 = vmatpush.msra.mxu0 0.0
    %3833 = vmatpush.msra.mxu0 0.0
    %3834 = vmatpush.msra.mxu0 0.0
    %3835 = vmatpush.msra.mxu0 0.0
    %3836 = vmatpush.msra.mxu0 0.0
    %3837 = vmatpush.msra.mxu0 0.0
    %3838 = vmatpush.msra.mxu0 0.0
    %3839 = vmatpush.msra.mxu0 %v3670
    %3840 = vmatpush.msra.mxu0 %v3669
    %3841 = vmatpush.msra.mxu0 %v3668
    %3842 = vmatpush.msra.mxu0 %v3667
    %3843 = vmatmul.f32.gmra.mxu0 %v3765
    %v3844 = vpop.f32.mrf.mxu0
    %v3845 = vadd.f32 0.0, %v3844
    %3846 = vdwg.mxu0
    %v3847 = vadd.f32 %v414, %v3845
    %v3848 = vadd.f32 %v3847, %v3695
    %v3849 = vxor.u32 %v3848, 2147483648
    %v3850 = vmul.f32 %v3849, 1.442695
    %v3851 = vpow.pop %v3850
    %v3852 = vadd.f32 %v3851, 1.0
    %v3853 = vrcp.pop %v3852
    %v3854 = vmul.f32 %v3852, %v3853
    %v3855 = vsub.f32 1.0, %v3854
    %v3856 = vmul.f32 %v3853, %v3855
    %v3857 = vadd.f32 %v3853, %v3856
    %vm3858 = vweird.f32 %v3852
    %vm3859 = vweird.f32 %v3853
    %vm3860 = vmor %vm3858, %vm3859
    %v3861 = vsel %vm3860, %v3853, %v3857
    %v3862 = vand.u32 2147483647, %v3852
    %vm3863 = vcmp.eq.f32.partialorder %v3862, 8.507059e+37
    %v3864 = vand.u32 %v3852, 2147483648
    %v3865 = vor.u32 1.1754944e-38, %v3864
    %v3866 = vsel %vm3863, %v3865, %v3861
    %v3867 = vmul.f32 1.0, %v3866
    %v3868 = vtanh.pop %v3848
    %v3869 = vmul.f32 %v3867, %v3727
    %3871 = vrot.lane.b32.xlu0 %v3868, 64
    %v3872 = vpop.permute.xlu0 %3871
    %v3874 = vmul.f32 %v3867, %v3872
    %3876 = vrot.lane.b32.xlu0 %v3874, 32
    %v3877 = vpop.permute.xlu0 %3876
    %v3879 = vadd.f32 %v3869, %v3877
    %v3880 = vtanh.pop %v3879
    %3882 = vrot.lane.b32.xlu0 %v3880, 64
    %v3883 = vpop.permute.xlu0 %3882
    %v3885 = vmul.f32 %v3867, %v3883
    %3887 = vrot.lane.b32.xlu0 %v3826, 32
    %v3888 = vpop.permute.xlu0 %3887
    %v3889 = vsel %vm254, %v3888, 0
    %3891 = vmatpush.msra.mxu0 0.0
    %3892 = vmatpush.msra.mxu0 0.0
    %3893 = vmatpush.msra.mxu0 0.0
    %3894 = vmatpush.msra.mxu0 0.0
    %3895 = vmatpush.msra.mxu0 0.0
    %3896 = vmatpush.msra.mxu0 0.0
    %3897 = vmatpush.msra.mxu0 0.0
    %3898 = vmatpush.msra.mxu0 0.0
    %3899 = vmatpush.msra.mxu0 0.0
    %3900 = vmatpush.msra.mxu0 0.0
    %3901 = vmatpush.msra.mxu0 0.0
    %3902 = vmatpush.msra.mxu0 0.0
    %3903 = vmatpush.msra.mxu0 %v3741
    %3904 = vmatpush.msra.mxu0 %v3740
    %3905 = vmatpush.msra.mxu0 %v3739
    %3906 = vmatpush.msra.mxu0 %v3738
    %3907 = vmatmul.f32.gmra.mxu0 %v3889
    %v3908 = vpop.f32.mrf.mxu0
    %v3909 = vadd.f32 0.0, %v3908
    %3910 = vdwg.mxu0
    %3912 = vrot.lane.b32.xlu0 %v3885, 32
    %v3913 = vpop.permute.xlu0 %3912
    %v3914 = vsel %vm254, %v3913, 0
    %3916 = vmatpush.msra.mxu0 0.0
    %3917 = vmatpush.msra.mxu0 0.0
    %3918 = vmatpush.msra.mxu0 0.0
    %3919 = vmatpush.msra.mxu0 0.0
    %3920 = vmatpush.msra.mxu0 0.0
    %3921 = vmatpush.msra.mxu0 0.0
    %3922 = vmatpush.msra.mxu0 0.0
    %3923 = vmatpush.msra.mxu0 0.0
    %3924 = vmatpush.msra.mxu0 0.0
    %3925 = vmatpush.msra.mxu0 0.0
    %3926 = vmatpush.msra.mxu0 0.0
    %3927 = vmatpush.msra.mxu0 0.0
    %3928 = vmatpush.msra.mxu0 %v3737
    %3929 = vmatpush.msra.mxu0 %v3736
    %3930 = vmatpush.msra.mxu0 %v3735
    %3931 = vmatpush.msra.mxu0 %v3734
    %3932 = vmatmul.f32.gmra.mxu0 %v3914
    %v3933 = vpop.f32.mrf.mxu0
    %v3934 = vadd.f32 %v3909, %v3933
    %3935 = vdwg.mxu0
    %v3936 = vadd.f32 %v3934, %v3788
    %v3937 = vxor.u32 %v3936, 2147483648
    %v3938 = vmul.f32 %v3937, 1.442695
    %v3939 = vpow.pop %v3938
    %v3940 = vadd.f32 %v3939, 1.0
    %v3941 = vrcp.pop %v3940
    %v3942 = vmul.f32 %v3940, %v3941
    %v3943 = vsub.f32 1.0, %v3942
    %v3944 = vmul.f32 %v3941, %v3943
    %v3945 = vadd.f32 %v3941, %v3944
    %vm3946 = vweird.f32 %v3940
    %vm3947 = vweird.f32 %v3941
    %vm3948 = vmor %vm3946, %vm3947
    %v3949 = vsel %vm3948, %v3941, %v3945
    %v3950 = vand.u32 2147483647, %v3940
    %vm3951 = vcmp.eq.f32.partialorder %v3950, 8.507059e+37
    %v3952 = vand.u32 %v3940, 2147483648
    %v3953 = vor.u32 1.1754944e-38, %v3952
    %v3954 = vsel %vm3951, %v3953, %v3949
    %v3955 = vmul.f32 1.0, %v3954
    %v3956 = vtanh.pop %v3936
    %v3957 = vmul.f32 %v3955, %v3820
    %3959 = vrot.lane.b32.xlu0 %v3956, 64
    %v3960 = vpop.permute.xlu0 %3959
    %v3962 = vmul.f32 %v3955, %v3960
    %3964 = vrot.lane.b32.xlu0 %v3962, 32
    %v3965 = vpop.permute.xlu0 %3964
    %v3967 = vadd.f32 %v3957, %v3965
    %v3968 = vtanh.pop %v3967
    %3970 = vrot.lane.b32.xlu0 %v3968, 64
    %v3971 = vpop.permute.xlu0 %3970
    %v3973 = vmul.f32 %v3955, %v3971
    %3974 = vmatpush.msra.mxu0 0.0
    %3975 = vmatpush.msra.mxu0 0.0
    %3976 = vmatpush.msra.mxu0 0.0
    %3977 = vmatpush.msra.mxu0 0.0
    %3978 = vmatpush.msra.mxu0 0.0
    %3979 = vmatpush.msra.mxu0 0.0
    %3980 = vmatpush.msra.mxu0 0.0
    %3981 = vmatpush.msra.mxu0 0.0
    %3982 = vmatpush.msra.mxu0 0.0
    %3983 = vmatpush.msra.mxu0 0.0
    %3984 = vmatpush.msra.mxu0 0.0
    %3985 = vmatpush.msra.mxu0 0.0
    %3986 = vmatpush.msra.mxu0 %v3670
    %3987 = vmatpush.msra.mxu0 %v3669
    %3988 = vmatpush.msra.mxu0 %v3668
    %3989 = vmatpush.msra.mxu0 %v3667
    %3990 = vmatmul.f32.gmra.mxu0 %v3914
    %v3991 = vpop.f32.mrf.mxu0
    %v3992 = vadd.f32 0.0, %v3991
    %3993 = vdwg.mxu0
    %v3994 = vadd.f32 %v417, %v3992
    %v3995 = vadd.f32 %v3994, %v3695
    %v3996 = vxor.u32 %v3995, 2147483648
    %v3997 = vmul.f32 %v3996, 1.442695
    %v3998 = vpow.pop %v3997
    %v3999 = vadd.f32 %v3998, 1.0
    %v4000 = vrcp.pop %v3999
    %v4001 = vmul.f32 %v3999, %v4000
    %v4002 = vsub.f32 1.0, %v4001
    %v4003 = vmul.f32 %v4000, %v4002
    %v4004 = vadd.f32 %v4000, %v4003
    %vm4005 = vweird.f32 %v3999
    %vm4006 = vweird.f32 %v4000
    %vm4007 = vmor %vm4005, %vm4006
    %v4008 = vsel %vm4007, %v4000, %v4004
    %v4009 = vand.u32 2147483647, %v3999
    %vm4010 = vcmp.eq.f32.partialorder %v4009, 8.507059e+37
    %v4011 = vand.u32 %v3999, 2147483648
    %v4012 = vor.u32 1.1754944e-38, %v4011
    %v4013 = vsel %vm4010, %v4012, %v4008
    %v4014 = vmul.f32 1.0, %v4013
    %v4015 = vtanh.pop %v3995
    %v4016 = vmul.f32 %v4014, %v3879
    %4018 = vrot.lane.b32.xlu0 %v4015, 64
    %v4019 = vpop.permute.xlu0 %4018
    %v4021 = vmul.f32 %v4014, %v4019
    %4023 = vrot.lane.b32.xlu0 %v4021, 32
    %v4024 = vpop.permute.xlu0 %4023
    %v4026 = vadd.f32 %v4016, %v4024
    %v4027 = vtanh.pop %v4026
    %4029 = vrot.lane.b32.xlu0 %v4027, 64
    %v4030 = vpop.permute.xlu0 %4029
    %v4032 = vmul.f32 %v4014, %v4030
    %4034 = vrot.lane.b32.xlu0 %v3973, 32
    %v4035 = vpop.permute.xlu0 %4034
    %v4036 = vsel %vm254, %v4035, 0
    %4038 = vmatpush.msra.mxu0 0.0
    %4039 = vmatpush.msra.mxu0 0.0
    %4040 = vmatpush.msra.mxu0 0.0
    %4041 = vmatpush.msra.mxu0 0.0
    %4042 = vmatpush.msra.mxu0 0.0
    %4043 = vmatpush.msra.mxu0 0.0
    %4044 = vmatpush.msra.mxu0 0.0
    %4045 = vmatpush.msra.mxu0 0.0
    %4046 = vmatpush.msra.mxu0 0.0
    %4047 = vmatpush.msra.mxu0 0.0
    %4048 = vmatpush.msra.mxu0 0.0
    %4049 = vmatpush.msra.mxu0 0.0
    %4050 = vmatpush.msra.mxu0 %v3741
    %4051 = vmatpush.msra.mxu0 %v3740
    %4052 = vmatpush.msra.mxu0 %v3739
    %4053 = vmatpush.msra.mxu0 %v3738
    %4054 = vmatmul.f32.gmra.mxu0 %v4036
    %v4055 = vpop.f32.mrf.mxu0
    %v4056 = vadd.f32 0.0, %v4055
    %4057 = vdwg.mxu0
    %4059 = vrot.lane.b32.xlu0 %v4032, 32
    %v4060 = vpop.permute.xlu0 %4059
    %v4061 = vsel %vm254, %v4060, 0
    %4063 = vmatpush.msra.mxu0 0.0
    %4064 = vmatpush.msra.mxu0 0.0
    %4065 = vmatpush.msra.mxu0 0.0
    %4066 = vmatpush.msra.mxu0 0.0
    %4067 = vmatpush.msra.mxu0 0.0
    %4068 = vmatpush.msra.mxu0 0.0
    %4069 = vmatpush.msra.mxu0 0.0
    %4070 = vmatpush.msra.mxu0 0.0
    %4071 = vmatpush.msra.mxu0 0.0
    %4072 = vmatpush.msra.mxu0 0.0
    %4073 = vmatpush.msra.mxu0 0.0
    %4074 = vmatpush.msra.mxu0 0.0
    %4075 = vmatpush.msra.mxu0 %v3737
    %4076 = vmatpush.msra.mxu0 %v3736
    %4077 = vmatpush.msra.mxu0 %v3735
    %4078 = vmatpush.msra.mxu0 %v3734
    %4079 = vmatmul.f32.gmra.mxu0 %v4061
    %v4080 = vpop.f32.mrf.mxu0
    %v4081 = vadd.f32 %v4056, %v4080
    %4082 = vdwg.mxu0
    %v4083 = vadd.f32 %v4081, %v3788
    %v4084 = vxor.u32 %v4083, 2147483648
    %v4085 = vmul.f32 %v4084, 1.442695
    %v4086 = vpow.pop %v4085
    %v4087 = vadd.f32 %v4086, 1.0
    %v4088 = vrcp.pop %v4087
    %v4089 = vmul.f32 %v4087, %v4088
    %v4090 = vsub.f32 1.0, %v4089
    %v4091 = vmul.f32 %v4088, %v4090
    %v4092 = vadd.f32 %v4088, %v4091
    %vm4093 = vweird.f32 %v4087
    %vm4094 = vweird.f32 %v4088
    %vm4095 = vmor %vm4093, %vm4094
    %v4096 = vsel %vm4095, %v4088, %v4092
    %v4097 = vand.u32 2147483647, %v4087
    %vm4098 = vcmp.eq.f32.partialorder %v4097, 8.507059e+37
    %v4099 = vand.u32 %v4087, 2147483648
    %v4100 = vor.u32 1.1754944e-38, %v4099
    %v4101 = vsel %vm4098, %v4100, %v4096
    %v4102 = vmul.f32 1.0, %v4101
    %v4103 = vtanh.pop %v4083
    %v4104 = vmul.f32 %v4102, %v3967
    %4106 = vrot.lane.b32.xlu0 %v4103, 64
    %v4107 = vpop.permute.xlu0 %4106
    %v4109 = vmul.f32 %v4102, %v4107
    %4111 = vrot.lane.b32.xlu0 %v4109, 32
    %v4112 = vpop.permute.xlu0 %4111
    %v4114 = vadd.f32 %v4104, %v4112
    %v4115 = vtanh.pop %v4114
    %4117 = vrot.lane.b32.xlu0 %v4115, 64
    %v4118 = vpop.permute.xlu0 %4117
    %v4120 = vmul.f32 %v4102, %v4118
    %4121 = vmatpush.msra.mxu0 0.0
    %4122 = vmatpush.msra.mxu0 0.0
    %4123 = vmatpush.msra.mxu0 0.0
    %4124 = vmatpush.msra.mxu0 0.0
    %4125 = vmatpush.msra.mxu0 0.0
    %4126 = vmatpush.msra.mxu0 0.0
    %4127 = vmatpush.msra.mxu0 0.0
    %4128 = vmatpush.msra.mxu0 0.0
    %4129 = vmatpush.msra.mxu0 0.0
    %4130 = vmatpush.msra.mxu0 0.0
    %4131 = vmatpush.msra.mxu0 0.0
    %4132 = vmatpush.msra.mxu0 0.0
    %4133 = vmatpush.msra.mxu0 %v3670
    %4134 = vmatpush.msra.mxu0 %v3669
    %4135 = vmatpush.msra.mxu0 %v3668
    %4136 = vmatpush.msra.mxu0 %v3667
    %4137 = vmatmul.f32.gmra.mxu0 %v4061
    %v4138 = vpop.f32.mrf.mxu0
    %v4139 = vadd.f32 0.0, %v4138
    %4140 = vdwg.mxu0
    %v4141 = vadd.f32 %v420, %v4139
    %v4142 = vadd.f32 %v4141, %v3695
    %v4143 = vxor.u32 %v4142, 2147483648
    %v4144 = vmul.f32 %v4143, 1.442695
    %v4145 = vpow.pop %v4144
    %v4146 = vadd.f32 %v4145, 1.0
    %v4147 = vrcp.pop %v4146
    %v4148 = vmul.f32 %v4146, %v4147
    %v4149 = vsub.f32 1.0, %v4148
    %v4150 = vmul.f32 %v4147, %v4149
    %v4151 = vadd.f32 %v4147, %v4150
    %vm4152 = vweird.f32 %v4146
    %vm4153 = vweird.f32 %v4147
    %vm4154 = vmor %vm4152, %vm4153
    %v4155 = vsel %vm4154, %v4147, %v4151
    %v4156 = vand.u32 2147483647, %v4146
    %vm4157 = vcmp.eq.f32.partialorder %v4156, 8.507059e+37
    %v4158 = vand.u32 %v4146, 2147483648
    %v4159 = vor.u32 1.1754944e-38, %v4158
    %v4160 = vsel %vm4157, %v4159, %v4155
    %v4161 = vmul.f32 1.0, %v4160
    %v4162 = vtanh.pop %v4142
    %v4163 = vmul.f32 %v4161, %v4026
    %4165 = vrot.lane.b32.xlu0 %v4162, 64
    %v4166 = vpop.permute.xlu0 %4165
    %v4168 = vmul.f32 %v4161, %v4166
    %4170 = vrot.lane.b32.xlu0 %v4168, 32
    %v4171 = vpop.permute.xlu0 %4170
    %v4173 = vadd.f32 %v4163, %v4171
    %v4174 = vtanh.pop %v4173
    %4176 = vrot.lane.b32.xlu0 %v4174, 64
    %v4177 = vpop.permute.xlu0 %4176
    %v4179 = vmul.f32 %v4161, %v4177
    %4181 = vrot.lane.b32.xlu0 %v4120, 32
    %v4182 = vpop.permute.xlu0 %4181
    %v4183 = vsel %vm254, %v4182, 0
    %4185 = vmatpush.msra.mxu0 0.0
    %4186 = vmatpush.msra.mxu0 0.0
    %4187 = vmatpush.msra.mxu0 0.0
    %4188 = vmatpush.msra.mxu0 0.0
    %4189 = vmatpush.msra.mxu0 0.0
    %4190 = vmatpush.msra.mxu0 0.0
    %4191 = vmatpush.msra.mxu0 0.0
    %4192 = vmatpush.msra.mxu0 0.0
    %4193 = vmatpush.msra.mxu0 0.0
    %4194 = vmatpush.msra.mxu0 0.0
    %4195 = vmatpush.msra.mxu0 0.0
    %4196 = vmatpush.msra.mxu0 0.0
    %4197 = vmatpush.msra.mxu0 %v3741
    %4198 = vmatpush.msra.mxu0 %v3740
    %4199 = vmatpush.msra.mxu0 %v3739
    %4200 = vmatpush.msra.mxu0 %v3738
    %4201 = vmatmul.f32.gmra.mxu0 %v4183
    %v4202 = vpop.f32.mrf.mxu0
    %v4203 = vadd.f32 0.0, %v4202
    %4204 = vdwg.mxu0
    %4206 = vrot.lane.b32.xlu0 %v4179, 32
    %v4207 = vpop.permute.xlu0 %4206
    %v4208 = vsel %vm254, %v4207, 0
    %4210 = vmatpush.msra.mxu0 0.0
    %4211 = vmatpush.msra.mxu0 0.0
    %4212 = vmatpush.msra.mxu0 0.0
    %4213 = vmatpush.msra.mxu0 0.0
    %4214 = vmatpush.msra.mxu0 0.0
    %4215 = vmatpush.msra.mxu0 0.0
    %4216 = vmatpush.msra.mxu0 0.0
    %4217 = vmatpush.msra.mxu0 0.0
    %4218 = vmatpush.msra.mxu0 0.0
    %4219 = vmatpush.msra.mxu0 0.0
    %4220 = vmatpush.msra.mxu0 0.0
    %4221 = vmatpush.msra.mxu0 0.0
    %4222 = vmatpush.msra.mxu0 %v3737
    %4223 = vmatpush.msra.mxu0 %v3736
    %4224 = vmatpush.msra.mxu0 %v3735
    %4225 = vmatpush.msra.mxu0 %v3734
    %4226 = vmatmul.f32.gmra.mxu0 %v4208
    %v4227 = vpop.f32.mrf.mxu0
    %v4228 = vadd.f32 %v4203, %v4227
    %4229 = vdwg.mxu0
    %v4230 = vadd.f32 %v4228, %v3788
    %v4231 = vxor.u32 %v4230, 2147483648
    %v4232 = vmul.f32 %v4231, 1.442695
    %v4233 = vpow.pop %v4232
    %v4234 = vadd.f32 %v4233, 1.0
    %v4235 = vrcp.pop %v4234
    %v4236 = vmul.f32 %v4234, %v4235
    %v4237 = vsub.f32 1.0, %v4236
    %v4238 = vmul.f32 %v4235, %v4237
    %v4239 = vadd.f32 %v4235, %v4238
    %vm4240 = vweird.f32 %v4234
    %vm4241 = vweird.f32 %v4235
    %vm4242 = vmor %vm4240, %vm4241
    %v4243 = vsel %vm4242, %v4235, %v4239
    %v4244 = vand.u32 2147483647, %v4234
    %vm4245 = vcmp.eq.f32.partialorder %v4244, 8.507059e+37
    %v4246 = vand.u32 %v4234, 2147483648
    %v4247 = vor.u32 1.1754944e-38, %v4246
    %v4248 = vsel %vm4245, %v4247, %v4243
    %v4249 = vmul.f32 1.0, %v4248
    %v4250 = vtanh.pop %v4230
    %v4251 = vmul.f32 %v4249, %v4114
    %4253 = vrot.lane.b32.xlu0 %v4250, 64
    %v4254 = vpop.permute.xlu0 %4253
    %v4256 = vmul.f32 %v4249, %v4254
    %4258 = vrot.lane.b32.xlu0 %v4256, 32
    %v4259 = vpop.permute.xlu0 %4258
    %v4261 = vadd.f32 %v4251, %v4259
    %v4262 = vtanh.pop %v4261
    %4264 = vrot.lane.b32.xlu0 %v4262, 64
    %v4265 = vpop.permute.xlu0 %4264
    %v4267 = vmul.f32 %v4249, %v4265
    %4268 = vmatpush.msra.mxu0 0.0
    %4269 = vmatpush.msra.mxu0 0.0
    %4270 = vmatpush.msra.mxu0 0.0
    %4271 = vmatpush.msra.mxu0 0.0
    %4272 = vmatpush.msra.mxu0 0.0
    %4273 = vmatpush.msra.mxu0 0.0
    %4274 = vmatpush.msra.mxu0 0.0
    %4275 = vmatpush.msra.mxu0 0.0
    %4276 = vmatpush.msra.mxu0 0.0
    %4277 = vmatpush.msra.mxu0 0.0
    %4278 = vmatpush.msra.mxu0 0.0
    %4279 = vmatpush.msra.mxu0 0.0
    %4280 = vmatpush.msra.mxu0 %v3670
    %4281 = vmatpush.msra.mxu0 %v3669
    %4282 = vmatpush.msra.mxu0 %v3668
    %4283 = vmatpush.msra.mxu0 %v3667
    %4284 = vmatmul.f32.gmra.mxu0 %v4208
    %v4285 = vpop.f32.mrf.mxu0
    %v4286 = vadd.f32 0.0, %v4285
    %4287 = vdwg.mxu0
    %v4288 = vadd.f32 %v423, %v4286
    %v4289 = vadd.f32 %v4288, %v3695
    %v4290 = vxor.u32 %v4289, 2147483648
    %v4291 = vmul.f32 %v4290, 1.442695
    %v4292 = vpow.pop %v4291
    %v4293 = vadd.f32 %v4292, 1.0
    %v4294 = vrcp.pop %v4293
    %v4295 = vmul.f32 %v4293, %v4294
    %v4296 = vsub.f32 1.0, %v4295
    %v4297 = vmul.f32 %v4294, %v4296
    %v4298 = vadd.f32 %v4294, %v4297
    %vm4299 = vweird.f32 %v4293
    %vm4300 = vweird.f32 %v4294
    %vm4301 = vmor %vm4299, %vm4300
    %v4302 = vsel %vm4301, %v4294, %v4298
    %v4303 = vand.u32 2147483647, %v4293
    %vm4304 = vcmp.eq.f32.partialorder %v4303, 8.507059e+37
    %v4305 = vand.u32 %v4293, 2147483648
    %v4306 = vor.u32 1.1754944e-38, %v4305
    %v4307 = vsel %vm4304, %v4306, %v4302
    %v4308 = vmul.f32 1.0, %v4307
    %v4309 = vtanh.pop %v4289
    %v4310 = vmul.f32 %v4308, %v4173
    %4312 = vrot.lane.b32.xlu0 %v4309, 64
    %v4313 = vpop.permute.xlu0 %4312
    %v4315 = vmul.f32 %v4308, %v4313
    %4317 = vrot.lane.b32.xlu0 %v4315, 32
    %v4318 = vpop.permute.xlu0 %4317
    %v4320 = vadd.f32 %v4310, %v4318
    %v4321 = vtanh.pop %v4320
    %4323 = vrot.lane.b32.xlu0 %v4321, 64
    %v4324 = vpop.permute.xlu0 %4323
    %v4326 = vmul.f32 %v4308, %v4324
    %4328 = vrot.lane.b32.xlu0 %v4267, 32
    %v4329 = vpop.permute.xlu0 %4328
    %v4330 = vsel %vm254, %v4329, 0
    %4332 = vmatpush.msra.mxu0 0.0
    %4333 = vmatpush.msra.mxu0 0.0
    %4334 = vmatpush.msra.mxu0 0.0
    %4335 = vmatpush.msra.mxu0 0.0
    %4336 = vmatpush.msra.mxu0 0.0
    %4337 = vmatpush.msra.mxu0 0.0
    %4338 = vmatpush.msra.mxu0 0.0
    %4339 = vmatpush.msra.mxu0 0.0
    %4340 = vmatpush.msra.mxu0 0.0
    %4341 = vmatpush.msra.mxu0 0.0
    %4342 = vmatpush.msra.mxu0 0.0
    %4343 = vmatpush.msra.mxu0 0.0
    %4344 = vmatpush.msra.mxu0 %v3741
    %4345 = vmatpush.msra.mxu0 %v3740
    %4346 = vmatpush.msra.mxu0 %v3739
    %4347 = vmatpush.msra.mxu0 %v3738
    %4348 = vmatmul.f32.gmra.mxu0 %v4330
    %v4349 = vpop.f32.mrf.mxu0
    %v4350 = vadd.f32 0.0, %v4349
    %4351 = vdwg.mxu0
    %4353 = vrot.lane.b32.xlu0 %v4326, 32
    %v4354 = vpop.permute.xlu0 %4353
    %v4355 = vsel %vm254, %v4354, 0
    %4357 = vmatpush.msra.mxu0 0.0
    %4358 = vmatpush.msra.mxu0 0.0
    %4359 = vmatpush.msra.mxu0 0.0
    %4360 = vmatpush.msra.mxu0 0.0
    %4361 = vmatpush.msra.mxu0 0.0
    %4362 = vmatpush.msra.mxu0 0.0
    %4363 = vmatpush.msra.mxu0 0.0
    %4364 = vmatpush.msra.mxu0 0.0
    %4365 = vmatpush.msra.mxu0 0.0
    %4366 = vmatpush.msra.mxu0 0.0
    %4367 = vmatpush.msra.mxu0 0.0
    %4368 = vmatpush.msra.mxu0 0.0
    %4369 = vmatpush.msra.mxu0 %v3737
    %4370 = vmatpush.msra.mxu0 %v3736
    %4371 = vmatpush.msra.mxu0 %v3735
    %4372 = vmatpush.msra.mxu0 %v3734
    %4373 = vmatmul.f32.gmra.mxu0 %v4355
    %v4374 = vpop.f32.mrf.mxu0
    %v4375 = vadd.f32 %v4350, %v4374
    %4376 = vdwg.mxu0
    %v4377 = vadd.f32 %v4375, %v3788
    %v4378 = vxor.u32 %v4377, 2147483648
    %v4379 = vmul.f32 %v4378, 1.442695
    %v4380 = vpow.pop %v4379
    %v4381 = vadd.f32 %v4380, 1.0
    %v4382 = vrcp.pop %v4381
    %v4383 = vmul.f32 %v4381, %v4382
    %v4384 = vsub.f32 1.0, %v4383
    %v4385 = vmul.f32 %v4382, %v4384
    %v4386 = vadd.f32 %v4382, %v4385
    %vm4387 = vweird.f32 %v4381
    %vm4388 = vweird.f32 %v4382
    %vm4389 = vmor %vm4387, %vm4388
    %v4390 = vsel %vm4389, %v4382, %v4386
    %v4391 = vand.u32 2147483647, %v4381
    %vm4392 = vcmp.eq.f32.partialorder %v4391, 8.507059e+37
    %v4393 = vand.u32 %v4381, 2147483648
    %v4394 = vor.u32 1.1754944e-38, %v4393
    %v4395 = vsel %vm4392, %v4394, %v4390
    %v4396 = vmul.f32 1.0, %v4395
    %v4397 = vtanh.pop %v4377
    %v4398 = vmul.f32 %v4396, %v4261
    %4400 = vrot.lane.b32.xlu0 %v4397, 64
    %v4401 = vpop.permute.xlu0 %4400
    %v4403 = vmul.f32 %v4396, %v4401
    %4405 = vrot.lane.b32.xlu0 %v4403, 32
    %v4406 = vpop.permute.xlu0 %4405
    %v4408 = vadd.f32 %v4398, %v4406
    %v4409 = vtanh.pop %v4408
    %4411 = vrot.lane.b32.xlu0 %v4409, 64
    %v4412 = vpop.permute.xlu0 %4411
    %v4414 = vmul.f32 %v4396, %v4412
    %4415 = vmatpush.msra.mxu0 0.0
    %4416 = vmatpush.msra.mxu0 0.0
    %4417 = vmatpush.msra.mxu0 0.0
    %4418 = vmatpush.msra.mxu0 0.0
    %4419 = vmatpush.msra.mxu0 0.0
    %4420 = vmatpush.msra.mxu0 0.0
    %4421 = vmatpush.msra.mxu0 0.0
    %4422 = vmatpush.msra.mxu0 0.0
    %4423 = vmatpush.msra.mxu0 0.0
    %4424 = vmatpush.msra.mxu0 0.0
    %4425 = vmatpush.msra.mxu0 0.0
    %4426 = vmatpush.msra.mxu0 0.0
    %4427 = vmatpush.msra.mxu0 %v3670
    %4428 = vmatpush.msra.mxu0 %v3669
    %4429 = vmatpush.msra.mxu0 %v3668
    %4430 = vmatpush.msra.mxu0 %v3667
    %4431 = vmatmul.f32.gmra.mxu0 %v4355
    %v4432 = vpop.f32.mrf.mxu0
    %v4433 = vadd.f32 0.0, %v4432
    %4434 = vdwg.mxu0
    %v4435 = vadd.f32 %v426, %v4433
    %v4436 = vadd.f32 %v4435, %v3695
    %v4437 = vxor.u32 %v4436, 2147483648
    %v4438 = vmul.f32 %v4437, 1.442695
    %v4439 = vpow.pop %v4438
    %v4440 = vadd.f32 %v4439, 1.0
    %v4441 = vrcp.pop %v4440
    %v4442 = vmul.f32 %v4440, %v4441
    %v4443 = vsub.f32 1.0, %v4442
    %v4444 = vmul.f32 %v4441, %v4443
    %v4445 = vadd.f32 %v4441, %v4444
    %vm4446 = vweird.f32 %v4440
    %vm4447 = vweird.f32 %v4441
    %vm4448 = vmor %vm4446, %vm4447
    %v4449 = vsel %vm4448, %v4441, %v4445
    %v4450 = vand.u32 2147483647, %v4440
    %vm4451 = vcmp.eq.f32.partialorder %v4450, 8.507059e+37
    %v4452 = vand.u32 %v4440, 2147483648
    %v4453 = vor.u32 1.1754944e-38, %v4452
    %v4454 = vsel %vm4451, %v4453, %v4449
    %v4455 = vmul.f32 1.0, %v4454
    %v4456 = vtanh.pop %v4436
    %v4457 = vmul.f32 %v4455, %v4320
    %4459 = vrot.lane.b32.xlu0 %v4456, 64
    %v4460 = vpop.permute.xlu0 %4459
    %v4462 = vmul.f32 %v4455, %v4460
    %4464 = vrot.lane.b32.xlu0 %v4462, 32
    %v4465 = vpop.permute.xlu0 %4464
    %v4467 = vadd.f32 %v4457, %v4465
    %v4468 = vtanh.pop %v4467
    %4470 = vrot.lane.b32.xlu0 %v4468, 64
    %v4471 = vpop.permute.xlu0 %4470
    %v4473 = vmul.f32 %v4455, %v4471
    %4475 = vrot.lane.b32.xlu0 %v4414, 32
    %v4476 = vpop.permute.xlu0 %4475
    %v4477 = vsel %vm254, %v4476, 0
    %4479 = vmatpush.msra.mxu0 0.0
    %4480 = vmatpush.msra.mxu0 0.0
    %4481 = vmatpush.msra.mxu0 0.0
    %4482 = vmatpush.msra.mxu0 0.0
    %4483 = vmatpush.msra.mxu0 0.0
    %4484 = vmatpush.msra.mxu0 0.0
    %4485 = vmatpush.msra.mxu0 0.0
    %4486 = vmatpush.msra.mxu0 0.0
    %4487 = vmatpush.msra.mxu0 0.0
    %4488 = vmatpush.msra.mxu0 0.0
    %4489 = vmatpush.msra.mxu0 0.0
    %4490 = vmatpush.msra.mxu0 0.0
    %4491 = vmatpush.msra.mxu0 %v3741
    %4492 = vmatpush.msra.mxu0 %v3740
    %4493 = vmatpush.msra.mxu0 %v3739
    %4494 = vmatpush.msra.mxu0 %v3738
    %4495 = vmatmul.f32.gmra.mxu0 %v4477
    %v4496 = vpop.f32.mrf.mxu0
    %v4497 = vadd.f32 0.0, %v4496
    %4498 = vdwg.mxu0
    %4500 = vrot.lane.b32.xlu0 %v4473, 32
    %v4501 = vpop.permute.xlu0 %4500
    %v4502 = vsel %vm254, %v4501, 0
    %4504 = vmatpush.msra.mxu0 0.0
    %4505 = vmatpush.msra.mxu0 0.0
    %4506 = vmatpush.msra.mxu0 0.0
    %4507 = vmatpush.msra.mxu0 0.0
    %4508 = vmatpush.msra.mxu0 0.0
    %4509 = vmatpush.msra.mxu0 0.0
    %4510 = vmatpush.msra.mxu0 0.0
    %4511 = vmatpush.msra.mxu0 0.0
    %4512 = vmatpush.msra.mxu0 0.0
    %4513 = vmatpush.msra.mxu0 0.0
    %4514 = vmatpush.msra.mxu0 0.0
    %4515 = vmatpush.msra.mxu0 0.0
    %4516 = vmatpush.msra.mxu0 %v3737
    %4517 = vmatpush.msra.mxu0 %v3736
    %4518 = vmatpush.msra.mxu0 %v3735
    %4519 = vmatpush.msra.mxu0 %v3734
    %4520 = vmatmul.f32.gmra.mxu0 %v4502
    %v4521 = vpop.f32.mrf.mxu0
    %v4522 = vadd.f32 %v4497, %v4521
    %4523 = vdwg.mxu0
    %v4524 = vadd.f32 %v4522, %v3788
    %v4525 = vxor.u32 %v4524, 2147483648
    %v4526 = vmul.f32 %v4525, 1.442695
    %v4527 = vpow.pop %v4526
    %v4528 = vadd.f32 %v4527, 1.0
    %v4529 = vrcp.pop %v4528
    %v4530 = vmul.f32 %v4528, %v4529
    %v4531 = vsub.f32 1.0, %v4530
    %v4532 = vmul.f32 %v4529, %v4531
    %v4533 = vadd.f32 %v4529, %v4532
    %vm4534 = vweird.f32 %v4528
    %vm4535 = vweird.f32 %v4529
    %vm4536 = vmor %vm4534, %vm4535
    %v4537 = vsel %vm4536, %v4529, %v4533
    %v4538 = vand.u32 2147483647, %v4528
    %vm4539 = vcmp.eq.f32.partialorder %v4538, 8.507059e+37
    %v4540 = vand.u32 %v4528, 2147483648
    %v4541 = vor.u32 1.1754944e-38, %v4540
    %v4542 = vsel %vm4539, %v4541, %v4537
    %v4543 = vmul.f32 1.0, %v4542
    %v4544 = vtanh.pop %v4524
    %v4545 = vmul.f32 %v4543, %v4408
    %4547 = vrot.lane.b32.xlu0 %v4544, 64
    %v4548 = vpop.permute.xlu0 %4547
    %v4550 = vmul.f32 %v4543, %v4548
    %4552 = vrot.lane.b32.xlu0 %v4550, 32
    %v4553 = vpop.permute.xlu0 %4552
    %v4555 = vadd.f32 %v4545, %v4553
    %v4556 = vtanh.pop %v4555
    %4558 = vrot.lane.b32.xlu0 %v4556, 64
    %v4559 = vpop.permute.xlu0 %4558
    %v4561 = vmul.f32 %v4543, %v4559
    %4562 = vmatpush.msra.mxu0 0.0
    %4563 = vmatpush.msra.mxu0 0.0
    %4564 = vmatpush.msra.mxu0 0.0
    %4565 = vmatpush.msra.mxu0 0.0
    %4566 = vmatpush.msra.mxu0 0.0
    %4567 = vmatpush.msra.mxu0 0.0
    %4568 = vmatpush.msra.mxu0 0.0
    %4569 = vmatpush.msra.mxu0 0.0
    %4570 = vmatpush.msra.mxu0 0.0
    %4571 = vmatpush.msra.mxu0 0.0
    %4572 = vmatpush.msra.mxu0 0.0
    %4573 = vmatpush.msra.mxu0 0.0
    %4574 = vmatpush.msra.mxu0 %v3670
    %4575 = vmatpush.msra.mxu0 %v3669
    %4576 = vmatpush.msra.mxu0 %v3668
    %4577 = vmatpush.msra.mxu0 %v3667
    %4578 = vmatmul.f32.gmra.mxu0 %v4502
    %v4579 = vpop.f32.mrf.mxu0
    %v4580 = vadd.f32 0.0, %v4579
    %4581 = vdwg.mxu0
    %v4582 = vadd.f32 %v429, %v4580
    %v4583 = vadd.f32 %v4582, %v3695
    %v4584 = vxor.u32 %v4583, 2147483648
    %v4585 = vmul.f32 %v4584, 1.442695
    %v4586 = vpow.pop %v4585
    %v4587 = vadd.f32 %v4586, 1.0
    %v4588 = vrcp.pop %v4587
    %v4589 = vmul.f32 %v4587, %v4588
    %v4590 = vsub.f32 1.0, %v4589
    %v4591 = vmul.f32 %v4588, %v4590
    %v4592 = vadd.f32 %v4588, %v4591
    %vm4593 = vweird.f32 %v4587
    %vm4594 = vweird.f32 %v4588
    %vm4595 = vmor %vm4593, %vm4594
    %v4596 = vsel %vm4595, %v4588, %v4592
    %v4597 = vand.u32 2147483647, %v4587
    %vm4598 = vcmp.eq.f32.partialorder %v4597, 8.507059e+37
    %v4599 = vand.u32 %v4587, 2147483648
    %v4600 = vor.u32 1.1754944e-38, %v4599
    %v4601 = vsel %vm4598, %v4600, %v4596
    %v4602 = vmul.f32 1.0, %v4601
    %v4603 = vtanh.pop %v4583
    %v4604 = vmul.f32 %v4602, %v4467
    %4606 = vrot.lane.b32.xlu0 %v4603, 64
    %v4607 = vpop.permute.xlu0 %4606
    %v4609 = vmul.f32 %v4602, %v4607
    %4611 = vrot.lane.b32.xlu0 %v4609, 32
    %v4612 = vpop.permute.xlu0 %4611
    %v4614 = vadd.f32 %v4604, %v4612
    %v4615 = vtanh.pop %v4614
    %4617 = vrot.lane.b32.xlu0 %v4615, 64
    %v4618 = vpop.permute.xlu0 %4617
    %v4620 = vmul.f32 %v4602, %v4618
    %4622 = vrot.lane.b32.xlu0 %v4561, 32
    %v4623 = vpop.permute.xlu0 %4622
    %v4624 = vsel %vm254, %v4623, 0
    %4626 = vmatpush.msra.mxu0 0.0
    %4627 = vmatpush.msra.mxu0 0.0
    %4628 = vmatpush.msra.mxu0 0.0
    %4629 = vmatpush.msra.mxu0 0.0
    %4630 = vmatpush.msra.mxu0 0.0
    %4631 = vmatpush.msra.mxu0 0.0
    %4632 = vmatpush.msra.mxu0 0.0
    %4633 = vmatpush.msra.mxu0 0.0
    %4634 = vmatpush.msra.mxu0 0.0
    %4635 = vmatpush.msra.mxu0 0.0
    %4636 = vmatpush.msra.mxu0 0.0
    %4637 = vmatpush.msra.mxu0 0.0
    %4638 = vmatpush.msra.mxu0 %v3741
    %4639 = vmatpush.msra.mxu0 %v3740
    %4640 = vmatpush.msra.mxu0 %v3739
    %4641 = vmatpush.msra.mxu0 %v3738
    %4642 = vmatmul.f32.gmra.mxu0 %v4624
    %v4643 = vpop.f32.mrf.mxu0
    %v4644 = vadd.f32 0.0, %v4643
    %4645 = vdwg.mxu0
    %4647 = vrot.lane.b32.xlu0 %v4620, 32
    %v4648 = vpop.permute.xlu0 %4647
    %v4649 = vsel %vm254, %v4648, 0
    %4651 = vmatpush.msra.mxu0 0.0
    %4652 = vmatpush.msra.mxu0 0.0
    %4653 = vmatpush.msra.mxu0 0.0
    %4654 = vmatpush.msra.mxu0 0.0
    %4655 = vmatpush.msra.mxu0 0.0
    %4656 = vmatpush.msra.mxu0 0.0
    %4657 = vmatpush.msra.mxu0 0.0
    %4658 = vmatpush.msra.mxu0 0.0
    %4659 = vmatpush.msra.mxu0 0.0
    %4660 = vmatpush.msra.mxu0 0.0
    %4661 = vmatpush.msra.mxu0 0.0
    %4662 = vmatpush.msra.mxu0 0.0
    %4663 = vmatpush.msra.mxu0 %v3737
    %4664 = vmatpush.msra.mxu0 %v3736
    %4665 = vmatpush.msra.mxu0 %v3735
    %4666 = vmatpush.msra.mxu0 %v3734
    %4667 = vmatmul.f32.gmra.mxu0 %v4649
    %v4668 = vpop.f32.mrf.mxu0
    %v4669 = vadd.f32 %v4644, %v4668
    %4670 = vdwg.mxu0
    %v4671 = vadd.f32 %v4669, %v3788
    %v4672 = vxor.u32 %v4671, 2147483648
    %v4673 = vmul.f32 %v4672, 1.442695
    %v4674 = vpow.pop %v4673
    %v4675 = vadd.f32 %v4674, 1.0
    %v4676 = vrcp.pop %v4675
    %v4677 = vmul.f32 %v4675, %v4676
    %v4678 = vsub.f32 1.0, %v4677
    %v4679 = vmul.f32 %v4676, %v4678
    %v4680 = vadd.f32 %v4676, %v4679
    %vm4681 = vweird.f32 %v4675
    %vm4682 = vweird.f32 %v4676
    %vm4683 = vmor %vm4681, %vm4682
    %v4684 = vsel %vm4683, %v4676, %v4680
    %v4685 = vand.u32 2147483647, %v4675
    %vm4686 = vcmp.eq.f32.partialorder %v4685, 8.507059e+37
    %v4687 = vand.u32 %v4675, 2147483648
    %v4688 = vor.u32 1.1754944e-38, %v4687
    %v4689 = vsel %vm4686, %v4688, %v4684
    %v4690 = vmul.f32 1.0, %v4689
    %v4691 = vtanh.pop %v4671
    %v4692 = vmul.f32 %v4690, %v4555
    %4694 = vrot.lane.b32.xlu0 %v4691, 64
    %v4695 = vpop.permute.xlu0 %4694
    %v4697 = vmul.f32 %v4690, %v4695
    %4699 = vrot.lane.b32.xlu0 %v4697, 32
    %v4700 = vpop.permute.xlu0 %4699
    %v4702 = vadd.f32 %v4692, %v4700
    %v4703 = vtanh.pop %v4702
    %4705 = vrot.lane.b32.xlu0 %v4703, 64
    %v4706 = vpop.permute.xlu0 %4705
    %v4708 = vmul.f32 %v4690, %v4706
    %4709 = vmatpush.msra.mxu0 0.0
    %4710 = vmatpush.msra.mxu0 0.0
    %4711 = vmatpush.msra.mxu0 0.0
    %4712 = vmatpush.msra.mxu0 0.0
    %4713 = vmatpush.msra.mxu0 0.0
    %4714 = vmatpush.msra.mxu0 0.0
    %4715 = vmatpush.msra.mxu0 0.0
    %4716 = vmatpush.msra.mxu0 0.0
    %4717 = vmatpush.msra.mxu0 0.0
    %4718 = vmatpush.msra.mxu0 0.0
    %4719 = vmatpush.msra.mxu0 0.0
    %4720 = vmatpush.msra.mxu0 0.0
    %4721 = vmatpush.msra.mxu0 %v3670
    %4722 = vmatpush.msra.mxu0 %v3669
    %4723 = vmatpush.msra.mxu0 %v3668
    %4724 = vmatpush.msra.mxu0 %v3667
    %4725 = vmatmul.f32.gmra.mxu0 %v4649
    %v4726 = vpop.f32.mrf.mxu0
    %v4727 = vadd.f32 0.0, %v4726
    %4728 = vdwg.mxu0
    %v4729 = vadd.f32 %v432, %v4727
    %v4730 = vadd.f32 %v4729, %v3695
    %v4731 = vxor.u32 %v4730, 2147483648
    %v4732 = vmul.f32 %v4731, 1.442695
    %v4733 = vpow.pop %v4732
    %v4734 = vadd.f32 %v4733, 1.0
    %v4735 = vrcp.pop %v4734
    %v4736 = vmul.f32 %v4734, %v4735
    %v4737 = vsub.f32 1.0, %v4736
    %v4738 = vmul.f32 %v4735, %v4737
    %v4739 = vadd.f32 %v4735, %v4738
    %vm4740 = vweird.f32 %v4734
    %vm4741 = vweird.f32 %v4735
    %vm4742 = vmor %vm4740, %vm4741
    %v4743 = vsel %vm4742, %v4735, %v4739
    %v4744 = vand.u32 2147483647, %v4734
    %vm4745 = vcmp.eq.f32.partialorder %v4744, 8.507059e+37
    %v4746 = vand.u32 %v4734, 2147483648
    %v4747 = vor.u32 1.1754944e-38, %v4746
    %v4748 = vsel %vm4745, %v4747, %v4743
    %v4749 = vmul.f32 1.0, %v4748
    %v4750 = vtanh.pop %v4730
    %v4751 = vmul.f32 %v4749, %v4614
    %4753 = vrot.lane.b32.xlu0 %v4750, 64
    %v4754 = vpop.permute.xlu0 %4753
    %v4756 = vmul.f32 %v4749, %v4754
    %4758 = vrot.lane.b32.xlu0 %v4756, 32
    %v4759 = vpop.permute.xlu0 %4758
    %v4761 = vadd.f32 %v4751, %v4759
    %v4762 = vtanh.pop %v4761
    %4764 = vrot.lane.b32.xlu0 %v4762, 64
    %v4765 = vpop.permute.xlu0 %4764
    %v4767 = vmul.f32 %v4749, %v4765
    %4769 = vrot.lane.b32.xlu0 %v4708, 32
    %v4770 = vpop.permute.xlu0 %4769
    %v4771 = vsel %vm254, %v4770, 0
    %4773 = vmatpush.msra.mxu0 0.0
    %4774 = vmatpush.msra.mxu0 0.0
    %4775 = vmatpush.msra.mxu0 0.0
    %4776 = vmatpush.msra.mxu0 0.0
    %4777 = vmatpush.msra.mxu0 0.0
    %4778 = vmatpush.msra.mxu0 0.0
    %4779 = vmatpush.msra.mxu0 0.0
    %4780 = vmatpush.msra.mxu0 0.0
    %4781 = vmatpush.msra.mxu0 0.0
    %4782 = vmatpush.msra.mxu0 0.0
    %4783 = vmatpush.msra.mxu0 0.0
    %4784 = vmatpush.msra.mxu0 0.0
    %4785 = vmatpush.msra.mxu0 %v3741
    %4786 = vmatpush.msra.mxu0 %v3740
    %4787 = vmatpush.msra.mxu0 %v3739
    %4788 = vmatpush.msra.mxu0 %v3738
    %4789 = vmatmul.f32.gmra.mxu0 %v4771
    %v4790 = vpop.f32.mrf.mxu0
    %v4791 = vadd.f32 0.0, %v4790
    %4792 = vdwg.mxu0
    %4794 = vrot.lane.b32.xlu0 %v4767, 32
    %v4795 = vpop.permute.xlu0 %4794
    %v4796 = vsel %vm254, %v4795, 0
    %4798 = vmatpush.msra.mxu0 0.0
    %4799 = vmatpush.msra.mxu0 0.0
    %4800 = vmatpush.msra.mxu0 0.0
    %4801 = vmatpush.msra.mxu0 0.0
    %4802 = vmatpush.msra.mxu0 0.0
    %4803 = vmatpush.msra.mxu0 0.0
    %4804 = vmatpush.msra.mxu0 0.0
    %4805 = vmatpush.msra.mxu0 0.0
    %4806 = vmatpush.msra.mxu0 0.0
    %4807 = vmatpush.msra.mxu0 0.0
    %4808 = vmatpush.msra.mxu0 0.0
    %4809 = vmatpush.msra.mxu0 0.0
    %4810 = vmatpush.msra.mxu0 %v3737
    %4811 = vmatpush.msra.mxu0 %v3736
    %4812 = vmatpush.msra.mxu0 %v3735
    %4813 = vmatpush.msra.mxu0 %v3734
    %4814 = vmatmul.f32.gmra.mxu0 %v4796
    %v4815 = vpop.f32.mrf.mxu0
    %v4816 = vadd.f32 %v4791, %v4815
    %4817 = vdwg.mxu0
    %v4818 = vadd.f32 %v4816, %v3788
    %v4819 = vxor.u32 %v4818, 2147483648
    %v4820 = vmul.f32 %v4819, 1.442695
    %v4821 = vpow.pop %v4820
    %v4822 = vadd.f32 %v4821, 1.0
    %v4823 = vrcp.pop %v4822
    %v4824 = vmul.f32 %v4822, %v4823
    %v4825 = vsub.f32 1.0, %v4824
    %v4826 = vmul.f32 %v4823, %v4825
    %v4827 = vadd.f32 %v4823, %v4826
    %vm4828 = vweird.f32 %v4822
    %vm4829 = vweird.f32 %v4823
    %vm4830 = vmor %vm4828, %vm4829
    %v4831 = vsel %vm4830, %v4823, %v4827
    %v4832 = vand.u32 2147483647, %v4822
    %vm4833 = vcmp.eq.f32.partialorder %v4832, 8.507059e+37
    %v4834 = vand.u32 %v4822, 2147483648
    %v4835 = vor.u32 1.1754944e-38, %v4834
    %v4836 = vsel %vm4833, %v4835, %v4831
    %v4837 = vmul.f32 1.0, %v4836
    %v4838 = vtanh.pop %v4818
    %v4839 = vmul.f32 %v4837, %v4702
    %4841 = vrot.lane.b32.xlu0 %v4838, 64
    %v4842 = vpop.permute.xlu0 %4841
    %v4844 = vmul.f32 %v4837, %v4842
    %4846 = vrot.lane.b32.xlu0 %v4844, 32
    %v4847 = vpop.permute.xlu0 %4846
    %v4849 = vadd.f32 %v4839, %v4847
    %v4850 = vtanh.pop %v4849
    %4852 = vrot.lane.b32.xlu0 %v4850, 64
    %v4853 = vpop.permute.xlu0 %4852
    %v4855 = vmul.f32 %v4837, %v4853
    %v4856 = vld [vmem:[%s3] sm:$0x3]
    %v4857 = vld [vmem:[#allocation4 + $0x108] sm:$0x3f]
    %v4858 = vld [vmem:[#allocation4 + $0x110] sm:$0x1]
    %v4859 = vperm.slane %v4858, 0
    %vm4860 = vcmask 48128
    %v4862 = vsel %vm4860, %v4856, 0
    %vm4864 = vcmask 1045504
    %v4866 = vsel %vm4864, %v4857, 0
    %4868 = vmatpush.msra.mxu0 0.0
    %4869 = vmatpush.msra.mxu0 0.0
    %4870 = vmatpush.msra.mxu0 0.0
    %4871 = vmatpush.msra.mxu0 0.0
    %4872 = vmatpush.msra.mxu0 0.0
    %4873 = vmatpush.msra.mxu0 0.0
    %4874 = vmatpush.msra.mxu0 0.0
    %4875 = vmatpush.msra.mxu0 0.0
    %4876 = vmatpush.msra.mxu0 0.0
    %4877 = vmatpush.msra.mxu0 0.0
    %4878 = vmatpush.msra.mxu0 0.0
    %4879 = vmatpush.msra.mxu0 0.0
    %4880 = vmatpush.msra.mxu0 0.0
    %4881 = vmatpush.msra.mxu0 0.0
    %4882 = vmatpush.msra.mxu0 0.0
    %4883 = vmatpush.msra.mxu0 %v4866
    %4884 = vmatmul.f32.gmra.mxu0 %v4862
    %v4885 = vpop.f32.mrf.mxu0
    %v4886 = vadd.f32 %v4859, %v4885
    %4887 = vdwg.mxu0
    %v4888 = vmax.f32 %v4886, 0.0
    %v4889 = vld [vmem:[#allocation4 + $0x128] sm:$0xff]
    %v4890 = vld [vmem:[#allocation4 + $0x130] sm:$0xff]
    %v4891 = vld [vmem:[#allocation4 + $0x138] sm:$0xff]
    %v4892 = vld [vmem:[#allocation4 + $0x140] sm:$0xff]
    %v4893 = vld [vmem:[#allocation4 + $0x148] sm:$0xff]
    %v4894 = vld [vmem:[#allocation4 + $0x150] sm:$0xff]
    %v4895 = vld [vmem:[#allocation4 + $0x158] sm:$0xff]
    %v4896 = vld [vmem:[#allocation4 + $0x160] sm:$0xff]
    %v4898 = vsel %vm254, %v4888, 0
    %4900 = vmatpush.msra.mxu0 0.0
    %4901 = vmatpush.msra.mxu0 0.0
    %4902 = vmatpush.msra.mxu0 0.0
    %4903 = vmatpush.msra.mxu0 0.0
    %4904 = vmatpush.msra.mxu0 0.0
    %4905 = vmatpush.msra.mxu0 0.0
    %4906 = vmatpush.msra.mxu0 0.0
    %4907 = vmatpush.msra.mxu0 0.0
    %4908 = vmatpush.msra.mxu0 0.0
    %4909 = vmatpush.msra.mxu0 0.0
    %4910 = vmatpush.msra.mxu0 0.0
    %4911 = vmatpush.msra.mxu0 0.0
    %4912 = vmatpush.msra.mxu0 %v4896
    %4913 = vmatpush.msra.mxu0 %v4895
    %4914 = vmatpush.msra.mxu0 %v4894
    %4915 = vmatpush.msra.mxu0 %v4893
    %4916 = vmatmul.f32.gmra.mxu0 %v4898
    %v4917 = vpop.f32.mrf.mxu0
    %v4918 = vadd.f32 0.0, %v4917
    %4919 = vdwg.mxu0
    %4921 = vrot.lane.b32.xlu0 %v4855, 32
    %v4922 = vpop.permute.xlu0 %4921
    %v4923 = vsel %vm254, %v4922, 0
    %4925 = vmatpush.msra.mxu0 0.0
    %4926 = vmatpush.msra.mxu0 0.0
    %4927 = vmatpush.msra.mxu0 0.0
    %4928 = vmatpush.msra.mxu0 0.0
    %4929 = vmatpush.msra.mxu0 0.0
    %4930 = vmatpush.msra.mxu0 0.0
    %4931 = vmatpush.msra.mxu0 0.0
    %4932 = vmatpush.msra.mxu0 0.0
    %4933 = vmatpush.msra.mxu0 0.0
    %4934 = vmatpush.msra.mxu0 0.0
    %4935 = vmatpush.msra.mxu0 0.0
    %4936 = vmatpush.msra.mxu0 0.0
    %4937 = vmatpush.msra.mxu0 %v4892
    %4938 = vmatpush.msra.mxu0 %v4891
    %4939 = vmatpush.msra.mxu0 %v4890
    %4940 = vmatpush.msra.mxu0 %v4889
    %4941 = vmatmul.f32.gmra.mxu0 %v4923
    %v4942 = vpop.f32.mrf.mxu0
    %v4943 = vadd.f32 %v4918, %v4942
    %4944 = vdwg.mxu0
    %4947 = vrot.lane.b32.xlu0 %v3665, 112
    %v4948 = vpop.permute.xlu0 %4947
    %4949 = vrot.lane.b32.xlu0 %v3666, 112
    %v4950 = vpop.permute.xlu0 %4949
    %4953 = vmatpush.msra.mxu0 0.0
    %4954 = vmatpush.msra.mxu0 0.0
    %4955 = vmatpush.msra.mxu0 0.0
    %4956 = vmatpush.msra.mxu0 0.0
    %4957 = vmatpush.msra.mxu0 0.0
    %4958 = vmatpush.msra.mxu0 0.0
    %4959 = vmatpush.msra.mxu0 0.0
    %4960 = vmatpush.msra.mxu0 0.0
    %4961 = vmatpush.msra.mxu0 0.0
    %4962 = vmatpush.msra.mxu0 0.0
    %4963 = vmatpush.msra.mxu0 0.0
    %4964 = vmatpush.msra.mxu0 0.0
    %4965 = vmatpush.msra.mxu0 0.0
    %4966 = vmatpush.msra.mxu0 0.0
    %4967 = vmatpush.msra.mxu0 %v4950
    %4968 = vmatpush.msra.mxu0 %v4948
    %4969 = vmatmul.f32.gmra.mxu0 %v511
    %v4970 = vpop.f32.mrf.mxu0
    %v4971 = vadd.f32 0.0, %v4970
    %4972 = vmatmul.f32.gmra.mxu0 %v514
    %v4973 = vpop.f32.mrf.mxu0
    %v4974 = vadd.f32 0.0, %v4973
    %4975 = vdwg.mxu0
    %v4976 = vld [vmem:[#allocation4 + $0x118] sm:$0xff]
    %v4977 = vld [vmem:[#allocation4 + $0x120] sm:$0xff]
    %v4979 = vsel %vm340, %v4971, 0
    %v4982 = vsel %vm340, %v4974, 0
    %4984 = vmatpush.msra.mxu0 0.0
    %4985 = vmatpush.msra.mxu0 0.0
    %4986 = vmatpush.msra.mxu0 0.0
    %4987 = vmatpush.msra.mxu0 0.0
    %4988 = vmatpush.msra.mxu0 0.0
    %4989 = vmatpush.msra.mxu0 0.0
    %4990 = vmatpush.msra.mxu0 0.0
    %4991 = vmatpush.msra.mxu0 0.0
    %4992 = vmatpush.msra.mxu0 0.0
    %4993 = vmatpush.msra.mxu0 0.0
    %4994 = vmatpush.msra.mxu0 0.0
    %4995 = vmatpush.msra.mxu0 0.0
    %4996 = vmatpush.msra.mxu0 0.0
    %4997 = vmatpush.msra.mxu0 0.0
    %4998 = vmatpush.msra.mxu0 %v4977
    %4999 = vmatpush.msra.mxu0 %v4976
    %5000 = vmatmul.f32.gmra.mxu0 %v4979
    %v5001 = vpop.f32.mrf.mxu0
    %v5002 = vadd.f32 0.0, %v5001
    %5003 = vmatmul.f32.gmra.mxu0 %v4982
    %v5004 = vpop.f32.mrf.mxu0
    %v5005 = vadd.f32 0.0, %v5004
    %5006 = vdwg.mxu0
    %v5007 = vsel %vm340, %v36, 0.0
    %5008 = vadd.xlane.f32.xlu0 %v5007
    %v5009 = vpop.xlane.xlu0 %5008
    %v5010 = vsel %vm340, %v37, 0.0
    %5011 = vadd.xlane.f32.xlu0 %v5010
    %v5012 = vpop.xlane.xlu0 %5011
    %v5014 = vrot.slane %v4943, 1
    %v5015 = vperm.slane %v4943, 0
    %v5016 = vperm.slane %v5014, 0
    %v5019 = vmul.f32 %v5009, %v5015
    %v5020 = vmul.f32 %v5012, %v5016
    %v5021 = vadd.f32 %v5002, %v5019
    %v5022 = vadd.f32 %v5005, %v5020
    %v5023 = vld [vmem:[#allocation4 + $0x168] sm:$0x1]
    %v5024 = vperm.slane %v5023, 0
    %v5025 = vadd.f32 %v5021, %v5024
    %v5026 = vadd.f32 %v5022, %v5024
    %v5027 = vtanh.pop %v5025
    %v5028 = vtanh.pop %v5026
    %5029 = vst.msk [vmem:[%s5] sm:$0xff] %vm136, %v5027
    %5030 = vst.msk [vmem:[%s5 + $0x8] sm:$0xff] %vm136, %v5028
    // Predicated region
    $region26: #{tpu_custom_call.1} parent=1 // pred_check
      _
    $region27: #{tpu_custom_call.1} parent=1 // pred_check_branch
      %5032 = sbr.rel (0) target = $region29
    $region28: #{tpu_custom_call.1} parent=1 // pred_region
      _
    $region29: #{tpu_custom_call.1} parent=1 // pred_fallthru
      _
    // Predicated region
    $region30: #{tpu_custom_call.1} parent=1 // pred_check
      _
    $region31: #{tpu_custom_call.1} parent=1 // pred_check_branch
      %5034 = sbr.rel (0) target = $region33
    $region32: #{tpu_custom_call.1} parent=1 // pred_region
      _
    $region33: #{tpu_custom_call.1} parent=1 // pred_fallthru
      _
    %5035 = vsyncpa [#allocation5], 1

</llo_original>
